<compile_context>
chip_gen: v7x
topology: tpu7x:2x2x1
jax: 0.10.0
libtpu: 0.0.40
codegen_flags: <defaults>
</compile_context>

<pallas_src>
import functools

import numpy as np
import jax
import jax.numpy as jnp
from jax.experimental import pallas as pl
from jax.experimental.pallas import tpu as pltpu


# ----------------------------------------------------------------------------
# Kernel
# ----------------------------------------------------------------------------
def _emotion_cnn_kernel(p1_ref, w1_ref, g1_ref, be1_ref,
                        w2_ref, g2_ref, be2_ref,
                        w3_ref, g3_ref, be3_ref,
                        wfc_ref, bfc_ref, wh_ref, bh_ref,
                        out_ref,
                        halo2_ref, halo3_ref,
                        p1a_ref, p1b_ref, p2a_ref, p2b_ref,
                        *, B, H, W):
    f32 = jnp.float32
    bf16 = jnp.bfloat16

    H1, W1 = H, W
    H2, W2 = H // 2, W // 2
    H3, W3 = H // 4, W // 4

    # Zero the haloed conv-input scratches once; interiors are overwritten.
    halo2_ref[...] = jnp.zeros_like(halo2_ref)
    halo3_ref[...] = jnp.zeros_like(halo3_ref)

    def bn_relu(y, g_ref, be_ref, eps=1e-5):
        # BatchNorm2d, training-mode batch stats (biased variance), f32 math.
        # Sums are done on the MXU (ones-row matmuls) instead of the XLU.
        n = y.shape[0]
        ones = jnp.ones((1, n), f32)
        s = jnp.dot(ones, y, preferred_element_type=f32)          # (1, C)
        sq = jnp.dot(ones, y * y, preferred_element_type=f32)     # (1, C)
        inv_n = 1.0 / n
        mu = s * inv_n
        var = sq * inv_n - mu * mu
        yh = (y - mu) * jax.lax.rsqrt(var + eps)
        return jnp.maximum(yh * g_ref[...] + be_ref[...], 0.0)

    def conv3x3(halo_ref, Hc, Wc, w_ref):
        """3x3 conv, padding=1, from a zero-haloed (B, (Hc+2)*Wc+2, Cin) bf16
        scratch.  Tap (di, dj) is the Hc*Wc-row slab at sublane offset
        (Wc+1) + di*Wc + dj of every image slab: the padded rows zero the
        row-out-of-range taps; a per-row column mask (applied once per
        dj-group to the f32 matmul output) zeroes the column wrap-around."""
        N = B * Hc * Wc
        Cin = halo_ref.shape[-1]

        def dj_group(dj):
            acc = None
            for di in (-1, 0, 1):
                t = (di + 1) * 3 + (dj + 1)                # kh*3 + kw
                off = (Wc + 1) + di * Wc + dj              # static offset
                tap = halo_ref[:, pl.ds(off, Hc * Wc), :].reshape(N, Cin)
                part = jnp.dot(tap, w_ref[t], preferred_element_type=f32)
                acc = part if acc is None else acc + part
            return acc                                      # (N, Cout) f32

        jj = jax.lax.broadcasted_iota(jnp.int32, (N, 1), 0) % Wc
        left_ok = (jj >= 1).astype(f32)
        right_ok = (jj <= Wc - 2).astype(f32)
        return dj_group(0) + left_ok * dj_group(-1) + right_ok * dj_group(1)

    def maxpool2_into_halo(h, Hc, Wc, scr_a, scr_b, halo_ref):
        """2x2 / stride-2 max pool via static + strided picks (no rolls).
        The pooled (B*Ho*Wo, C) result is written bf16 into the interior
        rows of the next conv's halo scratch."""
        C = h.shape[-1]
        Ho, Wo = Hc // 2, Wc // 2
        # rows i / i+1 -> grouped into dim 1 of the scratch, then maxed
        scr_a[...] = h.reshape(B * Ho, 2, Wc, C)
        m1 = jnp.maximum(scr_a[:, 0, :, :], scr_a[:, 1, :, :])   # (B*Ho, Wc, C)
        # cols j / j+1 -> even / odd strided picks (Wc even => flat parity == j parity)
        scr_b[...] = m1.reshape(B * Ho * Wc, C)
        even_j = scr_b[pl.ds(0, B * Ho * Wo, stride=2), :]
        odd_j = scr_b[pl.ds(1, B * Ho * Wo, stride=2), :]
        pooled = jnp.maximum(even_j, odd_j)                       # (B*Ho*Wo, C)
        halo_ref[:, pl.ds(Wo + 1, Ho * Wo), :] = (
            pooled.reshape(B, Ho * Wo, C).astype(bf16))

    # stage 1: conv1 (im2col'd in the wrapper) + BN + ReLU + maxpool2
    y1 = jnp.dot(p1_ref[...], w1_ref[...], preferred_element_type=f32)
    h1 = bn_relu(y1, g1_ref, be1_ref)                             # (B*H*W, 32)
    maxpool2_into_halo(h1, H1, W1, p1a_ref, p1b_ref, halo2_ref)

    # stage 2: conv2 (32->64) + BN + ReLU + maxpool2
    h2 = bn_relu(conv3x3(halo2_ref, H2, W2, w2_ref), g2_ref, be2_ref)
    maxpool2_into_halo(h2, H2, W2, p2a_ref, p2b_ref, halo3_ref)

    # stage 3: conv3 (64->128) + BN + ReLU
    h3 = bn_relu(conv3x3(halo3_ref, H3, W3, w3_ref), g3_ref, be3_ref)

    # AdaptiveAvgPool2d((1,1)) == mean over the H3*W3 rows of each image.
    gap = jnp.mean(h3.reshape(B, H3 * W3, h3.shape[-1]), axis=1)  # (B, 128)

    # head: fc(128->256), then packed [classifier | va_regressor] matmul.
    feats = jnp.dot(gap.astype(bf16), wfc_ref[...],
                    preferred_element_type=f32) + bfc_ref[...]
    out_ref[...] = (jnp.dot(feats.astype(bf16), wh_ref[...],
                            preferred_element_type=f32) + bh_ref[...])


# ----------------------------------------------------------------------------
# Parameters (deterministic, PyTorch-default-like scales)
# ----------------------------------------------------------------------------
def init_params(key, num_emotions=8, feature_dim=256):
    ks = jax.random.split(key, 12)

    def u(k, shape, fan_in):
        bound = 1.0 / np.sqrt(fan_in)
        return jax.random.uniform(k, shape, jnp.float32, -bound, bound)

    p = {}
    # Conv weights generated in PyTorch (Cout, Cin, kH, kW) layout, repacked
    # per tap to (9, Cin, Cout); tap t = kh*3 + kw matches the kernel order.
    w1 = u(ks[0], (32, 3, 3, 3), 3 * 9)
    p['w1'] = jnp.transpose(w1, (2, 3, 1, 0)).reshape(9, 3, 32)
    p['b1'] = u(ks[1], (1, 32), 3 * 9)       # used only by the reference
    w2 = u(ks[2], (64, 32, 3, 3), 32 * 9)
    p['w2'] = jnp.transpose(w2, (2, 3, 1, 0)).reshape(9, 32, 64)
    p['b2'] = u(ks[3], (1, 64), 32 * 9)      # used only by the reference
    w3 = u(ks[4], (128, 64, 3, 3), 64 * 9)
    p['w3'] = jnp.transpose(w3, (2, 3, 1, 0)).reshape(9, 64, 128)
    p['b3'] = u(ks[5], (1, 128), 64 * 9)     # used only by the reference
    # BatchNorm affine params (PyTorch default init: weight=1, bias=0).
    for c, name in ((32, '1'), (64, '2'), (128, '3')):
        p['g' + name] = jnp.ones((1, c), jnp.float32)
        p['be' + name] = jnp.zeros((1, c), jnp.float32)
    # Linear layers stored as (in, out) so the kernel does x @ W + b.
    p['wfc'] = u(ks[6], (128, feature_dim), 128)
    p['bfc'] = u(ks[7], (1, feature_dim), 128)
    p['wcls'] = u(ks[8], (feature_dim, num_emotions), feature_dim)
    p['bcls'] = u(ks[9], (1, num_emotions), feature_dim)
    p['wva'] = u(ks[10], (feature_dim, 2), feature_dim)
    p['bva'] = u(ks[11], (1, 2), feature_dim)
    return p


# ----------------------------------------------------------------------------
# Wrapper
# ----------------------------------------------------------------------------
def _vmem_limit_bytes():
    # ~3/4 of physical VMEM (>=96 MiB on v5e/v6e, ~48 MiB on v7x), capped.
    try:
        cap = getattr(pltpu.get_tpu_info(), "vmem_capacity_bytes", None)
    except Exception:
        cap = None
    if not cap:
        cap = 64 * 1024 * 1024
    return int(min(cap * 3 // 4, 100 * 1024 * 1024))


def emotion_cnn_forward(x, params, num_emotions=8):
    """x: NCHW float32 (B, 3, H, W). Returns (logits (B, num_emotions), va (B, 2))."""
    B, Cin, H, W = x.shape
    assert Cin == 3 and H % 4 == 0 and W % 4 == 0
    f32, bf16 = jnp.float32, jnp.bfloat16
    H2, W2 = H // 2, W // 2
    H3, W3 = H // 4, W // 4

    # conv1 im2col hoisted out of the kernel (pure layout plumbing): the
    # kernel receives bf16 (B*H*W, 27) patches, channels-per-tap in lanes.
    xn = jnp.transpose(x, (0, 2, 3, 1)).astype(f32)                 # (B,H,W,3)
    xp = jnp.pad(xn, ((0, 0), (1, 1), (1, 1), (0, 0)))
    p1 = jnp.concatenate(
        [xp[:, kh:kh + H, kw:kw + W, :] for kh in range(3) for kw in range(3)],
        axis=-1).reshape(B * H * W, 27).astype(bf16)

    w1 = params['w1'].reshape(27, 32).astype(bf16)                  # (9*Cin, Cout)
    w2 = params['w2'].astype(bf16)                                  # (9, 32, 64)
    w3 = params['w3'].astype(bf16)                                  # (9, 64, 128)
    wfc = params['wfc'].astype(bf16)
    # classifier + va_regressor packed into one head matmul / one store.
    wh = jnp.concatenate([params['wcls'], params['wva']], axis=1).astype(bf16)
    bh = jnp.concatenate([params['bcls'], params['bva']], axis=1)

    # conv biases b1/b2/b3 are intentionally NOT inputs (cancelled by BN).
    inputs = (p1, w1, params['g1'], params['be1'],
              w2, params['g2'], params['be2'],
              w3, params['g3'], params['be3'],
              wfc, params['bfc'], wh, bh)

    vmem = pl.BlockSpec(memory_space=pltpu.MemorySpace.VMEM)
    kernel = functools.partial(_emotion_cnn_kernel, B=B, H=H, W=W)
    out = pl.pallas_call(
        kernel,
        out_shape=jax.ShapeDtypeStruct((B, num_emotions + 2), f32),
        in_specs=[vmem] * len(inputs),
        out_specs=vmem,
        scratch_shapes=[
            pltpu.VMEM((B, (H2 + 2) * W2 + 2, 32), bf16),   # conv2 haloed input
            pltpu.VMEM((B, (H3 + 2) * W3 + 2, 64), bf16),   # conv3 haloed input
            pltpu.VMEM((B * H2, 2, W, 32), jnp.float32),    # pool1 row scratch
            pltpu.VMEM((B * H2 * W, 32), jnp.float32),      # pool1 col scratch
            pltpu.VMEM((B * H3, 2, W2, 64), jnp.float32),   # pool2 row scratch
            pltpu.VMEM((B * H3 * W2, 64), jnp.float32),     # pool2 col scratch
        ],
        compiler_params=pltpu.CompilerParams(
            vmem_limit_bytes=_vmem_limit_bytes()),
    )(*inputs)
    return out[:, :num_emotions], out[:, num_emotions:]


# ----------------------------------------------------------------------------
# Pure-JAX reference (keeps conv biases; mirrors bf16 matmul operands)
# ----------------------------------------------------------------------------
def reference_forward(x, params):
    f32, bf16 = jnp.float32, jnp.bfloat16

    def conv_bn_relu(h, wcol, b, g, be):
        Bh, Hh, Wh, _ = h.shape
        xp = jnp.pad(h, ((0, 0), (1, 1), (1, 1), (0, 0)))
        patches = jnp.concatenate(
            [xp[:, kh:kh + Hh, kw:kw + Wh, :] for kh in range(3) for kw in range(3)],
            axis=-1)
        y = jnp.einsum('bhwk,kc->bhwc', patches.astype(bf16), wcol.astype(bf16),
                       preferred_element_type=f32) + b.reshape(1, 1, 1, -1)
        mu = jnp.mean(y, axis=(0, 1, 2), keepdims=True)
        var = jnp.mean(y * y, axis=(0, 1, 2), keepdims=True) - mu * mu
        yh = (y - mu) * jax.lax.rsqrt(var + 1e-5)
        return jnp.maximum(yh * g.reshape(1, 1, 1, -1) + be.reshape(1, 1, 1, -1), 0.0)

    def maxpool2(h):
        Bh, Hh, Wh, C = h.shape
        return jnp.max(h.reshape(Bh, Hh // 2, 2, Wh // 2, 2, C), axis=(2, 4))

    xn = jnp.transpose(x, (0, 2, 3, 1)).astype(f32)
    h1 = conv_bn_relu(xn, params['w1'].reshape(27, 32),
                      params['b1'], params['g1'], params['be1'])
    p1 = maxpool2(h1)
    h2 = conv_bn_relu(p1, params['w2'].reshape(288, 64),
                      params['b2'], params['g2'], params['be2'])
    p2 = maxpool2(h2)
    h3 = conv_bn_relu(p2, params['w3'].reshape(576, 128),
                      params['b3'], params['g3'], params['be3'])
    gap = jnp.mean(h3, axis=(1, 2))
    feats = jnp.dot(gap.astype(bf16), params['wfc'].astype(bf16),
                    preferred_element_type=f32) + params['bfc']
    logits = jnp.dot(feats.astype(bf16), params['wcls'].astype(bf16),
                     preferred_element_type=f32) + params['bcls']
    va = jnp.dot(feats.astype(bf16), params['wva'].astype(bf16),
                 preferred_element_type=f32) + params['bva']
    return logits, va


if __name__ == "__main__":
    key = jax.random.PRNGKey(0)
    kx, kp = jax.random.split(key)
    # PyTorch-style NCHW input: batch=2, channels=3 (required by conv1), 16x16.
    x = jax.random.normal(kx, (2, 3, 16, 16), jnp.float32)
    params = init_params(kp)

    logits, va = jax.block_until_ready(emotion_cnn_forward(x, params))
    assert logits.shape == (2, 8) and va.shape == (2, 2)
    assert bool(jnp.all(jnp.isfinite(logits))) and bool(jnp.all(jnp.isfinite(va)))

    ref_logits, ref_va = reference_forward(x, params)
    np.testing.assert_allclose(np.asarray(logits), np.asarray(ref_logits),
                               rtol=1e-2, atol=1e-2)
    np.testing.assert_allclose(np.asarray(va), np.asarray(ref_va),
                               rtol=1e-2, atol=1e-2)
    print("KERNEL_OK")
</pallas_src>

<mosaic_0001>
module attributes {stable_mosaic.version = 11 : i64} {
  func.func @_emotion_cnn_kernel(%arg0: memref<512x27xbf16, #tpu.memory_space<vmem>>, %arg1: memref<27x32xbf16, #tpu.memory_space<vmem>>, %arg2: memref<1x32xf32, #tpu.memory_space<vmem>>, %arg3: memref<1x32xf32, #tpu.memory_space<vmem>>, %arg4: memref<9x32x64xbf16, #tpu.memory_space<vmem>>, %arg5: memref<1x64xf32, #tpu.memory_space<vmem>>, %arg6: memref<1x64xf32, #tpu.memory_space<vmem>>, %arg7: memref<9x64x128xbf16, #tpu.memory_space<vmem>>, %arg8: memref<1x128xf32, #tpu.memory_space<vmem>>, %arg9: memref<1x128xf32, #tpu.memory_space<vmem>>, %arg10: memref<128x256xbf16, #tpu.memory_space<vmem>>, %arg11: memref<1x256xf32, #tpu.memory_space<vmem>>, %arg12: memref<256x10xbf16, #tpu.memory_space<vmem>>, %arg13: memref<1x10xf32, #tpu.memory_space<vmem>>, %arg14: memref<2x10xf32, #tpu.memory_space<vmem>>, %arg15: memref<2x82x32xbf16, #tpu.memory_space<vmem>>, %arg16: memref<2x26x64xbf16, #tpu.memory_space<vmem>>, %arg17: memref<16x2x16x32xf32, #tpu.memory_space<vmem>>, %arg18: memref<256x32xf32, #tpu.memory_space<vmem>>, %arg19: memref<8x2x8x64xf32, #tpu.memory_space<vmem>>, %arg20: memref<64x64xf32, #tpu.memory_space<vmem>>) attributes {dimension_semantics = [], scalar_prefetch = 0 : i64, scratch_operands = 6 : i64, tpu.core_type = #tpu.core_type<tc>} {
    %cst = arith.constant 0.000000e+00 : bf16
    %0 = vector.broadcast %cst : bf16 to vector<2x82x32xbf16>
    %c0 = arith.constant 0 : index
    %c0_0 = arith.constant 0 : index
    %c0_1 = arith.constant 0 : index
    %1 = vector.load %arg15[%c0, %c0_0, %c0_1] : memref<2x82x32xbf16, #tpu.memory_space<vmem>>, vector<2x82x32xbf16>
    tpu.vector_store %arg15[%c0, %c0_0, %c0_1], %0 {strides = array<i32>} : memref<2x82x32xbf16, #tpu.memory_space<vmem>>, vector<2x82x32xbf16>,
    %cst_2 = arith.constant 0.000000e+00 : bf16
    %2 = vector.broadcast %cst_2 : bf16 to vector<2x26x64xbf16>
    %c0_3 = arith.constant 0 : index
    %c0_4 = arith.constant 0 : index
    %c0_5 = arith.constant 0 : index
    %3 = vector.load %arg16[%c0_3, %c0_4, %c0_5] : memref<2x26x64xbf16, #tpu.memory_space<vmem>>, vector<2x26x64xbf16>
    tpu.vector_store %arg16[%c0_3, %c0_4, %c0_5], %2 {strides = array<i32>} : memref<2x26x64xbf16, #tpu.memory_space<vmem>>, vector<2x26x64xbf16>,
    %c0_6 = arith.constant 0 : index
    %c0_7 = arith.constant 0 : index
    %4 = vector.load %arg0[%c0_6, %c0_7] : memref<512x27xbf16, #tpu.memory_space<vmem>>, vector<512x27xbf16>
    %c0_8 = arith.constant 0 : index
    %c0_9 = arith.constant 0 : index
    %5 = vector.load %arg1[%c0_8, %c0_9] : memref<27x32xbf16, #tpu.memory_space<vmem>>, vector<27x32xbf16>
    %cst_10 = arith.constant dense<0.000000e+00> : vector<512x32xf32>
    %6 = tpu.matmul %4, %5, %cst_10 {dimension_numbers = #tpu.dot_dimension_numbers<[1], [0], [0], [1], [0, 0, 1, 1], [], []>} : vector<512x27xbf16>, vector<27x32xbf16>, vector<512x32xf32> -> vector<512x32xf32>
    %cst_11 = arith.constant 1.000000e+00 : f32
    %7 = vector.broadcast %cst_11 : f32 to vector<1x512xf32>
    %cst_12 = arith.constant dense<0.000000e+00> : vector<1x32xf32>
    %8 = tpu.matmul %7, %6, %cst_12 {dimension_numbers = #tpu.dot_dimension_numbers<[1], [0], [0], [1], [0, 0, 1, 1], [], []>} : vector<1x512xf32>, vector<512x32xf32>, vector<1x32xf32> -> vector<1x32xf32>
    %9 = arith.mulf %6, %6 : vector<512x32xf32>
    %cst_13 = arith.constant dense<0.000000e+00> : vector<1x32xf32>
    %10 = tpu.matmul %7, %9, %cst_13 {dimension_numbers = #tpu.dot_dimension_numbers<[1], [0], [0], [1], [0, 0, 1, 1], [], []>} : vector<1x512xf32>, vector<512x32xf32>, vector<1x32xf32> -> vector<1x32xf32>
    %cst_14 = arith.constant 0.001953125 : f32
    %11 = vector.broadcast %cst_14 : f32 to vector<1x32xf32>
    %12 = arith.mulf %8, %11 : vector<1x32xf32>
    %cst_15 = arith.constant 0.001953125 : f32
    %13 = vector.broadcast %cst_15 : f32 to vector<1x32xf32>
    %14 = arith.mulf %10, %13 : vector<1x32xf32>
    %15 = arith.mulf %12, %12 : vector<1x32xf32>
    %16 = arith.subf %14, %15 : vector<1x32xf32>
    %17 = vector.broadcast %12 : vector<1x32xf32> to vector<512x32xf32>
    %18 = arith.subf %6, %17 : vector<512x32xf32>
    %cst_16 = arith.constant 9.99999974E-6 : f32
    %19 = vector.broadcast %cst_16 : f32 to vector<1x32xf32>
    %20 = arith.addf %16, %19 : vector<1x32xf32>
    %21 = math.rsqrt %20 : vector<1x32xf32>
    %22 = vector.broadcast %21 : vector<1x32xf32> to vector<512x32xf32>
    %23 = arith.mulf %18, %22 : vector<512x32xf32>
    %c0_17 = arith.constant 0 : index
    %c0_18 = arith.constant 0 : index
    %24 = vector.load %arg2[%c0_17, %c0_18] : memref<1x32xf32, #tpu.memory_space<vmem>>, vector<1x32xf32>
    %25 = vector.broadcast %24 : vector<1x32xf32> to vector<512x32xf32>
    %26 = arith.mulf %23, %25 : vector<512x32xf32>
    %c0_19 = arith.constant 0 : index
    %c0_20 = arith.constant 0 : index
    %27 = vector.load %arg3[%c0_19, %c0_20] : memref<1x32xf32, #tpu.memory_space<vmem>>, vector<1x32xf32>
    %28 = vector.broadcast %27 : vector<1x32xf32> to vector<512x32xf32>
    %29 = arith.addf %26, %28 : vector<512x32xf32>
    %cst_21 = arith.constant 0.000000e+00 : f32
    %30 = vector.broadcast %cst_21 : f32 to vector<512x32xf32>
    %31 = arith.maximumf %29, %30 : vector<512x32xf32>
    %32 = vector.shape_cast %31 : vector<512x32xf32> to vector<16x2x16x32xf32>
    %c0_22 = arith.constant 0 : index
    %c0_23 = arith.constant 0 : index
    %c0_24 = arith.constant 0 : index
    %c0_25 = arith.constant 0 : index
    %33 = vector.load %arg17[%c0_22, %c0_23, %c0_24, %c0_25] : memref<16x2x16x32xf32, #tpu.memory_space<vmem>>, vector<16x2x16x32xf32>
    tpu.vector_store %arg17[%c0_22, %c0_23, %c0_24, %c0_25], %32 {strides = array<i32>} : memref<16x2x16x32xf32, #tpu.memory_space<vmem>>, vector<16x2x16x32xf32>,
    %c0_26 = arith.constant 0 : index
    %c0_27 = arith.constant 0 : index
    %c0_28 = arith.constant 0 : index
    %c0_29 = arith.constant 0 : index
    %34 = vector.load %arg17[%c0_26, %c0_27, %c0_28, %c0_29] : memref<16x2x16x32xf32, #tpu.memory_space<vmem>>, vector<16x1x16x32xf32>
    %35 = vector.shape_cast %34 : vector<16x1x16x32xf32> to vector<16x16x32xf32>
    %c0_30 = arith.constant 0 : index
    %c1 = arith.constant 1 : index
    %c0_31 = arith.constant 0 : index
    %c0_32 = arith.constant 0 : index
    %36 = vector.load %arg17[%c0_30, %c1, %c0_31, %c0_32] : memref<16x2x16x32xf32, #tpu.memory_space<vmem>>, vector<16x1x16x32xf32>
    %37 = vector.shape_cast %36 : vector<16x1x16x32xf32> to vector<16x16x32xf32>
    %38 = arith.maximumf %35, %37 : vector<16x16x32xf32>
    %39 = vector.shape_cast %38 : vector<16x16x32xf32> to vector<256x32xf32>
    %c0_33 = arith.constant 0 : index
    %c0_34 = arith.constant 0 : index
    %40 = vector.load %arg18[%c0_33, %c0_34] : memref<256x32xf32, #tpu.memory_space<vmem>>, vector<256x32xf32>
    tpu.vector_store %arg18[%c0_33, %c0_34], %39 {strides = array<i32>} : memref<256x32xf32, #tpu.memory_space<vmem>>, vector<256x32xf32>,
    %c0_35 = arith.constant 0 : index
    %c0_36 = arith.constant 0 : index
    %41 = tpu.strided_load %arg18[%c0_35, %c0_36] {strides = array<i32: 2, 1>} : memref<256x32xf32, #tpu.memory_space<vmem>>, vector<128x32xf32>
    %c1_37 = arith.constant 1 : index
    %c0_38 = arith.constant 0 : index
    %42 = tpu.strided_load %arg18[%c1_37, %c0_38] {strides = array<i32: 2, 1>} : memref<256x32xf32, #tpu.memory_space<vmem>>, vector<128x32xf32>
    %43 = arith.maximumf %41, %42 : vector<128x32xf32>
    %44 = vector.shape_cast %43 : vector<128x32xf32> to vector<2x64x32xf32>
    %45 = arith.truncf %44 : vector<2x64x32xf32> to vector<2x64x32xbf16>
    %c0_39 = arith.constant 0 : index
    %c9 = arith.constant 9 : index
    %c0_40 = arith.constant 0 : index
    %46 = vector.load %arg15[%c0_39, %c9, %c0_40] : memref<2x82x32xbf16, #tpu.memory_space<vmem>>, vector<2x64x32xbf16>
    tpu.vector_store %arg15[%c0_39, %c9, %c0_40], %45 {strides = array<i32>} : memref<2x82x32xbf16, #tpu.memory_space<vmem>>, vector<2x64x32xbf16>,
    %47 = tpu.iota {dimensions = array<i32: 0>} : vector<128x1xi32>
    %c8_i32 = arith.constant 8 : i32
    %c0_i32 = arith.constant 0 : i32
    %48 = arith.cmpi eq, %c8_i32, %c0_i32 : i32
    %c1_i32 = arith.constant 1 : i32
    %49 = arith.select %48, %c1_i32, %c8_i32 : i32
    %50 = vector.broadcast %49 : i32 to vector<128x1xi32>
    %51 = arith.remsi %47, %50 : vector<128x1xi32>
    %c0_i32_41 = arith.constant 0 : i32
    %52 = vector.broadcast %c0_i32_41 : i32 to vector<128x1xi32>
    %53 = arith.cmpi ne, %51, %52 : vector<128x1xi32>
    %c0_i32_42 = arith.constant 0 : i32
    %54 = vector.broadcast %c0_i32_42 : i32 to vector<128x1xi32>
    %55 = arith.cmpi slt, %51, %54 : vector<128x1xi32>
    %c0_i32_43 = arith.constant 0 : i32
    %56 = arith.cmpi slt, %49, %c0_i32_43 : i32
    %57 = vector.broadcast %56 : i1 to vector<128x1xi1>
    %58 = vector.broadcast %57 : vector<128x1xi1> to vector<128x1xi1>
    %59 = arith.xori %55, %58 : vector<128x1xi1>
    %60 = arith.andi %59, %53 : vector<128x1xi1>
    %61 = vector.broadcast %49 : i32 to vector<128x1xi32>
    %62 = arith.addi %51, %61 : vector<128x1xi32>
    %63 = arith.select %60, %62, %51 : vector<128x1xi1>, vector<128x1xi32>
    %c1_i32_44 = arith.constant 1 : i32
    %64 = vector.broadcast %c1_i32_44 : i32 to vector<128x1xi32>
    %65 = arith.cmpi sge, %63, %64 : vector<128x1xi32>
    %66 = arith.extui %65 : vector<128x1xi1> to vector<128x1xi32>
    %67 = arith.sitofp %66 : vector<128x1xi32> to vector<128x1xf32>
    %c6_i32 = arith.constant 6 : i32
    %68 = vector.broadcast %c6_i32 : i32 to vector<128x1xi32>
    %69 = arith.cmpi sle, %63, %68 : vector<128x1xi32>
    %70 = arith.extui %69 : vector<128x1xi1> to vector<128x1xi32>
    %71 = arith.sitofp %70 : vector<128x1xi32> to vector<128x1xf32>
    %c0_45 = arith.constant 0 : index
    %c1_46 = arith.constant 1 : index
    %c0_47 = arith.constant 0 : index
    %72 = vector.load %arg15[%c0_45, %c1_46, %c0_47] : memref<2x82x32xbf16, #tpu.memory_space<vmem>>, vector<2x64x32xbf16>
    %73 = vector.shape_cast %72 : vector<2x64x32xbf16> to vector<128x32xbf16>
    %c1_48 = arith.constant 1 : index
    %c0_49 = arith.constant 0 : index
    %c0_50 = arith.constant 0 : index
    %74 = vector.load %arg4[%c1_48, %c0_49, %c0_50] : memref<9x32x64xbf16, #tpu.memory_space<vmem>>, vector<1x32x64xbf16>
    %75 = vector.shape_cast %74 : vector<1x32x64xbf16> to vector<32x64xbf16>
    %cst_51 = arith.constant dense<0.000000e+00> : vector<128x64xf32>
    %76 = tpu.matmul %73, %75, %cst_51 {dimension_numbers = #tpu.dot_dimension_numbers<[1], [0], [0], [1], [0, 0, 1, 1], [], []>} : vector<128x32xbf16>, vector<32x64xbf16>, vector<128x64xf32> -> vector<128x64xf32>
    %c0_52 = arith.constant 0 : index
    %c9_53 = arith.constant 9 : index
    %c0_54 = arith.constant 0 : index
    %77 = vector.load %arg15[%c0_52, %c9_53, %c0_54] : memref<2x82x32xbf16, #tpu.memory_space<vmem>>, vector<2x64x32xbf16>
    %78 = vector.shape_cast %77 : vector<2x64x32xbf16> to vector<128x32xbf16>
    %c4 = arith.constant 4 : index
    %c0_55 = arith.constant 0 : index
    %c0_56 = arith.constant 0 : index
    %79 = vector.load %arg4[%c4, %c0_55, %c0_56] : memref<9x32x64xbf16, #tpu.memory_space<vmem>>, vector<1x32x64xbf16>
    %80 = vector.shape_cast %79 : vector<1x32x64xbf16> to vector<32x64xbf16>
    %cst_57 = arith.constant dense<0.000000e+00> : vector<128x64xf32>
    %81 = tpu.matmul %78, %80, %cst_57 {dimension_numbers = #tpu.dot_dimension_numbers<[1], [0], [0], [1], [0, 0, 1, 1], [], []>} : vector<128x32xbf16>, vector<32x64xbf16>, vector<128x64xf32> -> vector<128x64xf32>
    %82 = arith.addf %76, %81 : vector<128x64xf32>
    %c0_58 = arith.constant 0 : index
    %c17 = arith.constant 17 : index
    %c0_59 = arith.constant 0 : index
    %83 = vector.load %arg15[%c0_58, %c17, %c0_59] : memref<2x82x32xbf16, #tpu.memory_space<vmem>>, vector<2x64x32xbf16>
    %84 = vector.shape_cast %83 : vector<2x64x32xbf16> to vector<128x32xbf16>
    %c7 = arith.constant 7 : index
    %c0_60 = arith.constant 0 : index
    %c0_61 = arith.constant 0 : index
    %85 = vector.load %arg4[%c7, %c0_60, %c0_61] : memref<9x32x64xbf16, #tpu.memory_space<vmem>>, vector<1x32x64xbf16>
    %86 = vector.shape_cast %85 : vector<1x32x64xbf16> to vector<32x64xbf16>
    %cst_62 = arith.constant dense<0.000000e+00> : vector<128x64xf32>
    %87 = tpu.matmul %84, %86, %cst_62 {dimension_numbers = #tpu.dot_dimension_numbers<[1], [0], [0], [1], [0, 0, 1, 1], [], []>} : vector<128x32xbf16>, vector<32x64xbf16>, vector<128x64xf32> -> vector<128x64xf32>
    %88 = arith.addf %82, %87 : vector<128x64xf32>
    %c0_63 = arith.constant 0 : index
    %c0_64 = arith.constant 0 : index
    %c0_65 = arith.constant 0 : index
    %89 = vector.load %arg15[%c0_63, %c0_64, %c0_65] : memref<2x82x32xbf16, #tpu.memory_space<vmem>>, vector<2x64x32xbf16>
    %90 = vector.shape_cast %89 : vector<2x64x32xbf16> to vector<128x32xbf16>
    %c0_66 = arith.constant 0 : index
    %c0_67 = arith.constant 0 : index
    %c0_68 = arith.constant 0 : index
    %91 = vector.load %arg4[%c0_66, %c0_67, %c0_68] : memref<9x32x64xbf16, #tpu.memory_space<vmem>>, vector<1x32x64xbf16>
    %92 = vector.shape_cast %91 : vector<1x32x64xbf16> to vector<32x64xbf16>
    %cst_69 = arith.constant dense<0.000000e+00> : vector<128x64xf32>
    %93 = tpu.matmul %90, %92, %cst_69 {dimension_numbers = #tpu.dot_dimension_numbers<[1], [0], [0], [1], [0, 0, 1, 1], [], []>} : vector<128x32xbf16>, vector<32x64xbf16>, vector<128x64xf32> -> vector<128x64xf32>
    %c0_70 = arith.constant 0 : index
    %c8 = arith.constant 8 : index
    %c0_71 = arith.constant 0 : index
    %94 = vector.load %arg15[%c0_70, %c8, %c0_71] : memref<2x82x32xbf16, #tpu.memory_space<vmem>>, vector<2x64x32xbf16>
    %95 = vector.shape_cast %94 : vector<2x64x32xbf16> to vector<128x32xbf16>
    %c3 = arith.constant 3 : index
    %c0_72 = arith.constant 0 : index
    %c0_73 = arith.constant 0 : index
    %96 = vector.load %arg4[%c3, %c0_72, %c0_73] : memref<9x32x64xbf16, #tpu.memory_space<vmem>>, vector<1x32x64xbf16>
    %97 = vector.shape_cast %96 : vector<1x32x64xbf16> to vector<32x64xbf16>
    %cst_74 = arith.constant dense<0.000000e+00> : vector<128x64xf32>
    %98 = tpu.matmul %95, %97, %cst_74 {dimension_numbers = #tpu.dot_dimension_numbers<[1], [0], [0], [1], [0, 0, 1, 1], [], []>} : vector<128x32xbf16>, vector<32x64xbf16>, vector<128x64xf32> -> vector<128x64xf32>
    %99 = arith.addf %93, %98 : vector<128x64xf32>
    %c0_75 = arith.constant 0 : index
    %c16 = arith.constant 16 : index
    %c0_76 = arith.constant 0 : index
    %100 = vector.load %arg15[%c0_75, %c16, %c0_76] : memref<2x82x32xbf16, #tpu.memory_space<vmem>>, vector<2x64x32xbf16>
    %101 = vector.shape_cast %100 : vector<2x64x32xbf16> to vector<128x32xbf16>
    %c6 = arith.constant 6 : index
    %c0_77 = arith.constant 0 : index
    %c0_78 = arith.constant 0 : index
    %102 = vector.load %arg4[%c6, %c0_77, %c0_78] : memref<9x32x64xbf16, #tpu.memory_space<vmem>>, vector<1x32x64xbf16>
    %103 = vector.shape_cast %102 : vector<1x32x64xbf16> to vector<32x64xbf16>
    %cst_79 = arith.constant dense<0.000000e+00> : vector<128x64xf32>
    %104 = tpu.matmul %101, %103, %cst_79 {dimension_numbers = #tpu.dot_dimension_numbers<[1], [0], [0], [1], [0, 0, 1, 1], [], []>} : vector<128x32xbf16>, vector<32x64xbf16>, vector<128x64xf32> -> vector<128x64xf32>
    %105 = arith.addf %99, %104 : vector<128x64xf32>
    %106 = vector.broadcast %67 : vector<128x1xf32> to vector<128x64xf32>
    %107 = arith.mulf %106, %105 : vector<128x64xf32>
    %108 = arith.addf %88, %107 : vector<128x64xf32>
    %c0_80 = arith.constant 0 : index
    %c2 = arith.constant 2 : index
    %c0_81 = arith.constant 0 : index
    %109 = vector.load %arg15[%c0_80, %c2, %c0_81] : memref<2x82x32xbf16, #tpu.memory_space<vmem>>, vector<2x64x32xbf16>
    %110 = vector.shape_cast %109 : vector<2x64x32xbf16> to vector<128x32xbf16>
    %c2_82 = arith.constant 2 : index
    %c0_83 = arith.constant 0 : index
    %c0_84 = arith.constant 0 : index
    %111 = vector.load %arg4[%c2_82, %c0_83, %c0_84] : memref<9x32x64xbf16, #tpu.memory_space<vmem>>, vector<1x32x64xbf16>
    %112 = vector.shape_cast %111 : vector<1x32x64xbf16> to vector<32x64xbf16>
    %cst_85 = arith.constant dense<0.000000e+00> : vector<128x64xf32>
    %113 = tpu.matmul %110, %112, %cst_85 {dimension_numbers = #tpu.dot_dimension_numbers<[1], [0], [0], [1], [0, 0, 1, 1], [], []>} : vector<128x32xbf16>, vector<32x64xbf16>, vector<128x64xf32> -> vector<128x64xf32>
    %c0_86 = arith.constant 0 : index
    %c10 = arith.constant 10 : index
    %c0_87 = arith.constant 0 : index
    %114 = vector.load %arg15[%c0_86, %c10, %c0_87] : memref<2x82x32xbf16, #tpu.memory_space<vmem>>, vector<2x64x32xbf16>
    %115 = vector.shape_cast %114 : vector<2x64x32xbf16> to vector<128x32xbf16>
    %c5 = arith.constant 5 : index
    %c0_88 = arith.constant 0 : index
    %c0_89 = arith.constant 0 : index
    %116 = vector.load %arg4[%c5, %c0_88, %c0_89] : memref<9x32x64xbf16, #tpu.memory_space<vmem>>, vector<1x32x64xbf16>
    %117 = vector.shape_cast %116 : vector<1x32x64xbf16> to vector<32x64xbf16>
    %cst_90 = arith.constant dense<0.000000e+00> : vector<128x64xf32>
    %118 = tpu.matmul %115, %117, %cst_90 {dimension_numbers = #tpu.dot_dimension_numbers<[1], [0], [0], [1], [0, 0, 1, 1], [], []>} : vector<128x32xbf16>, vector<32x64xbf16>, vector<128x64xf32> -> vector<128x64xf32>
    %119 = arith.addf %113, %118 : vector<128x64xf32>
    %c0_91 = arith.constant 0 : index
    %c18 = arith.constant 18 : index
    %c0_92 = arith.constant 0 : index
    %120 = vector.load %arg15[%c0_91, %c18, %c0_92] : memref<2x82x32xbf16, #tpu.memory_space<vmem>>, vector<2x64x32xbf16>
    %121 = vector.shape_cast %120 : vector<2x64x32xbf16> to vector<128x32xbf16>
    %c8_93 = arith.constant 8 : index
    %c0_94 = arith.constant 0 : index
    %c0_95 = arith.constant 0 : index
    %122 = vector.load %arg4[%c8_93, %c0_94, %c0_95] : memref<9x32x64xbf16, #tpu.memory_space<vmem>>, vector<1x32x64xbf16>
    %123 = vector.shape_cast %122 : vector<1x32x64xbf16> to vector<32x64xbf16>
    %cst_96 = arith.constant dense<0.000000e+00> : vector<128x64xf32>
    %124 = tpu.matmul %121, %123, %cst_96 {dimension_numbers = #tpu.dot_dimension_numbers<[1], [0], [0], [1], [0, 0, 1, 1], [], []>} : vector<128x32xbf16>, vector<32x64xbf16>, vector<128x64xf32> -> vector<128x64xf32>
    %125 = arith.addf %119, %124 : vector<128x64xf32>
    %126 = vector.broadcast %71 : vector<128x1xf32> to vector<128x64xf32>
    %127 = arith.mulf %126, %125 : vector<128x64xf32>
    %128 = arith.addf %108, %127 : vector<128x64xf32>
    %cst_97 = arith.constant 1.000000e+00 : f32
    %129 = vector.broadcast %cst_97 : f32 to vector<1x128xf32>
    %cst_98 = arith.constant dense<0.000000e+00> : vector<1x64xf32>
    %130 = tpu.matmul %129, %128, %cst_98 {dimension_numbers = #tpu.dot_dimension_numbers<[1], [0], [0], [1], [0, 0, 1, 1], [], []>} : vector<1x128xf32>, vector<128x64xf32>, vector<1x64xf32> -> vector<1x64xf32>
    %131 = arith.mulf %128, %128 : vector<128x64xf32>
    %cst_99 = arith.constant dense<0.000000e+00> : vector<1x64xf32>
    %132 = tpu.matmul %129, %131, %cst_99 {dimension_numbers = #tpu.dot_dimension_numbers<[1], [0], [0], [1], [0, 0, 1, 1], [], []>} : vector<1x128xf32>, vector<128x64xf32>, vector<1x64xf32> -> vector<1x64xf32>
    %cst_100 = arith.constant 7.812500e-03 : f32
    %133 = vector.broadcast %cst_100 : f32 to vector<1x64xf32>
    %134 = arith.mulf %130, %133 : vector<1x64xf32>
    %cst_101 = arith.constant 7.812500e-03 : f32
    %135 = vector.broadcast %cst_101 : f32 to vector<1x64xf32>
    %136 = arith.mulf %132, %135 : vector<1x64xf32>
    %137 = arith.mulf %134, %134 : vector<1x64xf32>
    %138 = arith.subf %136, %137 : vector<1x64xf32>
    %139 = vector.broadcast %134 : vector<1x64xf32> to vector<128x64xf32>
    %140 = arith.subf %128, %139 : vector<128x64xf32>
    %cst_102 = arith.constant 9.99999974E-6 : f32
    %141 = vector.broadcast %cst_102 : f32 to vector<1x64xf32>
    %142 = arith.addf %138, %141 : vector<1x64xf32>
    %143 = math.rsqrt %142 : vector<1x64xf32>
    %144 = vector.broadcast %143 : vector<1x64xf32> to vector<128x64xf32>
    %145 = arith.mulf %140, %144 : vector<128x64xf32>
    %c0_103 = arith.constant 0 : index
    %c0_104 = arith.constant 0 : index
    %146 = vector.load %arg5[%c0_103, %c0_104] : memref<1x64xf32, #tpu.memory_space<vmem>>, vector<1x64xf32>
    %147 = vector.broadcast %146 : vector<1x64xf32> to vector<128x64xf32>
    %148 = arith.mulf %145, %147 : vector<128x64xf32>
    %c0_105 = arith.constant 0 : index
    %c0_106 = arith.constant 0 : index
    %149 = vector.load %arg6[%c0_105, %c0_106] : memref<1x64xf32, #tpu.memory_space<vmem>>, vector<1x64xf32>
    %150 = vector.broadcast %149 : vector<1x64xf32> to vector<128x64xf32>
    %151 = arith.addf %148, %150 : vector<128x64xf32>
    %cst_107 = arith.constant 0.000000e+00 : f32
    %152 = vector.broadcast %cst_107 : f32 to vector<128x64xf32>
    %153 = arith.maximumf %151, %152 : vector<128x64xf32>
    %154 = vector.shape_cast %153 : vector<128x64xf32> to vector<8x2x8x64xf32>
    %c0_108 = arith.constant 0 : index
    %c0_109 = arith.constant 0 : index
    %c0_110 = arith.constant 0 : index
    %c0_111 = arith.constant 0 : index
    %155 = vector.load %arg19[%c0_108, %c0_109, %c0_110, %c0_111] : memref<8x2x8x64xf32, #tpu.memory_space<vmem>>, vector<8x2x8x64xf32>
    tpu.vector_store %arg19[%c0_108, %c0_109, %c0_110, %c0_111], %154 {strides = array<i32>} : memref<8x2x8x64xf32, #tpu.memory_space<vmem>>, vector<8x2x8x64xf32>,
    %c0_112 = arith.constant 0 : index
    %c0_113 = arith.constant 0 : index
    %c0_114 = arith.constant 0 : index
    %c0_115 = arith.constant 0 : index
    %156 = vector.load %arg19[%c0_112, %c0_113, %c0_114, %c0_115] : memref<8x2x8x64xf32, #tpu.memory_space<vmem>>, vector<8x1x8x64xf32>
    %157 = vector.shape_cast %156 : vector<8x1x8x64xf32> to vector<8x8x64xf32>
    %c0_116 = arith.constant 0 : index
    %c1_117 = arith.constant 1 : index
    %c0_118 = arith.constant 0 : index
    %c0_119 = arith.constant 0 : index
    %158 = vector.load %arg19[%c0_116, %c1_117, %c0_118, %c0_119] : memref<8x2x8x64xf32, #tpu.memory_space<vmem>>, vector<8x1x8x64xf32>
    %159 = vector.shape_cast %158 : vector<8x1x8x64xf32> to vector<8x8x64xf32>
    %160 = arith.maximumf %157, %159 : vector<8x8x64xf32>
    %161 = vector.shape_cast %160 : vector<8x8x64xf32> to vector<64x64xf32>
    %c0_120 = arith.constant 0 : index
    %c0_121 = arith.constant 0 : index
    %162 = vector.load %arg20[%c0_120, %c0_121] : memref<64x64xf32, #tpu.memory_space<vmem>>, vector<64x64xf32>
    tpu.vector_store %arg20[%c0_120, %c0_121], %161 {strides = array<i32>} : memref<64x64xf32, #tpu.memory_space<vmem>>, vector<64x64xf32>,
    %c0_122 = arith.constant 0 : index
    %c0_123 = arith.constant 0 : index
    %163 = tpu.strided_load %arg20[%c0_122, %c0_123] {strides = array<i32: 2, 1>} : memref<64x64xf32, #tpu.memory_space<vmem>>, vector<32x64xf32>
    %c1_124 = arith.constant 1 : index
    %c0_125 = arith.constant 0 : index
    %164 = tpu.strided_load %arg20[%c1_124, %c0_125] {strides = array<i32: 2, 1>} : memref<64x64xf32, #tpu.memory_space<vmem>>, vector<32x64xf32>
    %165 = arith.maximumf %163, %164 : vector<32x64xf32>
    %166 = vector.shape_cast %165 : vector<32x64xf32> to vector<2x16x64xf32>
    %167 = arith.truncf %166 : vector<2x16x64xf32> to vector<2x16x64xbf16>
    %c0_126 = arith.constant 0 : index
    %c5_127 = arith.constant 5 : index
    %c0_128 = arith.constant 0 : index
    %168 = vector.load %arg16[%c0_126, %c5_127, %c0_128] : memref<2x26x64xbf16, #tpu.memory_space<vmem>>, vector<2x16x64xbf16>
    tpu.vector_store %arg16[%c0_126, %c5_127, %c0_128], %167 {strides = array<i32>} : memref<2x26x64xbf16, #tpu.memory_space<vmem>>, vector<2x16x64xbf16>,
    %169 = tpu.iota {dimensions = array<i32: 0>} : vector<32x1xi32>
    %c4_i32 = arith.constant 4 : i32
    %c0_i32_129 = arith.constant 0 : i32
    %170 = arith.cmpi eq, %c4_i32, %c0_i32_129 : i32
    %c1_i32_130 = arith.constant 1 : i32
    %171 = arith.select %170, %c1_i32_130, %c4_i32 : i32
    %172 = vector.broadcast %171 : i32 to vector<32x1xi32>
    %173 = arith.remsi %169, %172 : vector<32x1xi32>
    %c0_i32_131 = arith.constant 0 : i32
    %174 = vector.broadcast %c0_i32_131 : i32 to vector<32x1xi32>
    %175 = arith.cmpi ne, %173, %174 : vector<32x1xi32>
    %c0_i32_132 = arith.constant 0 : i32
    %176 = vector.broadcast %c0_i32_132 : i32 to vector<32x1xi32>
    %177 = arith.cmpi slt, %173, %176 : vector<32x1xi32>
    %c0_i32_133 = arith.constant 0 : i32
    %178 = arith.cmpi slt, %171, %c0_i32_133 : i32
    %179 = vector.broadcast %178 : i1 to vector<32x1xi1>
    %180 = vector.broadcast %179 : vector<32x1xi1> to vector<32x1xi1>
    %181 = arith.xori %177, %180 : vector<32x1xi1>
    %182 = arith.andi %181, %175 : vector<32x1xi1>
    %183 = vector.broadcast %171 : i32 to vector<32x1xi32>
    %184 = arith.addi %173, %183 : vector<32x1xi32>
    %185 = arith.select %182, %184, %173 : vector<32x1xi1>, vector<32x1xi32>
    %c1_i32_134 = arith.constant 1 : i32
    %186 = vector.broadcast %c1_i32_134 : i32 to vector<32x1xi32>
    %187 = arith.cmpi sge, %185, %186 : vector<32x1xi32>
    %188 = arith.extui %187 : vector<32x1xi1> to vector<32x1xi32>
    %189 = arith.sitofp %188 : vector<32x1xi32> to vector<32x1xf32>
    %c2_i32 = arith.constant 2 : i32
    %190 = vector.broadcast %c2_i32 : i32 to vector<32x1xi32>
    %191 = arith.cmpi sle, %185, %190 : vector<32x1xi32>
    %192 = arith.extui %191 : vector<32x1xi1> to vector<32x1xi32>
    %193 = arith.sitofp %192 : vector<32x1xi32> to vector<32x1xf32>
    %c0_135 = arith.constant 0 : index
    %c1_136 = arith.constant 1 : index
    %c0_137 = arith.constant 0 : index
    %194 = vector.load %arg16[%c0_135, %c1_136, %c0_137] : memref<2x26x64xbf16, #tpu.memory_space<vmem>>, vector<2x16x64xbf16>
    %195 = vector.shape_cast %194 : vector<2x16x64xbf16> to vector<32x64xbf16>
    %c1_138 = arith.constant 1 : index
    %c0_139 = arith.constant 0 : index
    %c0_140 = arith.constant 0 : index
    %196 = vector.load %arg7[%c1_138, %c0_139, %c0_140] : memref<9x64x128xbf16, #tpu.memory_space<vmem>>, vector<1x64x128xbf16>
    %197 = vector.shape_cast %196 : vector<1x64x128xbf16> to vector<64x128xbf16>
    %cst_141 = arith.constant dense<0.000000e+00> : vector<32x128xf32>
    %198 = tpu.matmul %195, %197, %cst_141 {dimension_numbers = #tpu.dot_dimension_numbers<[1], [0], [0], [1], [0, 0, 1, 1], [], []>} : vector<32x64xbf16>, vector<64x128xbf16>, vector<32x128xf32> -> vector<32x128xf32>
    %c0_142 = arith.constant 0 : index
    %c5_143 = arith.constant 5 : index
    %c0_144 = arith.constant 0 : index
    %199 = vector.load %arg16[%c0_142, %c5_143, %c0_144] : memref<2x26x64xbf16, #tpu.memory_space<vmem>>, vector<2x16x64xbf16>
    %200 = vector.shape_cast %199 : vector<2x16x64xbf16> to vector<32x64xbf16>
    %c4_145 = arith.constant 4 : index
    %c0_146 = arith.constant 0 : index
    %c0_147 = arith.constant 0 : index
    %201 = vector.load %arg7[%c4_145, %c0_146, %c0_147] : memref<9x64x128xbf16, #tpu.memory_space<vmem>>, vector<1x64x128xbf16>
    %202 = vector.shape_cast %201 : vector<1x64x128xbf16> to vector<64x128xbf16>
    %cst_148 = arith.constant dense<0.000000e+00> : vector<32x128xf32>
    %203 = tpu.matmul %200, %202, %cst_148 {dimension_numbers = #tpu.dot_dimension_numbers<[1], [0], [0], [1], [0, 0, 1, 1], [], []>} : vector<32x64xbf16>, vector<64x128xbf16>, vector<32x128xf32> -> vector<32x128xf32>
    %204 = arith.addf %198, %203 : vector<32x128xf32>
    %c0_149 = arith.constant 0 : index
    %c9_150 = arith.constant 9 : index
    %c0_151 = arith.constant 0 : index
    %205 = vector.load %arg16[%c0_149, %c9_150, %c0_151] : memref<2x26x64xbf16, #tpu.memory_space<vmem>>, vector<2x16x64xbf16>
    %206 = vector.shape_cast %205 : vector<2x16x64xbf16> to vector<32x64xbf16>
    %c7_152 = arith.constant 7 : index
    %c0_153 = arith.constant 0 : index
    %c0_154 = arith.constant 0 : index
    %207 = vector.load %arg7[%c7_152, %c0_153, %c0_154] : memref<9x64x128xbf16, #tpu.memory_space<vmem>>, vector<1x64x128xbf16>
    %208 = vector.shape_cast %207 : vector<1x64x128xbf16> to vector<64x128xbf16>
    %cst_155 = arith.constant dense<0.000000e+00> : vector<32x128xf32>
    %209 = tpu.matmul %206, %208, %cst_155 {dimension_numbers = #tpu.dot_dimension_numbers<[1], [0], [0], [1], [0, 0, 1, 1], [], []>} : vector<32x64xbf16>, vector<64x128xbf16>, vector<32x128xf32> -> vector<32x128xf32>
    %210 = arith.addf %204, %209 : vector<32x128xf32>
    %c0_156 = arith.constant 0 : index
    %c0_157 = arith.constant 0 : index
    %c0_158 = arith.constant 0 : index
    %211 = vector.load %arg16[%c0_156, %c0_157, %c0_158] : memref<2x26x64xbf16, #tpu.memory_space<vmem>>, vector<2x16x64xbf16>
    %212 = vector.shape_cast %211 : vector<2x16x64xbf16> to vector<32x64xbf16>
    %c0_159 = arith.constant 0 : index
    %c0_160 = arith.constant 0 : index
    %c0_161 = arith.constant 0 : index
    %213 = vector.load %arg7[%c0_159, %c0_160, %c0_161] : memref<9x64x128xbf16, #tpu.memory_space<vmem>>, vector<1x64x128xbf16>
    %214 = vector.shape_cast %213 : vector<1x64x128xbf16> to vector<64x128xbf16>
    %cst_162 = arith.constant dense<0.000000e+00> : vector<32x128xf32>
    %215 = tpu.matmul %212, %214, %cst_162 {dimension_numbers = #tpu.dot_dimension_numbers<[1], [0], [0], [1], [0, 0, 1, 1], [], []>} : vector<32x64xbf16>, vector<64x128xbf16>, vector<32x128xf32> -> vector<32x128xf32>
    %c0_163 = arith.constant 0 : index
    %c4_164 = arith.constant 4 : index
    %c0_165 = arith.constant 0 : index
    %216 = vector.load %arg16[%c0_163, %c4_164, %c0_165] : memref<2x26x64xbf16, #tpu.memory_space<vmem>>, vector<2x16x64xbf16>
    %217 = vector.shape_cast %216 : vector<2x16x64xbf16> to vector<32x64xbf16>
    %c3_166 = arith.constant 3 : index
    %c0_167 = arith.constant 0 : index
    %c0_168 = arith.constant 0 : index
    %218 = vector.load %arg7[%c3_166, %c0_167, %c0_168] : memref<9x64x128xbf16, #tpu.memory_space<vmem>>, vector<1x64x128xbf16>
    %219 = vector.shape_cast %218 : vector<1x64x128xbf16> to vector<64x128xbf16>
    %cst_169 = arith.constant dense<0.000000e+00> : vector<32x128xf32>
    %220 = tpu.matmul %217, %219, %cst_169 {dimension_numbers = #tpu.dot_dimension_numbers<[1], [0], [0], [1], [0, 0, 1, 1], [], []>} : vector<32x64xbf16>, vector<64x128xbf16>, vector<32x128xf32> -> vector<32x128xf32>
    %221 = arith.addf %215, %220 : vector<32x128xf32>
    %c0_170 = arith.constant 0 : index
    %c8_171 = arith.constant 8 : index
    %c0_172 = arith.constant 0 : index
    %222 = vector.load %arg16[%c0_170, %c8_171, %c0_172] : memref<2x26x64xbf16, #tpu.memory_space<vmem>>, vector<2x16x64xbf16>
    %223 = vector.shape_cast %222 : vector<2x16x64xbf16> to vector<32x64xbf16>
    %c6_173 = arith.constant 6 : index
    %c0_174 = arith.constant 0 : index
    %c0_175 = arith.constant 0 : index
    %224 = vector.load %arg7[%c6_173, %c0_174, %c0_175] : memref<9x64x128xbf16, #tpu.memory_space<vmem>>, vector<1x64x128xbf16>
    %225 = vector.shape_cast %224 : vector<1x64x128xbf16> to vector<64x128xbf16>
    %cst_176 = arith.constant dense<0.000000e+00> : vector<32x128xf32>
    %226 = tpu.matmul %223, %225, %cst_176 {dimension_numbers = #tpu.dot_dimension_numbers<[1], [0], [0], [1], [0, 0, 1, 1], [], []>} : vector<32x64xbf16>, vector<64x128xbf16>, vector<32x128xf32> -> vector<32x128xf32>
    %227 = arith.addf %221, %226 : vector<32x128xf32>
    %228 = vector.broadcast %189 : vector<32x1xf32> to vector<32x128xf32>
    %229 = arith.mulf %228, %227 : vector<32x128xf32>
    %230 = arith.addf %210, %229 : vector<32x128xf32>
    %c0_177 = arith.constant 0 : index
    %c2_178 = arith.constant 2 : index
    %c0_179 = arith.constant 0 : index
    %231 = vector.load %arg16[%c0_177, %c2_178, %c0_179] : memref<2x26x64xbf16, #tpu.memory_space<vmem>>, vector<2x16x64xbf16>
    %232 = vector.shape_cast %231 : vector<2x16x64xbf16> to vector<32x64xbf16>
    %c2_180 = arith.constant 2 : index
    %c0_181 = arith.constant 0 : index
    %c0_182 = arith.constant 0 : index
    %233 = vector.load %arg7[%c2_180, %c0_181, %c0_182] : memref<9x64x128xbf16, #tpu.memory_space<vmem>>, vector<1x64x128xbf16>
    %234 = vector.shape_cast %233 : vector<1x64x128xbf16> to vector<64x128xbf16>
    %cst_183 = arith.constant dense<0.000000e+00> : vector<32x128xf32>
    %235 = tpu.matmul %232, %234, %cst_183 {dimension_numbers = #tpu.dot_dimension_numbers<[1], [0], [0], [1], [0, 0, 1, 1], [], []>} : vector<32x64xbf16>, vector<64x128xbf16>, vector<32x128xf32> -> vector<32x128xf32>
    %c0_184 = arith.constant 0 : index
    %c6_185 = arith.constant 6 : index
    %c0_186 = arith.constant 0 : index
    %236 = vector.load %arg16[%c0_184, %c6_185, %c0_186] : memref<2x26x64xbf16, #tpu.memory_space<vmem>>, vector<2x16x64xbf16>
    %237 = vector.shape_cast %236 : vector<2x16x64xbf16> to vector<32x64xbf16>
    %c5_187 = arith.constant 5 : index
    %c0_188 = arith.constant 0 : index
    %c0_189 = arith.constant 0 : index
    %238 = vector.load %arg7[%c5_187, %c0_188, %c0_189] : memref<9x64x128xbf16, #tpu.memory_space<vmem>>, vector<1x64x128xbf16>
    %239 = vector.shape_cast %238 : vector<1x64x128xbf16> to vector<64x128xbf16>
    %cst_190 = arith.constant dense<0.000000e+00> : vector<32x128xf32>
    %240 = tpu.matmul %237, %239, %cst_190 {dimension_numbers = #tpu.dot_dimension_numbers<[1], [0], [0], [1], [0, 0, 1, 1], [], []>} : vector<32x64xbf16>, vector<64x128xbf16>, vector<32x128xf32> -> vector<32x128xf32>
    %241 = arith.addf %235, %240 : vector<32x128xf32>
    %c0_191 = arith.constant 0 : index
    %c10_192 = arith.constant 10 : index
    %c0_193 = arith.constant 0 : index
    %242 = vector.load %arg16[%c0_191, %c10_192, %c0_193] : memref<2x26x64xbf16, #tpu.memory_space<vmem>>, vector<2x16x64xbf16>
    %243 = vector.shape_cast %242 : vector<2x16x64xbf16> to vector<32x64xbf16>
    %c8_194 = arith.constant 8 : index
    %c0_195 = arith.constant 0 : index
    %c0_196 = arith.constant 0 : index
    %244 = vector.load %arg7[%c8_194, %c0_195, %c0_196] : memref<9x64x128xbf16, #tpu.memory_space<vmem>>, vector<1x64x128xbf16>
    %245 = vector.shape_cast %244 : vector<1x64x128xbf16> to vector<64x128xbf16>
    %cst_197 = arith.constant dense<0.000000e+00> : vector<32x128xf32>
    %246 = tpu.matmul %243, %245, %cst_197 {dimension_numbers = #tpu.dot_dimension_numbers<[1], [0], [0], [1], [0, 0, 1, 1], [], []>} : vector<32x64xbf16>, vector<64x128xbf16>, vector<32x128xf32> -> vector<32x128xf32>
    %247 = arith.addf %241, %246 : vector<32x128xf32>
    %248 = vector.broadcast %193 : vector<32x1xf32> to vector<32x128xf32>
    %249 = arith.mulf %248, %247 : vector<32x128xf32>
    %250 = arith.addf %230, %249 : vector<32x128xf32>
    %cst_198 = arith.constant 1.000000e+00 : f32
    %251 = vector.broadcast %cst_198 : f32 to vector<1x32xf32>
    %cst_199 = arith.constant dense<0.000000e+00> : vector<1x128xf32>
    %252 = tpu.matmul %251, %250, %cst_199 {dimension_numbers = #tpu.dot_dimension_numbers<[1], [0], [0], [1], [0, 0, 1, 1], [], []>} : vector<1x32xf32>, vector<32x128xf32>, vector<1x128xf32> -> vector<1x128xf32>
    %253 = arith.mulf %250, %250 : vector<32x128xf32>
    %cst_200 = arith.constant dense<0.000000e+00> : vector<1x128xf32>
    %254 = tpu.matmul %251, %253, %cst_200 {dimension_numbers = #tpu.dot_dimension_numbers<[1], [0], [0], [1], [0, 0, 1, 1], [], []>} : vector<1x32xf32>, vector<32x128xf32>, vector<1x128xf32> -> vector<1x128xf32>
    %cst_201 = arith.constant 3.125000e-02 : f32
    %255 = vector.broadcast %cst_201 : f32 to vector<1x128xf32>
    %256 = arith.mulf %252, %255 : vector<1x128xf32>
    %cst_202 = arith.constant 3.125000e-02 : f32
    %257 = vector.broadcast %cst_202 : f32 to vector<1x128xf32>
    %258 = arith.mulf %254, %257 : vector<1x128xf32>
    %259 = arith.mulf %256, %256 : vector<1x128xf32>
    %260 = arith.subf %258, %259 : vector<1x128xf32>
    %261 = vector.broadcast %256 : vector<1x128xf32> to vector<32x128xf32>
    %262 = arith.subf %250, %261 : vector<32x128xf32>
    %cst_203 = arith.constant 9.99999974E-6 : f32
    %263 = vector.broadcast %cst_203 : f32 to vector<1x128xf32>
    %264 = arith.addf %260, %263 : vector<1x128xf32>
    %265 = math.rsqrt %264 : vector<1x128xf32>
    %266 = vector.broadcast %265 : vector<1x128xf32> to vector<32x128xf32>
    %267 = arith.mulf %262, %266 : vector<32x128xf32>
    %c0_204 = arith.constant 0 : index
    %c0_205 = arith.constant 0 : index
    %268 = vector.load %arg8[%c0_204, %c0_205] : memref<1x128xf32, #tpu.memory_space<vmem>>, vector<1x128xf32>
    %269 = vector.broadcast %268 : vector<1x128xf32> to vector<32x128xf32>
    %270 = arith.mulf %267, %269 : vector<32x128xf32>
    %c0_206 = arith.constant 0 : index
    %c0_207 = arith.constant 0 : index
    %271 = vector.load %arg9[%c0_206, %c0_207] : memref<1x128xf32, #tpu.memory_space<vmem>>, vector<1x128xf32>
    %272 = vector.broadcast %271 : vector<1x128xf32> to vector<32x128xf32>
    %273 = arith.addf %270, %272 : vector<32x128xf32>
    %cst_208 = arith.constant 0.000000e+00 : f32
    %274 = vector.broadcast %cst_208 : f32 to vector<32x128xf32>
    %275 = arith.maximumf %273, %274 : vector<32x128xf32>
    %276 = vector.shape_cast %275 : vector<32x128xf32> to vector<2x16x128xf32>
    %cst_209 = arith.constant dense<0.000000e+00> : vector<2x128xf32>
    %277 = vector.multi_reduction <add>, %276, %cst_209 [1] : vector<2x16x128xf32> to vector<2x128xf32>
    %cst_210 = arith.constant 1.600000e+01 : f32
    %278 = vector.broadcast %cst_210 : f32 to vector<2x128xf32>
    %279 = arith.divf %277, %278 : vector<2x128xf32>
    %280 = arith.truncf %279 : vector<2x128xf32> to vector<2x128xbf16>
    %c0_211 = arith.constant 0 : index
    %c0_212 = arith.constant 0 : index
    %281 = vector.load %arg10[%c0_211, %c0_212] : memref<128x256xbf16, #tpu.memory_space<vmem>>, vector<128x256xbf16>
    %cst_213 = arith.constant dense<0.000000e+00> : vector<2x256xf32>
    %282 = tpu.matmul %280, %281, %cst_213 {dimension_numbers = #tpu.dot_dimension_numbers<[1], [0], [0], [1], [0, 0, 1, 1], [], []>} : vector<2x128xbf16>, vector<128x256xbf16>, vector<2x256xf32> -> vector<2x256xf32>
    %c0_214 = arith.constant 0 : index
    %c0_215 = arith.constant 0 : index
    %283 = vector.load %arg11[%c0_214, %c0_215] : memref<1x256xf32, #tpu.memory_space<vmem>>, vector<1x256xf32>
    %284 = vector.broadcast %283 : vector<1x256xf32> to vector<2x256xf32>
    %285 = arith.addf %282, %284 : vector<2x256xf32>
    %286 = arith.truncf %285 : vector<2x256xf32> to vector<2x256xbf16>
    %c0_216 = arith.constant 0 : index
    %c0_217 = arith.constant 0 : index
    %287 = vector.load %arg12[%c0_216, %c0_217] : memref<256x10xbf16, #tpu.memory_space<vmem>>, vector<256x10xbf16>
    %cst_218 = arith.constant dense<0.000000e+00> : vector<2x10xf32>
    %288 = tpu.matmul %286, %287, %cst_218 {dimension_numbers = #tpu.dot_dimension_numbers<[1], [0], [0], [1], [0, 0, 1, 1], [], []>} : vector<2x256xbf16>, vector<256x10xbf16>, vector<2x10xf32> -> vector<2x10xf32>
    %c0_219 = arith.constant 0 : index
    %c0_220 = arith.constant 0 : index
    %289 = vector.load %arg13[%c0_219, %c0_220] : memref<1x10xf32, #tpu.memory_space<vmem>>, vector<1x10xf32>
    %290 = vector.broadcast %289 : vector<1x10xf32> to vector<2x10xf32>
    %291 = arith.addf %288, %290 : vector<2x10xf32>
    %c0_221 = arith.constant 0 : index
    %c0_222 = arith.constant 0 : index
    %292 = vector.load %arg14[%c0_221, %c0_222] : memref<2x10xf32, #tpu.memory_space<vmem>>, vector<2x10xf32>
    tpu.vector_store %arg14[%c0_221, %c0_222], %291 {strides = array<i32>} : memref<2x10xf32, #tpu.memory_space<vmem>>, vector<2x10xf32>,
    return
  }
}

</mosaic_0001>

<llo_original>
// kernel: tpu_custom_call.1
$region0: #{tpu_custom_call.1}
  #allocation0 [shape = 'u32[]', space=smem, size = 0x4, offset = 0x4, fixed_abs, tag = 'smem constant byte address 0x4 - core index']
  #allocation1 [shape = 'u32[144,128]{1,0:T(1,128)}', space=vmem, size = 0x12000, scoped, tag = 'internal scratch']
  #allocation2 [shape = 'bf16[2,82,32]{2,1,0:T(8,128)(2,1)}', space=vmem, size = 0xb000, scoped, tag = 'scratch operand']
  #allocation3 [shape = 'bf16[2,26,64]{2,1,0:T(8,128)(2,1)}', space=vmem, size = 0x4000, scoped, tag = 'scratch operand']
  #allocation4 [shape = 'f32[16,2,16,32]{3,2,1,0:T(8,128)}', space=vmem, size = 0x40000, scoped, tag = 'scratch operand']
  #allocation5 [shape = 'f32[256,32]{1,0:T(8,128)}', space=vmem, size = 0x20000, scoped, tag = 'scratch operand']
  #allocation6 [shape = 'f32[8,2,8,64]{3,2,1,0:T(8,128)}', space=vmem, size = 0x10000, scoped, tag = 'scratch operand']
  #allocation7 [shape = 'f32[64,64]{1,0:T(8,128)}', space=vmem, size = 0x8000, scoped, tag = 'scratch operand']
  %s0 = inlined_call_operand.vmem [shape: bf16[512,27], index: 0, kind: input, shape index: {}]
  %s1 = inlined_call_operand.vmem [shape: bf16[27,32], index: 1, kind: input, shape index: {}]
  %s2 = inlined_call_operand.vmem [shape: f32[1,32], index: 2, kind: input, shape index: {}]
  %s3 = inlined_call_operand.vmem [shape: f32[1,32], index: 3, kind: input, shape index: {}]
  %s4 = inlined_call_operand.vmem [shape: bf16[9,32,64], index: 4, kind: input, shape index: {}]
  %s5 = inlined_call_operand.vmem [shape: f32[1,64], index: 5, kind: input, shape index: {}]
  %s6 = inlined_call_operand.vmem [shape: f32[1,64], index: 6, kind: input, shape index: {}]
  %s7 = inlined_call_operand.vmem [shape: bf16[9,64,128], index: 7, kind: input, shape index: {}]
  %s8 = inlined_call_operand.vmem [shape: f32[1,128], index: 8, kind: input, shape index: {}]
  %s9 = inlined_call_operand.vmem [shape: f32[1,128], index: 9, kind: input, shape index: {}]
  %s10 = inlined_call_operand.hbm [shape: bf16[128,256], index: 10, kind: input, shape index: {}]
  %s11 = inlined_call_operand.vmem [shape: f32[1,256], index: 11, kind: input, shape index: {}]
  %s12 = inlined_call_operand.vmem [shape: bf16[256,10], index: 12, kind: input, shape index: {}]
  %s13 = inlined_call_operand.vmem [shape: f32[1,10], index: 13, kind: input, shape index: {}]
  %s14 = inlined_call_operand.hbm [shape: f32[2,10], index: 14, kind: output, shape index: {}]
  %s15 = sld [smem:[#allocation0]]
  $region70: #{tpu_custom_call.1} parent=0
    _
  %s17 = ssub.s32 1, %s15
  %s18 = scalar_select 0, %s17, %s15
  $region1: #{tpu_custom_call.1} parent=0
    #allocation8 [shape = 'u8[65536]{0}', space=vmem, size = 0x10000, scoped, tag = 'input window, operand 10, single buffered']
    #allocation9 [shape = 's32[1]{0}', space=sflag, size = 0x4, scoped, tag = 'scoped memory for tpu_custom_call.1']
    #allocation10 [shape = 's32[1]{0}', space=sflag, size = 0x4, scoped, tag = 'scoped memory for tpu_custom_call.1']
    #allocation11 [shape = 'u8[1024]{0}', space=vmem, size = 0x400, scoped, tag = 'output window, operand 0, single buffered']
    %19 = vsyncpa [#allocation9], 0
    %20 = vsyncpa [#allocation10], 0
    // Predicated region
    $region2: #{tpu_custom_call.1} parent=1 // pred_check
      _
    $region3: #{tpu_custom_call.1} parent=1 // pred_check_branch
      %22 = sbr.rel (0) target = $region5
    $region4: #{tpu_custom_call.1} parent=1 // pred_region
      _
    $region5: #{tpu_custom_call.1} parent=1 // pred_fallthru
      _
    // Predicated region
    $region6: #{tpu_custom_call.1} parent=1 // pred_check
      _
    $region7: #{tpu_custom_call.1} parent=1 // pred_check_branch
      %24 = sbr.rel (0) target = $region9
    $region8: #{tpu_custom_call.1} parent=1 // pred_region
      _
    $region9: #{tpu_custom_call.1} parent=1 // pred_fallthru
      _
    // Predicated region
    $region10: #{tpu_custom_call.1} parent=1 // pred_check
      _
    $region11: #{tpu_custom_call.1} parent=1 // pred_check_branch
      %26 = sbr.rel (0) target = $region13
    $region12: #{tpu_custom_call.1} parent=1 // pred_region
      _
    $region13: #{tpu_custom_call.1} parent=1 // pred_fallthru
      _
    // Predicated region
    $region14: #{tpu_custom_call.1} parent=1 // pred_check
      _
    $region15: #{tpu_custom_call.1} parent=1 // pred_check_branch
      %28 = sbr.rel (0) target = $region17
    $region16: #{tpu_custom_call.1} parent=1 // pred_region
      _
    $region17: #{tpu_custom_call.1} parent=1 // pred_fallthru
      _
    // Predicated region
    $region18: #{tpu_custom_call.1} parent=1 // pred_check
      _
    $region19: #{tpu_custom_call.1} parent=1 // pred_check_branch
      %30 = sbr.rel (0) target = $region21
    $region20: #{tpu_custom_call.1} parent=1 // pred_region
      _
    $region21: #{tpu_custom_call.1} parent=1 // pred_fallthru
      _
    // Predicated region
    $region22: #{tpu_custom_call.1} parent=1 // pred_check
      _
    $region23: #{tpu_custom_call.1} parent=1 // pred_check_branch
      %32 = sbr.rel (0) target = $region25
    $region24: #{tpu_custom_call.1} parent=1 // pred_region
      _
    $region25: #{tpu_custom_call.1} parent=1 // pred_fallthru
      _
    // Predicated region
    $region26: #{tpu_custom_call.1} parent=1 // pred_check
      _
    $region27: #{tpu_custom_call.1} parent=1 // pred_check_branch
      %34 = sbr.rel (0) target = $region29
    $region28: #{tpu_custom_call.1} parent=1 // pred_region
      _
    $region29: #{tpu_custom_call.1} parent=1 // pred_fallthru
      _
    // Predicated region
    $region30: #{tpu_custom_call.1} parent=1 // pred_check
      _
    $region31: #{tpu_custom_call.1} parent=1 // pred_check_branch
      %36 = sbr.rel (0) target = $region33
    $region32: #{tpu_custom_call.1} parent=1 // pred_region
      _
    $region33: #{tpu_custom_call.1} parent=1 // pred_fallthru
      _
    // Predicated region
    $region34: #{tpu_custom_call.1} parent=1 // pred_check
      _
    $region35: #{tpu_custom_call.1} parent=1 // pred_check_branch
      %38 = sbr.rel (0) target = $region37
    $region36: #{tpu_custom_call.1} parent=1 // pred_region
      _
    $region37: #{tpu_custom_call.1} parent=1 // pred_fallthru
      _
    // Predicated region
    $region38: #{tpu_custom_call.1} parent=1 // pred_check
      _
    $region39: #{tpu_custom_call.1} parent=1 // pred_check_branch
      %40 = sbr.rel (0) target = $region41
    $region40: #{tpu_custom_call.1} parent=1 // pred_region
      _
    $region41: #{tpu_custom_call.1} parent=1 // pred_fallthru
      _
    // Predicated region
    $region42: #{tpu_custom_call.1} parent=1 // pred_check
      _
    $region43: #{tpu_custom_call.1} parent=1 // pred_check_branch
      %42 = sbr.rel (0) target = $region45
    $region44: #{tpu_custom_call.1} parent=1 // pred_region
      %s44 = ssub.s32 2048, 2048
      %45 = vsyncadd [#allocation9], %s44
      %s46 = sshll.u32 [#allocation8], 4
      %s47 = int_to_ptr.vmem [resolvable:$true] %s46
      %52 = dma.hbm_to_vmem [thread:$0]  %s10, 2048, %s47, [#allocation9], 128, 128, 8
    $region45: #{tpu_custom_call.1} parent=1 // pred_fallthru
      _
    // Predicated region
    $region46: #{tpu_custom_call.1} parent=1 // pred_check
      _
    $region47: #{tpu_custom_call.1} parent=1 // pred_check_branch
      %54 = sbr.rel (0) target = $region49
    $region48: #{tpu_custom_call.1} parent=1 // pred_region
      _
    $region49: #{tpu_custom_call.1} parent=1 // pred_fallthru
      _
    // Predicated region
    $region50: #{tpu_custom_call.1} parent=1 // pred_check
      _
    $region51: #{tpu_custom_call.1} parent=1 // pred_check_branch
      %56 = sbr.rel (0) target = $region53
    $region52: #{tpu_custom_call.1} parent=1 // pred_region
      _
    $region53: #{tpu_custom_call.1} parent=1 // pred_fallthru
      _
    // Predicated region
    $region54: #{tpu_custom_call.1} parent=1 // pred_check
      _
    $region55: #{tpu_custom_call.1} parent=1 // pred_check_branch
      %58 = sbr.rel (0) target = $region57
    $region56: #{tpu_custom_call.1} parent=1 // pred_region
      _
    $region57: #{tpu_custom_call.1} parent=1 // pred_fallthru
      _
    // Predicated region
    $region58: #{tpu_custom_call.1} parent=1 // pred_check
      _
    $region59: #{tpu_custom_call.1} parent=1 // pred_check_branch
      %60 = sbr.rel (0) target = $region61
    $region60: #{tpu_custom_call.1} parent=1 // pred_region
      %61 = dma.done [#allocation9], 2048
    $region61: #{tpu_custom_call.1} parent=1 // pred_fallthru
      _
    %vm63 = vcmask 257024
    %64 = vst.msk [vmem:[#allocation2] sm:$0xf] %vm63, 0
    %65 = vst.msk [vmem:[#allocation2 + $0x4] sm:$0xf] %vm63, 0
    %66 = vst.msk [vmem:[#allocation2 + $0x8] sm:$0xf] %vm63, 0
    %67 = vst.msk [vmem:[#allocation2 + $0xc] sm:$0xf] %vm63, 0
    %68 = vst.msk [vmem:[#allocation2 + $0x10] sm:$0xf] %vm63, 0
    %69 = vst.msk [vmem:[#allocation2 + $0x14] sm:$0xf] %vm63, 0
    %70 = vst.msk [vmem:[#allocation2 + $0x18] sm:$0xf] %vm63, 0
    %71 = vst.msk [vmem:[#allocation2 + $0x1c] sm:$0xf] %vm63, 0
    %72 = vst.msk [vmem:[#allocation2 + $0x20] sm:$0xf] %vm63, 0
    %73 = vst.msk [vmem:[#allocation2 + $0x24] sm:$0xf] %vm63, 0
    %vm74 = vcmask 253952
    %75 = vst.msk [vmem:[#allocation2 + $0x28] sm:$0x1] %vm74, 0
    %76 = vst.msk [vmem:[#allocation2 + $0x2c] sm:$0xf] %vm63, 0
    %77 = vst.msk [vmem:[#allocation2 + $0x30] sm:$0xf] %vm63, 0
    %78 = vst.msk [vmem:[#allocation2 + $0x34] sm:$0xf] %vm63, 0
    %79 = vst.msk [vmem:[#allocation2 + $0x38] sm:$0xf] %vm63, 0
    %80 = vst.msk [vmem:[#allocation2 + $0x3c] sm:$0xf] %vm63, 0
    %81 = vst.msk [vmem:[#allocation2 + $0x40] sm:$0xf] %vm63, 0
    %82 = vst.msk [vmem:[#allocation2 + $0x44] sm:$0xf] %vm63, 0
    %83 = vst.msk [vmem:[#allocation2 + $0x48] sm:$0xf] %vm63, 0
    %84 = vst.msk [vmem:[#allocation2 + $0x4c] sm:$0xf] %vm63, 0
    %85 = vst.msk [vmem:[#allocation2 + $0x50] sm:$0xf] %vm63, 0
    %86 = vst.msk [vmem:[#allocation2 + $0x54] sm:$0x1] %vm74, 0
    %vm87 = vcmask 519168
    %88 = vst.msk [vmem:[#allocation3] sm:$0xf] %vm87, 0
    %89 = vst.msk [vmem:[#allocation3 + $0x4] sm:$0xf] %vm87, 0
    %90 = vst.msk [vmem:[#allocation3 + $0x8] sm:$0xf] %vm87, 0
    %vm91 = vcmask 516096
    %92 = vst.msk [vmem:[#allocation3 + $0xc] sm:$0x1] %vm91, 0
    %93 = vst.msk [vmem:[#allocation3 + $0x10] sm:$0xf] %vm87, 0
    %94 = vst.msk [vmem:[#allocation3 + $0x14] sm:$0xf] %vm87, 0
    %95 = vst.msk [vmem:[#allocation3 + $0x18] sm:$0xf] %vm87, 0
    %96 = vst.msk [vmem:[#allocation3 + $0x1c] sm:$0x1] %vm91, 0
    %v97 = vld [vmem:[%s0] sm:$0xf]
    %v98 = vld [vmem:[%s0 + $0x4] sm:$0xf]
    %v99 = vld [vmem:[%s0 + $0x8] sm:$0xf]
    %v100 = vld [vmem:[%s0 + $0xc] sm:$0xf]
    %v101 = vld [vmem:[%s0 + $0x10] sm:$0xf]
    %v102 = vld [vmem:[%s0 + $0x14] sm:$0xf]
    %v103 = vld [vmem:[%s0 + $0x18] sm:$0xf]
    %v104 = vld [vmem:[%s0 + $0x1c] sm:$0xf]
    %v105 = vld [vmem:[%s0 + $0x20] sm:$0xf]
    %v106 = vld [vmem:[%s0 + $0x24] sm:$0xf]
    %v107 = vld [vmem:[%s0 + $0x28] sm:$0xf]
    %v108 = vld [vmem:[%s0 + $0x2c] sm:$0xf]
    %v109 = vld [vmem:[%s0 + $0x30] sm:$0xf]
    %v110 = vld [vmem:[%s0 + $0x34] sm:$0xf]
    %v111 = vld [vmem:[%s0 + $0x38] sm:$0xf]
    %v112 = vld [vmem:[%s0 + $0x3c] sm:$0xf]
    %v113 = vld [vmem:[%s0 + $0x40] sm:$0xf]
    %v114 = vld [vmem:[%s0 + $0x44] sm:$0xf]
    %v115 = vld [vmem:[%s0 + $0x48] sm:$0xf]
    %v116 = vld [vmem:[%s0 + $0x4c] sm:$0xf]
    %v117 = vld [vmem:[%s0 + $0x50] sm:$0xf]
    %v118 = vld [vmem:[%s0 + $0x54] sm:$0xf]
    %v119 = vld [vmem:[%s0 + $0x58] sm:$0xf]
    %v120 = vld [vmem:[%s0 + $0x5c] sm:$0xf]
    %v121 = vld [vmem:[%s0 + $0x60] sm:$0xf]
    %v122 = vld [vmem:[%s0 + $0x64] sm:$0xf]
    %v123 = vld [vmem:[%s0 + $0x68] sm:$0xf]
    %v124 = vld [vmem:[%s0 + $0x6c] sm:$0xf]
    %v125 = vld [vmem:[%s0 + $0x70] sm:$0xf]
    %v126 = vld [vmem:[%s0 + $0x74] sm:$0xf]
    %v127 = vld [vmem:[%s0 + $0x78] sm:$0xf]
    %v128 = vld [vmem:[%s0 + $0x7c] sm:$0xf]
    %v129 = vld [vmem:[%s0 + $0x80] sm:$0xf]
    %v130 = vld [vmem:[%s0 + $0x84] sm:$0xf]
    %v131 = vld [vmem:[%s0 + $0x88] sm:$0xf]
    %v132 = vld [vmem:[%s0 + $0x8c] sm:$0xf]
    %v133 = vld [vmem:[%s0 + $0x90] sm:$0xf]
    %v134 = vld [vmem:[%s0 + $0x94] sm:$0xf]
    %v135 = vld [vmem:[%s0 + $0x98] sm:$0xf]
    %v136 = vld [vmem:[%s0 + $0x9c] sm:$0xf]
    %v137 = vld [vmem:[%s0 + $0xa0] sm:$0xf]
    %v138 = vld [vmem:[%s0 + $0xa4] sm:$0xf]
    %v139 = vld [vmem:[%s0 + $0xa8] sm:$0xf]
    %v140 = vld [vmem:[%s0 + $0xac] sm:$0xf]
    %v141 = vld [vmem:[%s0 + $0xb0] sm:$0xf]
    %v142 = vld [vmem:[%s0 + $0xb4] sm:$0xf]
    %v143 = vld [vmem:[%s0 + $0xb8] sm:$0xf]
    %v144 = vld [vmem:[%s0 + $0xbc] sm:$0xf]
    %v145 = vld [vmem:[%s0 + $0xc0] sm:$0xf]
    %v146 = vld [vmem:[%s0 + $0xc4] sm:$0xf]
    %v147 = vld [vmem:[%s0 + $0xc8] sm:$0xf]
    %v148 = vld [vmem:[%s0 + $0xcc] sm:$0xf]
    %v149 = vld [vmem:[%s0 + $0xd0] sm:$0xf]
    %v150 = vld [vmem:[%s0 + $0xd4] sm:$0xf]
    %v151 = vld [vmem:[%s0 + $0xd8] sm:$0xf]
    %v152 = vld [vmem:[%s0 + $0xdc] sm:$0xf]
    %v153 = vld [vmem:[%s0 + $0xe0] sm:$0xf]
    %v154 = vld [vmem:[%s0 + $0xe4] sm:$0xf]
    %v155 = vld [vmem:[%s0 + $0xe8] sm:$0xf]
    %v156 = vld [vmem:[%s0 + $0xec] sm:$0xf]
    %v157 = vld [vmem:[%s0 + $0xf0] sm:$0xf]
    %v158 = vld [vmem:[%s0 + $0xf4] sm:$0xf]
    %v159 = vld [vmem:[%s0 + $0xf8] sm:$0xf]
    %v160 = vld [vmem:[%s0 + $0xfc] sm:$0xf]
    %v161 = vld [vmem:[%s1] sm:$0xf]
    %v162 = vld [vmem:[%s1 + $0x4] sm:$0xf]
    %v163 = vld [vmem:[%s1 + $0x8] sm:$0xf]
    %v164 = vld [vmem:[%s1 + $0xc] sm:$0x3]
    %v229 = vunpack.c.l.b16 %v97
    %v230 = vunpack.c.l.b16 %v98
    %v231 = vunpack.c.l.b16 %v99
    %v232 = vunpack.c.l.b16 %v100
    %v233 = vunpack.c.l.b16 %v101
    %v234 = vunpack.c.l.b16 %v102
    %v235 = vunpack.c.l.b16 %v103
    %v236 = vunpack.c.l.b16 %v104
    %v237 = vunpack.c.l.b16 %v105
    %v238 = vunpack.c.l.b16 %v106
    %v239 = vunpack.c.l.b16 %v107
    %v240 = vunpack.c.l.b16 %v108
    %v241 = vunpack.c.l.b16 %v109
    %v242 = vunpack.c.l.b16 %v110
    %v243 = vunpack.c.l.b16 %v111
    %v244 = vunpack.c.l.b16 %v112
    %v245 = vunpack.c.l.b16 %v113
    %v246 = vunpack.c.l.b16 %v114
    %v247 = vunpack.c.l.b16 %v115
    %v248 = vunpack.c.l.b16 %v116
    %v249 = vunpack.c.l.b16 %v117
    %v250 = vunpack.c.l.b16 %v118
    %v251 = vunpack.c.l.b16 %v119
    %v252 = vunpack.c.l.b16 %v120
    %v253 = vunpack.c.l.b16 %v121
    %v254 = vunpack.c.l.b16 %v122
    %v255 = vunpack.c.l.b16 %v123
    %v256 = vunpack.c.l.b16 %v124
    %v257 = vunpack.c.l.b16 %v125
    %v258 = vunpack.c.l.b16 %v126
    %v259 = vunpack.c.l.b16 %v127
    %v260 = vunpack.c.l.b16 %v128
    %v261 = vunpack.c.l.b16 %v129
    %v262 = vunpack.c.l.b16 %v130
    %v263 = vunpack.c.l.b16 %v131
    %v264 = vunpack.c.l.b16 %v132
    %v265 = vunpack.c.l.b16 %v133
    %v266 = vunpack.c.l.b16 %v134
    %v267 = vunpack.c.l.b16 %v135
    %v268 = vunpack.c.l.b16 %v136
    %v269 = vunpack.c.l.b16 %v137
    %v270 = vunpack.c.l.b16 %v138
    %v271 = vunpack.c.l.b16 %v139
    %v272 = vunpack.c.l.b16 %v140
    %v273 = vunpack.c.l.b16 %v141
    %v274 = vunpack.c.l.b16 %v142
    %v275 = vunpack.c.l.b16 %v143
    %v276 = vunpack.c.l.b16 %v144
    %v277 = vunpack.c.l.b16 %v145
    %v278 = vunpack.c.l.b16 %v146
    %v279 = vunpack.c.l.b16 %v147
    %v280 = vunpack.c.l.b16 %v148
    %v281 = vunpack.c.l.b16 %v149
    %v282 = vunpack.c.l.b16 %v150
    %v283 = vunpack.c.l.b16 %v151
    %v284 = vunpack.c.l.b16 %v152
    %v285 = vunpack.c.l.b16 %v153
    %v286 = vunpack.c.l.b16 %v154
    %v287 = vunpack.c.l.b16 %v155
    %v288 = vunpack.c.l.b16 %v156
    %v289 = vunpack.c.l.b16 %v157
    %v290 = vunpack.c.l.b16 %v158
    %v291 = vunpack.c.l.b16 %v159
    %v292 = vunpack.c.l.b16 %v160
    %v293 = vpack.c.b16 %v230, %v229
    %v294 = vpack.c.b16 %v232, %v231
    %v295 = vpack.c.b16 %v234, %v233
    %v296 = vpack.c.b16 %v236, %v235
    %v297 = vpack.c.b16 %v238, %v237
    %v298 = vpack.c.b16 %v240, %v239
    %v299 = vpack.c.b16 %v242, %v241
    %v300 = vpack.c.b16 %v244, %v243
    %v301 = vpack.c.b16 %v246, %v245
    %v302 = vpack.c.b16 %v248, %v247
    %v303 = vpack.c.b16 %v250, %v249
    %v304 = vpack.c.b16 %v252, %v251
    %v305 = vpack.c.b16 %v254, %v253
    %v306 = vpack.c.b16 %v256, %v255
    %v307 = vpack.c.b16 %v258, %v257
    %v308 = vpack.c.b16 %v260, %v259
    %v309 = vpack.c.b16 %v262, %v261
    %v310 = vpack.c.b16 %v264, %v263
    %v311 = vpack.c.b16 %v266, %v265
    %v312 = vpack.c.b16 %v268, %v267
    %v313 = vpack.c.b16 %v270, %v269
    %v314 = vpack.c.b16 %v272, %v271
    %v315 = vpack.c.b16 %v274, %v273
    %v316 = vpack.c.b16 %v276, %v275
    %v317 = vpack.c.b16 %v278, %v277
    %v318 = vpack.c.b16 %v280, %v279
    %v319 = vpack.c.b16 %v282, %v281
    %v320 = vpack.c.b16 %v284, %v283
    %v321 = vpack.c.b16 %v286, %v285
    %v322 = vpack.c.b16 %v288, %v287
    %v323 = vpack.c.b16 %v290, %v289
    %v324 = vpack.c.b16 %v292, %v291
    %v329 = vunpack.c.l.b16 %v161
    %v330 = vunpack.c.l.b16 %v162
    %v331 = vunpack.c.l.b16 %v163
    %v332 = vunpack.c.l.b16 %v164
    %v333 = vpack.c.b16 %v330, %v329
    %v334 = vpack.c.b16 %v332, %v331
    %vm336 = vcmask 220160
    %v338 = vsel %vm336, %v293, 0
    %v341 = vsel %vm336, %v294, 0
    %v344 = vsel %vm336, %v295, 0
    %v347 = vsel %vm336, %v296, 0
    %v350 = vsel %vm336, %v297, 0
    %v353 = vsel %vm336, %v298, 0
    %v356 = vsel %vm336, %v299, 0
    %v359 = vsel %vm336, %v300, 0
    %v362 = vsel %vm336, %v301, 0
    %v365 = vsel %vm336, %v302, 0
    %v368 = vsel %vm336, %v303, 0
    %v371 = vsel %vm336, %v304, 0
    %v374 = vsel %vm336, %v305, 0
    %v377 = vsel %vm336, %v306, 0
    %v380 = vsel %vm336, %v307, 0
    %v383 = vsel %vm336, %v308, 0
    %v386 = vsel %vm336, %v309, 0
    %v389 = vsel %vm336, %v310, 0
    %v392 = vsel %vm336, %v311, 0
    %v395 = vsel %vm336, %v312, 0
    %v398 = vsel %vm336, %v313, 0
    %v401 = vsel %vm336, %v314, 0
    %v404 = vsel %vm336, %v315, 0
    %v407 = vsel %vm336, %v316, 0
    %v410 = vsel %vm336, %v317, 0
    %v413 = vsel %vm336, %v318, 0
    %v416 = vsel %vm336, %v319, 0
    %v419 = vsel %vm336, %v320, 0
    %v422 = vsel %vm336, %v321, 0
    %v425 = vsel %vm336, %v322, 0
    %v428 = vsel %vm336, %v323, 0
    %v431 = vsel %vm336, %v324, 0
    %vm433 = vcmask 1044480
    %vm434 = vcmask 1045504
    %v435 = vsel %vm433, 4294967295, 65535
    %v436 = vsel %vm434, %v435, 0
    %v438 = vand.u32 %v334, %v436
    %440 = vmatprep.subr.bf16.mxu0 0
    %441 = vmatpush1.bf16.msra.mxu0 %v333
    %442 = vmatprep.subr.bf16.mxu0 0
    %443 = vmatpush1.bf16.msra.mxu0 %v438
    %444 = vmatprep.subr.bf16.mxu0 0
    %445 = vmatpush1.bf16.msra.mxu0 0
    %446 = vmatprep.subr.bf16.mxu0 0
    %447 = vmatpush1.bf16.msra.mxu0 0
    %448 = vmatprep.subr.bf16.mxu0 0
    %449 = vmatpush1.bf16.msra.mxu0 0
    %450 = vmatprep.subr.bf16.mxu0 0
    %451 = vmatpush1.bf16.msra.mxu0 0
    %452 = vmatprep.subr.bf16.mxu0 0
    %453 = vmatpush1.bf16.msra.mxu0 0
    %454 = vmatprep.subr.bf16.mxu0 0
    %455 = vmatpush1.bf16.msra.mxu0 0
    %456 = vmatprep.subr.bf16.mxu0 0
    %457 = vmatpush1.bf16.msra.mxu0 0
    %458 = vmatprep.subr.bf16.mxu0 0
    %459 = vmatpush1.bf16.msra.mxu0 0
    %460 = vmatprep.subr.bf16.mxu0 0
    %461 = vmatpush1.bf16.msra.mxu0 0
    %462 = vmatprep.subr.bf16.mxu0 0
    %463 = vmatpush1.bf16.msra.mxu0 0
    %464 = vmatprep.subr.bf16.mxu0 0
    %465 = vmatpush1.bf16.msra.mxu0 0
    %466 = vmatprep.subr.bf16.mxu0 0
    %467 = vmatpush1.bf16.msra.mxu0 0
    %468 = vmatprep.subr.bf16.mxu0 0
    %469 = vmatpush1.bf16.msra.mxu0 0
    %470 = vmatprep.subr.bf16.mxu0 0
    %471 = vmatpush1.bf16.msra.mxu0 0
    %472 = vmatprep.mubr.bf16.mxu0 0
    %473 = vmatmul.mubr.bf16.gmra.mrb[0].mxu0 %v338
    %v474 = vpop.f32.mrb[0].mxu0
    %v475 = vadd.f32 0.0, %v474
    %v476 = vpop.f32.mrb[0].mxu0
    %v477 = vpop.f32.mrb[0].mxu0
    %v478 = vadd.f32 0.0, %v477
    %v479 = vpop.f32.mrb[0].mxu0
    %480 = vmatprep.mubr.bf16.mxu0 0
    %481 = vmatmul.mubr.bf16.gmra.mrb[0].mxu0 %v341
    %v482 = vpop.f32.mrb[0].mxu0
    %v483 = vadd.f32 0.0, %v482
    %v484 = vpop.f32.mrb[0].mxu0
    %v485 = vpop.f32.mrb[0].mxu0
    %v486 = vadd.f32 0.0, %v485
    %v487 = vpop.f32.mrb[0].mxu0
    %488 = vmatprep.mubr.bf16.mxu0 0
    %489 = vmatmul.mubr.bf16.gmra.mrb[0].mxu0 %v344
    %v490 = vpop.f32.mrb[0].mxu0
    %v491 = vadd.f32 0.0, %v490
    %v492 = vpop.f32.mrb[0].mxu0
    %v493 = vpop.f32.mrb[0].mxu0
    %v494 = vadd.f32 0.0, %v493
    %v495 = vpop.f32.mrb[0].mxu0
    %496 = vmatprep.mubr.bf16.mxu0 0
    %497 = vmatmul.mubr.bf16.gmra.mrb[0].mxu0 %v347
    %v498 = vpop.f32.mrb[0].mxu0
    %v499 = vadd.f32 0.0, %v498
    %v500 = vpop.f32.mrb[0].mxu0
    %v501 = vpop.f32.mrb[0].mxu0
    %v502 = vadd.f32 0.0, %v501
    %v503 = vpop.f32.mrb[0].mxu0
    %504 = vmatprep.mubr.bf16.mxu0 0
    %505 = vmatmul.mubr.bf16.gmra.mrb[0].mxu0 %v350
    %v506 = vpop.f32.mrb[0].mxu0
    %v507 = vadd.f32 0.0, %v506
    %v508 = vpop.f32.mrb[0].mxu0
    %v509 = vpop.f32.mrb[0].mxu0
    %v510 = vadd.f32 0.0, %v509
    %v511 = vpop.f32.mrb[0].mxu0
    %512 = vmatprep.mubr.bf16.mxu0 0
    %513 = vmatmul.mubr.bf16.gmra.mrb[0].mxu0 %v353
    %v514 = vpop.f32.mrb[0].mxu0
    %v515 = vadd.f32 0.0, %v514
    %v516 = vpop.f32.mrb[0].mxu0
    %v517 = vpop.f32.mrb[0].mxu0
    %v518 = vadd.f32 0.0, %v517
    %v519 = vpop.f32.mrb[0].mxu0
    %520 = vmatprep.mubr.bf16.mxu0 0
    %521 = vmatmul.mubr.bf16.gmra.mrb[0].mxu0 %v356
    %v522 = vpop.f32.mrb[0].mxu0
    %v523 = vadd.f32 0.0, %v522
    %v524 = vpop.f32.mrb[0].mxu0
    %v525 = vpop.f32.mrb[0].mxu0
    %v526 = vadd.f32 0.0, %v525
    %v527 = vpop.f32.mrb[0].mxu0
    %528 = vmatprep.mubr.bf16.mxu0 0
    %529 = vmatmul.mubr.bf16.gmra.mrb[0].mxu0 %v359
    %v530 = vpop.f32.mrb[0].mxu0
    %v531 = vadd.f32 0.0, %v530
    %v532 = vpop.f32.mrb[0].mxu0
    %v533 = vpop.f32.mrb[0].mxu0
    %v534 = vadd.f32 0.0, %v533
    %v535 = vpop.f32.mrb[0].mxu0
    %536 = vmatprep.mubr.bf16.mxu0 0
    %537 = vmatmul.mubr.bf16.gmra.mrb[0].mxu0 %v362
    %v538 = vpop.f32.mrb[0].mxu0
    %v539 = vadd.f32 0.0, %v538
    %v540 = vpop.f32.mrb[0].mxu0
    %v541 = vpop.f32.mrb[0].mxu0
    %v542 = vadd.f32 0.0, %v541
    %v543 = vpop.f32.mrb[0].mxu0
    %544 = vmatprep.mubr.bf16.mxu0 0
    %545 = vmatmul.mubr.bf16.gmra.mrb[0].mxu0 %v365
    %v546 = vpop.f32.mrb[0].mxu0
    %v547 = vadd.f32 0.0, %v546
    %v548 = vpop.f32.mrb[0].mxu0
    %v549 = vpop.f32.mrb[0].mxu0
    %v550 = vadd.f32 0.0, %v549
    %v551 = vpop.f32.mrb[0].mxu0
    %552 = vmatprep.mubr.bf16.mxu0 0
    %553 = vmatmul.mubr.bf16.gmra.mrb[0].mxu0 %v368
    %v554 = vpop.f32.mrb[0].mxu0
    %v555 = vadd.f32 0.0, %v554
    %v556 = vpop.f32.mrb[0].mxu0
    %v557 = vpop.f32.mrb[0].mxu0
    %v558 = vadd.f32 0.0, %v557
    %v559 = vpop.f32.mrb[0].mxu0
    %560 = vmatprep.mubr.bf16.mxu0 0
    %561 = vmatmul.mubr.bf16.gmra.mrb[0].mxu0 %v371
    %v562 = vpop.f32.mrb[0].mxu0
    %v563 = vadd.f32 0.0, %v562
    %v564 = vpop.f32.mrb[0].mxu0
    %v565 = vpop.f32.mrb[0].mxu0
    %v566 = vadd.f32 0.0, %v565
    %v567 = vpop.f32.mrb[0].mxu0
    %568 = vmatprep.mubr.bf16.mxu0 0
    %569 = vmatmul.mubr.bf16.gmra.mrb[0].mxu0 %v374
    %v570 = vpop.f32.mrb[0].mxu0
    %v571 = vadd.f32 0.0, %v570
    %v572 = vpop.f32.mrb[0].mxu0
    %v573 = vpop.f32.mrb[0].mxu0
    %v574 = vadd.f32 0.0, %v573
    %v575 = vpop.f32.mrb[0].mxu0
    %576 = vmatprep.mubr.bf16.mxu0 0
    %577 = vmatmul.mubr.bf16.gmra.mrb[0].mxu0 %v377
    %v578 = vpop.f32.mrb[0].mxu0
    %v579 = vadd.f32 0.0, %v578
    %v580 = vpop.f32.mrb[0].mxu0
    %v581 = vpop.f32.mrb[0].mxu0
    %v582 = vadd.f32 0.0, %v581
    %v583 = vpop.f32.mrb[0].mxu0
    %584 = vmatprep.mubr.bf16.mxu0 0
    %585 = vmatmul.mubr.bf16.gmra.mrb[0].mxu0 %v380
    %v586 = vpop.f32.mrb[0].mxu0
    %v587 = vadd.f32 0.0, %v586
    %v588 = vpop.f32.mrb[0].mxu0
    %v589 = vpop.f32.mrb[0].mxu0
    %v590 = vadd.f32 0.0, %v589
    %v591 = vpop.f32.mrb[0].mxu0
    %592 = vmatprep.mubr.bf16.mxu0 0
    %593 = vmatmul.mubr.bf16.gmra.mrb[0].mxu0 %v383
    %v594 = vpop.f32.mrb[0].mxu0
    %v595 = vadd.f32 0.0, %v594
    %v596 = vpop.f32.mrb[0].mxu0
    %v597 = vpop.f32.mrb[0].mxu0
    %v598 = vadd.f32 0.0, %v597
    %v599 = vpop.f32.mrb[0].mxu0
    %600 = vmatprep.mubr.bf16.mxu0 0
    %601 = vmatmul.mubr.bf16.gmra.mrb[0].mxu0 %v386
    %v602 = vpop.f32.mrb[0].mxu0
    %v603 = vadd.f32 0.0, %v602
    %v604 = vpop.f32.mrb[0].mxu0
    %v605 = vpop.f32.mrb[0].mxu0
    %v606 = vadd.f32 0.0, %v605
    %v607 = vpop.f32.mrb[0].mxu0
    %608 = vmatprep.mubr.bf16.mxu0 0
    %609 = vmatmul.mubr.bf16.gmra.mrb[0].mxu0 %v389
    %v610 = vpop.f32.mrb[0].mxu0
    %v611 = vadd.f32 0.0, %v610
    %v612 = vpop.f32.mrb[0].mxu0
    %v613 = vpop.f32.mrb[0].mxu0
    %v614 = vadd.f32 0.0, %v613
    %v615 = vpop.f32.mrb[0].mxu0
    %616 = vmatprep.mubr.bf16.mxu0 0
    %617 = vmatmul.mubr.bf16.gmra.mrb[0].mxu0 %v392
    %v618 = vpop.f32.mrb[0].mxu0
    %v619 = vadd.f32 0.0, %v618
    %v620 = vpop.f32.mrb[0].mxu0
    %v621 = vpop.f32.mrb[0].mxu0
    %v622 = vadd.f32 0.0, %v621
    %v623 = vpop.f32.mrb[0].mxu0
    %624 = vmatprep.mubr.bf16.mxu0 0
    %625 = vmatmul.mubr.bf16.gmra.mrb[0].mxu0 %v395
    %v626 = vpop.f32.mrb[0].mxu0
    %v627 = vadd.f32 0.0, %v626
    %v628 = vpop.f32.mrb[0].mxu0
    %v629 = vpop.f32.mrb[0].mxu0
    %v630 = vadd.f32 0.0, %v629
    %v631 = vpop.f32.mrb[0].mxu0
    %632 = vmatprep.mubr.bf16.mxu0 0
    %633 = vmatmul.mubr.bf16.gmra.mrb[0].mxu0 %v398
    %v634 = vpop.f32.mrb[0].mxu0
    %v635 = vadd.f32 0.0, %v634
    %v636 = vpop.f32.mrb[0].mxu0
    %v637 = vpop.f32.mrb[0].mxu0
    %v638 = vadd.f32 0.0, %v637
    %v639 = vpop.f32.mrb[0].mxu0
    %640 = vmatprep.mubr.bf16.mxu0 0
    %641 = vmatmul.mubr.bf16.gmra.mrb[0].mxu0 %v401
    %v642 = vpop.f32.mrb[0].mxu0
    %v643 = vadd.f32 0.0, %v642
    %v644 = vpop.f32.mrb[0].mxu0
    %v645 = vpop.f32.mrb[0].mxu0
    %v646 = vadd.f32 0.0, %v645
    %v647 = vpop.f32.mrb[0].mxu0
    %648 = vmatprep.mubr.bf16.mxu0 0
    %649 = vmatmul.mubr.bf16.gmra.mrb[0].mxu0 %v404
    %v650 = vpop.f32.mrb[0].mxu0
    %v651 = vadd.f32 0.0, %v650
    %v652 = vpop.f32.mrb[0].mxu0
    %v653 = vpop.f32.mrb[0].mxu0
    %v654 = vadd.f32 0.0, %v653
    %v655 = vpop.f32.mrb[0].mxu0
    %656 = vmatprep.mubr.bf16.mxu0 0
    %657 = vmatmul.mubr.bf16.gmra.mrb[0].mxu0 %v407
    %v658 = vpop.f32.mrb[0].mxu0
    %v659 = vadd.f32 0.0, %v658
    %v660 = vpop.f32.mrb[0].mxu0
    %v661 = vpop.f32.mrb[0].mxu0
    %v662 = vadd.f32 0.0, %v661
    %v663 = vpop.f32.mrb[0].mxu0
    %664 = vmatprep.mubr.bf16.mxu0 0
    %665 = vmatmul.mubr.bf16.gmra.mrb[0].mxu0 %v410
    %v666 = vpop.f32.mrb[0].mxu0
    %v667 = vadd.f32 0.0, %v666
    %v668 = vpop.f32.mrb[0].mxu0
    %v669 = vpop.f32.mrb[0].mxu0
    %v670 = vadd.f32 0.0, %v669
    %v671 = vpop.f32.mrb[0].mxu0
    %672 = vmatprep.mubr.bf16.mxu0 0
    %673 = vmatmul.mubr.bf16.gmra.mrb[0].mxu0 %v413
    %v674 = vpop.f32.mrb[0].mxu0
    %v675 = vadd.f32 0.0, %v674
    %v676 = vpop.f32.mrb[0].mxu0
    %v677 = vpop.f32.mrb[0].mxu0
    %v678 = vadd.f32 0.0, %v677
    %v679 = vpop.f32.mrb[0].mxu0
    %680 = vmatprep.mubr.bf16.mxu0 0
    %681 = vmatmul.mubr.bf16.gmra.mrb[0].mxu0 %v416
    %v682 = vpop.f32.mrb[0].mxu0
    %v683 = vadd.f32 0.0, %v682
    %v684 = vpop.f32.mrb[0].mxu0
    %v685 = vpop.f32.mrb[0].mxu0
    %v686 = vadd.f32 0.0, %v685
    %v687 = vpop.f32.mrb[0].mxu0
    %688 = vmatprep.mubr.bf16.mxu0 0
    %689 = vmatmul.mubr.bf16.gmra.mrb[0].mxu0 %v419
    %v690 = vpop.f32.mrb[0].mxu0
    %v691 = vadd.f32 0.0, %v690
    %v692 = vpop.f32.mrb[0].mxu0
    %v693 = vpop.f32.mrb[0].mxu0
    %v694 = vadd.f32 0.0, %v693
    %v695 = vpop.f32.mrb[0].mxu0
    %696 = vmatprep.mubr.bf16.mxu0 0
    %697 = vmatmul.mubr.bf16.gmra.mrb[0].mxu0 %v422
    %v698 = vpop.f32.mrb[0].mxu0
    %v699 = vadd.f32 0.0, %v698
    %v700 = vpop.f32.mrb[0].mxu0
    %v701 = vpop.f32.mrb[0].mxu0
    %v702 = vadd.f32 0.0, %v701
    %v703 = vpop.f32.mrb[0].mxu0
    %704 = vmatprep.mubr.bf16.mxu0 0
    %705 = vmatmul.mubr.bf16.gmra.mrb[0].mxu0 %v425
    %v706 = vpop.f32.mrb[0].mxu0
    %v707 = vadd.f32 0.0, %v706
    %v708 = vpop.f32.mrb[0].mxu0
    %v709 = vpop.f32.mrb[0].mxu0
    %v710 = vadd.f32 0.0, %v709
    %v711 = vpop.f32.mrb[0].mxu0
    %712 = vmatprep.mubr.bf16.mxu0 0
    %713 = vmatmul.mubr.bf16.gmra.mrb[0].mxu0 %v428
    %v714 = vpop.f32.mrb[0].mxu0
    %v715 = vadd.f32 0.0, %v714
    %v716 = vpop.f32.mrb[0].mxu0
    %v717 = vpop.f32.mrb[0].mxu0
    %v718 = vadd.f32 0.0, %v717
    %v719 = vpop.f32.mrb[0].mxu0
    %720 = vmatprep.mubr.bf16.mxu0 0
    %721 = vmatmul.mubr.bf16.gmra.mrb[0].mxu0 %v431
    %v722 = vpop.f32.mrb[0].mxu0
    %v723 = vadd.f32 0.0, %v722
    %v724 = vpop.f32.mrb[0].mxu0
    %v725 = vpop.f32.mrb[0].mxu0
    %v726 = vadd.f32 0.0, %v725
    %v727 = vpop.f32.mrb[0].mxu0
    %728 = vdwg.mxu0
    %729 = vmatprep.subr.mxu0 0.0
    %730 = vmatpush1.msra.mxu0 %v475
    %731 = vmatprep.subr.mxu0 0.0
    %732 = vmatpush1.msra.mxu0 %v478
    %733 = vmatprep.subr.mxu0 0.0
    %734 = vmatpush1.msra.mxu0 %v483
    %735 = vmatprep.subr.mxu0 0.0
    %736 = vmatpush1.msra.mxu0 %v486
    %737 = vmatprep.subr.mxu0 0.0
    %738 = vmatpush1.msra.mxu0 %v491
    %739 = vmatprep.subr.mxu0 0.0
    %740 = vmatpush1.msra.mxu0 %v494
    %741 = vmatprep.subr.mxu0 0.0
    %742 = vmatpush1.msra.mxu0 %v499
    %743 = vmatprep.subr.mxu0 0.0
    %744 = vmatpush1.msra.mxu0 %v502
    %745 = vmatprep.subr.mxu0 0.0
    %746 = vmatpush1.msra.mxu0 %v507
    %747 = vmatprep.subr.mxu0 0.0
    %748 = vmatpush1.msra.mxu0 %v510
    %749 = vmatprep.subr.mxu0 0.0
    %750 = vmatpush1.msra.mxu0 %v515
    %751 = vmatprep.subr.mxu0 0.0
    %752 = vmatpush1.msra.mxu0 %v518
    %753 = vmatprep.subr.mxu0 0.0
    %754 = vmatpush1.msra.mxu0 %v523
    %755 = vmatprep.subr.mxu0 0.0
    %756 = vmatpush1.msra.mxu0 %v526
    %757 = vmatprep.subr.mxu0 0.0
    %758 = vmatpush1.msra.mxu0 %v531
    %759 = vmatprep.subr.mxu0 0.0
    %760 = vmatpush1.msra.mxu0 %v534
    %761 = vmatprep.subr.mxu0 0.0
    %762 = vmatpush1.msra.mxu0 %v539
    %763 = vmatprep.subr.mxu0 0.0
    %764 = vmatpush1.msra.mxu0 %v542
    %765 = vmatprep.subr.mxu0 0.0
    %766 = vmatpush1.msra.mxu0 %v547
    %767 = vmatprep.subr.mxu0 0.0
    %768 = vmatpush1.msra.mxu0 %v550
    %769 = vmatprep.subr.mxu0 0.0
    %770 = vmatpush1.msra.mxu0 %v555
    %771 = vmatprep.subr.mxu0 0.0
    %772 = vmatpush1.msra.mxu0 %v558
    %773 = vmatprep.subr.mxu0 0.0
    %774 = vmatpush1.msra.mxu0 %v563
    %775 = vmatprep.subr.mxu0 0.0
    %776 = vmatpush1.msra.mxu0 %v566
    %777 = vmatprep.subr.mxu0 0.0
    %778 = vmatpush1.msra.mxu0 %v571
    %779 = vmatprep.subr.mxu0 0.0
    %780 = vmatpush1.msra.mxu0 %v574
    %781 = vmatprep.subr.mxu0 0.0
    %782 = vmatpush1.msra.mxu0 %v579
    %783 = vmatprep.subr.mxu0 0.0
    %784 = vmatpush1.msra.mxu0 %v582
    %785 = vmatprep.subr.mxu0 0.0
    %786 = vmatpush1.msra.mxu0 %v587
    %787 = vmatprep.subr.mxu0 0.0
    %788 = vmatpush1.msra.mxu0 %v590
    %789 = vmatprep.subr.mxu0 0.0
    %790 = vmatpush1.msra.mxu0 %v595
    %791 = vmatprep.subr.mxu0 0.0
    %792 = vmatpush1.msra.mxu0 %v598
    %793 = vmatprep.mubr.f32.mxu0 1.0
    %794 = vmatmul.mubr.f32.gmra.mrb[0].mxu0 1.0
    %v795 = vpop.f32.mrb[0].mxu0
    %v796 = vadd.f32 0.0, %v795
    %v797 = vpop.f32.mrb[0].mxu0
    %798 = vdwg.mxu0
    %799 = vmatprep.subr.mxu0 0.0
    %800 = vmatpush1.msra.mxu0 %v603
    %801 = vmatprep.subr.mxu0 0.0
    %802 = vmatpush1.msra.mxu0 %v606
    %803 = vmatprep.subr.mxu0 0.0
    %804 = vmatpush1.msra.mxu0 %v611
    %805 = vmatprep.subr.mxu0 0.0
    %806 = vmatpush1.msra.mxu0 %v614
    %807 = vmatprep.subr.mxu0 0.0
    %808 = vmatpush1.msra.mxu0 %v619
    %809 = vmatprep.subr.mxu0 0.0
    %810 = vmatpush1.msra.mxu0 %v622
    %811 = vmatprep.subr.mxu0 0.0
    %812 = vmatpush1.msra.mxu0 %v627
    %813 = vmatprep.subr.mxu0 0.0
    %814 = vmatpush1.msra.mxu0 %v630
    %815 = vmatprep.subr.mxu0 0.0
    %816 = vmatpush1.msra.mxu0 %v635
    %817 = vmatprep.subr.mxu0 0.0
    %818 = vmatpush1.msra.mxu0 %v638
    %819 = vmatprep.subr.mxu0 0.0
    %820 = vmatpush1.msra.mxu0 %v643
    %821 = vmatprep.subr.mxu0 0.0
    %822 = vmatpush1.msra.mxu0 %v646
    %823 = vmatprep.subr.mxu0 0.0
    %824 = vmatpush1.msra.mxu0 %v651
    %825 = vmatprep.subr.mxu0 0.0
    %826 = vmatpush1.msra.mxu0 %v654
    %827 = vmatprep.subr.mxu0 0.0
    %828 = vmatpush1.msra.mxu0 %v659
    %829 = vmatprep.subr.mxu0 0.0
    %830 = vmatpush1.msra.mxu0 %v662
    %831 = vmatprep.subr.mxu0 0.0
    %832 = vmatpush1.msra.mxu0 %v667
    %833 = vmatprep.subr.mxu0 0.0
    %834 = vmatpush1.msra.mxu0 %v670
    %835 = vmatprep.subr.mxu0 0.0
    %836 = vmatpush1.msra.mxu0 %v675
    %837 = vmatprep.subr.mxu0 0.0
    %838 = vmatpush1.msra.mxu0 %v678
    %839 = vmatprep.subr.mxu0 0.0
    %840 = vmatpush1.msra.mxu0 %v683
    %841 = vmatprep.subr.mxu0 0.0
    %842 = vmatpush1.msra.mxu0 %v686
    %843 = vmatprep.subr.mxu0 0.0
    %844 = vmatpush1.msra.mxu0 %v691
    %845 = vmatprep.subr.mxu0 0.0
    %846 = vmatpush1.msra.mxu0 %v694
    %847 = vmatprep.subr.mxu0 0.0
    %848 = vmatpush1.msra.mxu0 %v699
    %849 = vmatprep.subr.mxu0 0.0
    %850 = vmatpush1.msra.mxu0 %v702
    %851 = vmatprep.subr.mxu0 0.0
    %852 = vmatpush1.msra.mxu0 %v707
    %853 = vmatprep.subr.mxu0 0.0
    %854 = vmatpush1.msra.mxu0 %v710
    %855 = vmatprep.subr.mxu0 0.0
    %856 = vmatpush1.msra.mxu0 %v715
    %857 = vmatprep.subr.mxu0 0.0
    %858 = vmatpush1.msra.mxu0 %v718
    %859 = vmatprep.subr.mxu0 0.0
    %860 = vmatpush1.msra.mxu0 %v723
    %861 = vmatprep.subr.mxu0 0.0
    %862 = vmatpush1.msra.mxu0 %v726
    %863 = vmatprep.mubr.f32.mxu0 1.0
    %864 = vmatmul.mubr.f32.gmra.mrb[0].mxu0 1.0
    %v865 = vpop.f32.mrb[0].mxu0
    %v866 = vadd.f32 %v796, %v865
    %v867 = vpop.f32.mrb[0].mxu0
    %868 = vdwg.mxu0
    %v869 = vmul.f32 %v475, %v475
    %v870 = vmul.f32 %v478, %v478
    %v871 = vmul.f32 %v483, %v483
    %v872 = vmul.f32 %v486, %v486
    %v873 = vmul.f32 %v491, %v491
    %v874 = vmul.f32 %v494, %v494
    %v875 = vmul.f32 %v499, %v499
    %v876 = vmul.f32 %v502, %v502
    %v877 = vmul.f32 %v507, %v507
    %v878 = vmul.f32 %v510, %v510
    %v879 = vmul.f32 %v515, %v515
    %v880 = vmul.f32 %v518, %v518
    %v881 = vmul.f32 %v523, %v523
    %v882 = vmul.f32 %v526, %v526
    %v883 = vmul.f32 %v531, %v531
    %v884 = vmul.f32 %v534, %v534
    %v885 = vmul.f32 %v539, %v539
    %v886 = vmul.f32 %v542, %v542
    %v887 = vmul.f32 %v547, %v547
    %v888 = vmul.f32 %v550, %v550
    %v889 = vmul.f32 %v555, %v555
    %v890 = vmul.f32 %v558, %v558
    %v891 = vmul.f32 %v563, %v563
    %v892 = vmul.f32 %v566, %v566
    %v893 = vmul.f32 %v571, %v571
    %v894 = vmul.f32 %v574, %v574
    %v895 = vmul.f32 %v579, %v579
    %v896 = vmul.f32 %v582, %v582
    %v897 = vmul.f32 %v587, %v587
    %v898 = vmul.f32 %v590, %v590
    %v899 = vmul.f32 %v595, %v595
    %v900 = vmul.f32 %v598, %v598
    %v901 = vmul.f32 %v603, %v603
    %v902 = vmul.f32 %v606, %v606
    %v903 = vmul.f32 %v611, %v611
    %v904 = vmul.f32 %v614, %v614
    %v905 = vmul.f32 %v619, %v619
    %v906 = vmul.f32 %v622, %v622
    %v907 = vmul.f32 %v627, %v627
    %v908 = vmul.f32 %v630, %v630
    %v909 = vmul.f32 %v635, %v635
    %v910 = vmul.f32 %v638, %v638
    %v911 = vmul.f32 %v643, %v643
    %v912 = vmul.f32 %v646, %v646
    %v913 = vmul.f32 %v651, %v651
    %v914 = vmul.f32 %v654, %v654
    %v915 = vmul.f32 %v659, %v659
    %v916 = vmul.f32 %v662, %v662
    %v917 = vmul.f32 %v667, %v667
    %v918 = vmul.f32 %v670, %v670
    %v919 = vmul.f32 %v675, %v675
    %v920 = vmul.f32 %v678, %v678
    %v921 = vmul.f32 %v683, %v683
    %v922 = vmul.f32 %v686, %v686
    %v923 = vmul.f32 %v691, %v691
    %v924 = vmul.f32 %v694, %v694
    %v925 = vmul.f32 %v699, %v699
    %v926 = vmul.f32 %v702, %v702
    %v927 = vmul.f32 %v707, %v707
    %v928 = vmul.f32 %v710, %v710
    %v929 = vmul.f32 %v715, %v715
    %v930 = vmul.f32 %v718, %v718
    %v931 = vmul.f32 %v723, %v723
    %v932 = vmul.f32 %v726, %v726
    %933 = vmatprep.subr.mxu0 0.0
    %934 = vmatpush1.msra.mxu0 %v869
    %935 = vmatprep.subr.mxu0 0.0
    %936 = vmatpush1.msra.mxu0 %v870
    %937 = vmatprep.subr.mxu0 0.0
    %938 = vmatpush1.msra.mxu0 %v871
    %939 = vmatprep.subr.mxu0 0.0
    %940 = vmatpush1.msra.mxu0 %v872
    %941 = vmatprep.subr.mxu0 0.0
    %942 = vmatpush1.msra.mxu0 %v873
    %943 = vmatprep.subr.mxu0 0.0
    %944 = vmatpush1.msra.mxu0 %v874
    %945 = vmatprep.subr.mxu0 0.0
    %946 = vmatpush1.msra.mxu0 %v875
    %947 = vmatprep.subr.mxu0 0.0
    %948 = vmatpush1.msra.mxu0 %v876
    %949 = vmatprep.subr.mxu0 0.0
    %950 = vmatpush1.msra.mxu0 %v877
    %951 = vmatprep.subr.mxu0 0.0
    %952 = vmatpush1.msra.mxu0 %v878
    %953 = vmatprep.subr.mxu0 0.0
    %954 = vmatpush1.msra.mxu0 %v879
    %955 = vmatprep.subr.mxu0 0.0
    %956 = vmatpush1.msra.mxu0 %v880
    %957 = vmatprep.subr.mxu0 0.0
    %958 = vmatpush1.msra.mxu0 %v881
    %959 = vmatprep.subr.mxu0 0.0
    %960 = vmatpush1.msra.mxu0 %v882
    %961 = vmatprep.subr.mxu0 0.0
    %962 = vmatpush1.msra.mxu0 %v883
    %963 = vmatprep.subr.mxu0 0.0
    %964 = vmatpush1.msra.mxu0 %v884
    %965 = vmatprep.subr.mxu0 0.0
    %966 = vmatpush1.msra.mxu0 %v885
    %967 = vmatprep.subr.mxu0 0.0
    %968 = vmatpush1.msra.mxu0 %v886
    %969 = vmatprep.subr.mxu0 0.0
    %970 = vmatpush1.msra.mxu0 %v887
    %971 = vmatprep.subr.mxu0 0.0
    %972 = vmatpush1.msra.mxu0 %v888
    %973 = vmatprep.subr.mxu0 0.0
    %974 = vmatpush1.msra.mxu0 %v889
    %975 = vmatprep.subr.mxu0 0.0
    %976 = vmatpush1.msra.mxu0 %v890
    %977 = vmatprep.subr.mxu0 0.0
    %978 = vmatpush1.msra.mxu0 %v891
    %979 = vmatprep.subr.mxu0 0.0
    %980 = vmatpush1.msra.mxu0 %v892
    %981 = vmatprep.subr.mxu0 0.0
    %982 = vmatpush1.msra.mxu0 %v893
    %983 = vmatprep.subr.mxu0 0.0
    %984 = vmatpush1.msra.mxu0 %v894
    %985 = vmatprep.subr.mxu0 0.0
    %986 = vmatpush1.msra.mxu0 %v895
    %987 = vmatprep.subr.mxu0 0.0
    %988 = vmatpush1.msra.mxu0 %v896
    %989 = vmatprep.subr.mxu0 0.0
    %990 = vmatpush1.msra.mxu0 %v897
    %991 = vmatprep.subr.mxu0 0.0
    %992 = vmatpush1.msra.mxu0 %v898
    %993 = vmatprep.subr.mxu0 0.0
    %994 = vmatpush1.msra.mxu0 %v899
    %995 = vmatprep.subr.mxu0 0.0
    %996 = vmatpush1.msra.mxu0 %v900
    %997 = vmatprep.mubr.f32.mxu0 1.0
    %998 = vmatmul.mubr.f32.gmra.mrb[0].mxu0 1.0
    %v999 = vpop.f32.mrb[0].mxu0
    %v1000 = vadd.f32 0.0, %v999
    %v1001 = vpop.f32.mrb[0].mxu0
    %1002 = vdwg.mxu0
    %1003 = vmatprep.subr.mxu0 0.0
    %1004 = vmatpush1.msra.mxu0 %v901
    %1005 = vmatprep.subr.mxu0 0.0
    %1006 = vmatpush1.msra.mxu0 %v902
    %1007 = vmatprep.subr.mxu0 0.0
    %1008 = vmatpush1.msra.mxu0 %v903
    %1009 = vmatprep.subr.mxu0 0.0
    %1010 = vmatpush1.msra.mxu0 %v904
    %1011 = vmatprep.subr.mxu0 0.0
    %1012 = vmatpush1.msra.mxu0 %v905
    %1013 = vmatprep.subr.mxu0 0.0
    %1014 = vmatpush1.msra.mxu0 %v906
    %1015 = vmatprep.subr.mxu0 0.0
    %1016 = vmatpush1.msra.mxu0 %v907
    %1017 = vmatprep.subr.mxu0 0.0
    %1018 = vmatpush1.msra.mxu0 %v908
    %1019 = vmatprep.subr.mxu0 0.0
    %1020 = vmatpush1.msra.mxu0 %v909
    %1021 = vmatprep.subr.mxu0 0.0
    %1022 = vmatpush1.msra.mxu0 %v910
    %1023 = vmatprep.subr.mxu0 0.0
    %1024 = vmatpush1.msra.mxu0 %v911
    %1025 = vmatprep.subr.mxu0 0.0
    %1026 = vmatpush1.msra.mxu0 %v912
    %1027 = vmatprep.subr.mxu0 0.0
    %1028 = vmatpush1.msra.mxu0 %v913
    %1029 = vmatprep.subr.mxu0 0.0
    %1030 = vmatpush1.msra.mxu0 %v914
    %1031 = vmatprep.subr.mxu0 0.0
    %1032 = vmatpush1.msra.mxu0 %v915
    %1033 = vmatprep.subr.mxu0 0.0
    %1034 = vmatpush1.msra.mxu0 %v916
    %1035 = vmatprep.subr.mxu0 0.0
    %1036 = vmatpush1.msra.mxu0 %v917
    %1037 = vmatprep.subr.mxu0 0.0
    %1038 = vmatpush1.msra.mxu0 %v918
    %1039 = vmatprep.subr.mxu0 0.0
    %1040 = vmatpush1.msra.mxu0 %v919
    %1041 = vmatprep.subr.mxu0 0.0
    %1042 = vmatpush1.msra.mxu0 %v920
    %1043 = vmatprep.subr.mxu0 0.0
    %1044 = vmatpush1.msra.mxu0 %v921
    %1045 = vmatprep.subr.mxu0 0.0
    %1046 = vmatpush1.msra.mxu0 %v922
    %1047 = vmatprep.subr.mxu0 0.0
    %1048 = vmatpush1.msra.mxu0 %v923
    %1049 = vmatprep.subr.mxu0 0.0
    %1050 = vmatpush1.msra.mxu0 %v924
    %1051 = vmatprep.subr.mxu0 0.0
    %1052 = vmatpush1.msra.mxu0 %v925
    %1053 = vmatprep.subr.mxu0 0.0
    %1054 = vmatpush1.msra.mxu0 %v926
    %1055 = vmatprep.subr.mxu0 0.0
    %1056 = vmatpush1.msra.mxu0 %v927
    %1057 = vmatprep.subr.mxu0 0.0
    %1058 = vmatpush1.msra.mxu0 %v928
    %1059 = vmatprep.subr.mxu0 0.0
    %1060 = vmatpush1.msra.mxu0 %v929
    %1061 = vmatprep.subr.mxu0 0.0
    %1062 = vmatpush1.msra.mxu0 %v930
    %1063 = vmatprep.subr.mxu0 0.0
    %1064 = vmatpush1.msra.mxu0 %v931
    %1065 = vmatprep.subr.mxu0 0.0
    %1066 = vmatpush1.msra.mxu0 %v932
    %1067 = vmatprep.mubr.f32.mxu0 1.0
    %1068 = vmatmul.mubr.f32.gmra.mrb[0].mxu0 1.0
    %v1069 = vpop.f32.mrb[0].mxu0
    %v1070 = vadd.f32 %v1000, %v1069
    %v1071 = vpop.f32.mrb[0].mxu0
    %1072 = vdwg.mxu0
    %v1073 = vmul.f32 %v866, 0.001953125
    %v1074 = vmul.f32 %v1070, 0.001953125
    %v1075 = vmul.f32 %v1073, %v1073
    %v1076 = vsub.f32 %v1074, %v1075
    %v1077 = vlaneseq
    %v1078 = vshrl.u32 %v1077, 7
    %v1079 = vsub.s32 0, %v1078
    %v1080 = vrot.slane %v1073, %v1079
    %v1081 = vsub.f32 %v475, %v1080
    %v1082 = vsub.f32 %v478, %v1080
    %v1083 = vsub.f32 %v483, %v1080
    %v1084 = vsub.f32 %v486, %v1080
    %v1085 = vsub.f32 %v491, %v1080
    %v1086 = vsub.f32 %v494, %v1080
    %v1087 = vsub.f32 %v499, %v1080
    %v1088 = vsub.f32 %v502, %v1080
    %v1089 = vsub.f32 %v507, %v1080
    %v1090 = vsub.f32 %v510, %v1080
    %v1091 = vsub.f32 %v515, %v1080
    %v1092 = vsub.f32 %v518, %v1080
    %v1093 = vsub.f32 %v523, %v1080
    %v1094 = vsub.f32 %v526, %v1080
    %v1095 = vsub.f32 %v531, %v1080
    %v1096 = vsub.f32 %v534, %v1080
    %v1097 = vsub.f32 %v539, %v1080
    %v1098 = vsub.f32 %v542, %v1080
    %v1099 = vsub.f32 %v547, %v1080
    %v1100 = vsub.f32 %v550, %v1080
    %v1101 = vsub.f32 %v555, %v1080
    %v1102 = vsub.f32 %v558, %v1080
    %v1103 = vsub.f32 %v563, %v1080
    %v1104 = vsub.f32 %v566, %v1080
    %v1105 = vsub.f32 %v571, %v1080
    %v1106 = vsub.f32 %v574, %v1080
    %v1107 = vsub.f32 %v579, %v1080
    %v1108 = vsub.f32 %v582, %v1080
    %v1109 = vsub.f32 %v587, %v1080
    %v1110 = vsub.f32 %v590, %v1080
    %v1111 = vsub.f32 %v595, %v1080
    %v1112 = vsub.f32 %v598, %v1080
    %v1113 = vsub.f32 %v603, %v1080
    %v1114 = vsub.f32 %v606, %v1080
    %v1115 = vsub.f32 %v611, %v1080
    %v1116 = vsub.f32 %v614, %v1080
    %v1117 = vsub.f32 %v619, %v1080
    %v1118 = vsub.f32 %v622, %v1080
    %v1119 = vsub.f32 %v627, %v1080
    %v1120 = vsub.f32 %v630, %v1080
    %v1121 = vsub.f32 %v635, %v1080
    %v1122 = vsub.f32 %v638, %v1080
    %v1123 = vsub.f32 %v643, %v1080
    %v1124 = vsub.f32 %v646, %v1080
    %v1125 = vsub.f32 %v651, %v1080
    %v1126 = vsub.f32 %v654, %v1080
    %v1127 = vsub.f32 %v659, %v1080
    %v1128 = vsub.f32 %v662, %v1080
    %v1129 = vsub.f32 %v667, %v1080
    %v1130 = vsub.f32 %v670, %v1080
    %v1131 = vsub.f32 %v675, %v1080
    %v1132 = vsub.f32 %v678, %v1080
    %v1133 = vsub.f32 %v683, %v1080
    %v1134 = vsub.f32 %v686, %v1080
    %v1135 = vsub.f32 %v691, %v1080
    %v1136 = vsub.f32 %v694, %v1080
    %v1137 = vsub.f32 %v699, %v1080
    %v1138 = vsub.f32 %v702, %v1080
    %v1139 = vsub.f32 %v707, %v1080
    %v1140 = vsub.f32 %v710, %v1080
    %v1141 = vsub.f32 %v715, %v1080
    %v1142 = vsub.f32 %v718, %v1080
    %v1143 = vsub.f32 %v723, %v1080
    %v1144 = vsub.f32 %v726, %v1080
    %v1145 = vadd.f32 %v1076, 1e-05
    %v1146 = vrsqrt.pop %v1145
    %v1147 = vlaneseq
    %v1148 = vshrl.u32 %v1147, 7
    %v1149 = vsub.s32 0, %v1148
    %v1150 = vrot.slane %v1146, %v1149
    %v1151 = vmul.f32 %v1081, %v1150
    %v1152 = vmul.f32 %v1082, %v1150
    %v1153 = vmul.f32 %v1083, %v1150
    %v1154 = vmul.f32 %v1084, %v1150
    %v1155 = vmul.f32 %v1085, %v1150
    %v1156 = vmul.f32 %v1086, %v1150
    %v1157 = vmul.f32 %v1087, %v1150
    %v1158 = vmul.f32 %v1088, %v1150
    %v1159 = vmul.f32 %v1089, %v1150
    %v1160 = vmul.f32 %v1090, %v1150
    %v1161 = vmul.f32 %v1091, %v1150
    %v1162 = vmul.f32 %v1092, %v1150
    %v1163 = vmul.f32 %v1093, %v1150
    %v1164 = vmul.f32 %v1094, %v1150
    %v1165 = vmul.f32 %v1095, %v1150
    %v1166 = vmul.f32 %v1096, %v1150
    %v1167 = vmul.f32 %v1097, %v1150
    %v1168 = vmul.f32 %v1098, %v1150
    %v1169 = vmul.f32 %v1099, %v1150
    %v1170 = vmul.f32 %v1100, %v1150
    %v1171 = vmul.f32 %v1101, %v1150
    %v1172 = vmul.f32 %v1102, %v1150
    %v1173 = vmul.f32 %v1103, %v1150
    %v1174 = vmul.f32 %v1104, %v1150
    %v1175 = vmul.f32 %v1105, %v1150
    %v1176 = vmul.f32 %v1106, %v1150
    %v1177 = vmul.f32 %v1107, %v1150
    %v1178 = vmul.f32 %v1108, %v1150
    %v1179 = vmul.f32 %v1109, %v1150
    %v1180 = vmul.f32 %v1110, %v1150
    %v1181 = vmul.f32 %v1111, %v1150
    %v1182 = vmul.f32 %v1112, %v1150
    %v1183 = vmul.f32 %v1113, %v1150
    %v1184 = vmul.f32 %v1114, %v1150
    %v1185 = vmul.f32 %v1115, %v1150
    %v1186 = vmul.f32 %v1116, %v1150
    %v1187 = vmul.f32 %v1117, %v1150
    %v1188 = vmul.f32 %v1118, %v1150
    %v1189 = vmul.f32 %v1119, %v1150
    %v1190 = vmul.f32 %v1120, %v1150
    %v1191 = vmul.f32 %v1121, %v1150
    %v1192 = vmul.f32 %v1122, %v1150
    %v1193 = vmul.f32 %v1123, %v1150
    %v1194 = vmul.f32 %v1124, %v1150
    %v1195 = vmul.f32 %v1125, %v1150
    %v1196 = vmul.f32 %v1126, %v1150
    %v1197 = vmul.f32 %v1127, %v1150
    %v1198 = vmul.f32 %v1128, %v1150
    %v1199 = vmul.f32 %v1129, %v1150
    %v1200 = vmul.f32 %v1130, %v1150
    %v1201 = vmul.f32 %v1131, %v1150
    %v1202 = vmul.f32 %v1132, %v1150
    %v1203 = vmul.f32 %v1133, %v1150
    %v1204 = vmul.f32 %v1134, %v1150
    %v1205 = vmul.f32 %v1135, %v1150
    %v1206 = vmul.f32 %v1136, %v1150
    %v1207 = vmul.f32 %v1137, %v1150
    %v1208 = vmul.f32 %v1138, %v1150
    %v1209 = vmul.f32 %v1139, %v1150
    %v1210 = vmul.f32 %v1140, %v1150
    %v1211 = vmul.f32 %v1141, %v1150
    %v1212 = vmul.f32 %v1142, %v1150
    %v1213 = vmul.f32 %v1143, %v1150
    %v1214 = vmul.f32 %v1144, %v1150
    %v1215 = vld [vmem:[%s2] sm:$0x1]
    %v1217 = vlaneseq
    %v1218 = vshrl.u32 %v1217, 7
    %v1219 = vsub.s32 0, %v1218
    %v1220 = vrot.slane %v1215, %v1219
    %v1222 = vmul.f32 %v1151, %v1220
    %v1223 = vmul.f32 %v1152, %v1220
    %v1224 = vmul.f32 %v1153, %v1220
    %v1225 = vmul.f32 %v1154, %v1220
    %v1226 = vmul.f32 %v1155, %v1220
    %v1227 = vmul.f32 %v1156, %v1220
    %v1228 = vmul.f32 %v1157, %v1220
    %v1229 = vmul.f32 %v1158, %v1220
    %v1230 = vmul.f32 %v1159, %v1220
    %v1231 = vmul.f32 %v1160, %v1220
    %v1232 = vmul.f32 %v1161, %v1220
    %v1233 = vmul.f32 %v1162, %v1220
    %v1234 = vmul.f32 %v1163, %v1220
    %v1235 = vmul.f32 %v1164, %v1220
    %v1236 = vmul.f32 %v1165, %v1220
    %v1237 = vmul.f32 %v1166, %v1220
    %v1238 = vmul.f32 %v1167, %v1220
    %v1239 = vmul.f32 %v1168, %v1220
    %v1240 = vmul.f32 %v1169, %v1220
    %v1241 = vmul.f32 %v1170, %v1220
    %v1242 = vmul.f32 %v1171, %v1220
    %v1243 = vmul.f32 %v1172, %v1220
    %v1244 = vmul.f32 %v1173, %v1220
    %v1245 = vmul.f32 %v1174, %v1220
    %v1246 = vmul.f32 %v1175, %v1220
    %v1247 = vmul.f32 %v1176, %v1220
    %v1248 = vmul.f32 %v1177, %v1220
    %v1249 = vmul.f32 %v1178, %v1220
    %v1250 = vmul.f32 %v1179, %v1220
    %v1251 = vmul.f32 %v1180, %v1220
    %v1252 = vmul.f32 %v1181, %v1220
    %v1253 = vmul.f32 %v1182, %v1220
    %v1254 = vmul.f32 %v1183, %v1220
    %v1255 = vmul.f32 %v1184, %v1220
    %v1256 = vmul.f32 %v1185, %v1220
    %v1257 = vmul.f32 %v1186, %v1220
    %v1258 = vmul.f32 %v1187, %v1220
    %v1259 = vmul.f32 %v1188, %v1220
    %v1260 = vmul.f32 %v1189, %v1220
    %v1261 = vmul.f32 %v1190, %v1220
    %v1262 = vmul.f32 %v1191, %v1220
    %v1263 = vmul.f32 %v1192, %v1220
    %v1264 = vmul.f32 %v1193, %v1220
    %v1265 = vmul.f32 %v1194, %v1220
    %v1266 = vmul.f32 %v1195, %v1220
    %v1267 = vmul.f32 %v1196, %v1220
    %v1268 = vmul.f32 %v1197, %v1220
    %v1269 = vmul.f32 %v1198, %v1220
    %v1270 = vmul.f32 %v1199, %v1220
    %v1271 = vmul.f32 %v1200, %v1220
    %v1272 = vmul.f32 %v1201, %v1220
    %v1273 = vmul.f32 %v1202, %v1220
    %v1274 = vmul.f32 %v1203, %v1220
    %v1275 = vmul.f32 %v1204, %v1220
    %v1276 = vmul.f32 %v1205, %v1220
    %v1277 = vmul.f32 %v1206, %v1220
    %v1278 = vmul.f32 %v1207, %v1220
    %v1279 = vmul.f32 %v1208, %v1220
    %v1280 = vmul.f32 %v1209, %v1220
    %v1281 = vmul.f32 %v1210, %v1220
    %v1282 = vmul.f32 %v1211, %v1220
    %v1283 = vmul.f32 %v1212, %v1220
    %v1284 = vmul.f32 %v1213, %v1220
    %v1285 = vmul.f32 %v1214, %v1220
    %v1286 = vld [vmem:[%s3] sm:$0x1]
    %v1288 = vlaneseq
    %v1289 = vshrl.u32 %v1288, 7
    %v1290 = vsub.s32 0, %v1289
    %v1291 = vrot.slane %v1286, %v1290
    %v1293 = vadd.f32 %v1222, %v1291
    %v1294 = vadd.f32 %v1223, %v1291
    %v1295 = vadd.f32 %v1224, %v1291
    %v1296 = vadd.f32 %v1225, %v1291
    %v1297 = vadd.f32 %v1226, %v1291
    %v1298 = vadd.f32 %v1227, %v1291
    %v1299 = vadd.f32 %v1228, %v1291
    %v1300 = vadd.f32 %v1229, %v1291
    %v1301 = vadd.f32 %v1230, %v1291
    %v1302 = vadd.f32 %v1231, %v1291
    %v1303 = vadd.f32 %v1232, %v1291
    %v1304 = vadd.f32 %v1233, %v1291
    %v1305 = vadd.f32 %v1234, %v1291
    %v1306 = vadd.f32 %v1235, %v1291
    %v1307 = vadd.f32 %v1236, %v1291
    %v1308 = vadd.f32 %v1237, %v1291
    %v1309 = vadd.f32 %v1238, %v1291
    %v1310 = vadd.f32 %v1239, %v1291
    %v1311 = vadd.f32 %v1240, %v1291
    %v1312 = vadd.f32 %v1241, %v1291
    %v1313 = vadd.f32 %v1242, %v1291
    %v1314 = vadd.f32 %v1243, %v1291
    %v1315 = vadd.f32 %v1244, %v1291
    %v1316 = vadd.f32 %v1245, %v1291
    %v1317 = vadd.f32 %v1246, %v1291
    %v1318 = vadd.f32 %v1247, %v1291
    %v1319 = vadd.f32 %v1248, %v1291
    %v1320 = vadd.f32 %v1249, %v1291
    %v1321 = vadd.f32 %v1250, %v1291
    %v1322 = vadd.f32 %v1251, %v1291
    %v1323 = vadd.f32 %v1252, %v1291
    %v1324 = vadd.f32 %v1253, %v1291
    %v1325 = vadd.f32 %v1254, %v1291
    %v1326 = vadd.f32 %v1255, %v1291
    %v1327 = vadd.f32 %v1256, %v1291
    %v1328 = vadd.f32 %v1257, %v1291
    %v1329 = vadd.f32 %v1258, %v1291
    %v1330 = vadd.f32 %v1259, %v1291
    %v1331 = vadd.f32 %v1260, %v1291
    %v1332 = vadd.f32 %v1261, %v1291
    %v1333 = vadd.f32 %v1262, %v1291
    %v1334 = vadd.f32 %v1263, %v1291
    %v1335 = vadd.f32 %v1264, %v1291
    %v1336 = vadd.f32 %v1265, %v1291
    %v1337 = vadd.f32 %v1266, %v1291
    %v1338 = vadd.f32 %v1267, %v1291
    %v1339 = vadd.f32 %v1268, %v1291
    %v1340 = vadd.f32 %v1269, %v1291
    %v1341 = vadd.f32 %v1270, %v1291
    %v1342 = vadd.f32 %v1271, %v1291
    %v1343 = vadd.f32 %v1272, %v1291
    %v1344 = vadd.f32 %v1273, %v1291
    %v1345 = vadd.f32 %v1274, %v1291
    %v1346 = vadd.f32 %v1275, %v1291
    %v1347 = vadd.f32 %v1276, %v1291
    %v1348 = vadd.f32 %v1277, %v1291
    %v1349 = vadd.f32 %v1278, %v1291
    %v1350 = vadd.f32 %v1279, %v1291
    %v1351 = vadd.f32 %v1280, %v1291
    %v1352 = vadd.f32 %v1281, %v1291
    %v1353 = vadd.f32 %v1282, %v1291
    %v1354 = vadd.f32 %v1283, %v1291
    %v1355 = vadd.f32 %v1284, %v1291
    %v1356 = vadd.f32 %v1285, %v1291
    %v1357 = vmax.f32 %v1293, 0.0
    %v1358 = vmax.f32 %v1294, 0.0
    %v1359 = vmax.f32 %v1295, 0.0
    %v1360 = vmax.f32 %v1296, 0.0
    %v1361 = vmax.f32 %v1297, 0.0
    %v1362 = vmax.f32 %v1298, 0.0
    %v1363 = vmax.f32 %v1299, 0.0
    %v1364 = vmax.f32 %v1300, 0.0
    %v1365 = vmax.f32 %v1301, 0.0
    %v1366 = vmax.f32 %v1302, 0.0
    %v1367 = vmax.f32 %v1303, 0.0
    %v1368 = vmax.f32 %v1304, 0.0
    %v1369 = vmax.f32 %v1305, 0.0
    %v1370 = vmax.f32 %v1306, 0.0
    %v1371 = vmax.f32 %v1307, 0.0
    %v1372 = vmax.f32 %v1308, 0.0
    %v1373 = vmax.f32 %v1309, 0.0
    %v1374 = vmax.f32 %v1310, 0.0
    %v1375 = vmax.f32 %v1311, 0.0
    %v1376 = vmax.f32 %v1312, 0.0
    %v1377 = vmax.f32 %v1313, 0.0
    %v1378 = vmax.f32 %v1314, 0.0
    %v1379 = vmax.f32 %v1315, 0.0
    %v1380 = vmax.f32 %v1316, 0.0
    %v1381 = vmax.f32 %v1317, 0.0
    %v1382 = vmax.f32 %v1318, 0.0
    %v1383 = vmax.f32 %v1319, 0.0
    %v1384 = vmax.f32 %v1320, 0.0
    %v1385 = vmax.f32 %v1321, 0.0
    %v1386 = vmax.f32 %v1322, 0.0
    %v1387 = vmax.f32 %v1323, 0.0
    %v1388 = vmax.f32 %v1324, 0.0
    %v1389 = vmax.f32 %v1325, 0.0
    %v1390 = vmax.f32 %v1326, 0.0
    %v1391 = vmax.f32 %v1327, 0.0
    %v1392 = vmax.f32 %v1328, 0.0
    %v1393 = vmax.f32 %v1329, 0.0
    %v1394 = vmax.f32 %v1330, 0.0
    %v1395 = vmax.f32 %v1331, 0.0
    %v1396 = vmax.f32 %v1332, 0.0
    %v1397 = vmax.f32 %v1333, 0.0
    %v1398 = vmax.f32 %v1334, 0.0
    %v1399 = vmax.f32 %v1335, 0.0
    %v1400 = vmax.f32 %v1336, 0.0
    %v1401 = vmax.f32 %v1337, 0.0
    %v1402 = vmax.f32 %v1338, 0.0
    %v1403 = vmax.f32 %v1339, 0.0
    %v1404 = vmax.f32 %v1340, 0.0
    %v1405 = vmax.f32 %v1341, 0.0
    %v1406 = vmax.f32 %v1342, 0.0
    %v1407 = vmax.f32 %v1343, 0.0
    %v1408 = vmax.f32 %v1344, 0.0
    %v1409 = vmax.f32 %v1345, 0.0
    %v1410 = vmax.f32 %v1346, 0.0
    %v1411 = vmax.f32 %v1347, 0.0
    %v1412 = vmax.f32 %v1348, 0.0
    %v1413 = vmax.f32 %v1349, 0.0
    %v1414 = vmax.f32 %v1350, 0.0
    %v1415 = vmax.f32 %v1351, 0.0
    %v1416 = vmax.f32 %v1352, 0.0
    %v1417 = vmax.f32 %v1353, 0.0
    %v1418 = vmax.f32 %v1354, 0.0
    %v1419 = vmax.f32 %v1355, 0.0
    %v1420 = vmax.f32 %v1356, 0.0
    %vm1421 = vcmask 261120
    %1422 = vst.msk [vmem:[#allocation4] sm:$0xff] %vm1421, %v1357
    %1423 = vst.msk [vmem:[#allocation4 + $0x8] sm:$0xff] %vm1421, %v1358
    %1424 = vst.msk [vmem:[#allocation4 + $0x10] sm:$0xff] %vm1421, %v1359
    %1425 = vst.msk [vmem:[#allocation4 + $0x18] sm:$0xff] %vm1421, %v1360
    %1426 = vst.msk [vmem:[#allocation4 + $0x20] sm:$0xff] %vm1421, %v1361
    %1427 = vst.msk [vmem:[#allocation4 + $0x28] sm:$0xff] %vm1421, %v1362
    %1428 = vst.msk [vmem:[#allocation4 + $0x30] sm:$0xff] %vm1421, %v1363
    %1429 = vst.msk [vmem:[#allocation4 + $0x38] sm:$0xff] %vm1421, %v1364
    %1430 = vst.msk [vmem:[#allocation4 + $0x40] sm:$0xff] %vm1421, %v1365
    %1431 = vst.msk [vmem:[#allocation4 + $0x48] sm:$0xff] %vm1421, %v1366
    %1432 = vst.msk [vmem:[#allocation4 + $0x50] sm:$0xff] %vm1421, %v1367
    %1433 = vst.msk [vmem:[#allocation4 + $0x58] sm:$0xff] %vm1421, %v1368
    %1434 = vst.msk [vmem:[#allocation4 + $0x60] sm:$0xff] %vm1421, %v1369
    %1435 = vst.msk [vmem:[#allocation4 + $0x68] sm:$0xff] %vm1421, %v1370
    %1436 = vst.msk [vmem:[#allocation4 + $0x70] sm:$0xff] %vm1421, %v1371
    %1437 = vst.msk [vmem:[#allocation4 + $0x78] sm:$0xff] %vm1421, %v1372
    %1438 = vst.msk [vmem:[#allocation4 + $0x80] sm:$0xff] %vm1421, %v1373
    %1439 = vst.msk [vmem:[#allocation4 + $0x88] sm:$0xff] %vm1421, %v1374
    %1440 = vst.msk [vmem:[#allocation4 + $0x90] sm:$0xff] %vm1421, %v1375
    %1441 = vst.msk [vmem:[#allocation4 + $0x98] sm:$0xff] %vm1421, %v1376
    %1442 = vst.msk [vmem:[#allocation4 + $0xa0] sm:$0xff] %vm1421, %v1377
    %1443 = vst.msk [vmem:[#allocation4 + $0xa8] sm:$0xff] %vm1421, %v1378
    %1444 = vst.msk [vmem:[#allocation4 + $0xb0] sm:$0xff] %vm1421, %v1379
    %1445 = vst.msk [vmem:[#allocation4 + $0xb8] sm:$0xff] %vm1421, %v1380
    %1446 = vst.msk [vmem:[#allocation4 + $0xc0] sm:$0xff] %vm1421, %v1381
    %1447 = vst.msk [vmem:[#allocation4 + $0xc8] sm:$0xff] %vm1421, %v1382
    %1448 = vst.msk [vmem:[#allocation4 + $0xd0] sm:$0xff] %vm1421, %v1383
    %1449 = vst.msk [vmem:[#allocation4 + $0xd8] sm:$0xff] %vm1421, %v1384
    %1450 = vst.msk [vmem:[#allocation4 + $0xe0] sm:$0xff] %vm1421, %v1385
    %1451 = vst.msk [vmem:[#allocation4 + $0xe8] sm:$0xff] %vm1421, %v1386
    %1452 = vst.msk [vmem:[#allocation4 + $0xf0] sm:$0xff] %vm1421, %v1387
    %1453 = vst.msk [vmem:[#allocation4 + $0xf8] sm:$0xff] %vm1421, %v1388
    %1454 = vst.msk [vmem:[#allocation4 + $0x100] sm:$0xff] %vm1421, %v1389
    %1455 = vst.msk [vmem:[#allocation4 + $0x108] sm:$0xff] %vm1421, %v1390
    %1456 = vst.msk [vmem:[#allocation4 + $0x110] sm:$0xff] %vm1421, %v1391
    %1457 = vst.msk [vmem:[#allocation4 + $0x118] sm:$0xff] %vm1421, %v1392
    %1458 = vst.msk [vmem:[#allocation4 + $0x120] sm:$0xff] %vm1421, %v1393
    %1459 = vst.msk [vmem:[#allocation4 + $0x128] sm:$0xff] %vm1421, %v1394
    %1460 = vst.msk [vmem:[#allocation4 + $0x130] sm:$0xff] %vm1421, %v1395
    %1461 = vst.msk [vmem:[#allocation4 + $0x138] sm:$0xff] %vm1421, %v1396
    %1462 = vst.msk [vmem:[#allocation4 + $0x140] sm:$0xff] %vm1421, %v1397
    %1463 = vst.msk [vmem:[#allocation4 + $0x148] sm:$0xff] %vm1421, %v1398
    %1464 = vst.msk [vmem:[#allocation4 + $0x150] sm:$0xff] %vm1421, %v1399
    %1465 = vst.msk [vmem:[#allocation4 + $0x158] sm:$0xff] %vm1421, %v1400
    %1466 = vst.msk [vmem:[#allocation4 + $0x160] sm:$0xff] %vm1421, %v1401
    %1467 = vst.msk [vmem:[#allocation4 + $0x168] sm:$0xff] %vm1421, %v1402
    %1468 = vst.msk [vmem:[#allocation4 + $0x170] sm:$0xff] %vm1421, %v1403
    %1469 = vst.msk [vmem:[#allocation4 + $0x178] sm:$0xff] %vm1421, %v1404
    %1470 = vst.msk [vmem:[#allocation4 + $0x180] sm:$0xff] %vm1421, %v1405
    %1471 = vst.msk [vmem:[#allocation4 + $0x188] sm:$0xff] %vm1421, %v1406
    %1472 = vst.msk [vmem:[#allocation4 + $0x190] sm:$0xff] %vm1421, %v1407
    %1473 = vst.msk [vmem:[#allocation4 + $0x198] sm:$0xff] %vm1421, %v1408
    %1474 = vst.msk [vmem:[#allocation4 + $0x1a0] sm:$0xff] %vm1421, %v1409
    %1475 = vst.msk [vmem:[#allocation4 + $0x1a8] sm:$0xff] %vm1421, %v1410
    %1476 = vst.msk [vmem:[#allocation4 + $0x1b0] sm:$0xff] %vm1421, %v1411
    %1477 = vst.msk [vmem:[#allocation4 + $0x1b8] sm:$0xff] %vm1421, %v1412
    %1478 = vst.msk [vmem:[#allocation4 + $0x1c0] sm:$0xff] %vm1421, %v1413
    %1479 = vst.msk [vmem:[#allocation4 + $0x1c8] sm:$0xff] %vm1421, %v1414
    %1480 = vst.msk [vmem:[#allocation4 + $0x1d0] sm:$0xff] %vm1421, %v1415
    %1481 = vst.msk [vmem:[#allocation4 + $0x1d8] sm:$0xff] %vm1421, %v1416
    %1482 = vst.msk [vmem:[#allocation4 + $0x1e0] sm:$0xff] %vm1421, %v1417
    %1483 = vst.msk [vmem:[#allocation4 + $0x1e8] sm:$0xff] %vm1421, %v1418
    %1484 = vst.msk [vmem:[#allocation4 + $0x1f0] sm:$0xff] %vm1421, %v1419
    %1485 = vst.msk [vmem:[#allocation4 + $0x1f8] sm:$0xff] %vm1421, %v1420
    %v1486 = vld [vmem:[#allocation4] sm:$0xff]
    %v1487 = vld [vmem:[#allocation4 + $0x8] sm:$0xff]
    %v1488 = vld [vmem:[#allocation4 + $0x20] sm:$0xff]
    %v1489 = vld [vmem:[#allocation4 + $0x28] sm:$0xff]
    %v1490 = vld [vmem:[#allocation4 + $0x40] sm:$0xff]
    %v1491 = vld [vmem:[#allocation4 + $0x48] sm:$0xff]
    %v1492 = vld [vmem:[#allocation4 + $0x60] sm:$0xff]
    %v1493 = vld [vmem:[#allocation4 + $0x68] sm:$0xff]
    %v1494 = vld [vmem:[#allocation4 + $0x80] sm:$0xff]
    %v1495 = vld [vmem:[#allocation4 + $0x88] sm:$0xff]
    %v1496 = vld [vmem:[#allocation4 + $0xa0] sm:$0xff]
    %v1497 = vld [vmem:[#allocation4 + $0xa8] sm:$0xff]
    %v1498 = vld [vmem:[#allocation4 + $0xc0] sm:$0xff]
    %v1499 = vld [vmem:[#allocation4 + $0xc8] sm:$0xff]
    %v1500 = vld [vmem:[#allocation4 + $0xe0] sm:$0xff]
    %v1501 = vld [vmem:[#allocation4 + $0xe8] sm:$0xff]
    %v1502 = vld [vmem:[#allocation4 + $0x100] sm:$0xff]
    %v1503 = vld [vmem:[#allocation4 + $0x108] sm:$0xff]
    %v1504 = vld [vmem:[#allocation4 + $0x120] sm:$0xff]
    %v1505 = vld [vmem:[#allocation4 + $0x128] sm:$0xff]
    %v1506 = vld [vmem:[#allocation4 + $0x140] sm:$0xff]
    %v1507 = vld [vmem:[#allocation4 + $0x148] sm:$0xff]
    %v1508 = vld [vmem:[#allocation4 + $0x160] sm:$0xff]
    %v1509 = vld [vmem:[#allocation4 + $0x168] sm:$0xff]
    %v1510 = vld [vmem:[#allocation4 + $0x180] sm:$0xff]
    %v1511 = vld [vmem:[#allocation4 + $0x188] sm:$0xff]
    %v1512 = vld [vmem:[#allocation4 + $0x1a0] sm:$0xff]
    %v1513 = vld [vmem:[#allocation4 + $0x1a8] sm:$0xff]
    %v1514 = vld [vmem:[#allocation4 + $0x1c0] sm:$0xff]
    %v1515 = vld [vmem:[#allocation4 + $0x1c8] sm:$0xff]
    %v1516 = vld [vmem:[#allocation4 + $0x1e0] sm:$0xff]
    %v1517 = vld [vmem:[#allocation4 + $0x1e8] sm:$0xff]
    %s1518 = scalar_lea.vmem [#allocation4], 16
    %v1519 = vld [vmem:[%s1518] sm:$0xff]
    %v1520 = vld [vmem:[%s1518 + $0x8] sm:$0xff]
    %v1521 = vld [vmem:[%s1518 + $0x20] sm:$0xff]
    %v1522 = vld [vmem:[%s1518 + $0x28] sm:$0xff]
    %v1523 = vld [vmem:[%s1518 + $0x40] sm:$0xff]
    %v1524 = vld [vmem:[%s1518 + $0x48] sm:$0xff]
    %v1525 = vld [vmem:[%s1518 + $0x60] sm:$0xff]
    %v1526 = vld [vmem:[%s1518 + $0x68] sm:$0xff]
    %v1527 = vld [vmem:[%s1518 + $0x80] sm:$0xff]
    %v1528 = vld [vmem:[%s1518 + $0x88] sm:$0xff]
    %v1529 = vld [vmem:[%s1518 + $0xa0] sm:$0xff]
    %v1530 = vld [vmem:[%s1518 + $0xa8] sm:$0xff]
    %v1531 = vld [vmem:[%s1518 + $0xc0] sm:$0xff]
    %v1532 = vld [vmem:[%s1518 + $0xc8] sm:$0xff]
    %v1533 = vld [vmem:[%s1518 + $0xe0] sm:$0xff]
    %v1534 = vld [vmem:[%s1518 + $0xe8] sm:$0xff]
    %v1535 = vld [vmem:[%s1518 + $0x100] sm:$0xff]
    %v1536 = vld [vmem:[%s1518 + $0x108] sm:$0xff]
    %v1537 = vld [vmem:[%s1518 + $0x120] sm:$0xff]
    %v1538 = vld [vmem:[%s1518 + $0x128] sm:$0xff]
    %v1539 = vld [vmem:[%s1518 + $0x140] sm:$0xff]
    %v1540 = vld [vmem:[%s1518 + $0x148] sm:$0xff]
    %v1541 = vld [vmem:[%s1518 + $0x160] sm:$0xff]
    %v1542 = vld [vmem:[%s1518 + $0x168] sm:$0xff]
    %v1543 = vld [vmem:[%s1518 + $0x180] sm:$0xff]
    %v1544 = vld [vmem:[%s1518 + $0x188] sm:$0xff]
    %v1545 = vld [vmem:[%s1518 + $0x1a0] sm:$0xff]
    %v1546 = vld [vmem:[%s1518 + $0x1a8] sm:$0xff]
    %v1547 = vld [vmem:[%s1518 + $0x1c0] sm:$0xff]
    %v1548 = vld [vmem:[%s1518 + $0x1c8] sm:$0xff]
    %v1549 = vld [vmem:[%s1518 + $0x1e0] sm:$0xff]
    %v1550 = vld [vmem:[%s1518 + $0x1e8] sm:$0xff]
    %v1551 = vmax.f32 %v1486, %v1519
    %v1552 = vmax.f32 %v1487, %v1520
    %v1553 = vmax.f32 %v1488, %v1521
    %v1554 = vmax.f32 %v1489, %v1522
    %v1555 = vmax.f32 %v1490, %v1523
    %v1556 = vmax.f32 %v1491, %v1524
    %v1557 = vmax.f32 %v1492, %v1525
    %v1558 = vmax.f32 %v1493, %v1526
    %v1559 = vmax.f32 %v1494, %v1527
    %v1560 = vmax.f32 %v1495, %v1528
    %v1561 = vmax.f32 %v1496, %v1529
    %v1562 = vmax.f32 %v1497, %v1530
    %v1563 = vmax.f32 %v1498, %v1531
    %v1564 = vmax.f32 %v1499, %v1532
    %v1565 = vmax.f32 %v1500, %v1533
    %v1566 = vmax.f32 %v1501, %v1534
    %v1567 = vmax.f32 %v1502, %v1535
    %v1568 = vmax.f32 %v1503, %v1536
    %v1569 = vmax.f32 %v1504, %v1537
    %v1570 = vmax.f32 %v1505, %v1538
    %v1571 = vmax.f32 %v1506, %v1539
    %v1572 = vmax.f32 %v1507, %v1540
    %v1573 = vmax.f32 %v1508, %v1541
    %v1574 = vmax.f32 %v1509, %v1542
    %v1575 = vmax.f32 %v1510, %v1543
    %v1576 = vmax.f32 %v1511, %v1544
    %v1577 = vmax.f32 %v1512, %v1545
    %v1578 = vmax.f32 %v1513, %v1546
    %v1579 = vmax.f32 %v1514, %v1547
    %v1580 = vmax.f32 %v1515, %v1548
    %v1581 = vmax.f32 %v1516, %v1549
    %v1582 = vmax.f32 %v1517, %v1550
    %1583 = vst.msk [vmem:[#allocation5] sm:$0xff] %vm1421, %v1551
    %1584 = vst.msk [vmem:[#allocation5 + $0x8] sm:$0xff] %vm1421, %v1552
    %1585 = vst.msk [vmem:[#allocation5 + $0x10] sm:$0xff] %vm1421, %v1553
    %1586 = vst.msk [vmem:[#allocation5 + $0x18] sm:$0xff] %vm1421, %v1554
    %1587 = vst.msk [vmem:[#allocation5 + $0x20] sm:$0xff] %vm1421, %v1555
    %1588 = vst.msk [vmem:[#allocation5 + $0x28] sm:$0xff] %vm1421, %v1556
    %1589 = vst.msk [vmem:[#allocation5 + $0x30] sm:$0xff] %vm1421, %v1557
    %1590 = vst.msk [vmem:[#allocation5 + $0x38] sm:$0xff] %vm1421, %v1558
    %1591 = vst.msk [vmem:[#allocation5 + $0x40] sm:$0xff] %vm1421, %v1559
    %1592 = vst.msk [vmem:[#allocation5 + $0x48] sm:$0xff] %vm1421, %v1560
    %1593 = vst.msk [vmem:[#allocation5 + $0x50] sm:$0xff] %vm1421, %v1561
    %1594 = vst.msk [vmem:[#allocation5 + $0x58] sm:$0xff] %vm1421, %v1562
    %1595 = vst.msk [vmem:[#allocation5 + $0x60] sm:$0xff] %vm1421, %v1563
    %1596 = vst.msk [vmem:[#allocation5 + $0x68] sm:$0xff] %vm1421, %v1564
    %1597 = vst.msk [vmem:[#allocation5 + $0x70] sm:$0xff] %vm1421, %v1565
    %1598 = vst.msk [vmem:[#allocation5 + $0x78] sm:$0xff] %vm1421, %v1566
    %1599 = vst.msk [vmem:[#allocation5 + $0x80] sm:$0xff] %vm1421, %v1567
    %1600 = vst.msk [vmem:[#allocation5 + $0x88] sm:$0xff] %vm1421, %v1568
    %1601 = vst.msk [vmem:[#allocation5 + $0x90] sm:$0xff] %vm1421, %v1569
    %1602 = vst.msk [vmem:[#allocation5 + $0x98] sm:$0xff] %vm1421, %v1570
    %1603 = vst.msk [vmem:[#allocation5 + $0xa0] sm:$0xff] %vm1421, %v1571
    %1604 = vst.msk [vmem:[#allocation5 + $0xa8] sm:$0xff] %vm1421, %v1572
    %1605 = vst.msk [vmem:[#allocation5 + $0xb0] sm:$0xff] %vm1421, %v1573
    %1606 = vst.msk [vmem:[#allocation5 + $0xb8] sm:$0xff] %vm1421, %v1574
    %1607 = vst.msk [vmem:[#allocation5 + $0xc0] sm:$0xff] %vm1421, %v1575
    %1608 = vst.msk [vmem:[#allocation5 + $0xc8] sm:$0xff] %vm1421, %v1576
    %1609 = vst.msk [vmem:[#allocation5 + $0xd0] sm:$0xff] %vm1421, %v1577
    %1610 = vst.msk [vmem:[#allocation5 + $0xd8] sm:$0xff] %vm1421, %v1578
    %1611 = vst.msk [vmem:[#allocation5 + $0xe0] sm:$0xff] %vm1421, %v1579
    %1612 = vst.msk [vmem:[#allocation5 + $0xe8] sm:$0xff] %vm1421, %v1580
    %1613 = vst.msk [vmem:[#allocation5 + $0xf0] sm:$0xff] %vm1421, %v1581
    %1614 = vst.msk [vmem:[#allocation5 + $0xf8] sm:$0xff] %vm1421, %v1582
    %v1615 = vld [vmem:[#allocation5] ss:$2 sm:$0xff]
    %s1616 = scalar_lea.vmem [#allocation5], 16
    %v1617 = vld [vmem:[%s1616] ss:$2 sm:$0xff]
    %s1618 = scalar_lea.vmem [#allocation5], 32
    %v1619 = vld [vmem:[%s1618] ss:$2 sm:$0xff]
    %s1620 = scalar_lea.vmem [#allocation5], 48
    %v1621 = vld [vmem:[%s1620] ss:$2 sm:$0xff]
    %s1622 = scalar_lea.vmem [#allocation5], 64
    %v1623 = vld [vmem:[%s1622] ss:$2 sm:$0xff]
    %s1624 = scalar_lea.vmem [#allocation5], 80
    %v1625 = vld [vmem:[%s1624] ss:$2 sm:$0xff]
    %s1626 = scalar_lea.vmem [#allocation5], 96
    %v1627 = vld [vmem:[%s1626] ss:$2 sm:$0xff]
    %s1628 = scalar_lea.vmem [#allocation5], 112
    %v1629 = vld [vmem:[%s1628] ss:$2 sm:$0xff]
    %s1630 = scalar_lea.vmem [#allocation5], 128
    %v1631 = vld [vmem:[%s1630] ss:$2 sm:$0xff]
    %s1632 = scalar_lea.vmem [#allocation5], 144
    %v1633 = vld [vmem:[%s1632] ss:$2 sm:$0xff]
    %s1634 = scalar_lea.vmem [#allocation5], 160
    %v1635 = vld [vmem:[%s1634] ss:$2 sm:$0xff]
    %s1636 = scalar_lea.vmem [#allocation5], 176
    %v1637 = vld [vmem:[%s1636] ss:$2 sm:$0xff]
    %s1638 = scalar_lea.vmem [#allocation5], 192
    %v1639 = vld [vmem:[%s1638] ss:$2 sm:$0xff]
    %s1640 = scalar_lea.vmem [#allocation5], 208
    %v1641 = vld [vmem:[%s1640] ss:$2 sm:$0xff]
    %s1642 = scalar_lea.vmem [#allocation5], 224
    %v1643 = vld [vmem:[%s1642] ss:$2 sm:$0xff]
    %s1644 = scalar_lea.vmem [#allocation5], 240
    %v1645 = vld [vmem:[%s1644] ss:$2 sm:$0xff]
    %s1646 = scalar_lea.vmem [#allocation5], 1
    %v1647 = vld [vmem:[%s1646] ss:$2 sm:$0xff]
    %s1648 = scalar_lea.vmem [#allocation5], 17
    %v1649 = vld [vmem:[%s1648] ss:$2 sm:$0xff]
    %s1650 = scalar_lea.vmem [#allocation5], 33
    %v1651 = vld [vmem:[%s1650] ss:$2 sm:$0xff]
    %s1652 = scalar_lea.vmem [#allocation5], 49
    %v1653 = vld [vmem:[%s1652] ss:$2 sm:$0xff]
    %s1654 = scalar_lea.vmem [#allocation5], 65
    %v1655 = vld [vmem:[%s1654] ss:$2 sm:$0xff]
    %s1656 = scalar_lea.vmem [#allocation5], 81
    %v1657 = vld [vmem:[%s1656] ss:$2 sm:$0xff]
    %s1658 = scalar_lea.vmem [#allocation5], 97
    %v1659 = vld [vmem:[%s1658] ss:$2 sm:$0xff]
    %s1660 = scalar_lea.vmem [#allocation5], 113
    %v1661 = vld [vmem:[%s1660] ss:$2 sm:$0xff]
    %s1662 = scalar_lea.vmem [#allocation5], 129
    %v1663 = vld [vmem:[%s1662] ss:$2 sm:$0xff]
    %s1664 = scalar_lea.vmem [#allocation5], 145
    %v1665 = vld [vmem:[%s1664] ss:$2 sm:$0xff]
    %s1666 = scalar_lea.vmem [#allocation5], 161
    %v1667 = vld [vmem:[%s1666] ss:$2 sm:$0xff]
    %s1668 = scalar_lea.vmem [#allocation5], 177
    %v1669 = vld [vmem:[%s1668] ss:$2 sm:$0xff]
    %s1670 = scalar_lea.vmem [#allocation5], 193
    %v1671 = vld [vmem:[%s1670] ss:$2 sm:$0xff]
    %s1672 = scalar_lea.vmem [#allocation5], 209
    %v1673 = vld [vmem:[%s1672] ss:$2 sm:$0xff]
    %s1674 = scalar_lea.vmem [#allocation5], 225
    %v1675 = vld [vmem:[%s1674] ss:$2 sm:$0xff]
    %s1676 = scalar_lea.vmem [#allocation5], 241
    %v1677 = vld [vmem:[%s1676] ss:$2 sm:$0xff]
    %v1678 = vmax.f32 %v1615, %v1647
    %v1679 = vmax.f32 %v1617, %v1649
    %v1680 = vmax.f32 %v1619, %v1651
    %v1681 = vmax.f32 %v1621, %v1653
    %v1682 = vmax.f32 %v1623, %v1655
    %v1683 = vmax.f32 %v1625, %v1657
    %v1684 = vmax.f32 %v1627, %v1659
    %v1685 = vmax.f32 %v1629, %v1661
    %v1686 = vmax.f32 %v1631, %v1663
    %v1687 = vmax.f32 %v1633, %v1665
    %v1688 = vmax.f32 %v1635, %v1667
    %v1689 = vmax.f32 %v1637, %v1669
    %v1690 = vmax.f32 %v1639, %v1671
    %v1691 = vmax.f32 %v1641, %v1673
    %v1692 = vmax.f32 %v1643, %v1675
    %v1693 = vmax.f32 %v1645, %v1677
    %v1694 = vpack.c.bf16 %v1679, %v1678
    %v1695 = vpack.c.bf16 %v1681, %v1680
    %v1696 = vpack.c.bf16 %v1683, %v1682
    %v1697 = vpack.c.bf16 %v1685, %v1684
    %v1698 = vpack.c.bf16 %v1687, %v1686
    %v1699 = vpack.c.bf16 %v1689, %v1688
    %v1700 = vpack.c.bf16 %v1691, %v1690
    %v1701 = vpack.c.bf16 %v1693, %v1692
    %v1710 = vunpack.c.l.b16 %v1694
    %v1711 = vunpack.c.h.b16 %v1694
    %v1712 = vunpack.c.l.b16 %v1695
    %v1713 = vunpack.c.h.b16 %v1695
    %v1714 = vunpack.c.l.b16 %v1696
    %v1715 = vunpack.c.h.b16 %v1696
    %v1716 = vunpack.c.l.b16 %v1697
    %v1717 = vunpack.c.h.b16 %v1697
    %v1718 = vunpack.c.l.b16 %v1698
    %v1719 = vunpack.c.h.b16 %v1698
    %v1720 = vunpack.c.l.b16 %v1699
    %v1721 = vunpack.c.h.b16 %v1699
    %v1722 = vunpack.c.l.b16 %v1700
    %v1723 = vunpack.c.h.b16 %v1700
    %v1724 = vunpack.c.l.b16 %v1701
    %v1725 = vunpack.c.h.b16 %v1701
    %v1726 = vpack.c.b16 %v1710, %v1710
    %v1727 = vpack.c.b16 %v1711, %v1711
    %v1728 = vpack.c.b16 %v1712, %v1712
    %v1729 = vpack.c.b16 %v1713, %v1713
    %v1730 = vpack.c.b16 %v1714, %v1714
    %v1731 = vpack.c.b16 %v1715, %v1715
    %v1732 = vpack.c.b16 %v1716, %v1716
    %v1733 = vpack.c.b16 %v1717, %v1717
    %v1734 = vpack.c.b16 %v1718, %v1718
    %v1735 = vpack.c.b16 %v1719, %v1719
    %v1736 = vpack.c.b16 %v1720, %v1720
    %v1737 = vpack.c.b16 %v1721, %v1721
    %v1738 = vpack.c.b16 %v1722, %v1722
    %v1739 = vpack.c.b16 %v1723, %v1723
    %v1740 = vpack.c.b16 %v1724, %v1724
    %v1741 = vpack.c.b16 %v1725, %v1725
    %vm1742 = vsmask.f32 256
    %vm1743 = vsmask.f32 4368
    %vm1744 = vmor %vm1742, %vm1743
    %v1746 = vshrl.u32 %v1726, 16
    %v1748 = vrot.slane %v1746, 7
    %v1749 = vshll.u32 %v1726, 16
    %v1751 = vor.u32 %v1748, %v1749
    %v1752 = vrot.slane %v1748, 4
    %v1754 = vshrl.u32 %v1727, 16
    %v1756 = vrot.slane %v1754, 7
    %v1757 = vshll.u32 %v1727, 16
    %v1759 = vor.u32 %v1756, %v1757
    %v1760 = vsel %vm1744, %v1752, %v1759
    %v1761 = vrot.slane %v1756, 4
    %v1763 = vshrl.u32 %v1728, 16
    %v1765 = vrot.slane %v1763, 7
    %v1766 = vshll.u32 %v1728, 16
    %v1768 = vor.u32 %v1765, %v1766
    %v1769 = vsel %vm1744, %v1761, %v1768
    %v1770 = vrot.slane %v1765, 4
    %v1772 = vshrl.u32 %v1729, 16
    %v1774 = vrot.slane %v1772, 7
    %v1775 = vshll.u32 %v1729, 16
    %v1777 = vor.u32 %v1774, %v1775
    %v1778 = vsel %vm1744, %v1770, %v1777
    %v1779 = vrot.slane %v1774, 4
    %v1781 = vshrl.u32 %v1730, 16
    %v1783 = vrot.slane %v1781, 7
    %v1784 = vshll.u32 %v1730, 16
    %v1786 = vor.u32 %v1783, %v1784
    %v1787 = vsel %vm1744, %v1779, %v1786
    %v1788 = vrot.slane %v1783, 4
    %v1790 = vshrl.u32 %v1731, 16
    %v1792 = vrot.slane %v1790, 7
    %v1793 = vshll.u32 %v1731, 16
    %v1795 = vor.u32 %v1792, %v1793
    %v1796 = vsel %vm1744, %v1788, %v1795
    %v1797 = vrot.slane %v1792, 4
    %v1799 = vshrl.u32 %v1732, 16
    %v1801 = vrot.slane %v1799, 7
    %v1802 = vshll.u32 %v1732, 16
    %v1804 = vor.u32 %v1801, %v1802
    %v1805 = vsel %vm1744, %v1797, %v1804
    %v1806 = vrot.slane %v1801, 4
    %v1808 = vshrl.u32 %v1733, 16
    %v1810 = vrot.slane %v1808, 7
    %v1811 = vshll.u32 %v1733, 16
    %v1813 = vor.u32 %v1810, %v1811
    %v1814 = vsel %vm1744, %v1806, %v1813
    %v1815 = vrot.slane %v1810, 4
    %v1817 = vshrl.u32 %v1734, 16
    %v1819 = vrot.slane %v1817, 7
    %v1820 = vshll.u32 %v1734, 16
    %v1822 = vor.u32 %v1819, %v1820
    %v1823 = vrot.slane %v1819, 4
    %v1825 = vshrl.u32 %v1735, 16
    %v1827 = vrot.slane %v1825, 7
    %v1828 = vshll.u32 %v1735, 16
    %v1830 = vor.u32 %v1827, %v1828
    %v1831 = vsel %vm1744, %v1823, %v1830
    %v1832 = vrot.slane %v1827, 4
    %v1834 = vshrl.u32 %v1736, 16
    %v1836 = vrot.slane %v1834, 7
    %v1837 = vshll.u32 %v1736, 16
    %v1839 = vor.u32 %v1836, %v1837
    %v1840 = vsel %vm1744, %v1832, %v1839
    %v1841 = vrot.slane %v1836, 4
    %v1843 = vshrl.u32 %v1737, 16
    %v1845 = vrot.slane %v1843, 7
    %v1846 = vshll.u32 %v1737, 16
    %v1848 = vor.u32 %v1845, %v1846
    %v1849 = vsel %vm1744, %v1841, %v1848
    %v1850 = vrot.slane %v1845, 4
    %v1852 = vshrl.u32 %v1738, 16
    %v1854 = vrot.slane %v1852, 7
    %v1855 = vshll.u32 %v1738, 16
    %v1857 = vor.u32 %v1854, %v1855
    %v1858 = vsel %vm1744, %v1850, %v1857
    %v1859 = vrot.slane %v1854, 4
    %v1861 = vshrl.u32 %v1739, 16
    %v1863 = vrot.slane %v1861, 7
    %v1864 = vshll.u32 %v1739, 16
    %v1866 = vor.u32 %v1863, %v1864
    %v1867 = vsel %vm1744, %v1859, %v1866
    %v1868 = vrot.slane %v1863, 4
    %v1870 = vshrl.u32 %v1740, 16
    %v1872 = vrot.slane %v1870, 7
    %v1873 = vshll.u32 %v1740, 16
    %v1875 = vor.u32 %v1872, %v1873
    %v1876 = vsel %vm1744, %v1868, %v1875
    %v1877 = vrot.slane %v1872, 4
    %v1879 = vshrl.u32 %v1741, 16
    %v1881 = vrot.slane %v1879, 7
    %v1882 = vshll.u32 %v1741, 16
    %v1884 = vor.u32 %v1881, %v1882
    %v1885 = vsel %vm1744, %v1877, %v1884
    %v1886 = vrot.slane %v1881, 4
    %vm1905 = vcmask 257024
    %vm1906 = vsmask.f32 7938
    %vm1907 = vmand %vm1905, %vm1906
    %v1908 = vld [vmem:[#allocation2 + $0x4] sm:$0xf]
    %v1909 = vsel %vm1907, %v1751, %v1908
    %1910 = vst [vmem:[#allocation2 + $0x4] sm:$0xf] %v1909
    %1911 = vst.msk [vmem:[#allocation2 + $0x8] sm:$0xf] %vm63, %v1760
    %1912 = vst.msk [vmem:[#allocation2 + $0xc] sm:$0xf] %vm63, %v1769
    %1913 = vst.msk [vmem:[#allocation2 + $0x10] sm:$0xf] %vm63, %v1778
    %1914 = vst.msk [vmem:[#allocation2 + $0x14] sm:$0xf] %vm63, %v1787
    %1915 = vst.msk [vmem:[#allocation2 + $0x18] sm:$0xf] %vm63, %v1796
    %1916 = vst.msk [vmem:[#allocation2 + $0x1c] sm:$0xf] %vm63, %v1805
    %1917 = vst.msk [vmem:[#allocation2 + $0x20] sm:$0xf] %vm63, %v1814
    %vm1918 = vcmask 253952
    %vm1919 = vmand %vm1918, %vm1742
    %v1920 = vld [vmem:[#allocation2 + $0x24] sm:$0x1]
    %v1921 = vsel %vm1919, %v1815, %v1920
    %1922 = vst [vmem:[#allocation2 + $0x24] sm:$0x1] %v1921
    %v1923 = vld [vmem:[#allocation2 + $0x30] sm:$0xf]
    %v1924 = vsel %vm1907, %v1822, %v1923
    %1925 = vst [vmem:[#allocation2 + $0x30] sm:$0xf] %v1924
    %1926 = vst.msk [vmem:[#allocation2 + $0x34] sm:$0xf] %vm63, %v1831
    %1927 = vst.msk [vmem:[#allocation2 + $0x38] sm:$0xf] %vm63, %v1840
    %1928 = vst.msk [vmem:[#allocation2 + $0x3c] sm:$0xf] %vm63, %v1849
    %1929 = vst.msk [vmem:[#allocation2 + $0x40] sm:$0xf] %vm63, %v1858
    %1930 = vst.msk [vmem:[#allocation2 + $0x44] sm:$0xf] %vm63, %v1867
    %1931 = vst.msk [vmem:[#allocation2 + $0x48] sm:$0xf] %vm63, %v1876
    %1932 = vst.msk [vmem:[#allocation2 + $0x4c] sm:$0xf] %vm63, %v1885
    %v1933 = vld [vmem:[#allocation2 + $0x50] sm:$0x1]
    %v1934 = vsel %vm1919, %v1886, %v1933
    %1935 = vst [vmem:[#allocation2 + $0x50] sm:$0x1] %v1934
    %v1936 = vlaneseq
    %v1937 = vshrl.u32 %v1936, 7
    %v1938 = vadd.s32 %v1937, 8
    %v1939 = vadd.s32 %v1937, 16
    %v1940 = vadd.s32 %v1937, 24
    %v1941 = vadd.s32 %v1937, 32
    %v1942 = vadd.s32 %v1937, 40
    %v1943 = vadd.s32 %v1937, 48
    %v1944 = vadd.s32 %v1937, 56
    %v1945 = vadd.s32 %v1937, 64
    %v1946 = vadd.s32 %v1937, 72
    %v1947 = vadd.s32 %v1937, 80
    %v1948 = vadd.s32 %v1937, 88
    %v1949 = vadd.s32 %v1937, 96
    %v1950 = vadd.s32 %v1937, 104
    %v1951 = vadd.s32 %v1937, 112
    %v1952 = vadd.s32 %v1937, 120
    %vm1953 = vcmp.lt.s32.totalorder %v1937, 0
    %v1954 = vsub.s32 0, %v1937
    %v1955 = vsel %vm1953, %v1954, %v1937
    %v1956 = vshrl.u32 %v1955, 3
    %v1957 = vand.u32 %v1955, 7
    %v1958 = vsub.s32 0, %v1957
    %v1959 = vsel %vm1953, %v1958, %v1957
    %vm1960 = vcmp.lt.s32.totalorder %v1938, 0
    %v1961 = vsub.s32 0, %v1938
    %v1962 = vsel %vm1960, %v1961, %v1938
    %v1963 = vshrl.u32 %v1962, 3
    %v1964 = vand.u32 %v1962, 7
    %v1965 = vsub.s32 0, %v1964
    %v1966 = vsel %vm1960, %v1965, %v1964
    %vm1967 = vcmp.lt.s32.totalorder %v1939, 0
    %v1968 = vsub.s32 0, %v1939
    %v1969 = vsel %vm1967, %v1968, %v1939
    %v1970 = vshrl.u32 %v1969, 3
    %v1971 = vand.u32 %v1969, 7
    %v1972 = vsub.s32 0, %v1971
    %v1973 = vsel %vm1967, %v1972, %v1971
    %vm1974 = vcmp.lt.s32.totalorder %v1940, 0
    %v1975 = vsub.s32 0, %v1940
    %v1976 = vsel %vm1974, %v1975, %v1940
    %v1977 = vshrl.u32 %v1976, 3
    %v1978 = vand.u32 %v1976, 7
    %v1979 = vsub.s32 0, %v1978
    %v1980 = vsel %vm1974, %v1979, %v1978
    %vm1981 = vcmp.lt.s32.totalorder %v1941, 0
    %v1982 = vsub.s32 0, %v1941
    %v1983 = vsel %vm1981, %v1982, %v1941
    %v1984 = vshrl.u32 %v1983, 3
    %v1985 = vand.u32 %v1983, 7
    %v1986 = vsub.s32 0, %v1985
    %v1987 = vsel %vm1981, %v1986, %v1985
    %vm1988 = vcmp.lt.s32.totalorder %v1942, 0
    %v1989 = vsub.s32 0, %v1942
    %v1990 = vsel %vm1988, %v1989, %v1942
    %v1991 = vshrl.u32 %v1990, 3
    %v1992 = vand.u32 %v1990, 7
    %v1993 = vsub.s32 0, %v1992
    %v1994 = vsel %vm1988, %v1993, %v1992
    %vm1995 = vcmp.lt.s32.totalorder %v1943, 0
    %v1996 = vsub.s32 0, %v1943
    %v1997 = vsel %vm1995, %v1996, %v1943
    %v1998 = vshrl.u32 %v1997, 3
    %v1999 = vand.u32 %v1997, 7
    %v2000 = vsub.s32 0, %v1999
    %v2001 = vsel %vm1995, %v2000, %v1999
    %vm2002 = vcmp.lt.s32.totalorder %v1944, 0
    %v2003 = vsub.s32 0, %v1944
    %v2004 = vsel %vm2002, %v2003, %v1944
    %v2005 = vshrl.u32 %v2004, 3
    %v2006 = vand.u32 %v2004, 7
    %v2007 = vsub.s32 0, %v2006
    %v2008 = vsel %vm2002, %v2007, %v2006
    %vm2009 = vcmp.lt.s32.totalorder %v1945, 0
    %v2010 = vsub.s32 0, %v1945
    %v2011 = vsel %vm2009, %v2010, %v1945
    %v2012 = vshrl.u32 %v2011, 3
    %v2013 = vand.u32 %v2011, 7
    %v2014 = vsub.s32 0, %v2013
    %v2015 = vsel %vm2009, %v2014, %v2013
    %vm2016 = vcmp.lt.s32.totalorder %v1946, 0
    %v2017 = vsub.s32 0, %v1946
    %v2018 = vsel %vm2016, %v2017, %v1946
    %v2019 = vshrl.u32 %v2018, 3
    %v2020 = vand.u32 %v2018, 7
    %v2021 = vsub.s32 0, %v2020
    %v2022 = vsel %vm2016, %v2021, %v2020
    %vm2023 = vcmp.lt.s32.totalorder %v1947, 0
    %v2024 = vsub.s32 0, %v1947
    %v2025 = vsel %vm2023, %v2024, %v1947
    %v2026 = vshrl.u32 %v2025, 3
    %v2027 = vand.u32 %v2025, 7
    %v2028 = vsub.s32 0, %v2027
    %v2029 = vsel %vm2023, %v2028, %v2027
    %vm2030 = vcmp.lt.s32.totalorder %v1948, 0
    %v2031 = vsub.s32 0, %v1948
    %v2032 = vsel %vm2030, %v2031, %v1948
    %v2033 = vshrl.u32 %v2032, 3
    %v2034 = vand.u32 %v2032, 7
    %v2035 = vsub.s32 0, %v2034
    %v2036 = vsel %vm2030, %v2035, %v2034
    %vm2037 = vcmp.lt.s32.totalorder %v1949, 0
    %v2038 = vsub.s32 0, %v1949
    %v2039 = vsel %vm2037, %v2038, %v1949
    %v2040 = vshrl.u32 %v2039, 3
    %v2041 = vand.u32 %v2039, 7
    %v2042 = vsub.s32 0, %v2041
    %v2043 = vsel %vm2037, %v2042, %v2041
    %vm2044 = vcmp.lt.s32.totalorder %v1950, 0
    %v2045 = vsub.s32 0, %v1950
    %v2046 = vsel %vm2044, %v2045, %v1950
    %v2047 = vshrl.u32 %v2046, 3
    %v2048 = vand.u32 %v2046, 7
    %v2049 = vsub.s32 0, %v2048
    %v2050 = vsel %vm2044, %v2049, %v2048
    %vm2051 = vcmp.lt.s32.totalorder %v1951, 0
    %v2052 = vsub.s32 0, %v1951
    %v2053 = vsel %vm2051, %v2052, %v1951
    %v2054 = vshrl.u32 %v2053, 3
    %v2055 = vand.u32 %v2053, 7
    %v2056 = vsub.s32 0, %v2055
    %v2057 = vsel %vm2051, %v2056, %v2055
    %vm2058 = vcmp.lt.s32.totalorder %v1952, 0
    %v2059 = vsub.s32 0, %v1952
    %v2060 = vsel %vm2058, %v2059, %v1952
    %v2061 = vshrl.u32 %v2060, 3
    %v2062 = vand.u32 %v2060, 7
    %v2063 = vsub.s32 0, %v2062
    %v2064 = vsel %vm2058, %v2063, %v2062
    %vm2065 = vcmp.ne.s32.totalorder %v1959, 0
    %vm2066 = vcmp.ne.s32.totalorder %v1966, 0
    %vm2067 = vcmp.ne.s32.totalorder %v1973, 0
    %vm2068 = vcmp.ne.s32.totalorder %v1980, 0
    %vm2069 = vcmp.ne.s32.totalorder %v1987, 0
    %vm2070 = vcmp.ne.s32.totalorder %v1994, 0
    %vm2071 = vcmp.ne.s32.totalorder %v2001, 0
    %vm2072 = vcmp.ne.s32.totalorder %v2008, 0
    %vm2073 = vcmp.ne.s32.totalorder %v2015, 0
    %vm2074 = vcmp.ne.s32.totalorder %v2022, 0
    %vm2075 = vcmp.ne.s32.totalorder %v2029, 0
    %vm2076 = vcmp.ne.s32.totalorder %v2036, 0
    %vm2077 = vcmp.ne.s32.totalorder %v2043, 0
    %vm2078 = vcmp.ne.s32.totalorder %v2050, 0
    %vm2079 = vcmp.ne.s32.totalorder %v2057, 0
    %vm2080 = vcmp.ne.s32.totalorder %v2064, 0
    %vm2081 = vcmp.lt.s32.totalorder %v1959, 0
    %vm2082 = vcmp.lt.s32.totalorder %v1966, 0
    %vm2083 = vcmp.lt.s32.totalorder %v1973, 0
    %vm2084 = vcmp.lt.s32.totalorder %v1980, 0
    %vm2085 = vcmp.lt.s32.totalorder %v1987, 0
    %vm2086 = vcmp.lt.s32.totalorder %v1994, 0
    %vm2087 = vcmp.lt.s32.totalorder %v2001, 0
    %vm2088 = vcmp.lt.s32.totalorder %v2008, 0
    %vm2089 = vcmp.lt.s32.totalorder %v2015, 0
    %vm2090 = vcmp.lt.s32.totalorder %v2022, 0
    %vm2091 = vcmp.lt.s32.totalorder %v2029, 0
    %vm2092 = vcmp.lt.s32.totalorder %v2036, 0
    %vm2093 = vcmp.lt.s32.totalorder %v2043, 0
    %vm2094 = vcmp.lt.s32.totalorder %v2050, 0
    %vm2095 = vcmp.lt.s32.totalorder %v2057, 0
    %vm2096 = vcmp.lt.s32.totalorder %v2064, 0
    %vm2097 = vmand %vm2081, %vm2065
    %vm2098 = vmand %vm2082, %vm2066
    %vm2099 = vmand %vm2083, %vm2067
    %vm2100 = vmand %vm2084, %vm2068
    %vm2101 = vmand %vm2085, %vm2069
    %vm2102 = vmand %vm2086, %vm2070
    %vm2103 = vmand %vm2087, %vm2071
    %vm2104 = vmand %vm2088, %vm2072
    %vm2105 = vmand %vm2089, %vm2073
    %vm2106 = vmand %vm2090, %vm2074
    %vm2107 = vmand %vm2091, %vm2075
    %vm2108 = vmand %vm2092, %vm2076
    %vm2109 = vmand %vm2093, %vm2077
    %vm2110 = vmand %vm2094, %vm2078
    %vm2111 = vmand %vm2095, %vm2079
    %vm2112 = vmand %vm2096, %vm2080
    %v2113 = vadd.s32 %v1959, 8
    %v2114 = vadd.s32 %v1966, 8
    %v2115 = vadd.s32 %v1973, 8
    %v2116 = vadd.s32 %v1980, 8
    %v2117 = vadd.s32 %v1987, 8
    %v2118 = vadd.s32 %v1994, 8
    %v2119 = vadd.s32 %v2001, 8
    %v2120 = vadd.s32 %v2008, 8
    %v2121 = vadd.s32 %v2015, 8
    %v2122 = vadd.s32 %v2022, 8
    %v2123 = vadd.s32 %v2029, 8
    %v2124 = vadd.s32 %v2036, 8
    %v2125 = vadd.s32 %v2043, 8
    %v2126 = vadd.s32 %v2050, 8
    %v2127 = vadd.s32 %v2057, 8
    %v2128 = vadd.s32 %v2064, 8
    %v2129 = vsel %vm2097, %v2113, %v1959
    %v2130 = vsel %vm2098, %v2114, %v1966
    %v2131 = vsel %vm2099, %v2115, %v1973
    %v2132 = vsel %vm2100, %v2116, %v1980
    %v2133 = vsel %vm2101, %v2117, %v1987
    %v2134 = vsel %vm2102, %v2118, %v1994
    %v2135 = vsel %vm2103, %v2119, %v2001
    %v2136 = vsel %vm2104, %v2120, %v2008
    %v2137 = vsel %vm2105, %v2121, %v2015
    %v2138 = vsel %vm2106, %v2122, %v2022
    %v2139 = vsel %vm2107, %v2123, %v2029
    %v2140 = vsel %vm2108, %v2124, %v2036
    %v2141 = vsel %vm2109, %v2125, %v2043
    %v2142 = vsel %vm2110, %v2126, %v2050
    %v2143 = vsel %vm2111, %v2127, %v2057
    %v2144 = vsel %vm2112, %v2128, %v2064
    %vm2145 = vcmp.ge.s32.totalorder %v2129, 1
    %vm2146 = vcmp.ge.s32.totalorder %v2130, 1
    %vm2147 = vcmp.ge.s32.totalorder %v2131, 1
    %vm2148 = vcmp.ge.s32.totalorder %v2132, 1
    %vm2149 = vcmp.ge.s32.totalorder %v2133, 1
    %vm2150 = vcmp.ge.s32.totalorder %v2134, 1
    %vm2151 = vcmp.ge.s32.totalorder %v2135, 1
    %vm2152 = vcmp.ge.s32.totalorder %v2136, 1
    %vm2153 = vcmp.ge.s32.totalorder %v2137, 1
    %vm2154 = vcmp.ge.s32.totalorder %v2138, 1
    %vm2155 = vcmp.ge.s32.totalorder %v2139, 1
    %vm2156 = vcmp.ge.s32.totalorder %v2140, 1
    %vm2157 = vcmp.ge.s32.totalorder %v2141, 1
    %vm2158 = vcmp.ge.s32.totalorder %v2142, 1
    %vm2159 = vcmp.ge.s32.totalorder %v2143, 1
    %vm2160 = vcmp.ge.s32.totalorder %v2144, 1
    %v2161 = vsel %vm2145, 1, 0
    %v2162 = vsel %vm2146, 1, 0
    %v2163 = vsel %vm2147, 1, 0
    %v2164 = vsel %vm2148, 1, 0
    %v2165 = vsel %vm2149, 1, 0
    %v2166 = vsel %vm2150, 1, 0
    %v2167 = vsel %vm2151, 1, 0
    %v2168 = vsel %vm2152, 1, 0
    %v2169 = vsel %vm2153, 1, 0
    %v2170 = vsel %vm2154, 1, 0
    %v2171 = vsel %vm2155, 1, 0
    %v2172 = vsel %vm2156, 1, 0
    %v2173 = vsel %vm2157, 1, 0
    %v2174 = vsel %vm2158, 1, 0
    %v2175 = vsel %vm2159, 1, 0
    %v2176 = vsel %vm2160, 1, 0
    %v2177 = vcvt.s32.f32 %v2161
    %v2178 = vcvt.s32.f32 %v2162
    %v2179 = vcvt.s32.f32 %v2163
    %v2180 = vcvt.s32.f32 %v2164
    %v2181 = vcvt.s32.f32 %v2165
    %v2182 = vcvt.s32.f32 %v2166
    %v2183 = vcvt.s32.f32 %v2167
    %v2184 = vcvt.s32.f32 %v2168
    %v2185 = vcvt.s32.f32 %v2169
    %v2186 = vcvt.s32.f32 %v2170
    %v2187 = vcvt.s32.f32 %v2171
    %v2188 = vcvt.s32.f32 %v2172
    %v2189 = vcvt.s32.f32 %v2173
    %v2190 = vcvt.s32.f32 %v2174
    %v2191 = vcvt.s32.f32 %v2175
    %v2192 = vcvt.s32.f32 %v2176
    %vm2193 = vcmp.le.s32.totalorder %v2129, 6
    %vm2194 = vcmp.le.s32.totalorder %v2130, 6
    %vm2195 = vcmp.le.s32.totalorder %v2131, 6
    %vm2196 = vcmp.le.s32.totalorder %v2132, 6
    %vm2197 = vcmp.le.s32.totalorder %v2133, 6
    %vm2198 = vcmp.le.s32.totalorder %v2134, 6
    %vm2199 = vcmp.le.s32.totalorder %v2135, 6
    %vm2200 = vcmp.le.s32.totalorder %v2136, 6
    %vm2201 = vcmp.le.s32.totalorder %v2137, 6
    %vm2202 = vcmp.le.s32.totalorder %v2138, 6
    %vm2203 = vcmp.le.s32.totalorder %v2139, 6
    %vm2204 = vcmp.le.s32.totalorder %v2140, 6
    %vm2205 = vcmp.le.s32.totalorder %v2141, 6
    %vm2206 = vcmp.le.s32.totalorder %v2142, 6
    %vm2207 = vcmp.le.s32.totalorder %v2143, 6
    %vm2208 = vcmp.le.s32.totalorder %v2144, 6
    %v2209 = vsel %vm2193, 1, 0
    %v2210 = vsel %vm2194, 1, 0
    %v2211 = vsel %vm2195, 1, 0
    %v2212 = vsel %vm2196, 1, 0
    %v2213 = vsel %vm2197, 1, 0
    %v2214 = vsel %vm2198, 1, 0
    %v2215 = vsel %vm2199, 1, 0
    %v2216 = vsel %vm2200, 1, 0
    %v2217 = vsel %vm2201, 1, 0
    %v2218 = vsel %vm2202, 1, 0
    %v2219 = vsel %vm2203, 1, 0
    %v2220 = vsel %vm2204, 1, 0
    %v2221 = vsel %vm2205, 1, 0
    %v2222 = vsel %vm2206, 1, 0
    %v2223 = vsel %vm2207, 1, 0
    %v2224 = vsel %vm2208, 1, 0
    %v2225 = vcvt.s32.f32 %v2209
    %v2226 = vcvt.s32.f32 %v2210
    %v2227 = vcvt.s32.f32 %v2211
    %v2228 = vcvt.s32.f32 %v2212
    %v2229 = vcvt.s32.f32 %v2213
    %v2230 = vcvt.s32.f32 %v2214
    %v2231 = vcvt.s32.f32 %v2215
    %v2232 = vcvt.s32.f32 %v2216
    %v2233 = vcvt.s32.f32 %v2217
    %v2234 = vcvt.s32.f32 %v2218
    %v2235 = vcvt.s32.f32 %v2219
    %v2236 = vcvt.s32.f32 %v2220
    %v2237 = vcvt.s32.f32 %v2221
    %v2238 = vcvt.s32.f32 %v2222
    %v2239 = vcvt.s32.f32 %v2223
    %v2240 = vcvt.s32.f32 %v2224
    %v2241 = vld [vmem:[#allocation2] sm:$0xf]
    %v2242 = vld [vmem:[#allocation2 + $0x4] sm:$0xf]
    %v2243 = vld [vmem:[#allocation2 + $0x8] sm:$0xf]
    %v2244 = vld [vmem:[#allocation2 + $0xc] sm:$0xf]
    %v2245 = vld [vmem:[#allocation2 + $0x10] sm:$0xf]
    %v2246 = vld [vmem:[#allocation2 + $0x14] sm:$0xf]
    %v2247 = vld [vmem:[#allocation2 + $0x18] sm:$0xf]
    %v2248 = vld [vmem:[#allocation2 + $0x1c] sm:$0xf]
    %v2249 = vld [vmem:[#allocation2 + $0x20] sm:$0x1]
    %v2250 = vld [vmem:[#allocation2 + $0x2c] sm:$0xf]
    %v2251 = vld [vmem:[#allocation2 + $0x30] sm:$0xf]
    %v2252 = vld [vmem:[#allocation2 + $0x34] sm:$0xf]
    %v2253 = vld [vmem:[#allocation2 + $0x38] sm:$0xf]
    %v2254 = vld [vmem:[#allocation2 + $0x3c] sm:$0xf]
    %v2255 = vld [vmem:[#allocation2 + $0x40] sm:$0xf]
    %v2256 = vld [vmem:[#allocation2 + $0x44] sm:$0xf]
    %v2257 = vld [vmem:[#allocation2 + $0x48] sm:$0xf]
    %v2258 = vld [vmem:[#allocation2 + $0x4c] sm:$0x1]
    %vm2259 = vsmask.f32 3328
    %vm2260 = vsmask.f32 7440
    %vm2261 = vmor %vm2259, %vm2260
    %v2263 = vshrl.u32 %v2241, 16
    %v2265 = vrot.slane %v2263, 4
    %v2266 = vshll.u32 %v2241, 16
    %v2268 = vrot.slane %v2266, 5
    %v2269 = vor.u32 %v2265, %v2268
    %v2270 = vrot.slane %v2269, 4
    %v2272 = vshll.u32 %v2242, 16
    %v2274 = vrot.slane %v2272, 5
    %v2275 = vsel %vm2261, %v2270, %v2274
    %v2276 = vshrl.u32 %v2242, 16
    %v2278 = vrot.slane %v2276, 4
    %v2279 = vor.u32 %v2278, %v2274
    %v2280 = vrot.slane %v2279, 4
    %v2282 = vshll.u32 %v2243, 16
    %v2284 = vrot.slane %v2282, 5
    %v2285 = vsel %vm2261, %v2280, %v2284
    %v2286 = vshrl.u32 %v2243, 16
    %v2288 = vrot.slane %v2286, 4
    %v2289 = vor.u32 %v2288, %v2284
    %v2290 = vrot.slane %v2289, 4
    %v2292 = vshll.u32 %v2244, 16
    %v2294 = vrot.slane %v2292, 5
    %v2295 = vsel %vm2261, %v2290, %v2294
    %v2296 = vshrl.u32 %v2244, 16
    %v2298 = vrot.slane %v2296, 4
    %v2299 = vor.u32 %v2298, %v2294
    %v2300 = vrot.slane %v2299, 4
    %v2302 = vshll.u32 %v2245, 16
    %v2304 = vrot.slane %v2302, 5
    %v2305 = vsel %vm2261, %v2300, %v2304
    %v2306 = vshrl.u32 %v2245, 16
    %v2308 = vrot.slane %v2306, 4
    %v2309 = vor.u32 %v2308, %v2304
    %v2310 = vrot.slane %v2309, 4
    %v2312 = vshll.u32 %v2246, 16
    %v2314 = vrot.slane %v2312, 5
    %v2315 = vsel %vm2261, %v2310, %v2314
    %v2316 = vshrl.u32 %v2246, 16
    %v2318 = vrot.slane %v2316, 4
    %v2319 = vor.u32 %v2318, %v2314
    %v2320 = vrot.slane %v2319, 4
    %v2322 = vshll.u32 %v2247, 16
    %v2324 = vrot.slane %v2322, 5
    %v2325 = vsel %vm2261, %v2320, %v2324
    %v2326 = vshrl.u32 %v2247, 16
    %v2328 = vrot.slane %v2326, 4
    %v2329 = vor.u32 %v2328, %v2324
    %v2330 = vrot.slane %v2329, 4
    %v2332 = vshll.u32 %v2248, 16
    %v2334 = vrot.slane %v2332, 5
    %v2335 = vsel %vm2261, %v2330, %v2334
    %v2336 = vshrl.u32 %v2248, 16
    %v2338 = vrot.slane %v2336, 4
    %v2339 = vor.u32 %v2338, %v2334
    %v2340 = vrot.slane %v2339, 4
    %v2342 = vshll.u32 %v2249, 16
    %v2344 = vrot.slane %v2342, 5
    %v2345 = vsel %vm2261, %v2340, %v2344
    %v2347 = vshrl.u32 %v2250, 16
    %v2349 = vrot.slane %v2347, 4
    %v2350 = vshll.u32 %v2250, 16
    %v2352 = vrot.slane %v2350, 5
    %v2353 = vor.u32 %v2349, %v2352
    %v2354 = vrot.slane %v2353, 4
    %v2356 = vshll.u32 %v2251, 16
    %v2358 = vrot.slane %v2356, 5
    %v2359 = vsel %vm2261, %v2354, %v2358
    %v2360 = vshrl.u32 %v2251, 16
    %v2362 = vrot.slane %v2360, 4
    %v2363 = vor.u32 %v2362, %v2358
    %v2364 = vrot.slane %v2363, 4
    %v2366 = vshll.u32 %v2252, 16
    %v2368 = vrot.slane %v2366, 5
    %v2369 = vsel %vm2261, %v2364, %v2368
    %v2370 = vshrl.u32 %v2252, 16
    %v2372 = vrot.slane %v2370, 4
    %v2373 = vor.u32 %v2372, %v2368
    %v2374 = vrot.slane %v2373, 4
    %v2376 = vshll.u32 %v2253, 16
    %v2378 = vrot.slane %v2376, 5
    %v2379 = vsel %vm2261, %v2374, %v2378
    %v2380 = vshrl.u32 %v2253, 16
    %v2382 = vrot.slane %v2380, 4
    %v2383 = vor.u32 %v2382, %v2378
    %v2384 = vrot.slane %v2383, 4
    %v2386 = vshll.u32 %v2254, 16
    %v2388 = vrot.slane %v2386, 5
    %v2389 = vsel %vm2261, %v2384, %v2388
    %v2390 = vshrl.u32 %v2254, 16
    %v2392 = vrot.slane %v2390, 4
    %v2393 = vor.u32 %v2392, %v2388
    %v2394 = vrot.slane %v2393, 4
    %v2396 = vshll.u32 %v2255, 16
    %v2398 = vrot.slane %v2396, 5
    %v2399 = vsel %vm2261, %v2394, %v2398
    %v2400 = vshrl.u32 %v2255, 16
    %v2402 = vrot.slane %v2400, 4
    %v2403 = vor.u32 %v2402, %v2398
    %v2404 = vrot.slane %v2403, 4
    %v2406 = vshll.u32 %v2256, 16
    %v2408 = vrot.slane %v2406, 5
    %v2409 = vsel %vm2261, %v2404, %v2408
    %v2410 = vshrl.u32 %v2256, 16
    %v2412 = vrot.slane %v2410, 4
    %v2413 = vor.u32 %v2412, %v2408
    %v2414 = vrot.slane %v2413, 4
    %v2416 = vshll.u32 %v2257, 16
    %v2418 = vrot.slane %v2416, 5
    %v2419 = vsel %vm2261, %v2414, %v2418
    %v2420 = vshrl.u32 %v2257, 16
    %v2422 = vrot.slane %v2420, 4
    %v2423 = vor.u32 %v2422, %v2418
    %v2424 = vrot.slane %v2423, 4
    %v2426 = vshll.u32 %v2258, 16
    %v2428 = vrot.slane %v2426, 5
    %v2429 = vsel %vm2261, %v2424, %v2428
    %s2430 = scalar_lea.vmem %s4, 16
    %v2431 = vld [vmem:[%s2430] sm:$0xf]
    %v2432 = vld [vmem:[%s2430 + $0x4] sm:$0xf]
    %v2433 = vld [vmem:[%s2430 + $0x8] sm:$0xf]
    %v2434 = vld [vmem:[%s2430 + $0xc] sm:$0xf]
    %v2435 = vld [vmem:[#allocation2 + $0x20] sm:$0xf]
    %v2436 = vld [vmem:[#allocation2 + $0x24] sm:$0x1]
    %v2437 = vld [vmem:[#allocation2 + $0x4c] sm:$0xf]
    %v2438 = vld [vmem:[#allocation2 + $0x50] sm:$0x1]
    %v2440 = vshll.u32 %v2435, 16
    %v2442 = vrot.slane %v2440, 5
    %v2443 = vsel %vm2261, %v2340, %v2442
    %v2444 = vshrl.u32 %v2435, 16
    %v2446 = vrot.slane %v2444, 4
    %v2447 = vor.u32 %v2446, %v2442
    %v2448 = vrot.slane %v2447, 4
    %v2450 = vshll.u32 %v2436, 16
    %v2452 = vrot.slane %v2450, 5
    %v2453 = vsel %vm2261, %v2448, %v2452
    %v2455 = vshll.u32 %v2437, 16
    %v2457 = vrot.slane %v2455, 5
    %v2458 = vsel %vm2261, %v2424, %v2457
    %v2459 = vshrl.u32 %v2437, 16
    %v2461 = vrot.slane %v2459, 4
    %v2462 = vor.u32 %v2461, %v2457
    %v2463 = vrot.slane %v2462, 4
    %v2465 = vshll.u32 %v2438, 16
    %v2467 = vrot.slane %v2465, 5
    %v2468 = vsel %vm2261, %v2463, %v2467
    %s2469 = scalar_lea.vmem %s4, 64
    %v2470 = vld [vmem:[%s2469] sm:$0xf]
    %v2471 = vld [vmem:[%s2469 + $0x4] sm:$0xf]
    %v2472 = vld [vmem:[%s2469 + $0x8] sm:$0xf]
    %v2473 = vld [vmem:[%s2469 + $0xc] sm:$0xf]
    %v2474 = vunpack.c.l.b16 %v2285
    %v2475 = vunpack.c.l.b16 %v2295
    %v2476 = vunpack.c.l.b16 %v2305
    %v2477 = vunpack.c.l.b16 %v2315
    %v2478 = vunpack.c.l.b16 %v2325
    %v2479 = vunpack.c.l.b16 %v2335
    %v2480 = vunpack.c.l.b16 %v2443
    %v2481 = vunpack.c.l.b16 %v2453
    %v2482 = vunpack.c.l.b16 %v2369
    %v2483 = vunpack.c.l.b16 %v2379
    %v2484 = vunpack.c.l.b16 %v2389
    %v2485 = vunpack.c.l.b16 %v2399
    %v2486 = vunpack.c.l.b16 %v2409
    %v2487 = vunpack.c.l.b16 %v2419
    %v2488 = vunpack.c.l.b16 %v2458
    %v2489 = vunpack.c.l.b16 %v2468
    %v2490 = vpack.c.b16 %v2475, %v2474
    %v2491 = vpack.c.b16 %v2477, %v2476
    %v2492 = vpack.c.b16 %v2479, %v2478
    %v2493 = vpack.c.b16 %v2481, %v2480
    %v2494 = vpack.c.b16 %v2483, %v2482
    %v2495 = vpack.c.b16 %v2485, %v2484
    %v2496 = vpack.c.b16 %v2487, %v2486
    %v2497 = vpack.c.b16 %v2489, %v2488
    %v2502 = vunpack.c.l.b16 %v2470
    %v2503 = vunpack.c.l.b16 %v2471
    %v2504 = vunpack.c.l.b16 %v2472
    %v2505 = vunpack.c.l.b16 %v2473
    %v2506 = vpack.c.b16 %v2503, %v2502
    %v2507 = vpack.c.b16 %v2505, %v2504
    %v2511 = vsel %vm1421, %v2490, 0
    %v2514 = vsel %vm1421, %v2491, 0
    %v2517 = vsel %vm1421, %v2492, 0
    %v2520 = vsel %vm1421, %v2493, 0
    %v2523 = vsel %vm1421, %v2494, 0
    %v2526 = vsel %vm1421, %v2495, 0
    %v2529 = vsel %vm1421, %v2496, 0
    %v2532 = vsel %vm1421, %v2497, 0
    %2534 = vmatprep.subr.bf16.mxu0 0
    %2535 = vmatpush1.bf16.msra.mxu0 %v2506
    %2536 = vmatprep.subr.bf16.mxu0 0
    %2537 = vmatpush1.bf16.msra.mxu0 %v2507
    %2538 = vmatprep.subr.bf16.mxu0 0
    %2539 = vmatpush1.bf16.msra.mxu0 0
    %2540 = vmatprep.subr.bf16.mxu0 0
    %2541 = vmatpush1.bf16.msra.mxu0 0
    %2542 = vmatprep.subr.bf16.mxu0 0
    %2543 = vmatpush1.bf16.msra.mxu0 0
    %2544 = vmatprep.subr.bf16.mxu0 0
    %2545 = vmatpush1.bf16.msra.mxu0 0
    %2546 = vmatprep.subr.bf16.mxu0 0
    %2547 = vmatpush1.bf16.msra.mxu0 0
    %2548 = vmatprep.subr.bf16.mxu0 0
    %2549 = vmatpush1.bf16.msra.mxu0 0
    %2550 = vmatprep.subr.bf16.mxu0 0
    %2551 = vmatpush1.bf16.msra.mxu0 0
    %2552 = vmatprep.subr.bf16.mxu0 0
    %2553 = vmatpush1.bf16.msra.mxu0 0
    %2554 = vmatprep.subr.bf16.mxu0 0
    %2555 = vmatpush1.bf16.msra.mxu0 0
    %2556 = vmatprep.subr.bf16.mxu0 0
    %2557 = vmatpush1.bf16.msra.mxu0 0
    %2558 = vmatprep.subr.bf16.mxu0 0
    %2559 = vmatpush1.bf16.msra.mxu0 0
    %2560 = vmatprep.subr.bf16.mxu0 0
    %2561 = vmatpush1.bf16.msra.mxu0 0
    %2562 = vmatprep.subr.bf16.mxu0 0
    %2563 = vmatpush1.bf16.msra.mxu0 0
    %2564 = vmatprep.subr.bf16.mxu0 0
    %2565 = vmatpush1.bf16.msra.mxu0 0
    %2566 = vmatprep.mubr.bf16.mxu0 0
    %2567 = vmatmul.mubr.bf16.gmra.mrb[0].mxu0 %v2511
    %v2568 = vpop.f32.mrb[0].mxu0
    %v2569 = vadd.f32 0.0, %v2568
    %v2570 = vpop.f32.mrb[0].mxu0
    %v2571 = vpop.f32.mrb[0].mxu0
    %v2572 = vadd.f32 0.0, %v2571
    %v2573 = vpop.f32.mrb[0].mxu0
    %2574 = vmatprep.mubr.bf16.mxu0 0
    %2575 = vmatmul.mubr.bf16.gmra.mrb[0].mxu0 %v2514
    %v2576 = vpop.f32.mrb[0].mxu0
    %v2577 = vadd.f32 0.0, %v2576
    %v2578 = vpop.f32.mrb[0].mxu0
    %v2579 = vpop.f32.mrb[0].mxu0
    %v2580 = vadd.f32 0.0, %v2579
    %v2581 = vpop.f32.mrb[0].mxu0
    %2582 = vmatprep.mubr.bf16.mxu0 0
    %2583 = vmatmul.mubr.bf16.gmra.mrb[0].mxu0 %v2517
    %v2584 = vpop.f32.mrb[0].mxu0
    %v2585 = vadd.f32 0.0, %v2584
    %v2586 = vpop.f32.mrb[0].mxu0
    %v2587 = vpop.f32.mrb[0].mxu0
    %v2588 = vadd.f32 0.0, %v2587
    %v2589 = vpop.f32.mrb[0].mxu0
    %2590 = vmatprep.mubr.bf16.mxu0 0
    %2591 = vmatmul.mubr.bf16.gmra.mrb[0].mxu0 %v2520
    %v2592 = vpop.f32.mrb[0].mxu0
    %v2593 = vadd.f32 0.0, %v2592
    %v2594 = vpop.f32.mrb[0].mxu0
    %v2595 = vpop.f32.mrb[0].mxu0
    %v2596 = vadd.f32 0.0, %v2595
    %v2597 = vpop.f32.mrb[0].mxu0
    %2598 = vmatprep.mubr.bf16.mxu0 0
    %2599 = vmatmul.mubr.bf16.gmra.mrb[0].mxu0 %v2523
    %v2600 = vpop.f32.mrb[0].mxu0
    %v2601 = vadd.f32 0.0, %v2600
    %v2602 = vpop.f32.mrb[0].mxu0
    %v2603 = vpop.f32.mrb[0].mxu0
    %v2604 = vadd.f32 0.0, %v2603
    %v2605 = vpop.f32.mrb[0].mxu0
    %2606 = vmatprep.mubr.bf16.mxu0 0
    %2607 = vmatmul.mubr.bf16.gmra.mrb[0].mxu0 %v2526
    %v2608 = vpop.f32.mrb[0].mxu0
    %v2609 = vadd.f32 0.0, %v2608
    %v2610 = vpop.f32.mrb[0].mxu0
    %v2611 = vpop.f32.mrb[0].mxu0
    %v2612 = vadd.f32 0.0, %v2611
    %v2613 = vpop.f32.mrb[0].mxu0
    %2614 = vmatprep.mubr.bf16.mxu0 0
    %2615 = vmatmul.mubr.bf16.gmra.mrb[0].mxu0 %v2529
    %v2616 = vpop.f32.mrb[0].mxu0
    %v2617 = vadd.f32 0.0, %v2616
    %v2618 = vpop.f32.mrb[0].mxu0
    %v2619 = vpop.f32.mrb[0].mxu0
    %v2620 = vadd.f32 0.0, %v2619
    %v2621 = vpop.f32.mrb[0].mxu0
    %2622 = vmatprep.mubr.bf16.mxu0 0
    %2623 = vmatmul.mubr.bf16.gmra.mrb[0].mxu0 %v2532
    %v2624 = vpop.f32.mrb[0].mxu0
    %v2625 = vadd.f32 0.0, %v2624
    %v2626 = vpop.f32.mrb[0].mxu0
    %v2627 = vpop.f32.mrb[0].mxu0
    %v2628 = vadd.f32 0.0, %v2627
    %v2629 = vpop.f32.mrb[0].mxu0
    %2630 = vdwg.mxu0
    %v2631 = vunpack.c.l.b16 %v2275
    %v2632 = vunpack.c.l.b16 %v2345
    %v2633 = vunpack.c.l.b16 %v2359
    %v2634 = vunpack.c.l.b16 %v2429
    %v2635 = vpack.c.b16 %v2474, %v2631
    %v2636 = vpack.c.b16 %v2476, %v2475
    %v2637 = vpack.c.b16 %v2478, %v2477
    %v2638 = vpack.c.b16 %v2632, %v2479
    %v2639 = vpack.c.b16 %v2482, %v2633
    %v2640 = vpack.c.b16 %v2484, %v2483
    %v2641 = vpack.c.b16 %v2486, %v2485
    %v2642 = vpack.c.b16 %v2634, %v2487
    %v2647 = vunpack.c.l.b16 %v2431
    %v2648 = vunpack.c.l.b16 %v2432
    %v2649 = vunpack.c.l.b16 %v2433
    %v2650 = vunpack.c.l.b16 %v2434
    %v2651 = vpack.c.b16 %v2648, %v2647
    %v2652 = vpack.c.b16 %v2650, %v2649
    %v2656 = vsel %vm1421, %v2635, 0
    %v2659 = vsel %vm1421, %v2636, 0
    %v2662 = vsel %vm1421, %v2637, 0
    %v2665 = vsel %vm1421, %v2638, 0
    %v2668 = vsel %vm1421, %v2639, 0
    %v2671 = vsel %vm1421, %v2640, 0
    %v2674 = vsel %vm1421, %v2641, 0
    %v2677 = vsel %vm1421, %v2642, 0
    %2679 = vmatprep.subr.bf16.mxu0 0
    %2680 = vmatpush1.bf16.msra.mxu0 %v2651
    %2681 = vmatprep.subr.bf16.mxu0 0
    %2682 = vmatpush1.bf16.msra.mxu0 %v2652
    %2683 = vmatprep.subr.bf16.mxu0 0
    %2684 = vmatpush1.bf16.msra.mxu0 0
    %2685 = vmatprep.subr.bf16.mxu0 0
    %2686 = vmatpush1.bf16.msra.mxu0 0
    %2687 = vmatprep.subr.bf16.mxu0 0
    %2688 = vmatpush1.bf16.msra.mxu0 0
    %2689 = vmatprep.subr.bf16.mxu0 0
    %2690 = vmatpush1.bf16.msra.mxu0 0
    %2691 = vmatprep.subr.bf16.mxu0 0
    %2692 = vmatpush1.bf16.msra.mxu0 0
    %2693 = vmatprep.subr.bf16.mxu0 0
    %2694 = vmatpush1.bf16.msra.mxu0 0
    %2695 = vmatprep.subr.bf16.mxu0 0
    %2696 = vmatpush1.bf16.msra.mxu0 0
    %2697 = vmatprep.subr.bf16.mxu0 0
    %2698 = vmatpush1.bf16.msra.mxu0 0
    %2699 = vmatprep.subr.bf16.mxu0 0
    %2700 = vmatpush1.bf16.msra.mxu0 0
    %2701 = vmatprep.subr.bf16.mxu0 0
    %2702 = vmatpush1.bf16.msra.mxu0 0
    %2703 = vmatprep.subr.bf16.mxu0 0
    %2704 = vmatpush1.bf16.msra.mxu0 0
    %2705 = vmatprep.subr.bf16.mxu0 0
    %2706 = vmatpush1.bf16.msra.mxu0 0
    %2707 = vmatprep.subr.bf16.mxu0 0
    %2708 = vmatpush1.bf16.msra.mxu0 0
    %2709 = vmatprep.subr.bf16.mxu0 0
    %2710 = vmatpush1.bf16.msra.mxu0 0
    %2711 = vmatprep.mubr.bf16.mxu0 0
    %2712 = vmatmul.mubr.bf16.gmra.mrb[0].mxu0 %v2656
    %v2713 = vpop.f32.mrb[0].mxu0
    %v2714 = vadd.f32 %v2569, %v2713
    %v2715 = vpop.f32.mrb[0].mxu0
    %v2716 = vpop.f32.mrb[0].mxu0
    %v2717 = vadd.f32 %v2572, %v2716
    %v2718 = vpop.f32.mrb[0].mxu0
    %2719 = vmatprep.mubr.bf16.mxu0 0
    %2720 = vmatmul.mubr.bf16.gmra.mrb[0].mxu0 %v2659
    %v2721 = vpop.f32.mrb[0].mxu0
    %v2722 = vadd.f32 %v2577, %v2721
    %v2723 = vpop.f32.mrb[0].mxu0
    %v2724 = vpop.f32.mrb[0].mxu0
    %v2725 = vadd.f32 %v2580, %v2724
    %v2726 = vpop.f32.mrb[0].mxu0
    %2727 = vmatprep.mubr.bf16.mxu0 0
    %2728 = vmatmul.mubr.bf16.gmra.mrb[0].mxu0 %v2662
    %v2729 = vpop.f32.mrb[0].mxu0
    %v2730 = vadd.f32 %v2585, %v2729
    %v2731 = vpop.f32.mrb[0].mxu0
    %v2732 = vpop.f32.mrb[0].mxu0
    %v2733 = vadd.f32 %v2588, %v2732
    %v2734 = vpop.f32.mrb[0].mxu0
    %2735 = vmatprep.mubr.bf16.mxu0 0
    %2736 = vmatmul.mubr.bf16.gmra.mrb[0].mxu0 %v2665
    %v2737 = vpop.f32.mrb[0].mxu0
    %v2738 = vadd.f32 %v2593, %v2737
    %v2739 = vpop.f32.mrb[0].mxu0
    %v2740 = vpop.f32.mrb[0].mxu0
    %v2741 = vadd.f32 %v2596, %v2740
    %v2742 = vpop.f32.mrb[0].mxu0
    %2743 = vmatprep.mubr.bf16.mxu0 0
    %2744 = vmatmul.mubr.bf16.gmra.mrb[0].mxu0 %v2668
    %v2745 = vpop.f32.mrb[0].mxu0
    %v2746 = vadd.f32 %v2601, %v2745
    %v2747 = vpop.f32.mrb[0].mxu0
    %v2748 = vpop.f32.mrb[0].mxu0
    %v2749 = vadd.f32 %v2604, %v2748
    %v2750 = vpop.f32.mrb[0].mxu0
    %2751 = vmatprep.mubr.bf16.mxu0 0
    %2752 = vmatmul.mubr.bf16.gmra.mrb[0].mxu0 %v2671
    %v2753 = vpop.f32.mrb[0].mxu0
    %v2754 = vadd.f32 %v2609, %v2753
    %v2755 = vpop.f32.mrb[0].mxu0
    %v2756 = vpop.f32.mrb[0].mxu0
    %v2757 = vadd.f32 %v2612, %v2756
    %v2758 = vpop.f32.mrb[0].mxu0
    %2759 = vmatprep.mubr.bf16.mxu0 0
    %2760 = vmatmul.mubr.bf16.gmra.mrb[0].mxu0 %v2674
    %v2761 = vpop.f32.mrb[0].mxu0
    %v2762 = vadd.f32 %v2617, %v2761
    %v2763 = vpop.f32.mrb[0].mxu0
    %v2764 = vpop.f32.mrb[0].mxu0
    %v2765 = vadd.f32 %v2620, %v2764
    %v2766 = vpop.f32.mrb[0].mxu0
    %2767 = vmatprep.mubr.bf16.mxu0 0
    %2768 = vmatmul.mubr.bf16.gmra.mrb[0].mxu0 %v2677
    %v2769 = vpop.f32.mrb[0].mxu0
    %v2770 = vadd.f32 %v2625, %v2769
    %v2771 = vpop.f32.mrb[0].mxu0
    %v2772 = vpop.f32.mrb[0].mxu0
    %v2773 = vadd.f32 %v2628, %v2772
    %v2774 = vpop.f32.mrb[0].mxu0
    %2775 = vdwg.mxu0
    %v2776 = vld [vmem:[#allocation2 + $0x8] sm:$0xf]
    %v2777 = vld [vmem:[#allocation2 + $0xc] sm:$0xf]
    %v2778 = vld [vmem:[#allocation2 + $0x10] sm:$0xf]
    %v2779 = vld [vmem:[#allocation2 + $0x14] sm:$0xf]
    %v2780 = vld [vmem:[#allocation2 + $0x18] sm:$0xf]
    %v2781 = vld [vmem:[#allocation2 + $0x1c] sm:$0xf]
    %v2782 = vld [vmem:[#allocation2 + $0x20] sm:$0xf]
    %v2783 = vld [vmem:[#allocation2 + $0x24] sm:$0xf]
    %v2784 = vld [vmem:[#allocation2 + $0x28] sm:$0x1]
    %v2785 = vld [vmem:[#allocation2 + $0x34] sm:$0xf]
    %v2786 = vld [vmem:[#allocation2 + $0x38] sm:$0xf]
    %v2787 = vld [vmem:[#allocation2 + $0x3c] sm:$0xf]
    %v2788 = vld [vmem:[#allocation2 + $0x40] sm:$0xf]
    %v2789 = vld [vmem:[#allocation2 + $0x44] sm:$0xf]
    %v2790 = vld [vmem:[#allocation2 + $0x48] sm:$0xf]
    %v2791 = vld [vmem:[#allocation2 + $0x4c] sm:$0xf]
    %v2792 = vld [vmem:[#allocation2 + $0x50] sm:$0xf]
    %v2793 = vld [vmem:[#allocation2 + $0x54] sm:$0x1]
    %v2795 = vshrl.u32 %v2776, 16
    %v2797 = vrot.slane %v2795, 4
    %v2798 = vshll.u32 %v2776, 16
    %v2800 = vrot.slane %v2798, 5
    %v2801 = vor.u32 %v2797, %v2800
    %v2802 = vrot.slane %v2801, 4
    %v2804 = vshll.u32 %v2777, 16
    %v2806 = vrot.slane %v2804, 5
    %v2807 = vsel %vm2261, %v2802, %v2806
    %v2808 = vshrl.u32 %v2777, 16
    %v2810 = vrot.slane %v2808, 4
    %v2811 = vor.u32 %v2810, %v2806
    %v2812 = vrot.slane %v2811, 4
    %v2814 = vshll.u32 %v2778, 16
    %v2816 = vrot.slane %v2814, 5
    %v2817 = vsel %vm2261, %v2812, %v2816
    %v2818 = vshrl.u32 %v2778, 16
    %v2820 = vrot.slane %v2818, 4
    %v2821 = vor.u32 %v2820, %v2816
    %v2822 = vrot.slane %v2821, 4
    %v2824 = vshll.u32 %v2779, 16
    %v2826 = vrot.slane %v2824, 5
    %v2827 = vsel %vm2261, %v2822, %v2826
    %v2828 = vshrl.u32 %v2779, 16
    %v2830 = vrot.slane %v2828, 4
    %v2831 = vor.u32 %v2830, %v2826
    %v2832 = vrot.slane %v2831, 4
    %v2834 = vshll.u32 %v2780, 16
    %v2836 = vrot.slane %v2834, 5
    %v2837 = vsel %vm2261, %v2832, %v2836
    %v2838 = vshrl.u32 %v2780, 16
    %v2840 = vrot.slane %v2838, 4
    %v2841 = vor.u32 %v2840, %v2836
    %v2842 = vrot.slane %v2841, 4
    %v2844 = vshll.u32 %v2781, 16
    %v2846 = vrot.slane %v2844, 5
    %v2847 = vsel %vm2261, %v2842, %v2846
    %v2848 = vshrl.u32 %v2781, 16
    %v2850 = vrot.slane %v2848, 4
    %v2851 = vor.u32 %v2850, %v2846
    %v2852 = vrot.slane %v2851, 4
    %v2854 = vshll.u32 %v2782, 16
    %v2856 = vrot.slane %v2854, 5
    %v2857 = vsel %vm2261, %v2852, %v2856
    %v2858 = vshrl.u32 %v2782, 16
    %v2860 = vrot.slane %v2858, 4
    %v2861 = vor.u32 %v2860, %v2856
    %v2862 = vrot.slane %v2861, 4
    %v2864 = vshll.u32 %v2783, 16
    %v2866 = vrot.slane %v2864, 5
    %v2867 = vsel %vm2261, %v2862, %v2866
    %v2868 = vshrl.u32 %v2783, 16
    %v2870 = vrot.slane %v2868, 4
    %v2871 = vor.u32 %v2870, %v2866
    %v2872 = vrot.slane %v2871, 4
    %v2874 = vshll.u32 %v2784, 16
    %v2876 = vrot.slane %v2874, 5
    %v2877 = vsel %vm2261, %v2872, %v2876
    %v2879 = vshrl.u32 %v2785, 16
    %v2881 = vrot.slane %v2879, 4
    %v2882 = vshll.u32 %v2785, 16
    %v2884 = vrot.slane %v2882, 5
    %v2885 = vor.u32 %v2881, %v2884
    %v2886 = vrot.slane %v2885, 4
    %v2888 = vshll.u32 %v2786, 16
    %v2890 = vrot.slane %v2888, 5
    %v2891 = vsel %vm2261, %v2886, %v2890
    %v2892 = vshrl.u32 %v2786, 16
    %v2894 = vrot.slane %v2892, 4
    %v2895 = vor.u32 %v2894, %v2890
    %v2896 = vrot.slane %v2895, 4
    %v2898 = vshll.u32 %v2787, 16
    %v2900 = vrot.slane %v2898, 5
    %v2901 = vsel %vm2261, %v2896, %v2900
    %v2902 = vshrl.u32 %v2787, 16
    %v2904 = vrot.slane %v2902, 4
    %v2905 = vor.u32 %v2904, %v2900
    %v2906 = vrot.slane %v2905, 4
    %v2908 = vshll.u32 %v2788, 16
    %v2910 = vrot.slane %v2908, 5
    %v2911 = vsel %vm2261, %v2906, %v2910
    %v2912 = vshrl.u32 %v2788, 16
    %v2914 = vrot.slane %v2912, 4
    %v2915 = vor.u32 %v2914, %v2910
    %v2916 = vrot.slane %v2915, 4
    %v2918 = vshll.u32 %v2789, 16
    %v2920 = vrot.slane %v2918, 5
    %v2921 = vsel %vm2261, %v2916, %v2920
    %v2922 = vshrl.u32 %v2789, 16
    %v2924 = vrot.slane %v2922, 4
    %v2925 = vor.u32 %v2924, %v2920
    %v2926 = vrot.slane %v2925, 4
    %v2928 = vshll.u32 %v2790, 16
    %v2930 = vrot.slane %v2928, 5
    %v2931 = vsel %vm2261, %v2926, %v2930
    %v2932 = vshrl.u32 %v2790, 16
    %v2934 = vrot.slane %v2932, 4
    %v2935 = vor.u32 %v2934, %v2930
    %v2936 = vrot.slane %v2935, 4
    %v2938 = vshll.u32 %v2791, 16
    %v2940 = vrot.slane %v2938, 5
    %v2941 = vsel %vm2261, %v2936, %v2940
    %v2942 = vshrl.u32 %v2791, 16
    %v2944 = vrot.slane %v2942, 4
    %v2945 = vor.u32 %v2944, %v2940
    %v2946 = vrot.slane %v2945, 4
    %v2948 = vshll.u32 %v2792, 16
    %v2950 = vrot.slane %v2948, 5
    %v2951 = vsel %vm2261, %v2946, %v2950
    %v2952 = vshrl.u32 %v2792, 16
    %v2954 = vrot.slane %v2952, 4
    %v2955 = vor.u32 %v2954, %v2950
    %v2956 = vrot.slane %v2955, 4
    %v2958 = vshll.u32 %v2793, 16
    %v2960 = vrot.slane %v2958, 5
    %v2961 = vsel %vm2261, %v2956, %v2960
    %s2962 = scalar_lea.vmem %s4, 112
    %v2963 = vld [vmem:[%s2962] sm:$0xf]
    %v2964 = vld [vmem:[%s2962 + $0x4] sm:$0xf]
    %v2965 = vld [vmem:[%s2962 + $0x8] sm:$0xf]
    %v2966 = vld [vmem:[%s2962 + $0xc] sm:$0xf]
    %v2967 = vunpack.c.l.b16 %v2807
    %v2968 = vunpack.c.l.b16 %v2817
    %v2969 = vunpack.c.l.b16 %v2827
    %v2970 = vunpack.c.l.b16 %v2837
    %v2971 = vunpack.c.l.b16 %v2847
    %v2972 = vunpack.c.l.b16 %v2857
    %v2973 = vunpack.c.l.b16 %v2867
    %v2974 = vunpack.c.l.b16 %v2877
    %v2975 = vunpack.c.l.b16 %v2891
    %v2976 = vunpack.c.l.b16 %v2901
    %v2977 = vunpack.c.l.b16 %v2911
    %v2978 = vunpack.c.l.b16 %v2921
    %v2979 = vunpack.c.l.b16 %v2931
    %v2980 = vunpack.c.l.b16 %v2941
    %v2981 = vunpack.c.l.b16 %v2951
    %v2982 = vunpack.c.l.b16 %v2961
    %v2983 = vpack.c.b16 %v2968, %v2967
    %v2984 = vpack.c.b16 %v2970, %v2969
    %v2985 = vpack.c.b16 %v2972, %v2971
    %v2986 = vpack.c.b16 %v2974, %v2973
    %v2987 = vpack.c.b16 %v2976, %v2975
    %v2988 = vpack.c.b16 %v2978, %v2977
    %v2989 = vpack.c.b16 %v2980, %v2979
    %v2990 = vpack.c.b16 %v2982, %v2981
    %v2995 = vunpack.c.l.b16 %v2963
    %v2996 = vunpack.c.l.b16 %v2964
    %v2997 = vunpack.c.l.b16 %v2965
    %v2998 = vunpack.c.l.b16 %v2966
    %v2999 = vpack.c.b16 %v2996, %v2995
    %v3000 = vpack.c.b16 %v2998, %v2997
    %v3004 = vsel %vm1421, %v2983, 0
    %v3007 = vsel %vm1421, %v2984, 0
    %v3010 = vsel %vm1421, %v2985, 0
    %v3013 = vsel %vm1421, %v2986, 0
    %v3016 = vsel %vm1421, %v2987, 0
    %v3019 = vsel %vm1421, %v2988, 0
    %v3022 = vsel %vm1421, %v2989, 0
    %v3025 = vsel %vm1421, %v2990, 0
    %3027 = vmatprep.subr.bf16.mxu0 0
    %3028 = vmatpush1.bf16.msra.mxu0 %v2999
    %3029 = vmatprep.subr.bf16.mxu0 0
    %3030 = vmatpush1.bf16.msra.mxu0 %v3000
    %3031 = vmatprep.subr.bf16.mxu0 0
    %3032 = vmatpush1.bf16.msra.mxu0 0
    %3033 = vmatprep.subr.bf16.mxu0 0
    %3034 = vmatpush1.bf16.msra.mxu0 0
    %3035 = vmatprep.subr.bf16.mxu0 0
    %3036 = vmatpush1.bf16.msra.mxu0 0
    %3037 = vmatprep.subr.bf16.mxu0 0
    %3038 = vmatpush1.bf16.msra.mxu0 0
    %3039 = vmatprep.subr.bf16.mxu0 0
    %3040 = vmatpush1.bf16.msra.mxu0 0
    %3041 = vmatprep.subr.bf16.mxu0 0
    %3042 = vmatpush1.bf16.msra.mxu0 0
    %3043 = vmatprep.subr.bf16.mxu0 0
    %3044 = vmatpush1.bf16.msra.mxu0 0
    %3045 = vmatprep.subr.bf16.mxu0 0
    %3046 = vmatpush1.bf16.msra.mxu0 0
    %3047 = vmatprep.subr.bf16.mxu0 0
    %3048 = vmatpush1.bf16.msra.mxu0 0
    %3049 = vmatprep.subr.bf16.mxu0 0
    %3050 = vmatpush1.bf16.msra.mxu0 0
    %3051 = vmatprep.subr.bf16.mxu0 0
    %3052 = vmatpush1.bf16.msra.mxu0 0
    %3053 = vmatprep.subr.bf16.mxu0 0
    %3054 = vmatpush1.bf16.msra.mxu0 0
    %3055 = vmatprep.subr.bf16.mxu0 0
    %3056 = vmatpush1.bf16.msra.mxu0 0
    %3057 = vmatprep.subr.bf16.mxu0 0
    %3058 = vmatpush1.bf16.msra.mxu0 0
    %3059 = vmatprep.mubr.bf16.mxu0 0
    %3060 = vmatmul.mubr.bf16.gmra.mrb[0].mxu0 %v3004
    %v3061 = vpop.f32.mrb[0].mxu0
    %v3062 = vadd.f32 0.0, %v3061
    %v3063 = vpop.f32.mrb[0].mxu0
    %v3064 = vpop.f32.mrb[0].mxu0
    %v3065 = vadd.f32 0.0, %v3064
    %v3066 = vpop.f32.mrb[0].mxu0
    %3067 = vmatprep.mubr.bf16.mxu0 0
    %3068 = vmatmul.mubr.bf16.gmra.mrb[0].mxu0 %v3007
    %v3069 = vpop.f32.mrb[0].mxu0
    %v3070 = vadd.f32 0.0, %v3069
    %v3071 = vpop.f32.mrb[0].mxu0
    %v3072 = vpop.f32.mrb[0].mxu0
    %v3073 = vadd.f32 0.0, %v3072
    %v3074 = vpop.f32.mrb[0].mxu0
    %3075 = vmatprep.mubr.bf16.mxu0 0
    %3076 = vmatmul.mubr.bf16.gmra.mrb[0].mxu0 %v3010
    %v3077 = vpop.f32.mrb[0].mxu0
    %v3078 = vadd.f32 0.0, %v3077
    %v3079 = vpop.f32.mrb[0].mxu0
    %v3080 = vpop.f32.mrb[0].mxu0
    %v3081 = vadd.f32 0.0, %v3080
    %v3082 = vpop.f32.mrb[0].mxu0
    %3083 = vmatprep.mubr.bf16.mxu0 0
    %3084 = vmatmul.mubr.bf16.gmra.mrb[0].mxu0 %v3013
    %v3085 = vpop.f32.mrb[0].mxu0
    %v3086 = vadd.f32 0.0, %v3085
    %v3087 = vpop.f32.mrb[0].mxu0
    %v3088 = vpop.f32.mrb[0].mxu0
    %v3089 = vadd.f32 0.0, %v3088
    %v3090 = vpop.f32.mrb[0].mxu0
    %3091 = vmatprep.mubr.bf16.mxu0 0
    %3092 = vmatmul.mubr.bf16.gmra.mrb[0].mxu0 %v3016
    %v3093 = vpop.f32.mrb[0].mxu0
    %v3094 = vadd.f32 0.0, %v3093
    %v3095 = vpop.f32.mrb[0].mxu0
    %v3096 = vpop.f32.mrb[0].mxu0
    %v3097 = vadd.f32 0.0, %v3096
    %v3098 = vpop.f32.mrb[0].mxu0
    %3099 = vmatprep.mubr.bf16.mxu0 0
    %3100 = vmatmul.mubr.bf16.gmra.mrb[0].mxu0 %v3019
    %v3101 = vpop.f32.mrb[0].mxu0
    %v3102 = vadd.f32 0.0, %v3101
    %v3103 = vpop.f32.mrb[0].mxu0
    %v3104 = vpop.f32.mrb[0].mxu0
    %v3105 = vadd.f32 0.0, %v3104
    %v3106 = vpop.f32.mrb[0].mxu0
    %3107 = vmatprep.mubr.bf16.mxu0 0
    %3108 = vmatmul.mubr.bf16.gmra.mrb[0].mxu0 %v3022
    %v3109 = vpop.f32.mrb[0].mxu0
    %v3110 = vadd.f32 0.0, %v3109
    %v3111 = vpop.f32.mrb[0].mxu0
    %v3112 = vpop.f32.mrb[0].mxu0
    %v3113 = vadd.f32 0.0, %v3112
    %v3114 = vpop.f32.mrb[0].mxu0
    %3115 = vmatprep.mubr.bf16.mxu0 0
    %3116 = vmatmul.mubr.bf16.gmra.mrb[0].mxu0 %v3025
    %v3117 = vpop.f32.mrb[0].mxu0
    %v3118 = vadd.f32 0.0, %v3117
    %v3119 = vpop.f32.mrb[0].mxu0
    %v3120 = vpop.f32.mrb[0].mxu0
    %v3121 = vadd.f32 0.0, %v3120
    %v3122 = vpop.f32.mrb[0].mxu0
    %3123 = vdwg.mxu0
    %v3124 = vadd.f32 %v2714, %v3062
    %v3125 = vadd.f32 %v2717, %v3065
    %v3126 = vadd.f32 %v2722, %v3070
    %v3127 = vadd.f32 %v2725, %v3073
    %v3128 = vadd.f32 %v2730, %v3078
    %v3129 = vadd.f32 %v2733, %v3081
    %v3130 = vadd.f32 %v2738, %v3086
    %v3131 = vadd.f32 %v2741, %v3089
    %v3132 = vadd.f32 %v2746, %v3094
    %v3133 = vadd.f32 %v2749, %v3097
    %v3134 = vadd.f32 %v2754, %v3102
    %v3135 = vadd.f32 %v2757, %v3105
    %v3136 = vadd.f32 %v2762, %v3110
    %v3137 = vadd.f32 %v2765, %v3113
    %v3138 = vadd.f32 %v2770, %v3118
    %v3139 = vadd.f32 %v2773, %v3121
    %v3140 = vld [vmem:[#allocation2] sm:$0xf]
    %v3141 = vld [vmem:[#allocation2 + $0x4] sm:$0xf]
    %v3142 = vld [vmem:[#allocation2 + $0x8] sm:$0xf]
    %v3143 = vld [vmem:[#allocation2 + $0xc] sm:$0xf]
    %v3144 = vld [vmem:[#allocation2 + $0x10] sm:$0xf]
    %v3145 = vld [vmem:[#allocation2 + $0x14] sm:$0xf]
    %v3146 = vld [vmem:[#allocation2 + $0x18] sm:$0xf]
    %v3147 = vld [vmem:[#allocation2 + $0x1c] sm:$0xf]
    %v3148 = vld [vmem:[#allocation2 + $0x2c] sm:$0xf]
    %v3149 = vld [vmem:[#allocation2 + $0x30] sm:$0xf]
    %v3150 = vld [vmem:[#allocation2 + $0x34] sm:$0xf]
    %v3151 = vld [vmem:[#allocation2 + $0x38] sm:$0xf]
    %v3152 = vld [vmem:[#allocation2 + $0x3c] sm:$0xf]
    %v3153 = vld [vmem:[#allocation2 + $0x40] sm:$0xf]
    %v3154 = vld [vmem:[#allocation2 + $0x44] sm:$0xf]
    %v3155 = vld [vmem:[#allocation2 + $0x48] sm:$0xf]
    %v3156 = vld [vmem:[%s4] sm:$0xf]
    %v3157 = vld [vmem:[%s4 + $0x4] sm:$0xf]
    %v3158 = vld [vmem:[%s4 + $0x8] sm:$0xf]
    %v3159 = vld [vmem:[%s4 + $0xc] sm:$0xf]
    %v3160 = vld [vmem:[#allocation2 + $0x20] sm:$0xf]
    %v3161 = vld [vmem:[#allocation2 + $0x4c] sm:$0xf]
    %s3162 = scalar_lea.vmem %s4, 48
    %v3163 = vld [vmem:[%s3162] sm:$0xf]
    %v3164 = vld [vmem:[%s3162 + $0x4] sm:$0xf]
    %v3165 = vld [vmem:[%s3162 + $0x8] sm:$0xf]
    %v3166 = vld [vmem:[%s3162 + $0xc] sm:$0xf]
    %v3183 = vunpack.c.l.b16 %v2242
    %v3184 = vunpack.c.l.b16 %v2243
    %v3185 = vunpack.c.l.b16 %v2244
    %v3186 = vunpack.c.l.b16 %v2245
    %v3187 = vunpack.c.l.b16 %v2246
    %v3188 = vunpack.c.l.b16 %v2247
    %v3189 = vunpack.c.l.b16 %v2248
    %v3190 = vunpack.c.l.b16 %v3160
    %v3191 = vunpack.c.l.b16 %v2251
    %v3192 = vunpack.c.l.b16 %v2252
    %v3193 = vunpack.c.l.b16 %v2253
    %v3194 = vunpack.c.l.b16 %v2254
    %v3195 = vunpack.c.l.b16 %v2255
    %v3196 = vunpack.c.l.b16 %v2256
    %v3197 = vunpack.c.l.b16 %v2257
    %v3198 = vunpack.c.l.b16 %v3161
    %v3199 = vpack.c.b16 %v3184, %v3183
    %v3200 = vpack.c.b16 %v3186, %v3185
    %v3201 = vpack.c.b16 %v3188, %v3187
    %v3202 = vpack.c.b16 %v3190, %v3189
    %v3203 = vpack.c.b16 %v3192, %v3191
    %v3204 = vpack.c.b16 %v3194, %v3193
    %v3205 = vpack.c.b16 %v3196, %v3195
    %v3206 = vpack.c.b16 %v3198, %v3197
    %v3211 = vunpack.c.l.b16 %v3163
    %v3212 = vunpack.c.l.b16 %v3164
    %v3213 = vunpack.c.l.b16 %v3165
    %v3214 = vunpack.c.l.b16 %v3166
    %v3215 = vpack.c.b16 %v3212, %v3211
    %v3216 = vpack.c.b16 %v3214, %v3213
    %v3220 = vsel %vm1421, %v3199, 0
    %v3223 = vsel %vm1421, %v3200, 0
    %v3226 = vsel %vm1421, %v3201, 0
    %v3229 = vsel %vm1421, %v3202, 0
    %v3232 = vsel %vm1421, %v3203, 0
    %v3235 = vsel %vm1421, %v3204, 0
    %v3238 = vsel %vm1421, %v3205, 0
    %v3241 = vsel %vm1421, %v3206, 0
    %3243 = vmatprep.subr.bf16.mxu0 0
    %3244 = vmatpush1.bf16.msra.mxu0 %v3215
    %3245 = vmatprep.subr.bf16.mxu0 0
    %3246 = vmatpush1.bf16.msra.mxu0 %v3216
    %3247 = vmatprep.subr.bf16.mxu0 0
    %3248 = vmatpush1.bf16.msra.mxu0 0
    %3249 = vmatprep.subr.bf16.mxu0 0
    %3250 = vmatpush1.bf16.msra.mxu0 0
    %3251 = vmatprep.subr.bf16.mxu0 0
    %3252 = vmatpush1.bf16.msra.mxu0 0
    %3253 = vmatprep.subr.bf16.mxu0 0
    %3254 = vmatpush1.bf16.msra.mxu0 0
    %3255 = vmatprep.subr.bf16.mxu0 0
    %3256 = vmatpush1.bf16.msra.mxu0 0
    %3257 = vmatprep.subr.bf16.mxu0 0
    %3258 = vmatpush1.bf16.msra.mxu0 0
    %3259 = vmatprep.subr.bf16.mxu0 0
    %3260 = vmatpush1.bf16.msra.mxu0 0
    %3261 = vmatprep.subr.bf16.mxu0 0
    %3262 = vmatpush1.bf16.msra.mxu0 0
    %3263 = vmatprep.subr.bf16.mxu0 0
    %3264 = vmatpush1.bf16.msra.mxu0 0
    %3265 = vmatprep.subr.bf16.mxu0 0
    %3266 = vmatpush1.bf16.msra.mxu0 0
    %3267 = vmatprep.subr.bf16.mxu0 0
    %3268 = vmatpush1.bf16.msra.mxu0 0
    %3269 = vmatprep.subr.bf16.mxu0 0
    %3270 = vmatpush1.bf16.msra.mxu0 0
    %3271 = vmatprep.subr.bf16.mxu0 0
    %3272 = vmatpush1.bf16.msra.mxu0 0
    %3273 = vmatprep.subr.bf16.mxu0 0
    %3274 = vmatpush1.bf16.msra.mxu0 0
    %3275 = vmatprep.mubr.bf16.mxu0 0
    %3276 = vmatmul.mubr.bf16.gmra.mrb[0].mxu0 %v3220
    %v3277 = vpop.f32.mrb[0].mxu0
    %v3278 = vadd.f32 0.0, %v3277
    %v3279 = vpop.f32.mrb[0].mxu0
    %v3280 = vpop.f32.mrb[0].mxu0
    %v3281 = vadd.f32 0.0, %v3280
    %v3282 = vpop.f32.mrb[0].mxu0
    %3283 = vmatprep.mubr.bf16.mxu0 0
    %3284 = vmatmul.mubr.bf16.gmra.mrb[0].mxu0 %v3223
    %v3285 = vpop.f32.mrb[0].mxu0
    %v3286 = vadd.f32 0.0, %v3285
    %v3287 = vpop.f32.mrb[0].mxu0
    %v3288 = vpop.f32.mrb[0].mxu0
    %v3289 = vadd.f32 0.0, %v3288
    %v3290 = vpop.f32.mrb[0].mxu0
    %3291 = vmatprep.mubr.bf16.mxu0 0
    %3292 = vmatmul.mubr.bf16.gmra.mrb[0].mxu0 %v3226
    %v3293 = vpop.f32.mrb[0].mxu0
    %v3294 = vadd.f32 0.0, %v3293
    %v3295 = vpop.f32.mrb[0].mxu0
    %v3296 = vpop.f32.mrb[0].mxu0
    %v3297 = vadd.f32 0.0, %v3296
    %v3298 = vpop.f32.mrb[0].mxu0
    %3299 = vmatprep.mubr.bf16.mxu0 0
    %3300 = vmatmul.mubr.bf16.gmra.mrb[0].mxu0 %v3229
    %v3301 = vpop.f32.mrb[0].mxu0
    %v3302 = vadd.f32 0.0, %v3301
    %v3303 = vpop.f32.mrb[0].mxu0
    %v3304 = vpop.f32.mrb[0].mxu0
    %v3305 = vadd.f32 0.0, %v3304
    %v3306 = vpop.f32.mrb[0].mxu0
    %3307 = vmatprep.mubr.bf16.mxu0 0
    %3308 = vmatmul.mubr.bf16.gmra.mrb[0].mxu0 %v3232
    %v3309 = vpop.f32.mrb[0].mxu0
    %v3310 = vadd.f32 0.0, %v3309
    %v3311 = vpop.f32.mrb[0].mxu0
    %v3312 = vpop.f32.mrb[0].mxu0
    %v3313 = vadd.f32 0.0, %v3312
    %v3314 = vpop.f32.mrb[0].mxu0
    %3315 = vmatprep.mubr.bf16.mxu0 0
    %3316 = vmatmul.mubr.bf16.gmra.mrb[0].mxu0 %v3235
    %v3317 = vpop.f32.mrb[0].mxu0
    %v3318 = vadd.f32 0.0, %v3317
    %v3319 = vpop.f32.mrb[0].mxu0
    %v3320 = vpop.f32.mrb[0].mxu0
    %v3321 = vadd.f32 0.0, %v3320
    %v3322 = vpop.f32.mrb[0].mxu0
    %3323 = vmatprep.mubr.bf16.mxu0 0
    %3324 = vmatmul.mubr.bf16.gmra.mrb[0].mxu0 %v3238
    %v3325 = vpop.f32.mrb[0].mxu0
    %v3326 = vadd.f32 0.0, %v3325
    %v3327 = vpop.f32.mrb[0].mxu0
    %v3328 = vpop.f32.mrb[0].mxu0
    %v3329 = vadd.f32 0.0, %v3328
    %v3330 = vpop.f32.mrb[0].mxu0
    %3331 = vmatprep.mubr.bf16.mxu0 0
    %3332 = vmatmul.mubr.bf16.gmra.mrb[0].mxu0 %v3241
    %v3333 = vpop.f32.mrb[0].mxu0
    %v3334 = vadd.f32 0.0, %v3333
    %v3335 = vpop.f32.mrb[0].mxu0
    %v3336 = vpop.f32.mrb[0].mxu0
    %v3337 = vadd.f32 0.0, %v3336
    %v3338 = vpop.f32.mrb[0].mxu0
    %3339 = vdwg.mxu0
    %v3356 = vunpack.c.l.b16 %v3140
    %v3357 = vunpack.c.l.b16 %v3141
    %v3358 = vunpack.c.l.b16 %v3142
    %v3359 = vunpack.c.l.b16 %v3143
    %v3360 = vunpack.c.l.b16 %v3144
    %v3361 = vunpack.c.l.b16 %v3145
    %v3362 = vunpack.c.l.b16 %v3146
    %v3363 = vunpack.c.l.b16 %v3147
    %v3364 = vunpack.c.l.b16 %v3148
    %v3365 = vunpack.c.l.b16 %v3149
    %v3366 = vunpack.c.l.b16 %v3150
    %v3367 = vunpack.c.l.b16 %v3151
    %v3368 = vunpack.c.l.b16 %v3152
    %v3369 = vunpack.c.l.b16 %v3153
    %v3370 = vunpack.c.l.b16 %v3154
    %v3371 = vunpack.c.l.b16 %v3155
    %v3372 = vpack.c.b16 %v3357, %v3356
    %v3373 = vpack.c.b16 %v3359, %v3358
    %v3374 = vpack.c.b16 %v3361, %v3360
    %v3375 = vpack.c.b16 %v3363, %v3362
    %v3376 = vpack.c.b16 %v3365, %v3364
    %v3377 = vpack.c.b16 %v3367, %v3366
    %v3378 = vpack.c.b16 %v3369, %v3368
    %v3379 = vpack.c.b16 %v3371, %v3370
    %v3384 = vunpack.c.l.b16 %v3156
    %v3385 = vunpack.c.l.b16 %v3157
    %v3386 = vunpack.c.l.b16 %v3158
    %v3387 = vunpack.c.l.b16 %v3159
    %v3388 = vpack.c.b16 %v3385, %v3384
    %v3389 = vpack.c.b16 %v3387, %v3386
    %v3393 = vsel %vm1421, %v3372, 0
    %v3396 = vsel %vm1421, %v3373, 0
    %v3399 = vsel %vm1421, %v3374, 0
    %v3402 = vsel %vm1421, %v3375, 0
    %v3405 = vsel %vm1421, %v3376, 0
    %v3408 = vsel %vm1421, %v3377, 0
    %v3411 = vsel %vm1421, %v3378, 0
    %v3414 = vsel %vm1421, %v3379, 0
    %3416 = vmatprep.subr.bf16.mxu0 0
    %3417 = vmatpush1.bf16.msra.mxu0 %v3388
    %3418 = vmatprep.subr.bf16.mxu0 0
    %3419 = vmatpush1.bf16.msra.mxu0 %v3389
    %3420 = vmatprep.subr.bf16.mxu0 0
    %3421 = vmatpush1.bf16.msra.mxu0 0
    %3422 = vmatprep.subr.bf16.mxu0 0
    %3423 = vmatpush1.bf16.msra.mxu0 0
    %3424 = vmatprep.subr.bf16.mxu0 0
    %3425 = vmatpush1.bf16.msra.mxu0 0
    %3426 = vmatprep.subr.bf16.mxu0 0
    %3427 = vmatpush1.bf16.msra.mxu0 0
    %3428 = vmatprep.subr.bf16.mxu0 0
    %3429 = vmatpush1.bf16.msra.mxu0 0
    %3430 = vmatprep.subr.bf16.mxu0 0
    %3431 = vmatpush1.bf16.msra.mxu0 0
    %3432 = vmatprep.subr.bf16.mxu0 0
    %3433 = vmatpush1.bf16.msra.mxu0 0
    %3434 = vmatprep.subr.bf16.mxu0 0
    %3435 = vmatpush1.bf16.msra.mxu0 0
    %3436 = vmatprep.subr.bf16.mxu0 0
    %3437 = vmatpush1.bf16.msra.mxu0 0
    %3438 = vmatprep.subr.bf16.mxu0 0
    %3439 = vmatpush1.bf16.msra.mxu0 0
    %3440 = vmatprep.subr.bf16.mxu0 0
    %3441 = vmatpush1.bf16.msra.mxu0 0
    %3442 = vmatprep.subr.bf16.mxu0 0
    %3443 = vmatpush1.bf16.msra.mxu0 0
    %3444 = vmatprep.subr.bf16.mxu0 0
    %3445 = vmatpush1.bf16.msra.mxu0 0
    %3446 = vmatprep.subr.bf16.mxu0 0
    %3447 = vmatpush1.bf16.msra.mxu0 0
    %3448 = vmatprep.mubr.bf16.mxu0 0
    %3449 = vmatmul.mubr.bf16.gmra.mrb[0].mxu0 %v3393
    %v3450 = vpop.f32.mrb[0].mxu0
    %v3451 = vadd.f32 %v3278, %v3450
    %v3452 = vpop.f32.mrb[0].mxu0
    %v3453 = vpop.f32.mrb[0].mxu0
    %v3454 = vadd.f32 %v3281, %v3453
    %v3455 = vpop.f32.mrb[0].mxu0
    %3456 = vmatprep.mubr.bf16.mxu0 0
    %3457 = vmatmul.mubr.bf16.gmra.mrb[0].mxu0 %v3396
    %v3458 = vpop.f32.mrb[0].mxu0
    %v3459 = vadd.f32 %v3286, %v3458
    %v3460 = vpop.f32.mrb[0].mxu0
    %v3461 = vpop.f32.mrb[0].mxu0
    %v3462 = vadd.f32 %v3289, %v3461
    %v3463 = vpop.f32.mrb[0].mxu0
    %3464 = vmatprep.mubr.bf16.mxu0 0
    %3465 = vmatmul.mubr.bf16.gmra.mrb[0].mxu0 %v3399
    %v3466 = vpop.f32.mrb[0].mxu0
    %v3467 = vadd.f32 %v3294, %v3466
    %v3468 = vpop.f32.mrb[0].mxu0
    %v3469 = vpop.f32.mrb[0].mxu0
    %v3470 = vadd.f32 %v3297, %v3469
    %v3471 = vpop.f32.mrb[0].mxu0
    %3472 = vmatprep.mubr.bf16.mxu0 0
    %3473 = vmatmul.mubr.bf16.gmra.mrb[0].mxu0 %v3402
    %v3474 = vpop.f32.mrb[0].mxu0
    %v3475 = vadd.f32 %v3302, %v3474
    %v3476 = vpop.f32.mrb[0].mxu0
    %v3477 = vpop.f32.mrb[0].mxu0
    %v3478 = vadd.f32 %v3305, %v3477
    %v3479 = vpop.f32.mrb[0].mxu0
    %3480 = vmatprep.mubr.bf16.mxu0 0
    %3481 = vmatmul.mubr.bf16.gmra.mrb[0].mxu0 %v3405
    %v3482 = vpop.f32.mrb[0].mxu0
    %v3483 = vadd.f32 %v3310, %v3482
    %v3484 = vpop.f32.mrb[0].mxu0
    %v3485 = vpop.f32.mrb[0].mxu0
    %v3486 = vadd.f32 %v3313, %v3485
    %v3487 = vpop.f32.mrb[0].mxu0
    %3488 = vmatprep.mubr.bf16.mxu0 0
    %3489 = vmatmul.mubr.bf16.gmra.mrb[0].mxu0 %v3408
    %v3490 = vpop.f32.mrb[0].mxu0
    %v3491 = vadd.f32 %v3318, %v3490
    %v3492 = vpop.f32.mrb[0].mxu0
    %v3493 = vpop.f32.mrb[0].mxu0
    %v3494 = vadd.f32 %v3321, %v3493
    %v3495 = vpop.f32.mrb[0].mxu0
    %3496 = vmatprep.mubr.bf16.mxu0 0
    %3497 = vmatmul.mubr.bf16.gmra.mrb[0].mxu0 %v3411
    %v3498 = vpop.f32.mrb[0].mxu0
    %v3499 = vadd.f32 %v3326, %v3498
    %v3500 = vpop.f32.mrb[0].mxu0
    %v3501 = vpop.f32.mrb[0].mxu0
    %v3502 = vadd.f32 %v3329, %v3501
    %v3503 = vpop.f32.mrb[0].mxu0
    %3504 = vmatprep.mubr.bf16.mxu0 0
    %3505 = vmatmul.mubr.bf16.gmra.mrb[0].mxu0 %v3414
    %v3506 = vpop.f32.mrb[0].mxu0
    %v3507 = vadd.f32 %v3334, %v3506
    %v3508 = vpop.f32.mrb[0].mxu0
    %v3509 = vpop.f32.mrb[0].mxu0
    %v3510 = vadd.f32 %v3337, %v3509
    %v3511 = vpop.f32.mrb[0].mxu0
    %3512 = vdwg.mxu0
    %v3513 = vld [vmem:[#allocation2 + $0x24] sm:$0xf]
    %v3514 = vld [vmem:[#allocation2 + $0x50] sm:$0xf]
    %s3515 = scalar_lea.vmem %s4, 96
    %v3516 = vld [vmem:[%s3515] sm:$0xf]
    %v3517 = vld [vmem:[%s3515 + $0x4] sm:$0xf]
    %v3518 = vld [vmem:[%s3515 + $0x8] sm:$0xf]
    %v3519 = vld [vmem:[%s3515 + $0xc] sm:$0xf]
    %v3524 = vunpack.c.l.b16 %v2435
    %v3525 = vunpack.c.l.b16 %v3513
    %v3526 = vunpack.c.l.b16 %v2437
    %v3527 = vunpack.c.l.b16 %v3514
    %v3528 = vpack.c.b16 %v3185, %v3184
    %v3529 = vpack.c.b16 %v3187, %v3186
    %v3530 = vpack.c.b16 %v3189, %v3188
    %v3531 = vpack.c.b16 %v3525, %v3524
    %v3532 = vpack.c.b16 %v3193, %v3192
    %v3533 = vpack.c.b16 %v3195, %v3194
    %v3534 = vpack.c.b16 %v3197, %v3196
    %v3535 = vpack.c.b16 %v3527, %v3526
    %v3540 = vunpack.c.l.b16 %v3516
    %v3541 = vunpack.c.l.b16 %v3517
    %v3542 = vunpack.c.l.b16 %v3518
    %v3543 = vunpack.c.l.b16 %v3519
    %v3544 = vpack.c.b16 %v3541, %v3540
    %v3545 = vpack.c.b16 %v3543, %v3542
    %v3549 = vsel %vm1421, %v3528, 0
    %v3552 = vsel %vm1421, %v3529, 0
    %v3555 = vsel %vm1421, %v3530, 0
    %v3558 = vsel %vm1421, %v3531, 0
    %v3561 = vsel %vm1421, %v3532, 0
    %v3564 = vsel %vm1421, %v3533, 0
    %v3567 = vsel %vm1421, %v3534, 0
    %v3570 = vsel %vm1421, %v3535, 0
    %3572 = vmatprep.subr.bf16.mxu0 0
    %3573 = vmatpush1.bf16.msra.mxu0 %v3544
    %3574 = vmatprep.subr.bf16.mxu0 0
    %3575 = vmatpush1.bf16.msra.mxu0 %v3545
    %3576 = vmatprep.subr.bf16.mxu0 0
    %3577 = vmatpush1.bf16.msra.mxu0 0
    %3578 = vmatprep.subr.bf16.mxu0 0
    %3579 = vmatpush1.bf16.msra.mxu0 0
    %3580 = vmatprep.subr.bf16.mxu0 0
    %3581 = vmatpush1.bf16.msra.mxu0 0
    %3582 = vmatprep.subr.bf16.mxu0 0
    %3583 = vmatpush1.bf16.msra.mxu0 0
    %3584 = vmatprep.subr.bf16.mxu0 0
    %3585 = vmatpush1.bf16.msra.mxu0 0
    %3586 = vmatprep.subr.bf16.mxu0 0
    %3587 = vmatpush1.bf16.msra.mxu0 0
    %3588 = vmatprep.subr.bf16.mxu0 0
    %3589 = vmatpush1.bf16.msra.mxu0 0
    %3590 = vmatprep.subr.bf16.mxu0 0
    %3591 = vmatpush1.bf16.msra.mxu0 0
    %3592 = vmatprep.subr.bf16.mxu0 0
    %3593 = vmatpush1.bf16.msra.mxu0 0
    %3594 = vmatprep.subr.bf16.mxu0 0
    %3595 = vmatpush1.bf16.msra.mxu0 0
    %3596 = vmatprep.subr.bf16.mxu0 0
    %3597 = vmatpush1.bf16.msra.mxu0 0
    %3598 = vmatprep.subr.bf16.mxu0 0
    %3599 = vmatpush1.bf16.msra.mxu0 0
    %3600 = vmatprep.subr.bf16.mxu0 0
    %3601 = vmatpush1.bf16.msra.mxu0 0
    %3602 = vmatprep.subr.bf16.mxu0 0
    %3603 = vmatpush1.bf16.msra.mxu0 0
    %3604 = vmatprep.mubr.bf16.mxu0 0
    %3605 = vmatmul.mubr.bf16.gmra.mrb[0].mxu0 %v3549
    %v3606 = vpop.f32.mrb[0].mxu0
    %v3607 = vadd.f32 0.0, %v3606
    %v3608 = vpop.f32.mrb[0].mxu0
    %v3609 = vpop.f32.mrb[0].mxu0
    %v3610 = vadd.f32 0.0, %v3609
    %v3611 = vpop.f32.mrb[0].mxu0
    %3612 = vmatprep.mubr.bf16.mxu0 0
    %3613 = vmatmul.mubr.bf16.gmra.mrb[0].mxu0 %v3552
    %v3614 = vpop.f32.mrb[0].mxu0
    %v3615 = vadd.f32 0.0, %v3614
    %v3616 = vpop.f32.mrb[0].mxu0
    %v3617 = vpop.f32.mrb[0].mxu0
    %v3618 = vadd.f32 0.0, %v3617
    %v3619 = vpop.f32.mrb[0].mxu0
    %3620 = vmatprep.mubr.bf16.mxu0 0
    %3621 = vmatmul.mubr.bf16.gmra.mrb[0].mxu0 %v3555
    %v3622 = vpop.f32.mrb[0].mxu0
    %v3623 = vadd.f32 0.0, %v3622
    %v3624 = vpop.f32.mrb[0].mxu0
    %v3625 = vpop.f32.mrb[0].mxu0
    %v3626 = vadd.f32 0.0, %v3625
    %v3627 = vpop.f32.mrb[0].mxu0
    %3628 = vmatprep.mubr.bf16.mxu0 0
    %3629 = vmatmul.mubr.bf16.gmra.mrb[0].mxu0 %v3558
    %v3630 = vpop.f32.mrb[0].mxu0
    %v3631 = vadd.f32 0.0, %v3630
    %v3632 = vpop.f32.mrb[0].mxu0
    %v3633 = vpop.f32.mrb[0].mxu0
    %v3634 = vadd.f32 0.0, %v3633
    %v3635 = vpop.f32.mrb[0].mxu0
    %3636 = vmatprep.mubr.bf16.mxu0 0
    %3637 = vmatmul.mubr.bf16.gmra.mrb[0].mxu0 %v3561
    %v3638 = vpop.f32.mrb[0].mxu0
    %v3639 = vadd.f32 0.0, %v3638
    %v3640 = vpop.f32.mrb[0].mxu0
    %v3641 = vpop.f32.mrb[0].mxu0
    %v3642 = vadd.f32 0.0, %v3641
    %v3643 = vpop.f32.mrb[0].mxu0
    %3644 = vmatprep.mubr.bf16.mxu0 0
    %3645 = vmatmul.mubr.bf16.gmra.mrb[0].mxu0 %v3564
    %v3646 = vpop.f32.mrb[0].mxu0
    %v3647 = vadd.f32 0.0, %v3646
    %v3648 = vpop.f32.mrb[0].mxu0
    %v3649 = vpop.f32.mrb[0].mxu0
    %v3650 = vadd.f32 0.0, %v3649
    %v3651 = vpop.f32.mrb[0].mxu0
    %3652 = vmatprep.mubr.bf16.mxu0 0
    %3653 = vmatmul.mubr.bf16.gmra.mrb[0].mxu0 %v3567
    %v3654 = vpop.f32.mrb[0].mxu0
    %v3655 = vadd.f32 0.0, %v3654
    %v3656 = vpop.f32.mrb[0].mxu0
    %v3657 = vpop.f32.mrb[0].mxu0
    %v3658 = vadd.f32 0.0, %v3657
    %v3659 = vpop.f32.mrb[0].mxu0
    %3660 = vmatprep.mubr.bf16.mxu0 0
    %3661 = vmatmul.mubr.bf16.gmra.mrb[0].mxu0 %v3570
    %v3662 = vpop.f32.mrb[0].mxu0
    %v3663 = vadd.f32 0.0, %v3662
    %v3664 = vpop.f32.mrb[0].mxu0
    %v3665 = vpop.f32.mrb[0].mxu0
    %v3666 = vadd.f32 0.0, %v3665
    %v3667 = vpop.f32.mrb[0].mxu0
    %3668 = vdwg.mxu0
    %v3669 = vadd.f32 %v3451, %v3607
    %v3670 = vadd.f32 %v3454, %v3610
    %v3671 = vadd.f32 %v3459, %v3615
    %v3672 = vadd.f32 %v3462, %v3618
    %v3673 = vadd.f32 %v3467, %v3623
    %v3674 = vadd.f32 %v3470, %v3626
    %v3675 = vadd.f32 %v3475, %v3631
    %v3676 = vadd.f32 %v3478, %v3634
    %v3677 = vadd.f32 %v3483, %v3639
    %v3678 = vadd.f32 %v3486, %v3642
    %v3679 = vadd.f32 %v3491, %v3647
    %v3680 = vadd.f32 %v3494, %v3650
    %v3681 = vadd.f32 %v3499, %v3655
    %v3682 = vadd.f32 %v3502, %v3658
    %v3683 = vadd.f32 %v3507, %v3663
    %v3684 = vadd.f32 %v3510, %v3666
    %v3685 = vmul.f32 %v2177, %v3669
    %v3686 = vmul.f32 %v2178, %v3670
    %v3687 = vmul.f32 %v2179, %v3671
    %v3688 = vmul.f32 %v2180, %v3672
    %v3689 = vmul.f32 %v2181, %v3673
    %v3690 = vmul.f32 %v2182, %v3674
    %v3691 = vmul.f32 %v2183, %v3675
    %v3692 = vmul.f32 %v2184, %v3676
    %v3693 = vmul.f32 %v2185, %v3677
    %v3694 = vmul.f32 %v2186, %v3678
    %v3695 = vmul.f32 %v2187, %v3679
    %v3696 = vmul.f32 %v2188, %v3680
    %v3697 = vmul.f32 %v2189, %v3681
    %v3698 = vmul.f32 %v2190, %v3682
    %v3699 = vmul.f32 %v2191, %v3683
    %v3700 = vmul.f32 %v2192, %v3684
    %v3701 = vadd.f32 %v3124, %v3685
    %v3702 = vadd.f32 %v3125, %v3686
    %v3703 = vadd.f32 %v3126, %v3687
    %v3704 = vadd.f32 %v3127, %v3688
    %v3705 = vadd.f32 %v3128, %v3689
    %v3706 = vadd.f32 %v3129, %v3690
    %v3707 = vadd.f32 %v3130, %v3691
    %v3708 = vadd.f32 %v3131, %v3692
    %v3709 = vadd.f32 %v3132, %v3693
    %v3710 = vadd.f32 %v3133, %v3694
    %v3711 = vadd.f32 %v3134, %v3695
    %v3712 = vadd.f32 %v3135, %v3696
    %v3713 = vadd.f32 %v3136, %v3697
    %v3714 = vadd.f32 %v3137, %v3698
    %v3715 = vadd.f32 %v3138, %v3699
    %v3716 = vadd.f32 %v3139, %v3700
    %v3717 = vld [vmem:[#allocation2] sm:$0xe]
    %v3718 = vld [vmem:[#allocation2 + $0x2c] sm:$0xe]
    %vm3723 = vcmask 1042432
    %vm3724 = vcmask 1046532
    %vm3725 = vmor %vm3723, %vm3724
    %v3726 = vrot.slane %v3717, 5
    %v3727 = vrot.slane %v3726, 4
    %v3728 = vrot.slane %v2242, 5
    %v3729 = vsel %vm3725, %v3727, %v3728
    %v3730 = vrot.slane %v3728, 4
    %v3731 = vrot.slane %v2243, 5
    %v3732 = vsel %vm3725, %v3730, %v3731
    %v3733 = vrot.slane %v3731, 4
    %v3734 = vrot.slane %v2244, 5
    %v3735 = vsel %vm3725, %v3733, %v3734
    %v3736 = vrot.slane %v3734, 4
    %v3737 = vrot.slane %v2245, 5
    %v3738 = vsel %vm3725, %v3736, %v3737
    %v3739 = vrot.slane %v3737, 4
    %v3740 = vrot.slane %v2246, 5
    %v3741 = vsel %vm3725, %v3739, %v3740
    %v3742 = vrot.slane %v3740, 4
    %v3743 = vrot.slane %v2247, 5
    %v3744 = vsel %vm3725, %v3742, %v3743
    %v3745 = vrot.slane %v3743, 4
    %v3746 = vrot.slane %v2248, 5
    %v3747 = vsel %vm3725, %v3745, %v3746
    %v3748 = vrot.slane %v3746, 4
    %v3749 = vrot.slane %v2249, 5
    %v3750 = vsel %vm3725, %v3748, %v3749
    %v3751 = vrot.slane %v3718, 5
    %v3752 = vrot.slane %v3751, 4
    %v3753 = vrot.slane %v2251, 5
    %v3754 = vsel %vm3725, %v3752, %v3753
    %v3755 = vrot.slane %v3753, 4
    %v3756 = vrot.slane %v2252, 5
    %v3757 = vsel %vm3725, %v3755, %v3756
    %v3758 = vrot.slane %v3756, 4
    %v3759 = vrot.slane %v2253, 5
    %v3760 = vsel %vm3725, %v3758, %v3759
    %v3761 = vrot.slane %v3759, 4
    %v3762 = vrot.slane %v2254, 5
    %v3763 = vsel %vm3725, %v3761, %v3762
    %v3764 = vrot.slane %v3762, 4
    %v3765 = vrot.slane %v2255, 5
    %v3766 = vsel %vm3725, %v3764, %v3765
    %v3767 = vrot.slane %v3765, 4
    %v3768 = vrot.slane %v2256, 5
    %v3769 = vsel %vm3725, %v3767, %v3768
    %v3770 = vrot.slane %v3768, 4
    %v3771 = vrot.slane %v2257, 5
    %v3772 = vsel %vm3725, %v3770, %v3771
    %v3773 = vrot.slane %v3771, 4
    %v3774 = vrot.slane %v2258, 5
    %v3775 = vsel %vm3725, %v3773, %v3774
    %s3776 = scalar_lea.vmem %s4, 32
    %v3777 = vld [vmem:[%s3776] sm:$0xf]
    %v3778 = vld [vmem:[%s3776 + $0x4] sm:$0xf]
    %v3779 = vld [vmem:[%s3776 + $0x8] sm:$0xf]
    %v3780 = vld [vmem:[%s3776 + $0xc] sm:$0xf]
    %v3781 = vld [vmem:[#allocation2 + $0x4] sm:$0xe]
    %v3782 = vld [vmem:[#allocation2 + $0x30] sm:$0xe]
    %v3787 = vrot.slane %v3781, 5
    %v3788 = vrot.slane %v3787, 4
    %v3789 = vsel %vm3725, %v3788, %v3731
    %v3790 = vrot.slane %v2435, 5
    %v3791 = vsel %vm3725, %v3748, %v3790
    %v3792 = vrot.slane %v3790, 4
    %v3793 = vrot.slane %v2436, 5
    %v3794 = vsel %vm3725, %v3792, %v3793
    %v3795 = vrot.slane %v3782, 5
    %v3796 = vrot.slane %v3795, 4
    %v3797 = vsel %vm3725, %v3796, %v3756
    %v3798 = vrot.slane %v2437, 5
    %v3799 = vsel %vm3725, %v3773, %v3798
    %v3800 = vrot.slane %v3798, 4
    %v3801 = vrot.slane %v2438, 5
    %v3802 = vsel %vm3725, %v3800, %v3801
    %s3803 = scalar_lea.vmem %s4, 80
    %v3804 = vld [vmem:[%s3803] sm:$0xf]
    %v3805 = vld [vmem:[%s3803 + $0x4] sm:$0xf]
    %v3806 = vld [vmem:[%s3803 + $0x8] sm:$0xf]
    %v3807 = vld [vmem:[%s3803 + $0xc] sm:$0xf]
    %v3808 = vunpack.c.l.b16 %v3789
    %v3809 = vunpack.c.l.b16 %v3735
    %v3810 = vunpack.c.l.b16 %v3738
    %v3811 = vunpack.c.l.b16 %v3741
    %v3812 = vunpack.c.l.b16 %v3744
    %v3813 = vunpack.c.l.b16 %v3747
    %v3814 = vunpack.c.l.b16 %v3791
    %v3815 = vunpack.c.l.b16 %v3794
    %v3816 = vunpack.c.l.b16 %v3797
    %v3817 = vunpack.c.l.b16 %v3760
    %v3818 = vunpack.c.l.b16 %v3763
    %v3819 = vunpack.c.l.b16 %v3766
    %v3820 = vunpack.c.l.b16 %v3769
    %v3821 = vunpack.c.l.b16 %v3772
    %v3822 = vunpack.c.l.b16 %v3799
    %v3823 = vunpack.c.l.b16 %v3802
    %v3824 = vpack.c.b16 %v3809, %v3808
    %v3825 = vpack.c.b16 %v3811, %v3810
    %v3826 = vpack.c.b16 %v3813, %v3812
    %v3827 = vpack.c.b16 %v3815, %v3814
    %v3828 = vpack.c.b16 %v3817, %v3816
    %v3829 = vpack.c.b16 %v3819, %v3818
    %v3830 = vpack.c.b16 %v3821, %v3820
    %v3831 = vpack.c.b16 %v3823, %v3822
    %v3836 = vunpack.c.l.b16 %v3804
    %v3837 = vunpack.c.l.b16 %v3805
    %v3838 = vunpack.c.l.b16 %v3806
    %v3839 = vunpack.c.l.b16 %v3807
    %v3840 = vpack.c.b16 %v3837, %v3836
    %v3841 = vpack.c.b16 %v3839, %v3838
    %v3845 = vsel %vm1421, %v3824, 0
    %v3848 = vsel %vm1421, %v3825, 0
    %v3851 = vsel %vm1421, %v3826, 0
    %v3854 = vsel %vm1421, %v3827, 0
    %v3857 = vsel %vm1421, %v3828, 0
    %v3860 = vsel %vm1421, %v3829, 0
    %v3863 = vsel %vm1421, %v3830, 0
    %v3866 = vsel %vm1421, %v3831, 0
    %3868 = vmatprep.subr.bf16.mxu0 0
    %3869 = vmatpush1.bf16.msra.mxu0 %v3840
    %3870 = vmatprep.subr.bf16.mxu0 0
    %3871 = vmatpush1.bf16.msra.mxu0 %v3841
    %3872 = vmatprep.subr.bf16.mxu0 0
    %3873 = vmatpush1.bf16.msra.mxu0 0
    %3874 = vmatprep.subr.bf16.mxu0 0
    %3875 = vmatpush1.bf16.msra.mxu0 0
    %3876 = vmatprep.subr.bf16.mxu0 0
    %3877 = vmatpush1.bf16.msra.mxu0 0
    %3878 = vmatprep.subr.bf16.mxu0 0
    %3879 = vmatpush1.bf16.msra.mxu0 0
    %3880 = vmatprep.subr.bf16.mxu0 0
    %3881 = vmatpush1.bf16.msra.mxu0 0
    %3882 = vmatprep.subr.bf16.mxu0 0
    %3883 = vmatpush1.bf16.msra.mxu0 0
    %3884 = vmatprep.subr.bf16.mxu0 0
    %3885 = vmatpush1.bf16.msra.mxu0 0
    %3886 = vmatprep.subr.bf16.mxu0 0
    %3887 = vmatpush1.bf16.msra.mxu0 0
    %3888 = vmatprep.subr.bf16.mxu0 0
    %3889 = vmatpush1.bf16.msra.mxu0 0
    %3890 = vmatprep.subr.bf16.mxu0 0
    %3891 = vmatpush1.bf16.msra.mxu0 0
    %3892 = vmatprep.subr.bf16.mxu0 0
    %3893 = vmatpush1.bf16.msra.mxu0 0
    %3894 = vmatprep.subr.bf16.mxu0 0
    %3895 = vmatpush1.bf16.msra.mxu0 0
    %3896 = vmatprep.subr.bf16.mxu0 0
    %3897 = vmatpush1.bf16.msra.mxu0 0
    %3898 = vmatprep.subr.bf16.mxu0 0
    %3899 = vmatpush1.bf16.msra.mxu0 0
    %3900 = vmatprep.mubr.bf16.mxu0 0
    %3901 = vmatmul.mubr.bf16.gmra.mrb[0].mxu0 %v3845
    %v3902 = vpop.f32.mrb[0].mxu0
    %v3903 = vadd.f32 0.0, %v3902
    %v3904 = vpop.f32.mrb[0].mxu0
    %v3905 = vpop.f32.mrb[0].mxu0
    %v3906 = vadd.f32 0.0, %v3905
    %v3907 = vpop.f32.mrb[0].mxu0
    %3908 = vmatprep.mubr.bf16.mxu0 0
    %3909 = vmatmul.mubr.bf16.gmra.mrb[0].mxu0 %v3848
    %v3910 = vpop.f32.mrb[0].mxu0
    %v3911 = vadd.f32 0.0, %v3910
    %v3912 = vpop.f32.mrb[0].mxu0
    %v3913 = vpop.f32.mrb[0].mxu0
    %v3914 = vadd.f32 0.0, %v3913
    %v3915 = vpop.f32.mrb[0].mxu0
    %3916 = vmatprep.mubr.bf16.mxu0 0
    %3917 = vmatmul.mubr.bf16.gmra.mrb[0].mxu0 %v3851
    %v3918 = vpop.f32.mrb[0].mxu0
    %v3919 = vadd.f32 0.0, %v3918
    %v3920 = vpop.f32.mrb[0].mxu0
    %v3921 = vpop.f32.mrb[0].mxu0
    %v3922 = vadd.f32 0.0, %v3921
    %v3923 = vpop.f32.mrb[0].mxu0
    %3924 = vmatprep.mubr.bf16.mxu0 0
    %3925 = vmatmul.mubr.bf16.gmra.mrb[0].mxu0 %v3854
    %v3926 = vpop.f32.mrb[0].mxu0
    %v3927 = vadd.f32 0.0, %v3926
    %v3928 = vpop.f32.mrb[0].mxu0
    %v3929 = vpop.f32.mrb[0].mxu0
    %v3930 = vadd.f32 0.0, %v3929
    %v3931 = vpop.f32.mrb[0].mxu0
    %3932 = vmatprep.mubr.bf16.mxu0 0
    %3933 = vmatmul.mubr.bf16.gmra.mrb[0].mxu0 %v3857
    %v3934 = vpop.f32.mrb[0].mxu0
    %v3935 = vadd.f32 0.0, %v3934
    %v3936 = vpop.f32.mrb[0].mxu0
    %v3937 = vpop.f32.mrb[0].mxu0
    %v3938 = vadd.f32 0.0, %v3937
    %v3939 = vpop.f32.mrb[0].mxu0
    %3940 = vmatprep.mubr.bf16.mxu0 0
    %3941 = vmatmul.mubr.bf16.gmra.mrb[0].mxu0 %v3860
    %v3942 = vpop.f32.mrb[0].mxu0
    %v3943 = vadd.f32 0.0, %v3942
    %v3944 = vpop.f32.mrb[0].mxu0
    %v3945 = vpop.f32.mrb[0].mxu0
    %v3946 = vadd.f32 0.0, %v3945
    %v3947 = vpop.f32.mrb[0].mxu0
    %3948 = vmatprep.mubr.bf16.mxu0 0
    %3949 = vmatmul.mubr.bf16.gmra.mrb[0].mxu0 %v3863
    %v3950 = vpop.f32.mrb[0].mxu0
    %v3951 = vadd.f32 0.0, %v3950
    %v3952 = vpop.f32.mrb[0].mxu0
    %v3953 = vpop.f32.mrb[0].mxu0
    %v3954 = vadd.f32 0.0, %v3953
    %v3955 = vpop.f32.mrb[0].mxu0
    %3956 = vmatprep.mubr.bf16.mxu0 0
    %3957 = vmatmul.mubr.bf16.gmra.mrb[0].mxu0 %v3866
    %v3958 = vpop.f32.mrb[0].mxu0
    %v3959 = vadd.f32 0.0, %v3958
    %v3960 = vpop.f32.mrb[0].mxu0
    %v3961 = vpop.f32.mrb[0].mxu0
    %v3962 = vadd.f32 0.0, %v3961
    %v3963 = vpop.f32.mrb[0].mxu0
    %3964 = vdwg.mxu0
    %v3965 = vunpack.c.l.b16 %v3729
    %v3966 = vunpack.c.l.b16 %v3732
    %v3967 = vunpack.c.l.b16 %v3750
    %v3968 = vunpack.c.l.b16 %v3754
    %v3969 = vunpack.c.l.b16 %v3757
    %v3970 = vunpack.c.l.b16 %v3775
    %v3971 = vpack.c.b16 %v3966, %v3965
    %v3972 = vpack.c.b16 %v3810, %v3809
    %v3973 = vpack.c.b16 %v3812, %v3811
    %v3974 = vpack.c.b16 %v3967, %v3813
    %v3975 = vpack.c.b16 %v3969, %v3968
    %v3976 = vpack.c.b16 %v3818, %v3817
    %v3977 = vpack.c.b16 %v3820, %v3819
    %v3978 = vpack.c.b16 %v3970, %v3821
    %v3983 = vunpack.c.l.b16 %v3777
    %v3984 = vunpack.c.l.b16 %v3778
    %v3985 = vunpack.c.l.b16 %v3779
    %v3986 = vunpack.c.l.b16 %v3780
    %v3987 = vpack.c.b16 %v3984, %v3983
    %v3988 = vpack.c.b16 %v3986, %v3985
    %v3992 = vsel %vm1421, %v3971, 0
    %v3995 = vsel %vm1421, %v3972, 0
    %v3998 = vsel %vm1421, %v3973, 0
    %v4001 = vsel %vm1421, %v3974, 0
    %v4004 = vsel %vm1421, %v3975, 0
    %v4007 = vsel %vm1421, %v3976, 0
    %v4010 = vsel %vm1421, %v3977, 0
    %v4013 = vsel %vm1421, %v3978, 0
    %4015 = vmatprep.subr.bf16.mxu0 0
    %4016 = vmatpush1.bf16.msra.mxu0 %v3987
    %4017 = vmatprep.subr.bf16.mxu0 0
    %4018 = vmatpush1.bf16.msra.mxu0 %v3988
    %4019 = vmatprep.subr.bf16.mxu0 0
    %4020 = vmatpush1.bf16.msra.mxu0 0
    %4021 = vmatprep.subr.bf16.mxu0 0
    %4022 = vmatpush1.bf16.msra.mxu0 0
    %4023 = vmatprep.subr.bf16.mxu0 0
    %4024 = vmatpush1.bf16.msra.mxu0 0
    %4025 = vmatprep.subr.bf16.mxu0 0
    %4026 = vmatpush1.bf16.msra.mxu0 0
    %4027 = vmatprep.subr.bf16.mxu0 0
    %4028 = vmatpush1.bf16.msra.mxu0 0
    %4029 = vmatprep.subr.bf16.mxu0 0
    %4030 = vmatpush1.bf16.msra.mxu0 0
    %4031 = vmatprep.subr.bf16.mxu0 0
    %4032 = vmatpush1.bf16.msra.mxu0 0
    %4033 = vmatprep.subr.bf16.mxu0 0
    %4034 = vmatpush1.bf16.msra.mxu0 0
    %4035 = vmatprep.subr.bf16.mxu0 0
    %4036 = vmatpush1.bf16.msra.mxu0 0
    %4037 = vmatprep.subr.bf16.mxu0 0
    %4038 = vmatpush1.bf16.msra.mxu0 0
    %4039 = vmatprep.subr.bf16.mxu0 0
    %4040 = vmatpush1.bf16.msra.mxu0 0
    %4041 = vmatprep.subr.bf16.mxu0 0
    %4042 = vmatpush1.bf16.msra.mxu0 0
    %4043 = vmatprep.subr.bf16.mxu0 0
    %4044 = vmatpush1.bf16.msra.mxu0 0
    %4045 = vmatprep.subr.bf16.mxu0 0
    %4046 = vmatpush1.bf16.msra.mxu0 0
    %4047 = vmatprep.mubr.bf16.mxu0 0
    %4048 = vmatmul.mubr.bf16.gmra.mrb[0].mxu0 %v3992
    %v4049 = vpop.f32.mrb[0].mxu0
    %v4050 = vadd.f32 %v3903, %v4049
    %v4051 = vpop.f32.mrb[0].mxu0
    %v4052 = vpop.f32.mrb[0].mxu0
    %v4053 = vadd.f32 %v3906, %v4052
    %v4054 = vpop.f32.mrb[0].mxu0
    %4055 = vmatprep.mubr.bf16.mxu0 0
    %4056 = vmatmul.mubr.bf16.gmra.mrb[0].mxu0 %v3995
    %v4057 = vpop.f32.mrb[0].mxu0
    %v4058 = vadd.f32 %v3911, %v4057
    %v4059 = vpop.f32.mrb[0].mxu0
    %v4060 = vpop.f32.mrb[0].mxu0
    %v4061 = vadd.f32 %v3914, %v4060
    %v4062 = vpop.f32.mrb[0].mxu0
    %4063 = vmatprep.mubr.bf16.mxu0 0
    %4064 = vmatmul.mubr.bf16.gmra.mrb[0].mxu0 %v3998
    %v4065 = vpop.f32.mrb[0].mxu0
    %v4066 = vadd.f32 %v3919, %v4065
    %v4067 = vpop.f32.mrb[0].mxu0
    %v4068 = vpop.f32.mrb[0].mxu0
    %v4069 = vadd.f32 %v3922, %v4068
    %v4070 = vpop.f32.mrb[0].mxu0
    %4071 = vmatprep.mubr.bf16.mxu0 0
    %4072 = vmatmul.mubr.bf16.gmra.mrb[0].mxu0 %v4001
    %v4073 = vpop.f32.mrb[0].mxu0
    %v4074 = vadd.f32 %v3927, %v4073
    %v4075 = vpop.f32.mrb[0].mxu0
    %v4076 = vpop.f32.mrb[0].mxu0
    %v4077 = vadd.f32 %v3930, %v4076
    %v4078 = vpop.f32.mrb[0].mxu0
    %4079 = vmatprep.mubr.bf16.mxu0 0
    %4080 = vmatmul.mubr.bf16.gmra.mrb[0].mxu0 %v4004
    %v4081 = vpop.f32.mrb[0].mxu0
    %v4082 = vadd.f32 %v3935, %v4081
    %v4083 = vpop.f32.mrb[0].mxu0
    %v4084 = vpop.f32.mrb[0].mxu0
    %v4085 = vadd.f32 %v3938, %v4084
    %v4086 = vpop.f32.mrb[0].mxu0
    %4087 = vmatprep.mubr.bf16.mxu0 0
    %4088 = vmatmul.mubr.bf16.gmra.mrb[0].mxu0 %v4007
    %v4089 = vpop.f32.mrb[0].mxu0
    %v4090 = vadd.f32 %v3943, %v4089
    %v4091 = vpop.f32.mrb[0].mxu0
    %v4092 = vpop.f32.mrb[0].mxu0
    %v4093 = vadd.f32 %v3946, %v4092
    %v4094 = vpop.f32.mrb[0].mxu0
    %4095 = vmatprep.mubr.bf16.mxu0 0
    %4096 = vmatmul.mubr.bf16.gmra.mrb[0].mxu0 %v4010
    %v4097 = vpop.f32.mrb[0].mxu0
    %v4098 = vadd.f32 %v3951, %v4097
    %v4099 = vpop.f32.mrb[0].mxu0
    %v4100 = vpop.f32.mrb[0].mxu0
    %v4101 = vadd.f32 %v3954, %v4100
    %v4102 = vpop.f32.mrb[0].mxu0
    %4103 = vmatprep.mubr.bf16.mxu0 0
    %4104 = vmatmul.mubr.bf16.gmra.mrb[0].mxu0 %v4013
    %v4105 = vpop.f32.mrb[0].mxu0
    %v4106 = vadd.f32 %v3959, %v4105
    %v4107 = vpop.f32.mrb[0].mxu0
    %v4108 = vpop.f32.mrb[0].mxu0
    %v4109 = vadd.f32 %v3962, %v4108
    %v4110 = vpop.f32.mrb[0].mxu0
    %4111 = vdwg.mxu0
    %v4112 = vld [vmem:[#allocation2 + $0x8] sm:$0xe]
    %v4113 = vld [vmem:[#allocation2 + $0x34] sm:$0xe]
    %v4132 = vrot.slane %v4112, 5
    %v4133 = vrot.slane %v4132, 4
    %v4134 = vrot.slane %v2777, 5
    %v4135 = vsel %vm3725, %v4133, %v4134
    %v4136 = vrot.slane %v4134, 4
    %v4137 = vrot.slane %v2778, 5
    %v4138 = vsel %vm3725, %v4136, %v4137
    %v4139 = vrot.slane %v4137, 4
    %v4140 = vrot.slane %v2779, 5
    %v4141 = vsel %vm3725, %v4139, %v4140
    %v4142 = vrot.slane %v4140, 4
    %v4143 = vrot.slane %v2780, 5
    %v4144 = vsel %vm3725, %v4142, %v4143
    %v4145 = vrot.slane %v4143, 4
    %v4146 = vrot.slane %v2781, 5
    %v4147 = vsel %vm3725, %v4145, %v4146
    %v4148 = vrot.slane %v4146, 4
    %v4149 = vrot.slane %v2782, 5
    %v4150 = vsel %vm3725, %v4148, %v4149
    %v4151 = vrot.slane %v4149, 4
    %v4152 = vrot.slane %v2783, 5
    %v4153 = vsel %vm3725, %v4151, %v4152
    %v4154 = vrot.slane %v4152, 4
    %v4155 = vrot.slane %v2784, 5
    %v4156 = vsel %vm3725, %v4154, %v4155
    %v4157 = vrot.slane %v4113, 5
    %v4158 = vrot.slane %v4157, 4
    %v4159 = vrot.slane %v2786, 5
    %v4160 = vsel %vm3725, %v4158, %v4159
    %v4161 = vrot.slane %v4159, 4
    %v4162 = vrot.slane %v2787, 5
    %v4163 = vsel %vm3725, %v4161, %v4162
    %v4164 = vrot.slane %v4162, 4
    %v4165 = vrot.slane %v2788, 5
    %v4166 = vsel %vm3725, %v4164, %v4165
    %v4167 = vrot.slane %v4165, 4
    %v4168 = vrot.slane %v2789, 5
    %v4169 = vsel %vm3725, %v4167, %v4168
    %v4170 = vrot.slane %v4168, 4
    %v4171 = vrot.slane %v2790, 5
    %v4172 = vsel %vm3725, %v4170, %v4171
    %v4173 = vrot.slane %v4171, 4
    %v4174 = vrot.slane %v2791, 5
    %v4175 = vsel %vm3725, %v4173, %v4174
    %v4176 = vrot.slane %v4174, 4
    %v4177 = vrot.slane %v2792, 5
    %v4178 = vsel %vm3725, %v4176, %v4177
    %v4179 = vrot.slane %v4177, 4
    %v4180 = vrot.slane %v2793, 5
    %v4181 = vsel %vm3725, %v4179, %v4180
    %s4182 = scalar_lea.vmem %s4, 128
    %v4183 = vld [vmem:[%s4182] sm:$0xf]
    %v4184 = vld [vmem:[%s4182 + $0x4] sm:$0xf]
    %v4185 = vld [vmem:[%s4182 + $0x8] sm:$0xf]
    %v4186 = vld [vmem:[%s4182 + $0xc] sm:$0xf]
    %v4187 = vunpack.c.l.b16 %v4135
    %v4188 = vunpack.c.l.b16 %v4138
    %v4189 = vunpack.c.l.b16 %v4141
    %v4190 = vunpack.c.l.b16 %v4144
    %v4191 = vunpack.c.l.b16 %v4147
    %v4192 = vunpack.c.l.b16 %v4150
    %v4193 = vunpack.c.l.b16 %v4153
    %v4194 = vunpack.c.l.b16 %v4156
    %v4195 = vunpack.c.l.b16 %v4160
    %v4196 = vunpack.c.l.b16 %v4163
    %v4197 = vunpack.c.l.b16 %v4166
    %v4198 = vunpack.c.l.b16 %v4169
    %v4199 = vunpack.c.l.b16 %v4172
    %v4200 = vunpack.c.l.b16 %v4175
    %v4201 = vunpack.c.l.b16 %v4178
    %v4202 = vunpack.c.l.b16 %v4181
    %v4203 = vpack.c.b16 %v4188, %v4187
    %v4204 = vpack.c.b16 %v4190, %v4189
    %v4205 = vpack.c.b16 %v4192, %v4191
    %v4206 = vpack.c.b16 %v4194, %v4193
    %v4207 = vpack.c.b16 %v4196, %v4195
    %v4208 = vpack.c.b16 %v4198, %v4197
    %v4209 = vpack.c.b16 %v4200, %v4199
    %v4210 = vpack.c.b16 %v4202, %v4201
    %v4215 = vunpack.c.l.b16 %v4183
    %v4216 = vunpack.c.l.b16 %v4184
    %v4217 = vunpack.c.l.b16 %v4185
    %v4218 = vunpack.c.l.b16 %v4186
    %v4219 = vpack.c.b16 %v4216, %v4215
    %v4220 = vpack.c.b16 %v4218, %v4217
    %v4224 = vsel %vm1421, %v4203, 0
    %v4227 = vsel %vm1421, %v4204, 0
    %v4230 = vsel %vm1421, %v4205, 0
    %v4233 = vsel %vm1421, %v4206, 0
    %v4236 = vsel %vm1421, %v4207, 0
    %v4239 = vsel %vm1421, %v4208, 0
    %v4242 = vsel %vm1421, %v4209, 0
    %v4245 = vsel %vm1421, %v4210, 0
    %4247 = vmatprep.subr.bf16.mxu0 0
    %4248 = vmatpush1.bf16.msra.mxu0 %v4219
    %4249 = vmatprep.subr.bf16.mxu0 0
    %4250 = vmatpush1.bf16.msra.mxu0 %v4220
    %4251 = vmatprep.subr.bf16.mxu0 0
    %4252 = vmatpush1.bf16.msra.mxu0 0
    %4253 = vmatprep.subr.bf16.mxu0 0
    %4254 = vmatpush1.bf16.msra.mxu0 0
    %4255 = vmatprep.subr.bf16.mxu0 0
    %4256 = vmatpush1.bf16.msra.mxu0 0
    %4257 = vmatprep.subr.bf16.mxu0 0
    %4258 = vmatpush1.bf16.msra.mxu0 0
    %4259 = vmatprep.subr.bf16.mxu0 0
    %4260 = vmatpush1.bf16.msra.mxu0 0
    %4261 = vmatprep.subr.bf16.mxu0 0
    %4262 = vmatpush1.bf16.msra.mxu0 0
    %4263 = vmatprep.subr.bf16.mxu0 0
    %4264 = vmatpush1.bf16.msra.mxu0 0
    %4265 = vmatprep.subr.bf16.mxu0 0
    %4266 = vmatpush1.bf16.msra.mxu0 0
    %4267 = vmatprep.subr.bf16.mxu0 0
    %4268 = vmatpush1.bf16.msra.mxu0 0
    %4269 = vmatprep.subr.bf16.mxu0 0
    %4270 = vmatpush1.bf16.msra.mxu0 0
    %4271 = vmatprep.subr.bf16.mxu0 0
    %4272 = vmatpush1.bf16.msra.mxu0 0
    %4273 = vmatprep.subr.bf16.mxu0 0
    %4274 = vmatpush1.bf16.msra.mxu0 0
    %4275 = vmatprep.subr.bf16.mxu0 0
    %4276 = vmatpush1.bf16.msra.mxu0 0
    %4277 = vmatprep.subr.bf16.mxu0 0
    %4278 = vmatpush1.bf16.msra.mxu0 0
    %4279 = vmatprep.mubr.bf16.mxu0 0
    %4280 = vmatmul.mubr.bf16.gmra.mrb[0].mxu0 %v4224
    %v4281 = vpop.f32.mrb[0].mxu0
    %v4282 = vadd.f32 0.0, %v4281
    %v4283 = vpop.f32.mrb[0].mxu0
    %v4284 = vpop.f32.mrb[0].mxu0
    %v4285 = vadd.f32 0.0, %v4284
    %v4286 = vpop.f32.mrb[0].mxu0
    %4287 = vmatprep.mubr.bf16.mxu0 0
    %4288 = vmatmul.mubr.bf16.gmra.mrb[0].mxu0 %v4227
    %v4289 = vpop.f32.mrb[0].mxu0
    %v4290 = vadd.f32 0.0, %v4289
    %v4291 = vpop.f32.mrb[0].mxu0
    %v4292 = vpop.f32.mrb[0].mxu0
    %v4293 = vadd.f32 0.0, %v4292
    %v4294 = vpop.f32.mrb[0].mxu0
    %4295 = vmatprep.mubr.bf16.mxu0 0
    %4296 = vmatmul.mubr.bf16.gmra.mrb[0].mxu0 %v4230
    %v4297 = vpop.f32.mrb[0].mxu0
    %v4298 = vadd.f32 0.0, %v4297
    %v4299 = vpop.f32.mrb[0].mxu0
    %v4300 = vpop.f32.mrb[0].mxu0
    %v4301 = vadd.f32 0.0, %v4300
    %v4302 = vpop.f32.mrb[0].mxu0
    %4303 = vmatprep.mubr.bf16.mxu0 0
    %4304 = vmatmul.mubr.bf16.gmra.mrb[0].mxu0 %v4233
    %v4305 = vpop.f32.mrb[0].mxu0
    %v4306 = vadd.f32 0.0, %v4305
    %v4307 = vpop.f32.mrb[0].mxu0
    %v4308 = vpop.f32.mrb[0].mxu0
    %v4309 = vadd.f32 0.0, %v4308
    %v4310 = vpop.f32.mrb[0].mxu0
    %4311 = vmatprep.mubr.bf16.mxu0 0
    %4312 = vmatmul.mubr.bf16.gmra.mrb[0].mxu0 %v4236
    %v4313 = vpop.f32.mrb[0].mxu0
    %v4314 = vadd.f32 0.0, %v4313
    %v4315 = vpop.f32.mrb[0].mxu0
    %v4316 = vpop.f32.mrb[0].mxu0
    %v4317 = vadd.f32 0.0, %v4316
    %v4318 = vpop.f32.mrb[0].mxu0
    %4319 = vmatprep.mubr.bf16.mxu0 0
    %4320 = vmatmul.mubr.bf16.gmra.mrb[0].mxu0 %v4239
    %v4321 = vpop.f32.mrb[0].mxu0
    %v4322 = vadd.f32 0.0, %v4321
    %v4323 = vpop.f32.mrb[0].mxu0
    %v4324 = vpop.f32.mrb[0].mxu0
    %v4325 = vadd.f32 0.0, %v4324
    %v4326 = vpop.f32.mrb[0].mxu0
    %4327 = vmatprep.mubr.bf16.mxu0 0
    %4328 = vmatmul.mubr.bf16.gmra.mrb[0].mxu0 %v4242
    %v4329 = vpop.f32.mrb[0].mxu0
    %v4330 = vadd.f32 0.0, %v4329
    %v4331 = vpop.f32.mrb[0].mxu0
    %v4332 = vpop.f32.mrb[0].mxu0
    %v4333 = vadd.f32 0.0, %v4332
    %v4334 = vpop.f32.mrb[0].mxu0
    %4335 = vmatprep.mubr.bf16.mxu0 0
    %4336 = vmatmul.mubr.bf16.gmra.mrb[0].mxu0 %v4245
    %v4337 = vpop.f32.mrb[0].mxu0
    %v4338 = vadd.f32 0.0, %v4337
    %v4339 = vpop.f32.mrb[0].mxu0
    %v4340 = vpop.f32.mrb[0].mxu0
    %v4341 = vadd.f32 0.0, %v4340
    %v4342 = vpop.f32.mrb[0].mxu0
    %4343 = vdwg.mxu0
    %v4344 = vadd.f32 %v4050, %v4282
    %v4345 = vadd.f32 %v4053, %v4285
    %v4346 = vadd.f32 %v4058, %v4290
    %v4347 = vadd.f32 %v4061, %v4293
    %v4348 = vadd.f32 %v4066, %v4298
    %v4349 = vadd.f32 %v4069, %v4301
    %v4350 = vadd.f32 %v4074, %v4306
    %v4351 = vadd.f32 %v4077, %v4309
    %v4352 = vadd.f32 %v4082, %v4314
    %v4353 = vadd.f32 %v4085, %v4317
    %v4354 = vadd.f32 %v4090, %v4322
    %v4355 = vadd.f32 %v4093, %v4325
    %v4356 = vadd.f32 %v4098, %v4330
    %v4357 = vadd.f32 %v4101, %v4333
    %v4358 = vadd.f32 %v4106, %v4338
    %v4359 = vadd.f32 %v4109, %v4341
    %v4360 = vmul.f32 %v2225, %v4344
    %v4361 = vmul.f32 %v2226, %v4345
    %v4362 = vmul.f32 %v2227, %v4346
    %v4363 = vmul.f32 %v2228, %v4347
    %v4364 = vmul.f32 %v2229, %v4348
    %v4365 = vmul.f32 %v2230, %v4349
    %v4366 = vmul.f32 %v2231, %v4350
    %v4367 = vmul.f32 %v2232, %v4351
    %v4368 = vmul.f32 %v2233, %v4352
    %v4369 = vmul.f32 %v2234, %v4353
    %v4370 = vmul.f32 %v2235, %v4354
    %v4371 = vmul.f32 %v2236, %v4355
    %v4372 = vmul.f32 %v2237, %v4356
    %v4373 = vmul.f32 %v2238, %v4357
    %v4374 = vmul.f32 %v2239, %v4358
    %v4375 = vmul.f32 %v2240, %v4359
    %v4376 = vadd.f32 %v3701, %v4360
    %v4377 = vadd.f32 %v3702, %v4361
    %v4378 = vadd.f32 %v3703, %v4362
    %v4379 = vadd.f32 %v3704, %v4363
    %v4380 = vadd.f32 %v3705, %v4364
    %v4381 = vadd.f32 %v3706, %v4365
    %v4382 = vadd.f32 %v3707, %v4366
    %v4383 = vadd.f32 %v3708, %v4367
    %v4384 = vadd.f32 %v3709, %v4368
    %v4385 = vadd.f32 %v3710, %v4369
    %v4386 = vadd.f32 %v3711, %v4370
    %v4387 = vadd.f32 %v3712, %v4371
    %v4388 = vadd.f32 %v3713, %v4372
    %v4389 = vadd.f32 %v3714, %v4373
    %v4390 = vadd.f32 %v3715, %v4374
    %v4391 = vadd.f32 %v3716, %v4375
    %4392 = vmatprep.subr.mxu0 0.0
    %4393 = vmatpush1.msra.mxu0 %v4376
    %4394 = vmatprep.subr.mxu0 0.0
    %4395 = vmatpush1.msra.mxu0 %v4377
    %4396 = vmatprep.subr.mxu0 0.0
    %4397 = vmatpush1.msra.mxu0 %v4378
    %4398 = vmatprep.subr.mxu0 0.0
    %4399 = vmatpush1.msra.mxu0 %v4379
    %4400 = vmatprep.subr.mxu0 0.0
    %4401 = vmatpush1.msra.mxu0 %v4380
    %4402 = vmatprep.subr.mxu0 0.0
    %4403 = vmatpush1.msra.mxu0 %v4381
    %4404 = vmatprep.subr.mxu0 0.0
    %4405 = vmatpush1.msra.mxu0 %v4382
    %4406 = vmatprep.subr.mxu0 0.0
    %4407 = vmatpush1.msra.mxu0 %v4383
    %4408 = vmatprep.subr.mxu0 0.0
    %4409 = vmatpush1.msra.mxu0 %v4384
    %4410 = vmatprep.subr.mxu0 0.0
    %4411 = vmatpush1.msra.mxu0 %v4385
    %4412 = vmatprep.subr.mxu0 0.0
    %4413 = vmatpush1.msra.mxu0 %v4386
    %4414 = vmatprep.subr.mxu0 0.0
    %4415 = vmatpush1.msra.mxu0 %v4387
    %4416 = vmatprep.subr.mxu0 0.0
    %4417 = vmatpush1.msra.mxu0 %v4388
    %4418 = vmatprep.subr.mxu0 0.0
    %4419 = vmatpush1.msra.mxu0 %v4389
    %4420 = vmatprep.subr.mxu0 0.0
    %4421 = vmatpush1.msra.mxu0 %v4390
    %4422 = vmatprep.subr.mxu0 0.0
    %4423 = vmatpush1.msra.mxu0 %v4391
    %4424 = vmatprep.subr.mxu0 0.0
    %4425 = vmatpush1.msra.mxu0 0.0
    %4426 = vmatprep.subr.mxu0 0.0
    %4427 = vmatpush1.msra.mxu0 0.0
    %4428 = vmatprep.subr.mxu0 0.0
    %4429 = vmatpush1.msra.mxu0 0.0
    %4430 = vmatprep.subr.mxu0 0.0
    %4431 = vmatpush1.msra.mxu0 0.0
    %4432 = vmatprep.subr.mxu0 0.0
    %4433 = vmatpush1.msra.mxu0 0.0
    %4434 = vmatprep.subr.mxu0 0.0
    %4435 = vmatpush1.msra.mxu0 0.0
    %4436 = vmatprep.subr.mxu0 0.0
    %4437 = vmatpush1.msra.mxu0 0.0
    %4438 = vmatprep.subr.mxu0 0.0
    %4439 = vmatpush1.msra.mxu0 0.0
    %4440 = vmatprep.subr.mxu0 0.0
    %4441 = vmatpush1.msra.mxu0 0.0
    %4442 = vmatprep.subr.mxu0 0.0
    %4443 = vmatpush1.msra.mxu0 0.0
    %4444 = vmatprep.subr.mxu0 0.0
    %4445 = vmatpush1.msra.mxu0 0.0
    %4446 = vmatprep.subr.mxu0 0.0
    %4447 = vmatpush1.msra.mxu0 0.0
    %4448 = vmatprep.subr.mxu0 0.0
    %4449 = vmatpush1.msra.mxu0 0.0
    %4450 = vmatprep.subr.mxu0 0.0
    %4451 = vmatpush1.msra.mxu0 0.0
    %4452 = vmatprep.subr.mxu0 0.0
    %4453 = vmatpush1.msra.mxu0 0.0
    %4454 = vmatprep.subr.mxu0 0.0
    %4455 = vmatpush1.msra.mxu0 0.0
    %4456 = vmatprep.mubr.f32.mxu0 0.0
    %4457 = vmatmul.mubr.f32.gmra.mrb[0].mxu0 1.0
    %v4458 = vpop.f32.mrb[0].mxu0
    %v4459 = vadd.f32 0.0, %v4458
    %v4460 = vpop.f32.mrb[0].mxu0
    %4461 = vdwg.mxu0
    %v4462 = vmul.f32 %v4376, %v4376
    %v4463 = vmul.f32 %v4377, %v4377
    %v4464 = vmul.f32 %v4378, %v4378
    %v4465 = vmul.f32 %v4379, %v4379
    %v4466 = vmul.f32 %v4380, %v4380
    %v4467 = vmul.f32 %v4381, %v4381
    %v4468 = vmul.f32 %v4382, %v4382
    %v4469 = vmul.f32 %v4383, %v4383
    %v4470 = vmul.f32 %v4384, %v4384
    %v4471 = vmul.f32 %v4385, %v4385
    %v4472 = vmul.f32 %v4386, %v4386
    %v4473 = vmul.f32 %v4387, %v4387
    %v4474 = vmul.f32 %v4388, %v4388
    %v4475 = vmul.f32 %v4389, %v4389
    %v4476 = vmul.f32 %v4390, %v4390
    %v4477 = vmul.f32 %v4391, %v4391
    %4478 = vmatprep.subr.mxu0 0.0
    %4479 = vmatpush1.msra.mxu0 %v4462
    %4480 = vmatprep.subr.mxu0 0.0
    %4481 = vmatpush1.msra.mxu0 %v4463
    %4482 = vmatprep.subr.mxu0 0.0
    %4483 = vmatpush1.msra.mxu0 %v4464
    %4484 = vmatprep.subr.mxu0 0.0
    %4485 = vmatpush1.msra.mxu0 %v4465
    %4486 = vmatprep.subr.mxu0 0.0
    %4487 = vmatpush1.msra.mxu0 %v4466
    %4488 = vmatprep.subr.mxu0 0.0
    %4489 = vmatpush1.msra.mxu0 %v4467
    %4490 = vmatprep.subr.mxu0 0.0
    %4491 = vmatpush1.msra.mxu0 %v4468
    %4492 = vmatprep.subr.mxu0 0.0
    %4493 = vmatpush1.msra.mxu0 %v4469
    %4494 = vmatprep.subr.mxu0 0.0
    %4495 = vmatpush1.msra.mxu0 %v4470
    %4496 = vmatprep.subr.mxu0 0.0
    %4497 = vmatpush1.msra.mxu0 %v4471
    %4498 = vmatprep.subr.mxu0 0.0
    %4499 = vmatpush1.msra.mxu0 %v4472
    %4500 = vmatprep.subr.mxu0 0.0
    %4501 = vmatpush1.msra.mxu0 %v4473
    %4502 = vmatprep.subr.mxu0 0.0
    %4503 = vmatpush1.msra.mxu0 %v4474
    %4504 = vmatprep.subr.mxu0 0.0
    %4505 = vmatpush1.msra.mxu0 %v4475
    %4506 = vmatprep.subr.mxu0 0.0
    %4507 = vmatpush1.msra.mxu0 %v4476
    %4508 = vmatprep.subr.mxu0 0.0
    %4509 = vmatpush1.msra.mxu0 %v4477
    %4510 = vmatprep.subr.mxu0 0.0
    %4511 = vmatpush1.msra.mxu0 0.0
    %4512 = vmatprep.subr.mxu0 0.0
    %4513 = vmatpush1.msra.mxu0 0.0
    %4514 = vmatprep.subr.mxu0 0.0
    %4515 = vmatpush1.msra.mxu0 0.0
    %4516 = vmatprep.subr.mxu0 0.0
    %4517 = vmatpush1.msra.mxu0 0.0
    %4518 = vmatprep.subr.mxu0 0.0
    %4519 = vmatpush1.msra.mxu0 0.0
    %4520 = vmatprep.subr.mxu0 0.0
    %4521 = vmatpush1.msra.mxu0 0.0
    %4522 = vmatprep.subr.mxu0 0.0
    %4523 = vmatpush1.msra.mxu0 0.0
    %4524 = vmatprep.subr.mxu0 0.0
    %4525 = vmatpush1.msra.mxu0 0.0
    %4526 = vmatprep.subr.mxu0 0.0
    %4527 = vmatpush1.msra.mxu0 0.0
    %4528 = vmatprep.subr.mxu0 0.0
    %4529 = vmatpush1.msra.mxu0 0.0
    %4530 = vmatprep.subr.mxu0 0.0
    %4531 = vmatpush1.msra.mxu0 0.0
    %4532 = vmatprep.subr.mxu0 0.0
    %4533 = vmatpush1.msra.mxu0 0.0
    %4534 = vmatprep.subr.mxu0 0.0
    %4535 = vmatpush1.msra.mxu0 0.0
    %4536 = vmatprep.subr.mxu0 0.0
    %4537 = vmatpush1.msra.mxu0 0.0
    %4538 = vmatprep.subr.mxu0 0.0
    %4539 = vmatpush1.msra.mxu0 0.0
    %4540 = vmatprep.subr.mxu0 0.0
    %4541 = vmatpush1.msra.mxu0 0.0
    %4542 = vmatprep.mubr.f32.mxu0 0.0
    %4543 = vmatmul.mubr.f32.gmra.mrb[0].mxu0 1.0
    %v4544 = vpop.f32.mrb[0].mxu0
    %v4545 = vadd.f32 0.0, %v4544
    %v4546 = vpop.f32.mrb[0].mxu0
    %4547 = vdwg.mxu0
    %v4548 = vmul.f32 %v4459, 0.0078125
    %v4549 = vmul.f32 %v4545, 0.0078125
    %v4550 = vmul.f32 %v4548, %v4548
    %v4551 = vsub.f32 %v4549, %v4550
    %v4552 = vlaneseq
    %v4553 = vshrl.u32 %v4552, 7
    %v4554 = vsub.s32 0, %v4553
    %v4555 = vrot.slane %v4548, %v4554
    %v4556 = vsub.f32 %v4376, %v4555
    %v4557 = vsub.f32 %v4377, %v4555
    %v4558 = vsub.f32 %v4378, %v4555
    %v4559 = vsub.f32 %v4379, %v4555
    %v4560 = vsub.f32 %v4380, %v4555
    %v4561 = vsub.f32 %v4381, %v4555
    %v4562 = vsub.f32 %v4382, %v4555
    %v4563 = vsub.f32 %v4383, %v4555
    %v4564 = vsub.f32 %v4384, %v4555
    %v4565 = vsub.f32 %v4385, %v4555
    %v4566 = vsub.f32 %v4386, %v4555
    %v4567 = vsub.f32 %v4387, %v4555
    %v4568 = vsub.f32 %v4388, %v4555
    %v4569 = vsub.f32 %v4389, %v4555
    %v4570 = vsub.f32 %v4390, %v4555
    %v4571 = vsub.f32 %v4391, %v4555
    %v4572 = vadd.f32 %v4551, 1e-05
    %v4573 = vrsqrt.pop %v4572
    %v4574 = vlaneseq
    %v4575 = vshrl.u32 %v4574, 7
    %v4576 = vsub.s32 0, %v4575
    %v4577 = vrot.slane %v4573, %v4576
    %v4578 = vmul.f32 %v4556, %v4577
    %v4579 = vmul.f32 %v4557, %v4577
    %v4580 = vmul.f32 %v4558, %v4577
    %v4581 = vmul.f32 %v4559, %v4577
    %v4582 = vmul.f32 %v4560, %v4577
    %v4583 = vmul.f32 %v4561, %v4577
    %v4584 = vmul.f32 %v4562, %v4577
    %v4585 = vmul.f32 %v4563, %v4577
    %v4586 = vmul.f32 %v4564, %v4577
    %v4587 = vmul.f32 %v4565, %v4577
    %v4588 = vmul.f32 %v4566, %v4577
    %v4589 = vmul.f32 %v4567, %v4577
    %v4590 = vmul.f32 %v4568, %v4577
    %v4591 = vmul.f32 %v4569, %v4577
    %v4592 = vmul.f32 %v4570, %v4577
    %v4593 = vmul.f32 %v4571, %v4577
    %v4594 = vld [vmem:[%s5] sm:$0x1]
    %v4596 = vlaneseq
    %v4597 = vshrl.u32 %v4596, 7
    %v4598 = vsub.s32 0, %v4597
    %v4599 = vrot.slane %v4594, %v4598
    %v4601 = vmul.f32 %v4578, %v4599
    %v4602 = vmul.f32 %v4579, %v4599
    %v4603 = vmul.f32 %v4580, %v4599
    %v4604 = vmul.f32 %v4581, %v4599
    %v4605 = vmul.f32 %v4582, %v4599
    %v4606 = vmul.f32 %v4583, %v4599
    %v4607 = vmul.f32 %v4584, %v4599
    %v4608 = vmul.f32 %v4585, %v4599
    %v4609 = vmul.f32 %v4586, %v4599
    %v4610 = vmul.f32 %v4587, %v4599
    %v4611 = vmul.f32 %v4588, %v4599
    %v4612 = vmul.f32 %v4589, %v4599
    %v4613 = vmul.f32 %v4590, %v4599
    %v4614 = vmul.f32 %v4591, %v4599
    %v4615 = vmul.f32 %v4592, %v4599
    %v4616 = vmul.f32 %v4593, %v4599
    %v4617 = vld [vmem:[%s6] sm:$0x1]
    %v4619 = vlaneseq
    %v4620 = vshrl.u32 %v4619, 7
    %v4621 = vsub.s32 0, %v4620
    %v4622 = vrot.slane %v4617, %v4621
    %v4624 = vadd.f32 %v4601, %v4622
    %v4625 = vadd.f32 %v4602, %v4622
    %v4626 = vadd.f32 %v4603, %v4622
    %v4627 = vadd.f32 %v4604, %v4622
    %v4628 = vadd.f32 %v4605, %v4622
    %v4629 = vadd.f32 %v4606, %v4622
    %v4630 = vadd.f32 %v4607, %v4622
    %v4631 = vadd.f32 %v4608, %v4622
    %v4632 = vadd.f32 %v4609, %v4622
    %v4633 = vadd.f32 %v4610, %v4622
    %v4634 = vadd.f32 %v4611, %v4622
    %v4635 = vadd.f32 %v4612, %v4622
    %v4636 = vadd.f32 %v4613, %v4622
    %v4637 = vadd.f32 %v4614, %v4622
    %v4638 = vadd.f32 %v4615, %v4622
    %v4639 = vadd.f32 %v4616, %v4622
    %v4640 = vmax.f32 %v4624, 0.0
    %v4641 = vmax.f32 %v4625, 0.0
    %v4642 = vmax.f32 %v4626, 0.0
    %v4643 = vmax.f32 %v4627, 0.0
    %v4644 = vmax.f32 %v4628, 0.0
    %v4645 = vmax.f32 %v4629, 0.0
    %v4646 = vmax.f32 %v4630, 0.0
    %v4647 = vmax.f32 %v4631, 0.0
    %v4648 = vmax.f32 %v4632, 0.0
    %v4649 = vmax.f32 %v4633, 0.0
    %v4650 = vmax.f32 %v4634, 0.0
    %v4651 = vmax.f32 %v4635, 0.0
    %v4652 = vmax.f32 %v4636, 0.0
    %v4653 = vmax.f32 %v4637, 0.0
    %v4654 = vmax.f32 %v4638, 0.0
    %v4655 = vmax.f32 %v4639, 0.0
    %vm4656 = vcmask 523264
    %4657 = vst.msk [vmem:[#allocation6] sm:$0xff] %vm4656, %v4640
    %4658 = vst.msk [vmem:[#allocation6 + $0x8] sm:$0xff] %vm4656, %v4641
    %4659 = vst.msk [vmem:[#allocation6 + $0x10] sm:$0xff] %vm4656, %v4642
    %4660 = vst.msk [vmem:[#allocation6 + $0x18] sm:$0xff] %vm4656, %v4643
    %4661 = vst.msk [vmem:[#allocation6 + $0x20] sm:$0xff] %vm4656, %v4644
    %4662 = vst.msk [vmem:[#allocation6 + $0x28] sm:$0xff] %vm4656, %v4645
    %4663 = vst.msk [vmem:[#allocation6 + $0x30] sm:$0xff] %vm4656, %v4646
    %4664 = vst.msk [vmem:[#allocation6 + $0x38] sm:$0xff] %vm4656, %v4647
    %4665 = vst.msk [vmem:[#allocation6 + $0x40] sm:$0xff] %vm4656, %v4648
    %4666 = vst.msk [vmem:[#allocation6 + $0x48] sm:$0xff] %vm4656, %v4649
    %4667 = vst.msk [vmem:[#allocation6 + $0x50] sm:$0xff] %vm4656, %v4650
    %4668 = vst.msk [vmem:[#allocation6 + $0x58] sm:$0xff] %vm4656, %v4651
    %4669 = vst.msk [vmem:[#allocation6 + $0x60] sm:$0xff] %vm4656, %v4652
    %4670 = vst.msk [vmem:[#allocation6 + $0x68] sm:$0xff] %vm4656, %v4653
    %4671 = vst.msk [vmem:[#allocation6 + $0x70] sm:$0xff] %vm4656, %v4654
    %4672 = vst.msk [vmem:[#allocation6 + $0x78] sm:$0xff] %vm4656, %v4655
    %v4673 = vld [vmem:[#allocation6] sm:$0xff]
    %v4674 = vld [vmem:[#allocation6 + $0x10] sm:$0xff]
    %v4675 = vld [vmem:[#allocation6 + $0x20] sm:$0xff]
    %v4676 = vld [vmem:[#allocation6 + $0x30] sm:$0xff]
    %v4677 = vld [vmem:[#allocation6 + $0x40] sm:$0xff]
    %v4678 = vld [vmem:[#allocation6 + $0x50] sm:$0xff]
    %v4679 = vld [vmem:[#allocation6 + $0x60] sm:$0xff]
    %v4680 = vld [vmem:[#allocation6 + $0x70] sm:$0xff]
    %s4681 = scalar_lea.vmem [#allocation6], 8
    %v4682 = vld [vmem:[%s4681] sm:$0xff]
    %v4683 = vld [vmem:[%s4681 + $0x10] sm:$0xff]
    %v4684 = vld [vmem:[%s4681 + $0x20] sm:$0xff]
    %v4685 = vld [vmem:[%s4681 + $0x30] sm:$0xff]
    %v4686 = vld [vmem:[%s4681 + $0x40] sm:$0xff]
    %v4687 = vld [vmem:[%s4681 + $0x50] sm:$0xff]
    %v4688 = vld [vmem:[%s4681 + $0x60] sm:$0xff]
    %v4689 = vld [vmem:[%s4681 + $0x70] sm:$0xff]
    %v4690 = vmax.f32 %v4673, %v4682
    %v4691 = vmax.f32 %v4674, %v4683
    %v4692 = vmax.f32 %v4675, %v4684
    %v4693 = vmax.f32 %v4676, %v4685
    %v4694 = vmax.f32 %v4677, %v4686
    %v4695 = vmax.f32 %v4678, %v4687
    %v4696 = vmax.f32 %v4679, %v4688
    %v4697 = vmax.f32 %v4680, %v4689
    %4698 = vst.msk [vmem:[#allocation7] sm:$0xff] %vm4656, %v4690
    %4699 = vst.msk [vmem:[#allocation7 + $0x8] sm:$0xff] %vm4656, %v4691
    %4700 = vst.msk [vmem:[#allocation7 + $0x10] sm:$0xff] %vm4656, %v4692
    %4701 = vst.msk [vmem:[#allocation7 + $0x18] sm:$0xff] %vm4656, %v4693
    %4702 = vst.msk [vmem:[#allocation7 + $0x20] sm:$0xff] %vm4656, %v4694
    %4703 = vst.msk [vmem:[#allocation7 + $0x28] sm:$0xff] %vm4656, %v4695
    %4704 = vst.msk [vmem:[#allocation7 + $0x30] sm:$0xff] %vm4656, %v4696
    %4705 = vst.msk [vmem:[#allocation7 + $0x38] sm:$0xff] %vm4656, %v4697
    %v4706 = vld [vmem:[#allocation7] ss:$2 sm:$0xff]
    %s4707 = scalar_lea.vmem [#allocation7], 16
    %v4708 = vld [vmem:[%s4707] ss:$2 sm:$0xff]
    %s4709 = scalar_lea.vmem [#allocation7], 32
    %v4710 = vld [vmem:[%s4709] ss:$2 sm:$0xff]
    %s4711 = scalar_lea.vmem [#allocation7], 48
    %v4712 = vld [vmem:[%s4711] ss:$2 sm:$0xff]
    %s4713 = scalar_lea.vmem [#allocation7], 1
    %v4714 = vld [vmem:[%s4713] ss:$2 sm:$0xff]
    %s4715 = scalar_lea.vmem [#allocation7], 17
    %v4716 = vld [vmem:[%s4715] ss:$2 sm:$0xff]
    %s4717 = scalar_lea.vmem [#allocation7], 33
    %v4718 = vld [vmem:[%s4717] ss:$2 sm:$0xff]
    %s4719 = scalar_lea.vmem [#allocation7], 49
    %v4720 = vld [vmem:[%s4719] ss:$2 sm:$0xff]
    %v4721 = vmax.f32 %v4706, %v4714
    %v4722 = vmax.f32 %v4708, %v4716
    %v4723 = vmax.f32 %v4710, %v4718
    %v4724 = vmax.f32 %v4712, %v4720
    %v4725 = vpack.c.bf16 %v4722, %v4721
    %v4726 = vpack.c.bf16 %v4724, %v4723
    %v4729 = vunpack.c.l.b16 %v4725
    %v4730 = vunpack.c.h.b16 %v4725
    %v4731 = vunpack.c.l.b16 %v4726
    %v4732 = vunpack.c.h.b16 %v4726
    %v4733 = vpack.c.b16 %v4729, %v4729
    %v4734 = vpack.c.b16 %v4730, %v4730
    %v4735 = vpack.c.b16 %v4731, %v4731
    %v4736 = vpack.c.b16 %v4732, %v4732
    %vm4737 = vsmask.f32 2304
    %vm4738 = vsmask.f32 6416
    %vm4739 = vmor %vm4737, %vm4738
    %v4741 = vshrl.u32 %v4733, 16
    %v4743 = vrot.slane %v4741, 5
    %v4744 = vshll.u32 %v4733, 16
    %v4746 = vrot.slane %v4744, 6
    %v4747 = vor.u32 %v4743, %v4746
    %v4748 = vrot.slane %v4747, 4
    %v4750 = vshrl.u32 %v4734, 16
    %v4752 = vrot.slane %v4750, 5
    %v4753 = vshll.u32 %v4734, 16
    %v4755 = vrot.slane %v4753, 6
    %v4756 = vor.u32 %v4752, %v4755
    %v4757 = vsel %vm4739, %v4748, %v4756
    %v4758 = vrot.slane %v4756, 4
    %v4760 = vshrl.u32 %v4735, 16
    %v4762 = vrot.slane %v4760, 5
    %v4763 = vshll.u32 %v4735, 16
    %v4765 = vrot.slane %v4763, 6
    %v4766 = vor.u32 %v4762, %v4765
    %v4767 = vrot.slane %v4766, 4
    %v4769 = vshrl.u32 %v4736, 16
    %v4771 = vrot.slane %v4769, 5
    %v4772 = vshll.u32 %v4736, 16
    %v4774 = vrot.slane %v4772, 6
    %v4775 = vor.u32 %v4771, %v4774
    %v4776 = vsel %vm4739, %v4767, %v4775
    %v4777 = vrot.slane %v4775, 4
    %vm4784 = vcmask 519170
    %vm4785 = vsmask.f32 7946
    %vm4786 = vmand %vm4784, %vm4785
    %v4787 = vld [vmem:[#allocation3] sm:$0xc]
    %v4788 = vsel %vm4786, %v4747, %v4787
    %4789 = vst [vmem:[#allocation3] sm:$0xc] %v4788
    %4790 = vst.msk [vmem:[#allocation3 + $0x4] sm:$0xf] %vm87, %v4757
    %vm4791 = vcmask 518144
    %vm4792 = vmand %vm4791, %vm4737
    %v4793 = vld [vmem:[#allocation3 + $0x8] sm:$0x7]
    %v4794 = vsel %vm4792, %v4758, %v4793
    %4795 = vst [vmem:[#allocation3 + $0x8] sm:$0x7] %v4794
    %v4796 = vld [vmem:[#allocation3 + $0x10] sm:$0xc]
    %v4797 = vsel %vm4786, %v4766, %v4796
    %4798 = vst [vmem:[#allocation3 + $0x10] sm:$0xc] %v4797
    %4799 = vst.msk [vmem:[#allocation3 + $0x14] sm:$0xf] %vm87, %v4776
    %v4800 = vld [vmem:[#allocation3 + $0x18] sm:$0x7]
    %v4801 = vsel %vm4792, %v4777, %v4800
    %4802 = vst [vmem:[#allocation3 + $0x18] sm:$0x7] %v4801
    %vm4803 = vcmp.lt.s32.totalorder %v1937, 0
    %v4804 = vsub.s32 0, %v1937
    %v4805 = vsel %vm4803, %v4804, %v1937
    %v4806 = vshrl.u32 %v4805, 2
    %v4807 = vand.u32 %v4805, 3
    %v4808 = vsub.s32 0, %v4807
    %v4809 = vsel %vm4803, %v4808, %v4807
    %vm4810 = vcmp.lt.s32.totalorder %v1938, 0
    %v4811 = vsub.s32 0, %v1938
    %v4812 = vsel %vm4810, %v4811, %v1938
    %v4813 = vshrl.u32 %v4812, 2
    %v4814 = vand.u32 %v4812, 3
    %v4815 = vsub.s32 0, %v4814
    %v4816 = vsel %vm4810, %v4815, %v4814
    %vm4817 = vcmp.lt.s32.totalorder %v1939, 0
    %v4818 = vsub.s32 0, %v1939
    %v4819 = vsel %vm4817, %v4818, %v1939
    %v4820 = vshrl.u32 %v4819, 2
    %v4821 = vand.u32 %v4819, 3
    %v4822 = vsub.s32 0, %v4821
    %v4823 = vsel %vm4817, %v4822, %v4821
    %vm4824 = vcmp.lt.s32.totalorder %v1940, 0
    %v4825 = vsub.s32 0, %v1940
    %v4826 = vsel %vm4824, %v4825, %v1940
    %v4827 = vshrl.u32 %v4826, 2
    %v4828 = vand.u32 %v4826, 3
    %v4829 = vsub.s32 0, %v4828
    %v4830 = vsel %vm4824, %v4829, %v4828
    %vm4831 = vcmp.ne.s32.totalorder %v4809, 0
    %vm4832 = vcmp.ne.s32.totalorder %v4816, 0
    %vm4833 = vcmp.ne.s32.totalorder %v4823, 0
    %vm4834 = vcmp.ne.s32.totalorder %v4830, 0
    %vm4835 = vcmp.lt.s32.totalorder %v4809, 0
    %vm4836 = vcmp.lt.s32.totalorder %v4816, 0
    %vm4837 = vcmp.lt.s32.totalorder %v4823, 0
    %vm4838 = vcmp.lt.s32.totalorder %v4830, 0
    %vm4839 = vmand %vm4835, %vm4831
    %vm4840 = vmand %vm4836, %vm4832
    %vm4841 = vmand %vm4837, %vm4833
    %vm4842 = vmand %vm4838, %vm4834
    %v4843 = vadd.s32 %v4809, 4
    %v4844 = vadd.s32 %v4816, 4
    %v4845 = vadd.s32 %v4823, 4
    %v4846 = vadd.s32 %v4830, 4
    %v4847 = vsel %vm4839, %v4843, %v4809
    %v4848 = vsel %vm4840, %v4844, %v4816
    %v4849 = vsel %vm4841, %v4845, %v4823
    %v4850 = vsel %vm4842, %v4846, %v4830
    %vm4851 = vcmp.ge.s32.totalorder %v4847, 1
    %vm4852 = vcmp.ge.s32.totalorder %v4848, 1
    %vm4853 = vcmp.ge.s32.totalorder %v4849, 1
    %vm4854 = vcmp.ge.s32.totalorder %v4850, 1
    %v4855 = vsel %vm4851, 1, 0
    %v4856 = vsel %vm4852, 1, 0
    %v4857 = vsel %vm4853, 1, 0
    %v4858 = vsel %vm4854, 1, 0
    %v4859 = vcvt.s32.f32 %v4855
    %v4860 = vcvt.s32.f32 %v4856
    %v4861 = vcvt.s32.f32 %v4857
    %v4862 = vcvt.s32.f32 %v4858
    %vm4863 = vcmp.le.s32.totalorder %v4847, 2
    %vm4864 = vcmp.le.s32.totalorder %v4848, 2
    %vm4865 = vcmp.le.s32.totalorder %v4849, 2
    %vm4866 = vcmp.le.s32.totalorder %v4850, 2
    %v4867 = vsel %vm4863, 1, 0
    %v4868 = vsel %vm4864, 1, 0
    %v4869 = vsel %vm4865, 1, 0
    %v4870 = vsel %vm4866, 1, 0
    %v4871 = vcvt.s32.f32 %v4867
    %v4872 = vcvt.s32.f32 %v4868
    %v4873 = vcvt.s32.f32 %v4869
    %v4874 = vcvt.s32.f32 %v4870
    %v4875 = vld [vmem:[#allocation3] sm:$0xf]
    %v4876 = vld [vmem:[#allocation3 + $0x4] sm:$0xf]
    %v4877 = vld [vmem:[#allocation3 + $0x8] sm:$0x1]
    %v4878 = vld [vmem:[#allocation3 + $0x10] sm:$0xf]
    %v4879 = vld [vmem:[#allocation3 + $0x14] sm:$0xf]
    %v4880 = vld [vmem:[#allocation3 + $0x18] sm:$0x1]
    %v4882 = vshrl.u32 %v4875, 16
    %v4884 = vrot.slane %v4882, 4
    %v4885 = vshll.u32 %v4875, 16
    %v4887 = vrot.slane %v4885, 5
    %v4888 = vor.u32 %v4884, %v4887
    %v4889 = vrot.slane %v4888, 4
    %v4891 = vshll.u32 %v4876, 16
    %v4893 = vrot.slane %v4891, 5
    %v4894 = vsel %vm2261, %v4889, %v4893
    %v4895 = vshrl.u32 %v4876, 16
    %v4897 = vrot.slane %v4895, 4
    %v4898 = vor.u32 %v4897, %v4893
    %v4899 = vrot.slane %v4898, 4
    %v4901 = vshll.u32 %v4877, 16
    %v4903 = vrot.slane %v4901, 5
    %v4904 = vsel %vm2261, %v4899, %v4903
    %v4906 = vshrl.u32 %v4878, 16
    %v4908 = vrot.slane %v4906, 4
    %v4909 = vshll.u32 %v4878, 16
    %v4911 = vrot.slane %v4909, 5
    %v4912 = vor.u32 %v4908, %v4911
    %v4913 = vrot.slane %v4912, 4
    %v4915 = vshll.u32 %v4879, 16
    %v4917 = vrot.slane %v4915, 5
    %v4918 = vsel %vm2261, %v4913, %v4917
    %v4919 = vshrl.u32 %v4879, 16
    %v4921 = vrot.slane %v4919, 4
    %v4922 = vor.u32 %v4921, %v4917
    %v4923 = vrot.slane %v4922, 4
    %v4925 = vshll.u32 %v4880, 16
    %v4927 = vrot.slane %v4925, 5
    %v4928 = vsel %vm2261, %v4923, %v4927
    %s4929 = scalar_lea.vmem %s7, 32
    %v4930 = vld [vmem:[%s4929] sm:$0xf]
    %v4931 = vld [vmem:[%s4929 + $0x4] sm:$0xf]
    %v4932 = vld [vmem:[%s4929 + $0x8] sm:$0xf]
    %v4933 = vld [vmem:[%s4929 + $0xc] sm:$0xf]
    %v4934 = vld [vmem:[%s4929 + $0x10] sm:$0xf]
    %v4935 = vld [vmem:[%s4929 + $0x14] sm:$0xf]
    %v4936 = vld [vmem:[%s4929 + $0x18] sm:$0xf]
    %v4937 = vld [vmem:[%s4929 + $0x1c] sm:$0xf]
    %v4938 = vld [vmem:[#allocation3] sm:$0xc]
    %v4939 = vld [vmem:[#allocation3 + $0x8] sm:$0x7]
    %v4940 = vld [vmem:[#allocation3 + $0x10] sm:$0xc]
    %v4941 = vld [vmem:[#allocation3 + $0x18] sm:$0x7]
    %vm4942 = vsmask.f32 1280
    %vm4943 = vsmask.f32 5392
    %vm4944 = vmor %vm4942, %vm4943
    %v4946 = vshrl.u32 %v4938, 16
    %v4948 = vrot.slane %v4946, 6
    %v4949 = vshll.u32 %v4938, 16
    %v4951 = vrot.slane %v4949, 7
    %v4952 = vor.u32 %v4948, %v4951
    %v4953 = vrot.slane %v4952, 4
    %v4954 = vrot.slane %v4895, 6
    %v4955 = vrot.slane %v4891, 7
    %v4956 = vor.u32 %v4954, %v4955
    %v4957 = vsel %vm4944, %v4953, %v4956
    %v4958 = vrot.slane %v4956, 4
    %v4960 = vshrl.u32 %v4939, 16
    %v4962 = vrot.slane %v4960, 6
    %v4963 = vshll.u32 %v4939, 16
    %v4965 = vrot.slane %v4963, 7
    %v4966 = vor.u32 %v4962, %v4965
    %v4967 = vsel %vm4944, %v4958, %v4966
    %v4969 = vshrl.u32 %v4940, 16
    %v4971 = vrot.slane %v4969, 6
    %v4972 = vshll.u32 %v4940, 16
    %v4974 = vrot.slane %v4972, 7
    %v4975 = vor.u32 %v4971, %v4974
    %v4976 = vrot.slane %v4975, 4
    %v4977 = vrot.slane %v4919, 6
    %v4978 = vrot.slane %v4915, 7
    %v4979 = vor.u32 %v4977, %v4978
    %v4980 = vsel %vm4944, %v4976, %v4979
    %v4981 = vrot.slane %v4979, 4
    %v4983 = vshrl.u32 %v4941, 16
    %v4985 = vrot.slane %v4983, 6
    %v4986 = vshll.u32 %v4941, 16
    %v4988 = vrot.slane %v4986, 7
    %v4989 = vor.u32 %v4985, %v4988
    %v4990 = vsel %vm4944, %v4981, %v4989
    %s4991 = scalar_lea.vmem %s7, 128
    %v4992 = vld [vmem:[%s4991] sm:$0xf]
    %v4993 = vld [vmem:[%s4991 + $0x4] sm:$0xf]
    %v4994 = vld [vmem:[%s4991 + $0x8] sm:$0xf]
    %v4995 = vld [vmem:[%s4991 + $0xc] sm:$0xf]
    %v4996 = vld [vmem:[%s4991 + $0x10] sm:$0xf]
    %v4997 = vld [vmem:[%s4991 + $0x14] sm:$0xf]
    %v4998 = vld [vmem:[%s4991 + $0x18] sm:$0xf]
    %v4999 = vld [vmem:[%s4991 + $0x1c] sm:$0xf]
    %v5000 = vunpack.c.l.b16 %v4957
    %v5001 = vunpack.c.l.b16 %v4967
    %v5002 = vunpack.c.l.b16 %v4980
    %v5003 = vunpack.c.l.b16 %v4990
    %v5004 = vpack.c.b16 %v5001, %v5000
    %v5005 = vpack.c.b16 %v5003, %v5002
    %v5014 = vunpack.c.l.b16 %v4992
    %v5015 = vunpack.c.l.b16 %v4993
    %v5016 = vunpack.c.l.b16 %v4994
    %v5017 = vunpack.c.l.b16 %v4995
    %v5018 = vunpack.c.l.b16 %v4996
    %v5019 = vunpack.c.l.b16 %v4997
    %v5020 = vunpack.c.l.b16 %v4998
    %v5021 = vunpack.c.l.b16 %v4999
    %v5022 = vpack.c.b16 %v5015, %v5014
    %v5023 = vpack.c.b16 %v5017, %v5016
    %v5024 = vpack.c.b16 %v5019, %v5018
    %v5025 = vpack.c.b16 %v5021, %v5020
    %v5031 = vsel %vm4656, %v5004, 0
    %v5034 = vsel %vm4656, %v5005, 0
    %5036 = vmatprep.subr.bf16.mxu0 0
    %5037 = vmatpush1.bf16.msra.mxu0 %v5022
    %5038 = vmatprep.subr.bf16.mxu0 0
    %5039 = vmatpush1.bf16.msra.mxu0 %v5023
    %5040 = vmatprep.subr.bf16.mxu0 0
    %5041 = vmatpush1.bf16.msra.mxu0 %v5024
    %5042 = vmatprep.subr.bf16.mxu0 0
    %5043 = vmatpush1.bf16.msra.mxu0 %v5025
    %5044 = vmatprep.subr.bf16.mxu0 0
    %5045 = vmatpush1.bf16.msra.mxu0 0
    %5046 = vmatprep.subr.bf16.mxu0 0
    %5047 = vmatpush1.bf16.msra.mxu0 0
    %5048 = vmatprep.subr.bf16.mxu0 0
    %5049 = vmatpush1.bf16.msra.mxu0 0
    %5050 = vmatprep.subr.bf16.mxu0 0
    %5051 = vmatpush1.bf16.msra.mxu0 0
    %5052 = vmatprep.subr.bf16.mxu0 0
    %5053 = vmatpush1.bf16.msra.mxu0 0
    %5054 = vmatprep.subr.bf16.mxu0 0
    %5055 = vmatpush1.bf16.msra.mxu0 0
    %5056 = vmatprep.subr.bf16.mxu0 0
    %5057 = vmatpush1.bf16.msra.mxu0 0
    %5058 = vmatprep.subr.bf16.mxu0 0
    %5059 = vmatpush1.bf16.msra.mxu0 0
    %5060 = vmatprep.subr.bf16.mxu0 0
    %5061 = vmatpush1.bf16.msra.mxu0 0
    %5062 = vmatprep.subr.bf16.mxu0 0
    %5063 = vmatpush1.bf16.msra.mxu0 0
    %5064 = vmatprep.subr.bf16.mxu0 0
    %5065 = vmatpush1.bf16.msra.mxu0 0
    %5066 = vmatprep.subr.bf16.mxu0 0
    %5067 = vmatpush1.bf16.msra.mxu0 0
    %5068 = vmatprep.mubr.bf16.mxu0 0
    %5069 = vmatmul.mubr.bf16.gmra.mrb[0].mxu0 %v5031
    %v5070 = vpop.f32.mrb[0].mxu0
    %v5071 = vadd.f32 0.0, %v5070
    %v5072 = vpop.f32.mrb[0].mxu0
    %v5073 = vpop.f32.mrb[0].mxu0
    %v5074 = vadd.f32 0.0, %v5073
    %v5075 = vpop.f32.mrb[0].mxu0
    %5076 = vmatprep.mubr.bf16.mxu0 0
    %5077 = vmatmul.mubr.bf16.gmra.mrb[0].mxu0 %v5034
    %v5078 = vpop.f32.mrb[0].mxu0
    %v5079 = vadd.f32 0.0, %v5078
    %v5080 = vpop.f32.mrb[0].mxu0
    %v5081 = vpop.f32.mrb[0].mxu0
    %v5082 = vadd.f32 0.0, %v5081
    %v5083 = vpop.f32.mrb[0].mxu0
    %5084 = vdwg.mxu0
    %v5085 = vunpack.c.l.b16 %v4894
    %v5086 = vunpack.c.l.b16 %v4904
    %v5087 = vunpack.c.l.b16 %v4918
    %v5088 = vunpack.c.l.b16 %v4928
    %v5089 = vpack.c.b16 %v5086, %v5085
    %v5090 = vpack.c.b16 %v5088, %v5087
    %v5099 = vunpack.c.l.b16 %v4930
    %v5100 = vunpack.c.l.b16 %v4931
    %v5101 = vunpack.c.l.b16 %v4932
    %v5102 = vunpack.c.l.b16 %v4933
    %v5103 = vunpack.c.l.b16 %v4934
    %v5104 = vunpack.c.l.b16 %v4935
    %v5105 = vunpack.c.l.b16 %v4936
    %v5106 = vunpack.c.l.b16 %v4937
    %v5107 = vpack.c.b16 %v5100, %v5099
    %v5108 = vpack.c.b16 %v5102, %v5101
    %v5109 = vpack.c.b16 %v5104, %v5103
    %v5110 = vpack.c.b16 %v5106, %v5105
    %v5116 = vsel %vm4656, %v5089, 0
    %v5119 = vsel %vm4656, %v5090, 0
    %5121 = vmatprep.subr.bf16.mxu0 0
    %5122 = vmatpush1.bf16.msra.mxu0 %v5107
    %5123 = vmatprep.subr.bf16.mxu0 0
    %5124 = vmatpush1.bf16.msra.mxu0 %v5108
    %5125 = vmatprep.subr.bf16.mxu0 0
    %5126 = vmatpush1.bf16.msra.mxu0 %v5109
    %5127 = vmatprep.subr.bf16.mxu0 0
    %5128 = vmatpush1.bf16.msra.mxu0 %v5110
    %5129 = vmatprep.subr.bf16.mxu0 0
    %5130 = vmatpush1.bf16.msra.mxu0 0
    %5131 = vmatprep.subr.bf16.mxu0 0
    %5132 = vmatpush1.bf16.msra.mxu0 0
    %5133 = vmatprep.subr.bf16.mxu0 0
    %5134 = vmatpush1.bf16.msra.mxu0 0
    %5135 = vmatprep.subr.bf16.mxu0 0
    %5136 = vmatpush1.bf16.msra.mxu0 0
    %5137 = vmatprep.subr.bf16.mxu0 0
    %5138 = vmatpush1.bf16.msra.mxu0 0
    %5139 = vmatprep.subr.bf16.mxu0 0
    %5140 = vmatpush1.bf16.msra.mxu0 0
    %5141 = vmatprep.subr.bf16.mxu0 0
    %5142 = vmatpush1.bf16.msra.mxu0 0
    %5143 = vmatprep.subr.bf16.mxu0 0
    %5144 = vmatpush1.bf16.msra.mxu0 0
    %5145 = vmatprep.subr.bf16.mxu0 0
    %5146 = vmatpush1.bf16.msra.mxu0 0
    %5147 = vmatprep.subr.bf16.mxu0 0
    %5148 = vmatpush1.bf16.msra.mxu0 0
    %5149 = vmatprep.subr.bf16.mxu0 0
    %5150 = vmatpush1.bf16.msra.mxu0 0
    %5151 = vmatprep.subr.bf16.mxu0 0
    %5152 = vmatpush1.bf16.msra.mxu0 0
    %5153 = vmatprep.mubr.bf16.mxu0 0
    %5154 = vmatmul.mubr.bf16.gmra.mrb[0].mxu0 %v5116
    %v5155 = vpop.f32.mrb[0].mxu0
    %v5156 = vadd.f32 %v5071, %v5155
    %v5157 = vpop.f32.mrb[0].mxu0
    %v5158 = vpop.f32.mrb[0].mxu0
    %v5159 = vadd.f32 %v5074, %v5158
    %v5160 = vpop.f32.mrb[0].mxu0
    %5161 = vmatprep.mubr.bf16.mxu0 0
    %5162 = vmatmul.mubr.bf16.gmra.mrb[0].mxu0 %v5119
    %v5163 = vpop.f32.mrb[0].mxu0
    %v5164 = vadd.f32 %v5079, %v5163
    %v5165 = vpop.f32.mrb[0].mxu0
    %v5166 = vpop.f32.mrb[0].mxu0
    %v5167 = vadd.f32 %v5082, %v5166
    %v5168 = vpop.f32.mrb[0].mxu0
    %5169 = vdwg.mxu0
    %v5170 = vld [vmem:[#allocation3 + $0x4] sm:$0xf]
    %v5171 = vld [vmem:[#allocation3 + $0x8] sm:$0xf]
    %v5172 = vld [vmem:[#allocation3 + $0xc] sm:$0x1]
    %v5173 = vld [vmem:[#allocation3 + $0x14] sm:$0xf]
    %v5174 = vld [vmem:[#allocation3 + $0x18] sm:$0xf]
    %v5175 = vld [vmem:[#allocation3 + $0x1c] sm:$0x1]
    %v5177 = vshrl.u32 %v5170, 16
    %v5179 = vrot.slane %v5177, 4
    %v5180 = vshll.u32 %v5170, 16
    %v5182 = vrot.slane %v5180, 5
    %v5183 = vor.u32 %v5179, %v5182
    %v5184 = vrot.slane %v5183, 4
    %v5186 = vshll.u32 %v5171, 16
    %v5188 = vrot.slane %v5186, 5
    %v5189 = vsel %vm2261, %v5184, %v5188
    %v5190 = vshrl.u32 %v5171, 16
    %v5192 = vrot.slane %v5190, 4
    %v5193 = vor.u32 %v5192, %v5188
    %v5194 = vrot.slane %v5193, 4
    %v5196 = vshll.u32 %v5172, 16
    %v5198 = vrot.slane %v5196, 5
    %v5199 = vsel %vm2261, %v5194, %v5198
    %v5201 = vshrl.u32 %v5173, 16
    %v5203 = vrot.slane %v5201, 4
    %v5204 = vshll.u32 %v5173, 16
    %v5206 = vrot.slane %v5204, 5
    %v5207 = vor.u32 %v5203, %v5206
    %v5208 = vrot.slane %v5207, 4
    %v5210 = vshll.u32 %v5174, 16
    %v5212 = vrot.slane %v5210, 5
    %v5213 = vsel %vm2261, %v5208, %v5212
    %v5214 = vshrl.u32 %v5174, 16
    %v5216 = vrot.slane %v5214, 4
    %v5217 = vor.u32 %v5216, %v5212
    %v5218 = vrot.slane %v5217, 4
    %v5220 = vshll.u32 %v5175, 16
    %v5222 = vrot.slane %v5220, 5
    %v5223 = vsel %vm2261, %v5218, %v5222
    %s5224 = scalar_lea.vmem %s7, 224
    %v5225 = vld [vmem:[%s5224] sm:$0xf]
    %v5226 = vld [vmem:[%s5224 + $0x4] sm:$0xf]
    %v5227 = vld [vmem:[%s5224 + $0x8] sm:$0xf]
    %v5228 = vld [vmem:[%s5224 + $0xc] sm:$0xf]
    %v5229 = vld [vmem:[%s5224 + $0x10] sm:$0xf]
    %v5230 = vld [vmem:[%s5224 + $0x14] sm:$0xf]
    %v5231 = vld [vmem:[%s5224 + $0x18] sm:$0xf]
    %v5232 = vld [vmem:[%s5224 + $0x1c] sm:$0xf]
    %v5233 = vunpack.c.l.b16 %v5189
    %v5234 = vunpack.c.l.b16 %v5199
    %v5235 = vunpack.c.l.b16 %v5213
    %v5236 = vunpack.c.l.b16 %v5223
    %v5237 = vpack.c.b16 %v5234, %v5233
    %v5238 = vpack.c.b16 %v5236, %v5235
    %v5247 = vunpack.c.l.b16 %v5225
    %v5248 = vunpack.c.l.b16 %v5226
    %v5249 = vunpack.c.l.b16 %v5227
    %v5250 = vunpack.c.l.b16 %v5228
    %v5251 = vunpack.c.l.b16 %v5229
    %v5252 = vunpack.c.l.b16 %v5230
    %v5253 = vunpack.c.l.b16 %v5231
    %v5254 = vunpack.c.l.b16 %v5232
    %v5255 = vpack.c.b16 %v5248, %v5247
    %v5256 = vpack.c.b16 %v5250, %v5249
    %v5257 = vpack.c.b16 %v5252, %v5251
    %v5258 = vpack.c.b16 %v5254, %v5253
    %v5264 = vsel %vm4656, %v5237, 0
    %v5267 = vsel %vm4656, %v5238, 0
    %5269 = vmatprep.subr.bf16.mxu0 0
    %5270 = vmatpush1.bf16.msra.mxu0 %v5255
    %5271 = vmatprep.subr.bf16.mxu0 0
    %5272 = vmatpush1.bf16.msra.mxu0 %v5256
    %5273 = vmatprep.subr.bf16.mxu0 0
    %5274 = vmatpush1.bf16.msra.mxu0 %v5257
    %5275 = vmatprep.subr.bf16.mxu0 0
    %5276 = vmatpush1.bf16.msra.mxu0 %v5258
    %5277 = vmatprep.subr.bf16.mxu0 0
    %5278 = vmatpush1.bf16.msra.mxu0 0
    %5279 = vmatprep.subr.bf16.mxu0 0
    %5280 = vmatpush1.bf16.msra.mxu0 0
    %5281 = vmatprep.subr.bf16.mxu0 0
    %5282 = vmatpush1.bf16.msra.mxu0 0
    %5283 = vmatprep.subr.bf16.mxu0 0
    %5284 = vmatpush1.bf16.msra.mxu0 0
    %5285 = vmatprep.subr.bf16.mxu0 0
    %5286 = vmatpush1.bf16.msra.mxu0 0
    %5287 = vmatprep.subr.bf16.mxu0 0
    %5288 = vmatpush1.bf16.msra.mxu0 0
    %5289 = vmatprep.subr.bf16.mxu0 0
    %5290 = vmatpush1.bf16.msra.mxu0 0
    %5291 = vmatprep.subr.bf16.mxu0 0
    %5292 = vmatpush1.bf16.msra.mxu0 0
    %5293 = vmatprep.subr.bf16.mxu0 0
    %5294 = vmatpush1.bf16.msra.mxu0 0
    %5295 = vmatprep.subr.bf16.mxu0 0
    %5296 = vmatpush1.bf16.msra.mxu0 0
    %5297 = vmatprep.subr.bf16.mxu0 0
    %5298 = vmatpush1.bf16.msra.mxu0 0
    %5299 = vmatprep.subr.bf16.mxu0 0
    %5300 = vmatpush1.bf16.msra.mxu0 0
    %5301 = vmatprep.mubr.bf16.mxu0 0
    %5302 = vmatmul.mubr.bf16.gmra.mrb[0].mxu0 %v5264
    %v5303 = vpop.f32.mrb[0].mxu0
    %v5304 = vadd.f32 0.0, %v5303
    %v5305 = vpop.f32.mrb[0].mxu0
    %v5306 = vpop.f32.mrb[0].mxu0
    %v5307 = vadd.f32 0.0, %v5306
    %v5308 = vpop.f32.mrb[0].mxu0
    %5309 = vmatprep.mubr.bf16.mxu0 0
    %5310 = vmatmul.mubr.bf16.gmra.mrb[0].mxu0 %v5267
    %v5311 = vpop.f32.mrb[0].mxu0
    %v5312 = vadd.f32 0.0, %v5311
    %v5313 = vpop.f32.mrb[0].mxu0
    %v5314 = vpop.f32.mrb[0].mxu0
    %v5315 = vadd.f32 0.0, %v5314
    %v5316 = vpop.f32.mrb[0].mxu0
    %5317 = vdwg.mxu0
    %v5318 = vadd.f32 %v5156, %v5304
    %v5319 = vadd.f32 %v5159, %v5307
    %v5320 = vadd.f32 %v5164, %v5312
    %v5321 = vadd.f32 %v5167, %v5315
    %v5322 = vld [vmem:[#allocation3] sm:$0xf]
    %v5323 = vld [vmem:[#allocation3 + $0x4] sm:$0xf]
    %v5324 = vld [vmem:[#allocation3 + $0x10] sm:$0xf]
    %v5325 = vld [vmem:[#allocation3 + $0x14] sm:$0xf]
    %v5326 = vld [vmem:[%s7] sm:$0xf]
    %v5327 = vld [vmem:[%s7 + $0x4] sm:$0xf]
    %v5328 = vld [vmem:[%s7 + $0x8] sm:$0xf]
    %v5329 = vld [vmem:[%s7 + $0xc] sm:$0xf]
    %v5330 = vld [vmem:[%s7 + $0x10] sm:$0xf]
    %v5331 = vld [vmem:[%s7 + $0x14] sm:$0xf]
    %v5332 = vld [vmem:[%s7 + $0x18] sm:$0xf]
    %v5333 = vld [vmem:[%s7 + $0x1c] sm:$0xf]
    %v5334 = vld [vmem:[#allocation3 + $0x8] sm:$0x3]
    %v5335 = vld [vmem:[#allocation3 + $0x18] sm:$0x3]
    %vm5342 = vcmask 1041408
    %vm5343 = vcmask 1045508
    %vm5344 = vmor %vm5342, %vm5343
    %v5345 = vrot.slane %v4938, 6
    %v5346 = vrot.slane %v5345, 4
    %v5347 = vrot.slane %v4876, 6
    %v5348 = vsel %vm5344, %v5346, %v5347
    %v5349 = vrot.slane %v5347, 4
    %v5350 = vrot.slane %v5334, 6
    %v5351 = vsel %vm5344, %v5349, %v5350
    %v5352 = vrot.slane %v4940, 6
    %v5353 = vrot.slane %v5352, 4
    %v5354 = vrot.slane %v4879, 6
    %v5355 = vsel %vm5344, %v5353, %v5354
    %v5356 = vrot.slane %v5354, 4
    %v5357 = vrot.slane %v5335, 6
    %v5358 = vsel %vm5344, %v5356, %v5357
    %s5359 = scalar_lea.vmem %s7, 96
    %v5360 = vld [vmem:[%s5359] sm:$0xf]
    %v5361 = vld [vmem:[%s5359 + $0x4] sm:$0xf]
    %v5362 = vld [vmem:[%s5359 + $0x8] sm:$0xf]
    %v5363 = vld [vmem:[%s5359 + $0xc] sm:$0xf]
    %v5364 = vld [vmem:[%s5359 + $0x10] sm:$0xf]
    %v5365 = vld [vmem:[%s5359 + $0x14] sm:$0xf]
    %v5366 = vld [vmem:[%s5359 + $0x18] sm:$0xf]
    %v5367 = vld [vmem:[%s5359 + $0x1c] sm:$0xf]
    %v5368 = vunpack.c.l.b16 %v5348
    %v5369 = vunpack.c.l.b16 %v5351
    %v5370 = vunpack.c.l.b16 %v5355
    %v5371 = vunpack.c.l.b16 %v5358
    %v5372 = vpack.c.b16 %v5369, %v5368
    %v5373 = vpack.c.b16 %v5371, %v5370
    %v5382 = vunpack.c.l.b16 %v5360
    %v5383 = vunpack.c.l.b16 %v5361
    %v5384 = vunpack.c.l.b16 %v5362
    %v5385 = vunpack.c.l.b16 %v5363
    %v5386 = vunpack.c.l.b16 %v5364
    %v5387 = vunpack.c.l.b16 %v5365
    %v5388 = vunpack.c.l.b16 %v5366
    %v5389 = vunpack.c.l.b16 %v5367
    %v5390 = vpack.c.b16 %v5383, %v5382
    %v5391 = vpack.c.b16 %v5385, %v5384
    %v5392 = vpack.c.b16 %v5387, %v5386
    %v5393 = vpack.c.b16 %v5389, %v5388
    %v5399 = vsel %vm4656, %v5372, 0
    %v5402 = vsel %vm4656, %v5373, 0
    %5404 = vmatprep.subr.bf16.mxu0 0
    %5405 = vmatpush1.bf16.msra.mxu0 %v5390
    %5406 = vmatprep.subr.bf16.mxu0 0
    %5407 = vmatpush1.bf16.msra.mxu0 %v5391
    %5408 = vmatprep.subr.bf16.mxu0 0
    %5409 = vmatpush1.bf16.msra.mxu0 %v5392
    %5410 = vmatprep.subr.bf16.mxu0 0
    %5411 = vmatpush1.bf16.msra.mxu0 %v5393
    %5412 = vmatprep.subr.bf16.mxu0 0
    %5413 = vmatpush1.bf16.msra.mxu0 0
    %5414 = vmatprep.subr.bf16.mxu0 0
    %5415 = vmatpush1.bf16.msra.mxu0 0
    %5416 = vmatprep.subr.bf16.mxu0 0
    %5417 = vmatpush1.bf16.msra.mxu0 0
    %5418 = vmatprep.subr.bf16.mxu0 0
    %5419 = vmatpush1.bf16.msra.mxu0 0
    %5420 = vmatprep.subr.bf16.mxu0 0
    %5421 = vmatpush1.bf16.msra.mxu0 0
    %5422 = vmatprep.subr.bf16.mxu0 0
    %5423 = vmatpush1.bf16.msra.mxu0 0
    %5424 = vmatprep.subr.bf16.mxu0 0
    %5425 = vmatpush1.bf16.msra.mxu0 0
    %5426 = vmatprep.subr.bf16.mxu0 0
    %5427 = vmatpush1.bf16.msra.mxu0 0
    %5428 = vmatprep.subr.bf16.mxu0 0
    %5429 = vmatpush1.bf16.msra.mxu0 0
    %5430 = vmatprep.subr.bf16.mxu0 0
    %5431 = vmatpush1.bf16.msra.mxu0 0
    %5432 = vmatprep.subr.bf16.mxu0 0
    %5433 = vmatpush1.bf16.msra.mxu0 0
    %5434 = vmatprep.subr.bf16.mxu0 0
    %5435 = vmatpush1.bf16.msra.mxu0 0
    %5436 = vmatprep.mubr.bf16.mxu0 0
    %5437 = vmatmul.mubr.bf16.gmra.mrb[0].mxu0 %v5399
    %v5438 = vpop.f32.mrb[0].mxu0
    %v5439 = vadd.f32 0.0, %v5438
    %v5440 = vpop.f32.mrb[0].mxu0
    %v5441 = vpop.f32.mrb[0].mxu0
    %v5442 = vadd.f32 0.0, %v5441
    %v5443 = vpop.f32.mrb[0].mxu0
    %5444 = vmatprep.mubr.bf16.mxu0 0
    %5445 = vmatmul.mubr.bf16.gmra.mrb[0].mxu0 %v5402
    %v5446 = vpop.f32.mrb[0].mxu0
    %v5447 = vadd.f32 0.0, %v5446
    %v5448 = vpop.f32.mrb[0].mxu0
    %v5449 = vpop.f32.mrb[0].mxu0
    %v5450 = vadd.f32 0.0, %v5449
    %v5451 = vpop.f32.mrb[0].mxu0
    %5452 = vdwg.mxu0
    %v5457 = vunpack.c.l.b16 %v5322
    %v5458 = vunpack.c.l.b16 %v5323
    %v5459 = vunpack.c.l.b16 %v5324
    %v5460 = vunpack.c.l.b16 %v5325
    %v5461 = vpack.c.b16 %v5458, %v5457
    %v5462 = vpack.c.b16 %v5460, %v5459
    %v5471 = vunpack.c.l.b16 %v5326
    %v5472 = vunpack.c.l.b16 %v5327
    %v5473 = vunpack.c.l.b16 %v5328
    %v5474 = vunpack.c.l.b16 %v5329
    %v5475 = vunpack.c.l.b16 %v5330
    %v5476 = vunpack.c.l.b16 %v5331
    %v5477 = vunpack.c.l.b16 %v5332
    %v5478 = vunpack.c.l.b16 %v5333
    %v5479 = vpack.c.b16 %v5472, %v5471
    %v5480 = vpack.c.b16 %v5474, %v5473
    %v5481 = vpack.c.b16 %v5476, %v5475
    %v5482 = vpack.c.b16 %v5478, %v5477
    %v5488 = vsel %vm4656, %v5461, 0
    %v5491 = vsel %vm4656, %v5462, 0
    %5493 = vmatprep.subr.bf16.mxu0 0
    %5494 = vmatpush1.bf16.msra.mxu0 %v5479
    %5495 = vmatprep.subr.bf16.mxu0 0
    %5496 = vmatpush1.bf16.msra.mxu0 %v5480
    %5497 = vmatprep.subr.bf16.mxu0 0
    %5498 = vmatpush1.bf16.msra.mxu0 %v5481
    %5499 = vmatprep.subr.bf16.mxu0 0
    %5500 = vmatpush1.bf16.msra.mxu0 %v5482
    %5501 = vmatprep.subr.bf16.mxu0 0
    %5502 = vmatpush1.bf16.msra.mxu0 0
    %5503 = vmatprep.subr.bf16.mxu0 0
    %5504 = vmatpush1.bf16.msra.mxu0 0
    %5505 = vmatprep.subr.bf16.mxu0 0
    %5506 = vmatpush1.bf16.msra.mxu0 0
    %5507 = vmatprep.subr.bf16.mxu0 0
    %5508 = vmatpush1.bf16.msra.mxu0 0
    %5509 = vmatprep.subr.bf16.mxu0 0
    %5510 = vmatpush1.bf16.msra.mxu0 0
    %5511 = vmatprep.subr.bf16.mxu0 0
    %5512 = vmatpush1.bf16.msra.mxu0 0
    %5513 = vmatprep.subr.bf16.mxu0 0
    %5514 = vmatpush1.bf16.msra.mxu0 0
    %5515 = vmatprep.subr.bf16.mxu0 0
    %5516 = vmatpush1.bf16.msra.mxu0 0
    %5517 = vmatprep.subr.bf16.mxu0 0
    %5518 = vmatpush1.bf16.msra.mxu0 0
    %5519 = vmatprep.subr.bf16.mxu0 0
    %5520 = vmatpush1.bf16.msra.mxu0 0
    %5521 = vmatprep.subr.bf16.mxu0 0
    %5522 = vmatpush1.bf16.msra.mxu0 0
    %5523 = vmatprep.subr.bf16.mxu0 0
    %5524 = vmatpush1.bf16.msra.mxu0 0
    %5525 = vmatprep.mubr.bf16.mxu0 0
    %5526 = vmatmul.mubr.bf16.gmra.mrb[0].mxu0 %v5488
    %v5527 = vpop.f32.mrb[0].mxu0
    %v5528 = vadd.f32 %v5439, %v5527
    %v5529 = vpop.f32.mrb[0].mxu0
    %v5530 = vpop.f32.mrb[0].mxu0
    %v5531 = vadd.f32 %v5442, %v5530
    %v5532 = vpop.f32.mrb[0].mxu0
    %5533 = vmatprep.mubr.bf16.mxu0 0
    %5534 = vmatmul.mubr.bf16.gmra.mrb[0].mxu0 %v5491
    %v5535 = vpop.f32.mrb[0].mxu0
    %v5536 = vadd.f32 %v5447, %v5535
    %v5537 = vpop.f32.mrb[0].mxu0
    %v5538 = vpop.f32.mrb[0].mxu0
    %v5539 = vadd.f32 %v5450, %v5538
    %v5540 = vpop.f32.mrb[0].mxu0
    %5541 = vdwg.mxu0
    %v5542 = vld [vmem:[#allocation3 + $0x8] sm:$0xf]
    %v5543 = vld [vmem:[#allocation3 + $0x18] sm:$0xf]
    %s5544 = scalar_lea.vmem %s7, 192
    %v5545 = vld [vmem:[%s5544] sm:$0xf]
    %v5546 = vld [vmem:[%s5544 + $0x4] sm:$0xf]
    %v5547 = vld [vmem:[%s5544 + $0x8] sm:$0xf]
    %v5548 = vld [vmem:[%s5544 + $0xc] sm:$0xf]
    %v5549 = vld [vmem:[%s5544 + $0x10] sm:$0xf]
    %v5550 = vld [vmem:[%s5544 + $0x14] sm:$0xf]
    %v5551 = vld [vmem:[%s5544 + $0x18] sm:$0xf]
    %v5552 = vld [vmem:[%s5544 + $0x1c] sm:$0xf]
    %v5555 = vunpack.c.l.b16 %v4876
    %v5556 = vunpack.c.l.b16 %v5542
    %v5557 = vunpack.c.l.b16 %v4879
    %v5558 = vunpack.c.l.b16 %v5543
    %v5559 = vpack.c.b16 %v5556, %v5555
    %v5560 = vpack.c.b16 %v5558, %v5557
    %v5569 = vunpack.c.l.b16 %v5545
    %v5570 = vunpack.c.l.b16 %v5546
    %v5571 = vunpack.c.l.b16 %v5547
    %v5572 = vunpack.c.l.b16 %v5548
    %v5573 = vunpack.c.l.b16 %v5549
    %v5574 = vunpack.c.l.b16 %v5550
    %v5575 = vunpack.c.l.b16 %v5551
    %v5576 = vunpack.c.l.b16 %v5552
    %v5577 = vpack.c.b16 %v5570, %v5569
    %v5578 = vpack.c.b16 %v5572, %v5571
    %v5579 = vpack.c.b16 %v5574, %v5573
    %v5580 = vpack.c.b16 %v5576, %v5575
    %v5586 = vsel %vm4656, %v5559, 0
    %v5589 = vsel %vm4656, %v5560, 0
    %5591 = vmatprep.subr.bf16.mxu0 0
    %5592 = vmatpush1.bf16.msra.mxu0 %v5577
    %5593 = vmatprep.subr.bf16.mxu0 0
    %5594 = vmatpush1.bf16.msra.mxu0 %v5578
    %5595 = vmatprep.subr.bf16.mxu0 0
    %5596 = vmatpush1.bf16.msra.mxu0 %v5579
    %5597 = vmatprep.subr.bf16.mxu0 0
    %5598 = vmatpush1.bf16.msra.mxu0 %v5580
    %5599 = vmatprep.subr.bf16.mxu0 0
    %5600 = vmatpush1.bf16.msra.mxu0 0
    %5601 = vmatprep.subr.bf16.mxu0 0
    %5602 = vmatpush1.bf16.msra.mxu0 0
    %5603 = vmatprep.subr.bf16.mxu0 0
    %5604 = vmatpush1.bf16.msra.mxu0 0
    %5605 = vmatprep.subr.bf16.mxu0 0
    %5606 = vmatpush1.bf16.msra.mxu0 0
    %5607 = vmatprep.subr.bf16.mxu0 0
    %5608 = vmatpush1.bf16.msra.mxu0 0
    %5609 = vmatprep.subr.bf16.mxu0 0
    %5610 = vmatpush1.bf16.msra.mxu0 0
    %5611 = vmatprep.subr.bf16.mxu0 0
    %5612 = vmatpush1.bf16.msra.mxu0 0
    %5613 = vmatprep.subr.bf16.mxu0 0
    %5614 = vmatpush1.bf16.msra.mxu0 0
    %5615 = vmatprep.subr.bf16.mxu0 0
    %5616 = vmatpush1.bf16.msra.mxu0 0
    %5617 = vmatprep.subr.bf16.mxu0 0
    %5618 = vmatpush1.bf16.msra.mxu0 0
    %5619 = vmatprep.subr.bf16.mxu0 0
    %5620 = vmatpush1.bf16.msra.mxu0 0
    %5621 = vmatprep.subr.bf16.mxu0 0
    %5622 = vmatpush1.bf16.msra.mxu0 0
    %5623 = vmatprep.mubr.bf16.mxu0 0
    %5624 = vmatmul.mubr.bf16.gmra.mrb[0].mxu0 %v5586
    %v5625 = vpop.f32.mrb[0].mxu0
    %v5626 = vadd.f32 0.0, %v5625
    %v5627 = vpop.f32.mrb[0].mxu0
    %v5628 = vpop.f32.mrb[0].mxu0
    %v5629 = vadd.f32 0.0, %v5628
    %v5630 = vpop.f32.mrb[0].mxu0
    %5631 = vmatprep.mubr.bf16.mxu0 0
    %5632 = vmatmul.mubr.bf16.gmra.mrb[0].mxu0 %v5589
    %v5633 = vpop.f32.mrb[0].mxu0
    %v5634 = vadd.f32 0.0, %v5633
    %v5635 = vpop.f32.mrb[0].mxu0
    %v5636 = vpop.f32.mrb[0].mxu0
    %v5637 = vadd.f32 0.0, %v5636
    %v5638 = vpop.f32.mrb[0].mxu0
    %5639 = vdwg.mxu0
    %v5640 = vadd.f32 %v5528, %v5626
    %v5641 = vadd.f32 %v5531, %v5629
    %v5642 = vadd.f32 %v5536, %v5634
    %v5643 = vadd.f32 %v5539, %v5637
    %v5644 = vmul.f32 %v4859, %v5640
    %v5645 = vmul.f32 %v4860, %v5641
    %v5646 = vmul.f32 %v4861, %v5642
    %v5647 = vmul.f32 %v4862, %v5643
    %v5648 = vadd.f32 %v5318, %v5644
    %v5649 = vadd.f32 %v5319, %v5645
    %v5650 = vadd.f32 %v5320, %v5646
    %v5651 = vadd.f32 %v5321, %v5647
    %v5652 = vld [vmem:[#allocation3] sm:$0xe]
    %v5653 = vld [vmem:[#allocation3 + $0x10] sm:$0xe]
    %v5658 = vrot.slane %v5652, 5
    %v5659 = vrot.slane %v5658, 4
    %v5660 = vrot.slane %v4876, 5
    %v5661 = vsel %vm3725, %v5659, %v5660
    %v5662 = vrot.slane %v5660, 4
    %v5663 = vrot.slane %v4877, 5
    %v5664 = vsel %vm3725, %v5662, %v5663
    %v5665 = vrot.slane %v5653, 5
    %v5666 = vrot.slane %v5665, 4
    %v5667 = vrot.slane %v4879, 5
    %v5668 = vsel %vm3725, %v5666, %v5667
    %v5669 = vrot.slane %v5667, 4
    %v5670 = vrot.slane %v4880, 5
    %v5671 = vsel %vm3725, %v5669, %v5670
    %s5672 = scalar_lea.vmem %s7, 64
    %v5673 = vld [vmem:[%s5672] sm:$0xf]
    %v5674 = vld [vmem:[%s5672 + $0x4] sm:$0xf]
    %v5675 = vld [vmem:[%s5672 + $0x8] sm:$0xf]
    %v5676 = vld [vmem:[%s5672 + $0xc] sm:$0xf]
    %v5677 = vld [vmem:[%s5672 + $0x10] sm:$0xf]
    %v5678 = vld [vmem:[%s5672 + $0x14] sm:$0xf]
    %v5679 = vld [vmem:[%s5672 + $0x18] sm:$0xf]
    %v5680 = vld [vmem:[%s5672 + $0x1c] sm:$0xf]
    %v5681 = vld [vmem:[#allocation3] sm:$0x8]
    %v5682 = vld [vmem:[#allocation3 + $0x10] sm:$0x8]
    %vm5687 = vcmask 1040384
    %vm5688 = vcmask 1044484
    %vm5689 = vmor %vm5687, %vm5688
    %v5690 = vrot.slane %v5681, 7
    %v5691 = vrot.slane %v5690, 4
    %v5692 = vrot.slane %v4876, 7
    %v5693 = vsel %vm5689, %v5691, %v5692
    %v5694 = vrot.slane %v5692, 4
    %v5695 = vrot.slane %v4939, 7
    %v5696 = vsel %vm5689, %v5694, %v5695
    %v5697 = vrot.slane %v5682, 7
    %v5698 = vrot.slane %v5697, 4
    %v5699 = vrot.slane %v4879, 7
    %v5700 = vsel %vm5689, %v5698, %v5699
    %v5701 = vrot.slane %v5699, 4
    %v5702 = vrot.slane %v4941, 7
    %v5703 = vsel %vm5689, %v5701, %v5702
    %s5704 = scalar_lea.vmem %s7, 160
    %v5705 = vld [vmem:[%s5704] sm:$0xf]
    %v5706 = vld [vmem:[%s5704 + $0x4] sm:$0xf]
    %v5707 = vld [vmem:[%s5704 + $0x8] sm:$0xf]
    %v5708 = vld [vmem:[%s5704 + $0xc] sm:$0xf]
    %v5709 = vld [vmem:[%s5704 + $0x10] sm:$0xf]
    %v5710 = vld [vmem:[%s5704 + $0x14] sm:$0xf]
    %v5711 = vld [vmem:[%s5704 + $0x18] sm:$0xf]
    %v5712 = vld [vmem:[%s5704 + $0x1c] sm:$0xf]
    %v5713 = vunpack.c.l.b16 %v5693
    %v5714 = vunpack.c.l.b16 %v5696
    %v5715 = vunpack.c.l.b16 %v5700
    %v5716 = vunpack.c.l.b16 %v5703
    %v5717 = vpack.c.b16 %v5714, %v5713
    %v5718 = vpack.c.b16 %v5716, %v5715
    %v5727 = vunpack.c.l.b16 %v5705
    %v5728 = vunpack.c.l.b16 %v5706
    %v5729 = vunpack.c.l.b16 %v5707
    %v5730 = vunpack.c.l.b16 %v5708
    %v5731 = vunpack.c.l.b16 %v5709
    %v5732 = vunpack.c.l.b16 %v5710
    %v5733 = vunpack.c.l.b16 %v5711
    %v5734 = vunpack.c.l.b16 %v5712
    %v5735 = vpack.c.b16 %v5728, %v5727
    %v5736 = vpack.c.b16 %v5730, %v5729
    %v5737 = vpack.c.b16 %v5732, %v5731
    %v5738 = vpack.c.b16 %v5734, %v5733
    %v5744 = vsel %vm4656, %v5717, 0
    %v5747 = vsel %vm4656, %v5718, 0
    %5749 = vmatprep.subr.bf16.mxu0 0
    %5750 = vmatpush1.bf16.msra.mxu0 %v5735
    %5751 = vmatprep.subr.bf16.mxu0 0
    %5752 = vmatpush1.bf16.msra.mxu0 %v5736
    %5753 = vmatprep.subr.bf16.mxu0 0
    %5754 = vmatpush1.bf16.msra.mxu0 %v5737
    %5755 = vmatprep.subr.bf16.mxu0 0
    %5756 = vmatpush1.bf16.msra.mxu0 %v5738
    %5757 = vmatprep.subr.bf16.mxu0 0
    %5758 = vmatpush1.bf16.msra.mxu0 0
    %5759 = vmatprep.subr.bf16.mxu0 0
    %5760 = vmatpush1.bf16.msra.mxu0 0
    %5761 = vmatprep.subr.bf16.mxu0 0
    %5762 = vmatpush1.bf16.msra.mxu0 0
    %5763 = vmatprep.subr.bf16.mxu0 0
    %5764 = vmatpush1.bf16.msra.mxu0 0
    %5765 = vmatprep.subr.bf16.mxu0 0
    %5766 = vmatpush1.bf16.msra.mxu0 0
    %5767 = vmatprep.subr.bf16.mxu0 0
    %5768 = vmatpush1.bf16.msra.mxu0 0
    %5769 = vmatprep.subr.bf16.mxu0 0
    %5770 = vmatpush1.bf16.msra.mxu0 0
    %5771 = vmatprep.subr.bf16.mxu0 0
    %5772 = vmatpush1.bf16.msra.mxu0 0
    %5773 = vmatprep.subr.bf16.mxu0 0
    %5774 = vmatpush1.bf16.msra.mxu0 0
    %5775 = vmatprep.subr.bf16.mxu0 0
    %5776 = vmatpush1.bf16.msra.mxu0 0
    %5777 = vmatprep.subr.bf16.mxu0 0
    %5778 = vmatpush1.bf16.msra.mxu0 0
    %5779 = vmatprep.subr.bf16.mxu0 0
    %5780 = vmatpush1.bf16.msra.mxu0 0
    %5781 = vmatprep.mubr.bf16.mxu0 0
    %5782 = vmatmul.mubr.bf16.gmra.mrb[0].mxu0 %v5744
    %v5783 = vpop.f32.mrb[0].mxu0
    %v5784 = vadd.f32 0.0, %v5783
    %v5785 = vpop.f32.mrb[0].mxu0
    %v5786 = vpop.f32.mrb[0].mxu0
    %v5787 = vadd.f32 0.0, %v5786
    %v5788 = vpop.f32.mrb[0].mxu0
    %5789 = vmatprep.mubr.bf16.mxu0 0
    %5790 = vmatmul.mubr.bf16.gmra.mrb[0].mxu0 %v5747
    %v5791 = vpop.f32.mrb[0].mxu0
    %v5792 = vadd.f32 0.0, %v5791
    %v5793 = vpop.f32.mrb[0].mxu0
    %v5794 = vpop.f32.mrb[0].mxu0
    %v5795 = vadd.f32 0.0, %v5794
    %v5796 = vpop.f32.mrb[0].mxu0
    %5797 = vdwg.mxu0
    %v5798 = vunpack.c.l.b16 %v5661
    %v5799 = vunpack.c.l.b16 %v5664
    %v5800 = vunpack.c.l.b16 %v5668
    %v5801 = vunpack.c.l.b16 %v5671
    %v5802 = vpack.c.b16 %v5799, %v5798
    %v5803 = vpack.c.b16 %v5801, %v5800
    %v5812 = vunpack.c.l.b16 %v5673
    %v5813 = vunpack.c.l.b16 %v5674
    %v5814 = vunpack.c.l.b16 %v5675
    %v5815 = vunpack.c.l.b16 %v5676
    %v5816 = vunpack.c.l.b16 %v5677
    %v5817 = vunpack.c.l.b16 %v5678
    %v5818 = vunpack.c.l.b16 %v5679
    %v5819 = vunpack.c.l.b16 %v5680
    %v5820 = vpack.c.b16 %v5813, %v5812
    %v5821 = vpack.c.b16 %v5815, %v5814
    %v5822 = vpack.c.b16 %v5817, %v5816
    %v5823 = vpack.c.b16 %v5819, %v5818
    %v5829 = vsel %vm4656, %v5802, 0
    %v5832 = vsel %vm4656, %v5803, 0
    %5834 = vmatprep.subr.bf16.mxu0 0
    %5835 = vmatpush1.bf16.msra.mxu0 %v5820
    %5836 = vmatprep.subr.bf16.mxu0 0
    %5837 = vmatpush1.bf16.msra.mxu0 %v5821
    %5838 = vmatprep.subr.bf16.mxu0 0
    %5839 = vmatpush1.bf16.msra.mxu0 %v5822
    %5840 = vmatprep.subr.bf16.mxu0 0
    %5841 = vmatpush1.bf16.msra.mxu0 %v5823
    %5842 = vmatprep.subr.bf16.mxu0 0
    %5843 = vmatpush1.bf16.msra.mxu0 0
    %5844 = vmatprep.subr.bf16.mxu0 0
    %5845 = vmatpush1.bf16.msra.mxu0 0
    %5846 = vmatprep.subr.bf16.mxu0 0
    %5847 = vmatpush1.bf16.msra.mxu0 0
    %5848 = vmatprep.subr.bf16.mxu0 0
    %5849 = vmatpush1.bf16.msra.mxu0 0
    %5850 = vmatprep.subr.bf16.mxu0 0
    %5851 = vmatpush1.bf16.msra.mxu0 0
    %5852 = vmatprep.subr.bf16.mxu0 0
    %5853 = vmatpush1.bf16.msra.mxu0 0
    %5854 = vmatprep.subr.bf16.mxu0 0
    %5855 = vmatpush1.bf16.msra.mxu0 0
    %5856 = vmatprep.subr.bf16.mxu0 0
    %5857 = vmatpush1.bf16.msra.mxu0 0
    %5858 = vmatprep.subr.bf16.mxu0 0
    %5859 = vmatpush1.bf16.msra.mxu0 0
    %5860 = vmatprep.subr.bf16.mxu0 0
    %5861 = vmatpush1.bf16.msra.mxu0 0
    %5862 = vmatprep.subr.bf16.mxu0 0
    %5863 = vmatpush1.bf16.msra.mxu0 0
    %5864 = vmatprep.subr.bf16.mxu0 0
    %5865 = vmatpush1.bf16.msra.mxu0 0
    %5866 = vmatprep.mubr.bf16.mxu0 0
    %5867 = vmatmul.mubr.bf16.gmra.mrb[0].mxu0 %v5829
    %v5868 = vpop.f32.mrb[0].mxu0
    %v5869 = vadd.f32 %v5784, %v5868
    %v5870 = vpop.f32.mrb[0].mxu0
    %v5871 = vpop.f32.mrb[0].mxu0
    %v5872 = vadd.f32 %v5787, %v5871
    %v5873 = vpop.f32.mrb[0].mxu0
    %5874 = vmatprep.mubr.bf16.mxu0 0
    %5875 = vmatmul.mubr.bf16.gmra.mrb[0].mxu0 %v5832
    %v5876 = vpop.f32.mrb[0].mxu0
    %v5877 = vadd.f32 %v5792, %v5876
    %v5878 = vpop.f32.mrb[0].mxu0
    %v5879 = vpop.f32.mrb[0].mxu0
    %v5880 = vadd.f32 %v5795, %v5879
    %v5881 = vpop.f32.mrb[0].mxu0
    %5882 = vdwg.mxu0
    %v5883 = vld [vmem:[#allocation3 + $0x4] sm:$0xe]
    %v5884 = vld [vmem:[#allocation3 + $0x14] sm:$0xe]
    %v5891 = vrot.slane %v5883, 5
    %v5892 = vrot.slane %v5891, 4
    %v5893 = vrot.slane %v5171, 5
    %v5894 = vsel %vm3725, %v5892, %v5893
    %v5895 = vrot.slane %v5893, 4
    %v5896 = vrot.slane %v5172, 5
    %v5897 = vsel %vm3725, %v5895, %v5896
    %v5898 = vrot.slane %v5884, 5
    %v5899 = vrot.slane %v5898, 4
    %v5900 = vrot.slane %v5174, 5
    %v5901 = vsel %vm3725, %v5899, %v5900
    %v5902 = vrot.slane %v5900, 4
    %v5903 = vrot.slane %v5175, 5
    %v5904 = vsel %vm3725, %v5902, %v5903
    %s5905 = scalar_lea.vmem %s7, 256
    %v5906 = vld [vmem:[%s5905] sm:$0xf]
    %v5907 = vld [vmem:[%s5905 + $0x4] sm:$0xf]
    %v5908 = vld [vmem:[%s5905 + $0x8] sm:$0xf]
    %v5909 = vld [vmem:[%s5905 + $0xc] sm:$0xf]
    %v5910 = vld [vmem:[%s5905 + $0x10] sm:$0xf]
    %v5911 = vld [vmem:[%s5905 + $0x14] sm:$0xf]
    %v5912 = vld [vmem:[%s5905 + $0x18] sm:$0xf]
    %v5913 = vld [vmem:[%s5905 + $0x1c] sm:$0xf]
    %v5914 = vunpack.c.l.b16 %v5894
    %v5915 = vunpack.c.l.b16 %v5897
    %v5916 = vunpack.c.l.b16 %v5901
    %v5917 = vunpack.c.l.b16 %v5904
    %v5918 = vpack.c.b16 %v5915, %v5914
    %v5919 = vpack.c.b16 %v5917, %v5916
    %v5928 = vunpack.c.l.b16 %v5906
    %v5929 = vunpack.c.l.b16 %v5907
    %v5930 = vunpack.c.l.b16 %v5908
    %v5931 = vunpack.c.l.b16 %v5909
    %v5932 = vunpack.c.l.b16 %v5910
    %v5933 = vunpack.c.l.b16 %v5911
    %v5934 = vunpack.c.l.b16 %v5912
    %v5935 = vunpack.c.l.b16 %v5913
    %v5936 = vpack.c.b16 %v5929, %v5928
    %v5937 = vpack.c.b16 %v5931, %v5930
    %v5938 = vpack.c.b16 %v5933, %v5932
    %v5939 = vpack.c.b16 %v5935, %v5934
    %v5945 = vsel %vm4656, %v5918, 0
    %v5948 = vsel %vm4656, %v5919, 0
    %5950 = vmatprep.subr.bf16.mxu0 0
    %5951 = vmatpush1.bf16.msra.mxu0 %v5936
    %5952 = vmatprep.subr.bf16.mxu0 0
    %5953 = vmatpush1.bf16.msra.mxu0 %v5937
    %5954 = vmatprep.subr.bf16.mxu0 0
    %5955 = vmatpush1.bf16.msra.mxu0 %v5938
    %5956 = vmatprep.subr.bf16.mxu0 0
    %5957 = vmatpush1.bf16.msra.mxu0 %v5939
    %5958 = vmatprep.subr.bf16.mxu0 0
    %5959 = vmatpush1.bf16.msra.mxu0 0
    %5960 = vmatprep.subr.bf16.mxu0 0
    %5961 = vmatpush1.bf16.msra.mxu0 0
    %5962 = vmatprep.subr.bf16.mxu0 0
    %5963 = vmatpush1.bf16.msra.mxu0 0
    %5964 = vmatprep.subr.bf16.mxu0 0
    %5965 = vmatpush1.bf16.msra.mxu0 0
    %5966 = vmatprep.subr.bf16.mxu0 0
    %5967 = vmatpush1.bf16.msra.mxu0 0
    %5968 = vmatprep.subr.bf16.mxu0 0
    %5969 = vmatpush1.bf16.msra.mxu0 0
    %5970 = vmatprep.subr.bf16.mxu0 0
    %5971 = vmatpush1.bf16.msra.mxu0 0
    %5972 = vmatprep.subr.bf16.mxu0 0
    %5973 = vmatpush1.bf16.msra.mxu0 0
    %5974 = vmatprep.subr.bf16.mxu0 0
    %5975 = vmatpush1.bf16.msra.mxu0 0
    %5976 = vmatprep.subr.bf16.mxu0 0
    %5977 = vmatpush1.bf16.msra.mxu0 0
    %5978 = vmatprep.subr.bf16.mxu0 0
    %5979 = vmatpush1.bf16.msra.mxu0 0
    %5980 = vmatprep.subr.bf16.mxu0 0
    %5981 = vmatpush1.bf16.msra.mxu0 0
    %5982 = vmatprep.mubr.bf16.mxu0 0
    %5983 = vmatmul.mubr.bf16.gmra.mrb[0].mxu0 %v5945
    %v5984 = vpop.f32.mrb[0].mxu0
    %v5985 = vadd.f32 0.0, %v5984
    %v5986 = vpop.f32.mrb[0].mxu0
    %v5987 = vpop.f32.mrb[0].mxu0
    %v5988 = vadd.f32 0.0, %v5987
    %v5989 = vpop.f32.mrb[0].mxu0
    %5990 = vmatprep.mubr.bf16.mxu0 0
    %5991 = vmatmul.mubr.bf16.gmra.mrb[0].mxu0 %v5948
    %v5992 = vpop.f32.mrb[0].mxu0
    %v5993 = vadd.f32 0.0, %v5992
    %v5994 = vpop.f32.mrb[0].mxu0
    %v5995 = vpop.f32.mrb[0].mxu0
    %v5996 = vadd.f32 0.0, %v5995
    %v5997 = vpop.f32.mrb[0].mxu0
    %5998 = vdwg.mxu0
    %v5999 = vadd.f32 %v5869, %v5985
    %v6000 = vadd.f32 %v5872, %v5988
    %v6001 = vadd.f32 %v5877, %v5993
    %v6002 = vadd.f32 %v5880, %v5996
    %v6003 = vmul.f32 %v4871, %v5999
    %v6004 = vmul.f32 %v4872, %v6000
    %v6005 = vmul.f32 %v4873, %v6001
    %v6006 = vmul.f32 %v4874, %v6002
    %v6007 = vadd.f32 %v5648, %v6003
    %v6008 = vadd.f32 %v5649, %v6004
    %v6009 = vadd.f32 %v5650, %v6005
    %v6010 = vadd.f32 %v5651, %v6006
    %v6012 = vsel %vm1421, 1.0, 0
    %6014 = vmatprep.subr.mxu0 0.0
    %6015 = vmatpush1.msra.mxu0 %v6007
    %6016 = vmatprep.subr.mxu0 0.0
    %6017 = vmatpush1.msra.mxu0 %v6008
    %6018 = vmatprep.subr.mxu0 0.0
    %6019 = vmatpush1.msra.mxu0 %v6009
    %6020 = vmatprep.subr.mxu0 0.0
    %6021 = vmatpush1.msra.mxu0 %v6010
    %6022 = vmatprep.subr.mxu0 0.0
    %6023 = vmatpush1.msra.mxu0 0.0
    %6024 = vmatprep.subr.mxu0 0.0
    %6025 = vmatpush1.msra.mxu0 0.0
    %6026 = vmatprep.subr.mxu0 0.0
    %6027 = vmatpush1.msra.mxu0 0.0
    %6028 = vmatprep.subr.mxu0 0.0
    %6029 = vmatpush1.msra.mxu0 0.0
    %6030 = vmatprep.subr.mxu0 0.0
    %6031 = vmatpush1.msra.mxu0 0.0
    %6032 = vmatprep.subr.mxu0 0.0
    %6033 = vmatpush1.msra.mxu0 0.0
    %6034 = vmatprep.subr.mxu0 0.0
    %6035 = vmatpush1.msra.mxu0 0.0
    %6036 = vmatprep.subr.mxu0 0.0
    %6037 = vmatpush1.msra.mxu0 0.0
    %6038 = vmatprep.subr.mxu0 0.0
    %6039 = vmatpush1.msra.mxu0 0.0
    %6040 = vmatprep.subr.mxu0 0.0
    %6041 = vmatpush1.msra.mxu0 0.0
    %6042 = vmatprep.subr.mxu0 0.0
    %6043 = vmatpush1.msra.mxu0 0.0
    %6044 = vmatprep.subr.mxu0 0.0
    %6045 = vmatpush1.msra.mxu0 0.0
    %6046 = vmatprep.subr.mxu0 0.0
    %6047 = vmatpush1.msra.mxu0 0.0
    %6048 = vmatprep.subr.mxu0 0.0
    %6049 = vmatpush1.msra.mxu0 0.0
    %6050 = vmatprep.subr.mxu0 0.0
    %6051 = vmatpush1.msra.mxu0 0.0
    %6052 = vmatprep.subr.mxu0 0.0
    %6053 = vmatpush1.msra.mxu0 0.0
    %6054 = vmatprep.subr.mxu0 0.0
    %6055 = vmatpush1.msra.mxu0 0.0
    %6056 = vmatprep.subr.mxu0 0.0
    %6057 = vmatpush1.msra.mxu0 0.0
    %6058 = vmatprep.subr.mxu0 0.0
    %6059 = vmatpush1.msra.mxu0 0.0
    %6060 = vmatprep.subr.mxu0 0.0
    %6061 = vmatpush1.msra.mxu0 0.0
    %6062 = vmatprep.subr.mxu0 0.0
    %6063 = vmatpush1.msra.mxu0 0.0
    %6064 = vmatprep.subr.mxu0 0.0
    %6065 = vmatpush1.msra.mxu0 0.0
    %6066 = vmatprep.subr.mxu0 0.0
    %6067 = vmatpush1.msra.mxu0 0.0
    %6068 = vmatprep.subr.mxu0 0.0
    %6069 = vmatpush1.msra.mxu0 0.0
    %6070 = vmatprep.subr.mxu0 0.0
    %6071 = vmatpush1.msra.mxu0 0.0
    %6072 = vmatprep.subr.mxu0 0.0
    %6073 = vmatpush1.msra.mxu0 0.0
    %6074 = vmatprep.subr.mxu0 0.0
    %6075 = vmatpush1.msra.mxu0 0.0
    %6076 = vmatprep.subr.mxu0 0.0
    %6077 = vmatpush1.msra.mxu0 0.0
    %6078 = vmatprep.mubr.f32.mxu0 0.0
    %6079 = vmatmul.mubr.f32.gmra.mrb[0].mxu0 %v6012
    %v6080 = vpop.f32.mrb[0].mxu0
    %v6081 = vadd.f32 0.0, %v6080
    %v6082 = vpop.f32.mrb[0].mxu0
    %6083 = vdwg.mxu0
    %v6084 = vmul.f32 %v6007, %v6007
    %v6085 = vmul.f32 %v6008, %v6008
    %v6086 = vmul.f32 %v6009, %v6009
    %v6087 = vmul.f32 %v6010, %v6010
    %6088 = vmatprep.subr.mxu0 0.0
    %6089 = vmatpush1.msra.mxu0 %v6084
    %6090 = vmatprep.subr.mxu0 0.0
    %6091 = vmatpush1.msra.mxu0 %v6085
    %6092 = vmatprep.subr.mxu0 0.0
    %6093 = vmatpush1.msra.mxu0 %v6086
    %6094 = vmatprep.subr.mxu0 0.0
    %6095 = vmatpush1.msra.mxu0 %v6087
    %6096 = vmatprep.subr.mxu0 0.0
    %6097 = vmatpush1.msra.mxu0 0.0
    %6098 = vmatprep.subr.mxu0 0.0
    %6099 = vmatpush1.msra.mxu0 0.0
    %6100 = vmatprep.subr.mxu0 0.0
    %6101 = vmatpush1.msra.mxu0 0.0
    %6102 = vmatprep.subr.mxu0 0.0
    %6103 = vmatpush1.msra.mxu0 0.0
    %6104 = vmatprep.subr.mxu0 0.0
    %6105 = vmatpush1.msra.mxu0 0.0
    %6106 = vmatprep.subr.mxu0 0.0
    %6107 = vmatpush1.msra.mxu0 0.0
    %6108 = vmatprep.subr.mxu0 0.0
    %6109 = vmatpush1.msra.mxu0 0.0
    %6110 = vmatprep.subr.mxu0 0.0
    %6111 = vmatpush1.msra.mxu0 0.0
    %6112 = vmatprep.subr.mxu0 0.0
    %6113 = vmatpush1.msra.mxu0 0.0
    %6114 = vmatprep.subr.mxu0 0.0
    %6115 = vmatpush1.msra.mxu0 0.0
    %6116 = vmatprep.subr.mxu0 0.0
    %6117 = vmatpush1.msra.mxu0 0.0
    %6118 = vmatprep.subr.mxu0 0.0
    %6119 = vmatpush1.msra.mxu0 0.0
    %6120 = vmatprep.subr.mxu0 0.0
    %6121 = vmatpush1.msra.mxu0 0.0
    %6122 = vmatprep.subr.mxu0 0.0
    %6123 = vmatpush1.msra.mxu0 0.0
    %6124 = vmatprep.subr.mxu0 0.0
    %6125 = vmatpush1.msra.mxu0 0.0
    %6126 = vmatprep.subr.mxu0 0.0
    %6127 = vmatpush1.msra.mxu0 0.0
    %6128 = vmatprep.subr.mxu0 0.0
    %6129 = vmatpush1.msra.mxu0 0.0
    %6130 = vmatprep.subr.mxu0 0.0
    %6131 = vmatpush1.msra.mxu0 0.0
    %6132 = vmatprep.subr.mxu0 0.0
    %6133 = vmatpush1.msra.mxu0 0.0
    %6134 = vmatprep.subr.mxu0 0.0
    %6135 = vmatpush1.msra.mxu0 0.0
    %6136 = vmatprep.subr.mxu0 0.0
    %6137 = vmatpush1.msra.mxu0 0.0
    %6138 = vmatprep.subr.mxu0 0.0
    %6139 = vmatpush1.msra.mxu0 0.0
    %6140 = vmatprep.subr.mxu0 0.0
    %6141 = vmatpush1.msra.mxu0 0.0
    %6142 = vmatprep.subr.mxu0 0.0
    %6143 = vmatpush1.msra.mxu0 0.0
    %6144 = vmatprep.subr.mxu0 0.0
    %6145 = vmatpush1.msra.mxu0 0.0
    %6146 = vmatprep.subr.mxu0 0.0
    %6147 = vmatpush1.msra.mxu0 0.0
    %6148 = vmatprep.subr.mxu0 0.0
    %6149 = vmatpush1.msra.mxu0 0.0
    %6150 = vmatprep.subr.mxu0 0.0
    %6151 = vmatpush1.msra.mxu0 0.0
    %6152 = vmatprep.mubr.f32.mxu0 0.0
    %6153 = vmatmul.mubr.f32.gmra.mrb[0].mxu0 %v6012
    %v6154 = vpop.f32.mrb[0].mxu0
    %v6155 = vadd.f32 0.0, %v6154
    %v6156 = vpop.f32.mrb[0].mxu0
    %6157 = vdwg.mxu0
    %v6158 = vmul.f32 %v6081, 0.03125
    %v6159 = vmul.f32 %v6155, 0.03125
    %v6160 = vmul.f32 %v6158, %v6158
    %v6161 = vsub.f32 %v6159, %v6160
    %v6162 = vlaneseq
    %v6163 = vshrl.u32 %v6162, 7
    %v6164 = vsub.s32 0, %v6163
    %v6165 = vrot.slane %v6158, %v6164
    %v6166 = vsub.f32 %v6007, %v6165
    %v6167 = vsub.f32 %v6008, %v6165
    %v6168 = vsub.f32 %v6009, %v6165
    %v6169 = vsub.f32 %v6010, %v6165
    %v6170 = vadd.f32 %v6161, 1e-05
    %v6171 = vrsqrt.pop %v6170
    %v6172 = vlaneseq
    %v6173 = vshrl.u32 %v6172, 7
    %v6174 = vsub.s32 0, %v6173
    %v6175 = vrot.slane %v6171, %v6174
    %v6176 = vmul.f32 %v6166, %v6175
    %v6177 = vmul.f32 %v6167, %v6175
    %v6178 = vmul.f32 %v6168, %v6175
    %v6179 = vmul.f32 %v6169, %v6175
    %v6180 = vld [vmem:[%s8] sm:$0x1]
    %v6182 = vlaneseq
    %v6183 = vshrl.u32 %v6182, 7
    %v6184 = vsub.s32 0, %v6183
    %v6185 = vrot.slane %v6180, %v6184
    %v6187 = vmul.f32 %v6176, %v6185
    %v6188 = vmul.f32 %v6177, %v6185
    %v6189 = vmul.f32 %v6178, %v6185
    %v6190 = vmul.f32 %v6179, %v6185
    %v6191 = vld [vmem:[%s9] sm:$0x1]
    %v6193 = vlaneseq
    %v6194 = vshrl.u32 %v6193, 7
    %v6195 = vsub.s32 0, %v6194
    %v6196 = vrot.slane %v6191, %v6195
    %v6198 = vadd.f32 %v6187, %v6196
    %v6199 = vadd.f32 %v6188, %v6196
    %v6200 = vadd.f32 %v6189, %v6196
    %v6201 = vadd.f32 %v6190, %v6196
    %v6202 = vmax.f32 %v6198, 0.0
    %v6203 = vmax.f32 %v6199, 0.0
    %v6204 = vmax.f32 %v6200, 0.0
    %v6205 = vmax.f32 %v6201, 0.0
    %v6206 = vadd.f32 %v6202, %v6203
    %v6207 = vrot.slane %v6206, 4
    %v6208 = vadd.f32 %v6206, %v6207
    %v6209 = vrot.slane %v6208, 2
    %v6210 = vadd.f32 %v6208, %v6209
    %v6211 = vrot.slane %v6210, 1
    %v6212 = vadd.f32 %v6210, %v6211
    %v6213 = vadd.f32 %v6204, %v6205
    %v6214 = vrot.slane %v6213, 4
    %v6215 = vadd.f32 %v6213, %v6214
    %v6216 = vrot.slane %v6215, 2
    %v6217 = vadd.f32 %v6215, %v6216
    %v6218 = vrot.slane %v6217, 1
    %v6219 = vadd.f32 %v6217, %v6218
    %v6220 = vrcp.pop 16.0
    %v6221 = vmul.f32 %v6212, %v6220
    %v6222 = vmul.f32 %v6219, %v6220
    %v6223 = vpack.c.bf16 %v6221, %v6221
    %v6224 = vpack.c.bf16 %v6222, %v6222
    %v6225 = vld [vmem:[#allocation8] sm:$0xff]
    %v6226 = vld [vmem:[#allocation8 + $0x8] sm:$0xff]
    %v6227 = vld [vmem:[#allocation8 + $0x10] sm:$0xff]
    %v6228 = vld [vmem:[#allocation8 + $0x18] sm:$0xff]
    %v6229 = vld [vmem:[#allocation8 + $0x20] sm:$0xff]
    %v6230 = vld [vmem:[#allocation8 + $0x28] sm:$0xff]
    %v6231 = vld [vmem:[#allocation8 + $0x30] sm:$0xff]
    %v6232 = vld [vmem:[#allocation8 + $0x38] sm:$0xff]
    %v6233 = vld [vmem:[#allocation8 + $0x40] sm:$0xff]
    %v6234 = vld [vmem:[#allocation8 + $0x48] sm:$0xff]
    %v6235 = vld [vmem:[#allocation8 + $0x50] sm:$0xff]
    %v6236 = vld [vmem:[#allocation8 + $0x58] sm:$0xff]
    %v6237 = vld [vmem:[#allocation8 + $0x60] sm:$0xff]
    %v6238 = vld [vmem:[#allocation8 + $0x68] sm:$0xff]
    %v6239 = vld [vmem:[#allocation8 + $0x70] sm:$0xff]
    %v6240 = vld [vmem:[#allocation8 + $0x78] sm:$0xff]
    %v6241 = vld [vmem:[%s11] sm:$0x3]
    %v6243 = vlaneseq
    %v6244 = vshrl.u32 %v6243, 7
    %v6245 = vsub.s32 0, %v6244
    %v6246 = vrot.slane %v6241, %v6245
    %v6247 = vlaneseq
    %v6248 = vshrl.u32 %v6247, 7
    %v6249 = vsub.s32 1, %v6248
    %v6250 = vrot.slane %v6241, %v6249
    %v6255 = vunpack.c.l.b16 %v6223
    %v6256 = vunpack.c.l.b16 %v6224
    %vm6257 = vcmask 1041409
    %v6258 = vsel %vm6257, %v6256, %v6255
    %v6259 = vpack.c.b16 %v6258, %v6258
    %v6277 = vunpack.c.l.b16 %v6225
    %v6278 = vunpack.c.h.b16 %v6225
    %v6279 = vunpack.c.l.b16 %v6226
    %v6280 = vunpack.c.h.b16 %v6226
    %v6281 = vunpack.c.l.b16 %v6227
    %v6282 = vunpack.c.h.b16 %v6227
    %v6283 = vunpack.c.l.b16 %v6228
    %v6284 = vunpack.c.h.b16 %v6228
    %v6285 = vunpack.c.l.b16 %v6229
    %v6286 = vunpack.c.h.b16 %v6229
    %v6287 = vunpack.c.l.b16 %v6230
    %v6288 = vunpack.c.h.b16 %v6230
    %v6289 = vunpack.c.l.b16 %v6231
    %v6290 = vunpack.c.h.b16 %v6231
    %v6291 = vunpack.c.l.b16 %v6232
    %v6292 = vunpack.c.h.b16 %v6232
    %v6293 = vunpack.c.l.b16 %v6233
    %v6294 = vunpack.c.h.b16 %v6233
    %v6295 = vunpack.c.l.b16 %v6234
    %v6296 = vunpack.c.h.b16 %v6234
    %v6297 = vunpack.c.l.b16 %v6235
    %v6298 = vunpack.c.h.b16 %v6235
    %v6299 = vunpack.c.l.b16 %v6236
    %v6300 = vunpack.c.h.b16 %v6236
    %v6301 = vunpack.c.l.b16 %v6237
    %v6302 = vunpack.c.h.b16 %v6237
    %v6303 = vunpack.c.l.b16 %v6238
    %v6304 = vunpack.c.h.b16 %v6238
    %v6305 = vunpack.c.l.b16 %v6239
    %v6306 = vunpack.c.h.b16 %v6239
    %v6307 = vunpack.c.l.b16 %v6240
    %v6308 = vunpack.c.h.b16 %v6240
    %v6309 = vpack.c.b16 %v6279, %v6277
    %v6310 = vpack.c.b16 %v6280, %v6278
    %v6311 = vpack.c.b16 %v6283, %v6281
    %v6312 = vpack.c.b16 %v6284, %v6282
    %v6313 = vpack.c.b16 %v6287, %v6285
    %v6314 = vpack.c.b16 %v6288, %v6286
    %v6315 = vpack.c.b16 %v6291, %v6289
    %v6316 = vpack.c.b16 %v6292, %v6290
    %v6317 = vpack.c.b16 %v6295, %v6293
    %v6318 = vpack.c.b16 %v6296, %v6294
    %v6319 = vpack.c.b16 %v6299, %v6297
    %v6320 = vpack.c.b16 %v6300, %v6298
    %v6321 = vpack.c.b16 %v6303, %v6301
    %v6322 = vpack.c.b16 %v6304, %v6302
    %v6323 = vpack.c.b16 %v6307, %v6305
    %v6324 = vpack.c.b16 %v6308, %v6306
    %6341 = vmatprep.subr.bf16.mxu0 %v6310
    %6342 = vmatpush1.bf16.msra.mxu0 %v6309
    %6343 = vmatprep.subr.bf16.mxu0 %v6312
    %6344 = vmatpush1.bf16.msra.mxu0 %v6311
    %6345 = vmatprep.subr.bf16.mxu0 %v6314
    %6346 = vmatpush1.bf16.msra.mxu0 %v6313
    %6347 = vmatprep.subr.bf16.mxu0 %v6316
    %6348 = vmatpush1.bf16.msra.mxu0 %v6315
    %6349 = vmatprep.subr.bf16.mxu0 %v6318
    %6350 = vmatpush1.bf16.msra.mxu0 %v6317
    %6351 = vmatprep.subr.bf16.mxu0 %v6320
    %6352 = vmatpush1.bf16.msra.mxu0 %v6319
    %6353 = vmatprep.subr.bf16.mxu0 %v6322
    %6354 = vmatpush1.bf16.msra.mxu0 %v6321
    %6355 = vmatprep.subr.bf16.mxu0 %v6324
    %6356 = vmatpush1.bf16.msra.mxu0 %v6323
    %6357 = vmatprep.subr.bf16.mxu0 0
    %6358 = vmatpush1.bf16.msra.mxu0 0
    %6359 = vmatprep.subr.bf16.mxu0 0
    %6360 = vmatpush1.bf16.msra.mxu0 0
    %6361 = vmatprep.subr.bf16.mxu0 0
    %6362 = vmatpush1.bf16.msra.mxu0 0
    %6363 = vmatprep.subr.bf16.mxu0 0
    %6364 = vmatpush1.bf16.msra.mxu0 0
    %6365 = vmatprep.subr.bf16.mxu0 0
    %6366 = vmatpush1.bf16.msra.mxu0 0
    %6367 = vmatprep.subr.bf16.mxu0 0
    %6368 = vmatpush1.bf16.msra.mxu0 0
    %6369 = vmatprep.subr.bf16.mxu0 0
    %6370 = vmatpush1.bf16.msra.mxu0 0
    %6371 = vmatprep.subr.bf16.mxu0 0
    %6372 = vmatpush1.bf16.msra.mxu0 0
    %6373 = vmatprep.mubr.bf16.mxu0 0
    %6374 = vmatmul.mubr.bf16.gmra.mrb[0].mxu0 %v6259
    %v6375 = vpop.f32.mrb[0].mxu0
    %v6376 = vadd.f32 %v6246, %v6375
    %v6377 = vpop.f32.mrb[0].mxu0
    %v6378 = vadd.f32 %v6250, %v6377
    %v6379 = vpop.f32.mrb[0].mxu0
    %v6380 = vpop.f32.mrb[0].mxu0
    %6381 = vdwg.mxu0
    %v6382 = vpack.c.bf16 %v6376, %v6376
    %v6383 = vpack.c.bf16 %v6378, %v6378
    %v6384 = vld [vmem:[%s12] sm:$0xf]
    %v6385 = vld [vmem:[%s12 + $0x4] sm:$0xf]
    %v6386 = vld [vmem:[%s12 + $0x8] sm:$0xf]
    %v6387 = vld [vmem:[%s12 + $0xc] sm:$0xf]
    %v6388 = vld [vmem:[%s12 + $0x10] sm:$0xf]
    %v6389 = vld [vmem:[%s12 + $0x14] sm:$0xf]
    %v6390 = vld [vmem:[%s12 + $0x18] sm:$0xf]
    %v6391 = vld [vmem:[%s12 + $0x1c] sm:$0xf]
    %v6392 = vld [vmem:[%s12 + $0x20] sm:$0xf]
    %v6393 = vld [vmem:[%s12 + $0x24] sm:$0xf]
    %v6394 = vld [vmem:[%s12 + $0x28] sm:$0xf]
    %v6395 = vld [vmem:[%s12 + $0x2c] sm:$0xf]
    %v6396 = vld [vmem:[%s12 + $0x30] sm:$0xf]
    %v6397 = vld [vmem:[%s12 + $0x34] sm:$0xf]
    %v6398 = vld [vmem:[%s12 + $0x38] sm:$0xf]
    %v6399 = vld [vmem:[%s12 + $0x3c] sm:$0xf]
    %v6400 = vld [vmem:[%s12 + $0x40] sm:$0xf]
    %v6401 = vld [vmem:[%s12 + $0x44] sm:$0xf]
    %v6402 = vld [vmem:[%s12 + $0x48] sm:$0xf]
    %v6403 = vld [vmem:[%s12 + $0x4c] sm:$0xf]
    %v6404 = vld [vmem:[%s12 + $0x50] sm:$0xf]
    %v6405 = vld [vmem:[%s12 + $0x54] sm:$0xf]
    %v6406 = vld [vmem:[%s12 + $0x58] sm:$0xf]
    %v6407 = vld [vmem:[%s12 + $0x5c] sm:$0xf]
    %v6408 = vld [vmem:[%s12 + $0x60] sm:$0xf]
    %v6409 = vld [vmem:[%s12 + $0x64] sm:$0xf]
    %v6410 = vld [vmem:[%s12 + $0x68] sm:$0xf]
    %v6411 = vld [vmem:[%s12 + $0x6c] sm:$0xf]
    %v6412 = vld [vmem:[%s12 + $0x70] sm:$0xf]
    %v6413 = vld [vmem:[%s12 + $0x74] sm:$0xf]
    %v6414 = vld [vmem:[%s12 + $0x78] sm:$0xf]
    %v6415 = vld [vmem:[%s12 + $0x7c] sm:$0xf]
    %v6416 = vld [vmem:[%s13] sm:$0x1]
    %v6418 = vlaneseq
    %v6419 = vshrl.u32 %v6418, 7
    %v6420 = vsub.s32 0, %v6419
    %v6421 = vrot.slane %v6416, %v6420
    %v6455 = vunpack.c.l.b16 %v6384
    %v6456 = vunpack.c.l.b16 %v6385
    %v6457 = vunpack.c.l.b16 %v6386
    %v6458 = vunpack.c.l.b16 %v6387
    %v6459 = vunpack.c.l.b16 %v6388
    %v6460 = vunpack.c.l.b16 %v6389
    %v6461 = vunpack.c.l.b16 %v6390
    %v6462 = vunpack.c.l.b16 %v6391
    %v6463 = vunpack.c.l.b16 %v6392
    %v6464 = vunpack.c.l.b16 %v6393
    %v6465 = vunpack.c.l.b16 %v6394
    %v6466 = vunpack.c.l.b16 %v6395
    %v6467 = vunpack.c.l.b16 %v6396
    %v6468 = vunpack.c.l.b16 %v6397
    %v6469 = vunpack.c.l.b16 %v6398
    %v6470 = vunpack.c.l.b16 %v6399
    %v6471 = vunpack.c.l.b16 %v6400
    %v6472 = vunpack.c.l.b16 %v6401
    %v6473 = vunpack.c.l.b16 %v6402
    %v6474 = vunpack.c.l.b16 %v6403
    %v6475 = vunpack.c.l.b16 %v6404
    %v6476 = vunpack.c.l.b16 %v6405
    %v6477 = vunpack.c.l.b16 %v6406
    %v6478 = vunpack.c.l.b16 %v6407
    %v6479 = vunpack.c.l.b16 %v6408
    %v6480 = vunpack.c.l.b16 %v6409
    %v6481 = vunpack.c.l.b16 %v6410
    %v6482 = vunpack.c.l.b16 %v6411
    %v6483 = vunpack.c.l.b16 %v6412
    %v6484 = vunpack.c.l.b16 %v6413
    %v6485 = vunpack.c.l.b16 %v6414
    %v6486 = vunpack.c.l.b16 %v6415
    %v6487 = vpack.c.b16 %v6456, %v6455
    %v6488 = vpack.c.b16 %v6458, %v6457
    %v6489 = vpack.c.b16 %v6460, %v6459
    %v6490 = vpack.c.b16 %v6462, %v6461
    %v6491 = vpack.c.b16 %v6464, %v6463
    %v6492 = vpack.c.b16 %v6466, %v6465
    %v6493 = vpack.c.b16 %v6468, %v6467
    %v6494 = vpack.c.b16 %v6470, %v6469
    %v6495 = vpack.c.b16 %v6472, %v6471
    %v6496 = vpack.c.b16 %v6474, %v6473
    %v6497 = vpack.c.b16 %v6476, %v6475
    %v6498 = vpack.c.b16 %v6478, %v6477
    %v6499 = vpack.c.b16 %v6480, %v6479
    %v6500 = vpack.c.b16 %v6482, %v6481
    %v6501 = vpack.c.b16 %v6484, %v6483
    %v6502 = vpack.c.b16 %v6486, %v6485
    %6519 = vmatprep.subr.bf16.mxu0 0
    %6520 = vmatpush1.bf16.msra.mxu0 %v6487
    %6521 = vmatprep.subr.bf16.mxu0 0
    %6522 = vmatpush1.bf16.msra.mxu0 %v6488
    %6523 = vmatprep.subr.bf16.mxu0 0
    %6524 = vmatpush1.bf16.msra.mxu0 %v6489
    %6525 = vmatprep.subr.bf16.mxu0 0
    %6526 = vmatpush1.bf16.msra.mxu0 %v6490
    %6527 = vmatprep.subr.bf16.mxu0 0
    %6528 = vmatpush1.bf16.msra.mxu0 %v6491
    %6529 = vmatprep.subr.bf16.mxu0 0
    %6530 = vmatpush1.bf16.msra.mxu0 %v6492
    %6531 = vmatprep.subr.bf16.mxu0 0
    %6532 = vmatpush1.bf16.msra.mxu0 %v6493
    %6533 = vmatprep.subr.bf16.mxu0 0
    %6534 = vmatpush1.bf16.msra.mxu0 %v6494
    %6535 = vmatprep.subr.bf16.mxu0 0
    %6536 = vmatpush1.bf16.msra.mxu0 %v6495
    %6537 = vmatprep.subr.bf16.mxu0 0
    %6538 = vmatpush1.bf16.msra.mxu0 %v6496
    %6539 = vmatprep.subr.bf16.mxu0 0
    %6540 = vmatpush1.bf16.msra.mxu0 %v6497
    %6541 = vmatprep.subr.bf16.mxu0 0
    %6542 = vmatpush1.bf16.msra.mxu0 %v6498
    %6543 = vmatprep.subr.bf16.mxu0 0
    %6544 = vmatpush1.bf16.msra.mxu0 %v6499
    %6545 = vmatprep.subr.bf16.mxu0 0
    %6546 = vmatpush1.bf16.msra.mxu0 %v6500
    %6547 = vmatprep.subr.bf16.mxu0 0
    %6548 = vmatpush1.bf16.msra.mxu0 %v6501
    %6549 = vmatprep.subr.bf16.mxu0 0
    %6550 = vmatpush1.bf16.msra.mxu0 %v6502
    %6551 = vmatprep.mubr.bf16.mxu0 %v6383
    %6552 = vmatmul.mubr.bf16.gmra.mrb[0].mxu0 %v6382
    %v6553 = vpop.f32.mrb[0].mxu0
    %v6554 = vadd.f32 %v6421, %v6553
    %v6555 = vpop.f32.mrb[0].mxu0
    %v6556 = vpop.f32.mrb[0].mxu0
    %v6557 = vpop.f32.mrb[0].mxu0
    %6558 = vdwg.mxu0
    %vm6559 = vcmask 74752
    %6560 = vst.msk [vmem:[#allocation11] sm:$0x3] %vm6559, %v6554
    // Predicated region
    $region62: #{tpu_custom_call.1} parent=1 // pred_check
      _
    $region63: #{tpu_custom_call.1} parent=1 // pred_check_branch
      %6562 = sbr.rel (0) target = $region65
    $region64: #{tpu_custom_call.1} parent=1 // pred_region
      %s6564 = ssub.s32 32, 32
      %6565 = vsyncadd [#allocation10], %s6564
      %s6567 = sshll.u32 [#allocation11], 4
      %s6568 = int_to_ptr.vmem [resolvable:$true] %s6567
      %6570 = dma.vmem_to_hbm [thread:$0]  %s6568, 32, %s14, [#allocation10]
    $region65: #{tpu_custom_call.1} parent=1 // pred_fallthru
      _
    // Predicated region
    $region66: #{tpu_custom_call.1} parent=1 // pred_check
      _
    $region67: #{tpu_custom_call.1} parent=1 // pred_check_branch
      %6572 = sbr.rel (0) target = $region69
    $region68: #{tpu_custom_call.1} parent=1 // pred_region
      %6573 = dma.done [#allocation10], 32
    $region69: #{tpu_custom_call.1} parent=1 // pred_fallthru
      _
    %6574 = vsyncpa [#allocation9], 1
    %6575 = vsyncpa [#allocation10], 1

</llo_original>
